<compile_context>
chip_gen: v6e
topology: v6e:2x2x1
jax: 0.10.0
libtpu: 0.0.40
codegen_flags: <defaults>
</compile_context>

<pallas_src>
import functools

import jax
import jax.numpy as jnp
from jax.experimental import pallas as pl
from jax.experimental.pallas import tpu as pltpu


# ----------------------------------------------------------------------------
# Pallas kernel: bidirectional LSTM + mean over time, one node-tile per grid step
# ----------------------------------------------------------------------------
def _bilstm_mean_kernel(xa_ref, w_in_ref, w_hh_ref, b_ref, out_ref, gin_ref):
    """Fused bi-LSTM + temporal mean.

    xa_ref  : (T, TILE_N, 2D) bf16   xa[t] = concat(x[t], x[T-1-t])
    w_in_ref: (2D, 8H)        bf16   input->gates, interleaved gate columns
                                     [i_f,i_b,f_f,f_b,g_f,g_b,o_f,o_b]
    w_hh_ref: (2H, 8H)        bf16   hidden->gates (block structured: h_fwd rows
                                     feed fwd columns, h_bwd rows feed bwd columns)
    b_ref   : (1, 8H)         f32    b_ih + b_hh, interleaved columns
    out_ref : (TILE_N, 2H)    f32    mean_t [h_fwd(t) | h_bwd(t)]
    gin_ref : (T, TILE_N, 8H) f32    VMEM scratch: hoisted input-gate projections
    """
    T, TN, D2 = xa_ref.shape
    H8 = w_in_ref.shape[1]
    H2 = H8 // 4                       # 2*H: width of one gate over both directions

    # ---- hoisted input projection: one big MXU matmul over all timesteps ----
    xa = xa_ref[...].reshape(T * TN, D2)
    gin = jnp.dot(xa, w_in_ref[...], preferred_element_type=jnp.float32)
    gin_ref[...] = (gin + b_ref[...]).reshape(T, TN, H8)

    w_hh = w_hh_ref[...]

    # ---- shared recurrence: one (TILE_N,2H)x(2H,8H) matmul drives both dirs ----
    def step(t, carry):
        h, c, acc = carry
        gates = (jnp.dot(h.astype(jnp.bfloat16), w_hh,
                         preferred_element_type=jnp.float32)
                 + gin_ref[t])
        i = jax.nn.sigmoid(gates[:, 0 * H2:1 * H2])
        f = jax.nn.sigmoid(gates[:, 1 * H2:2 * H2])
        g = jnp.tanh(gates[:, 2 * H2:3 * H2])
        o = jax.nn.sigmoid(gates[:, 3 * H2:4 * H2])
        c = f * c + i * g
        h = o * jnp.tanh(c)
        return h, c, acc + h

    zeros = jnp.zeros((TN, H2), jnp.float32)
    _, _, acc = jax.lax.fori_loop(0, T, step, (zeros, zeros, zeros),
                                  unroll=True)
    out_ref[...] = acc * (1.0 / T)     # mean over time; [fwd | bwd] column order


# ----------------------------------------------------------------------------
# Parameter packing (torch nn.LSTM layout -> fused kernel operands)
# ----------------------------------------------------------------------------
def _interleave_gate_cols(w_fwd, w_bwd, H):
    """(R,4H)+(R,4H) in gate order (i,f,g,o) -> (R,8H) with columns
    [i_f, i_b, f_f, f_b, g_f, g_b, o_f, o_b]."""
    R = w_fwd.shape[0]
    wf = w_fwd.reshape(R, 4, 1, H)
    wb = w_bwd.reshape(R, 4, 1, H)
    return jnp.concatenate([wf, wb], axis=2).reshape(R, 8 * H)


def prep_bilstm_params(p, in_dim, hidden_dim):
    H = hidden_dim // 2
    wih_f, wih_b = p["wih_f"].T, p["wih_b"].T          # (D, 4H)
    whh_f, whh_b = p["whh_f"].T, p["whh_b"].T          # (H, 4H)
    z_in, z_hh = jnp.zeros_like(wih_f), jnp.zeros_like(whh_f)
    w_in = jnp.concatenate([
        _interleave_gate_cols(wih_f, z_in, H),         # rows hit by x[t]
        _interleave_gate_cols(z_in, wih_b, H),         # rows hit by x[T-1-t]
    ], axis=0).astype(jnp.bfloat16)                    # (2D, 8H)
    w_hh = jnp.concatenate([
        _interleave_gate_cols(whh_f, z_hh, H),         # rows hit by h_fwd
        _interleave_gate_cols(z_hh, whh_b, H),         # rows hit by h_bwd
    ], axis=0).astype(jnp.bfloat16)                    # (2H, 8H)
    b_f = (p["bih_f"] + p["bhh_f"]).reshape(1, 4 * H)
    b_b = (p["bih_b"] + p["bhh_b"]).reshape(1, 4 * H)
    b_c = _interleave_gate_cols(b_f, b_b, H).astype(jnp.float32)   # (1, 8H)
    return w_in, w_hh, b_c


# ----------------------------------------------------------------------------
# Pallas wrapper
# ----------------------------------------------------------------------------
def content_aggregation(feats, w_in, w_hh, b_c, *, hidden_dim, tile_n=128):
    """feats: (N, C, in_dim) f32 -> (N, hidden_dim) f32 == mean_t biLSTM(feats)."""
    N, T, D = feats.shape
    H = hidden_dim // 2

    # time-major; fold the backward direction's time reversal into the input
    x_tm = jnp.transpose(feats, (1, 0, 2))                       # (T, N, D)
    xa = jnp.concatenate([x_tm, x_tm[::-1]], axis=-1)            # (T, N, 2D)
    xa = xa.astype(jnp.bfloat16)

    tile_n = min(tile_n, max(8, ((N + 7) // 8) * 8))
    n_pad = pl.cdiv(N, tile_n) * tile_n
    if n_pad != N:
        xa = jnp.pad(xa, ((0, 0), (0, n_pad - N), (0, 0)))

    out = pl.pallas_call(
        _bilstm_mean_kernel,
        out_shape=jax.ShapeDtypeStruct((n_pad, 2 * H), jnp.float32),
        grid=(n_pad // tile_n,),
        in_specs=[
            pl.BlockSpec((T, tile_n, 2 * D), lambda i: (0, i, 0)),
            pl.BlockSpec((2 * D, 8 * H), lambda i: (0, 0)),
            pl.BlockSpec((2 * H, 8 * H), lambda i: (0, 0)),
            pl.BlockSpec((1, 8 * H), lambda i: (0, 0)),
        ],
        out_specs=pl.BlockSpec((tile_n, 2 * H), lambda i: (i, 0)),
        scratch_shapes=[pltpu.VMEM((T, tile_n, 8 * H), jnp.float32)],
        compiler_params=pltpu.CompilerParams(
            dimension_semantics=("parallel",)),
    )(xa, w_in, w_hh, b_c)
    return out[:N]


# ----------------------------------------------------------------------------
# Init (torch.nn.LSTM-style uniform init) and pure-JAX reference
# ----------------------------------------------------------------------------
def init_content_aggregation(key, in_dim, hidden_dim):
    H = hidden_dim // 2
    bound = 1.0 / float(H) ** 0.5
    names_shapes = [
        ("wih_f", (4 * H, in_dim)), ("whh_f", (4 * H, H)),
        ("bih_f", (4 * H,)), ("bhh_f", (4 * H,)),
        ("wih_b", (4 * H, in_dim)), ("whh_b", (4 * H, H)),
        ("bih_b", (4 * H,)), ("bhh_b", (4 * H,)),
    ]
    ks = jax.random.split(key, len(names_shapes))
    return {n: jax.random.uniform(k, s, jnp.float32, -bound, bound)
            for (n, s), k in zip(names_shapes, ks)}


def content_aggregation_ref(feats, p, hidden_dim):
    """Pure-JAX reference matching nn.LSTM(bidirectional=True) + mean(dim=1)."""
    H = hidden_dim // 2
    N, T, _ = feats.shape

    def run(wih, whh, bih, bhh, reverse):
        h = jnp.zeros((N, H), jnp.float32)
        c = jnp.zeros((N, H), jnp.float32)
        acc = jnp.zeros((N, H), jnp.float32)
        order = range(T - 1, -1, -1) if reverse else range(T)
        for t in order:
            gates = feats[:, t] @ wih.T + h @ whh.T + bih + bhh
            i = jax.nn.sigmoid(gates[:, 0 * H:1 * H])
            f = jax.nn.sigmoid(gates[:, 1 * H:2 * H])
            g = jnp.tanh(gates[:, 2 * H:3 * H])
            o = jax.nn.sigmoid(gates[:, 3 * H:4 * H])
            c = f * c + i * g
            h = o * jnp.tanh(c)
            acc = acc + h
        return acc / T

    fwd = run(p["wih_f"], p["whh_f"], p["bih_f"], p["bhh_f"], reverse=False)
    bwd = run(p["wih_b"], p["whh_b"], p["bih_b"], p["bhh_b"], reverse=True)
    return jnp.concatenate([fwd, bwd], axis=-1)


# ----------------------------------------------------------------------------
# Demo
# ----------------------------------------------------------------------------
if __name__ == "__main__":
    in_dim, hidden_dim = 32, 128        # H = 64 -> 2H = 128, 8H = 512 (lane-dense)
    num_nodes, num_feats = 256, 8       # N nodes, C content features per node

    root = jax.random.PRNGKey(0)
    k_param, k_feat = jax.random.split(root)
    params = init_content_aggregation(k_param, in_dim, hidden_dim)
    feats = jax.random.normal(k_feat, (num_nodes, num_feats, in_dim), jnp.float32)

    w_in, w_hh, b_c = prep_bilstm_params(params, in_dim, hidden_dim)

    fwd_fn = jax.jit(functools.partial(content_aggregation,
                                       hidden_dim=hidden_dim, tile_n=128))
    out = jax.block_until_ready(fwd_fn(feats, w_in, w_hh, b_c))

    assert out.shape == (num_nodes, hidden_dim), out.shape
    assert bool(jnp.all(jnp.isfinite(out)))

    ref = content_aggregation_ref(feats, params, hidden_dim)
    err = float(jnp.max(jnp.abs(out - ref)))
    assert err < 5e-2, f"max abs error vs reference: {err}"

    print("KERNEL_OK")
</pallas_src>

<mosaic_0001>
module attributes {stable_mosaic.version = 11 : i64} {
  func.func @_bilstm_mean_kernel(%arg0: i32, %arg1: memref<8x128x64xbf16, #tpu.memory_space<vmem>>, %arg2: memref<64x512xbf16, #tpu.memory_space<vmem>>, %arg3: memref<128x512xbf16, #tpu.memory_space<vmem>>, %arg4: memref<1x512xf32, #tpu.memory_space<vmem>>, %arg5: memref<128x128xf32, #tpu.memory_space<vmem>>, %arg6: memref<8x128x512xf32, #tpu.memory_space<vmem>>) attributes {dimension_semantics = [#tpu.dimension_semantics<parallel>], iteration_bounds = array<i64: 2>, scalar_prefetch = 0 : i64, scratch_operands = 1 : i64, tpu.core_type = #tpu.core_type<tc>, window_params = [{transform_indices = @transform_0, window_bounds = array<i64: 8, 128, 64>}, {pipeline_mode = #tpu.pipeline_mode<synchronous>, transform_indices = @transform_1, window_bounds = array<i64: 64, 512>}, {pipeline_mode = #tpu.pipeline_mode<synchronous>, transform_indices = @transform_2, window_bounds = array<i64: 128, 512>}, {pipeline_mode = #tpu.pipeline_mode<synchronous>, transform_indices = @transform_3, window_bounds = array<i64: 1, 512>}, {transform_indices = @transform_4, window_bounds = array<i64: 128, 128>}]} {
    %c0 = arith.constant 0 : index
    %c0_0 = arith.constant 0 : index
    %c0_1 = arith.constant 0 : index
    %0 = vector.load %arg1[%c0, %c0_0, %c0_1] : memref<8x128x64xbf16, #tpu.memory_space<vmem>>, vector<8x128x64xbf16>
    %1 = vector.shape_cast %0 : vector<8x128x64xbf16> to vector<1024x64xbf16>
    %c0_2 = arith.constant 0 : index
    %c0_3 = arith.constant 0 : index
    %2 = vector.load %arg2[%c0_2, %c0_3] : memref<64x512xbf16, #tpu.memory_space<vmem>>, vector<64x512xbf16>
    %cst = arith.constant dense<0.000000e+00> : vector<1024x512xf32>
    %3 = tpu.matmul %1, %2, %cst {dimension_numbers = #tpu.dot_dimension_numbers<[1], [0], [0], [1], [0, 0, 1, 1], [], []>} : vector<1024x64xbf16>, vector<64x512xbf16>, vector<1024x512xf32> -> vector<1024x512xf32>
    %c0_4 = arith.constant 0 : index
    %c0_5 = arith.constant 0 : index
    %4 = vector.load %arg4[%c0_4, %c0_5] : memref<1x512xf32, #tpu.memory_space<vmem>>, vector<1x512xf32>
    %5 = vector.broadcast %4 : vector<1x512xf32> to vector<1024x512xf32>
    %6 = arith.addf %3, %5 : vector<1024x512xf32>
    %7 = vector.shape_cast %6 : vector<1024x512xf32> to vector<8x128x512xf32>
    %c0_6 = arith.constant 0 : index
    %c0_7 = arith.constant 0 : index
    %c0_8 = arith.constant 0 : index
    %8 = vector.load %arg6[%c0_6, %c0_7, %c0_8] : memref<8x128x512xf32, #tpu.memory_space<vmem>>, vector<8x128x512xf32>
    tpu.vector_store %arg6[%c0_6, %c0_7, %c0_8], %7 {strides = array<i32>} : memref<8x128x512xf32, #tpu.memory_space<vmem>>, vector<8x128x512xf32>,
    %c0_9 = arith.constant 0 : index
    %c0_10 = arith.constant 0 : index
    %9 = vector.load %arg3[%c0_9, %c0_10] : memref<128x512xbf16, #tpu.memory_space<vmem>>, vector<128x512xbf16>
    %cst_11 = arith.constant 0.000000e+00 : f32
    %10 = vector.broadcast %cst_11 : f32 to vector<128x128xf32>
    %c0_i32 = arith.constant 0 : i32
    %11 = arith.truncf %10 : vector<128x128xf32> to vector<128x128xbf16>
    %cst_12 = arith.constant dense<0.000000e+00> : vector<128x512xf32>
    %12 = tpu.matmul %11, %9, %cst_12 {dimension_numbers = #tpu.dot_dimension_numbers<[1], [0], [0], [1], [0, 0, 1, 1], [], []>} : vector<128x128xbf16>, vector<128x512xbf16>, vector<128x512xf32> -> vector<128x512xf32>
    %13 = arith.index_cast %c0_i32 : i32 to index
    %c0_13 = arith.constant 0 : index
    %c0_14 = arith.constant 0 : index
    %14 = vector.load %arg6[%13, %c0_13, %c0_14] : memref<8x128x512xf32, #tpu.memory_space<vmem>>, vector<1x128x512xf32>
    %15 = vector.shape_cast %14 : vector<1x128x512xf32> to vector<128x512xf32>
    %16 = arith.addf %12, %15 : vector<128x512xf32>
    %17 = vector.extract_strided_slice %16 {offsets = [0, 0], sizes = [128, 128], strides = [1, 1]} : vector<128x512xf32> to vector<128x128xf32>
    %18 = arith.negf %17 : vector<128x128xf32>
    %19 = math.exp %18 : vector<128x128xf32>
    %cst_15 = arith.constant 1.000000e+00 : f32
    %20 = vector.broadcast %cst_15 : f32 to vector<128x128xf32>
    %21 = arith.addf %20, %19 : vector<128x128xf32>
    %22 = arith.divf %20, %21 : vector<128x128xf32>
    %23 = vector.extract_strided_slice %16 {offsets = [0, 128], sizes = [128, 128], strides = [1, 1]} : vector<128x512xf32> to vector<128x128xf32>
    %24 = arith.negf %23 : vector<128x128xf32>
    %25 = math.exp %24 : vector<128x128xf32>
    %cst_16 = arith.constant 1.000000e+00 : f32
    %26 = vector.broadcast %cst_16 : f32 to vector<128x128xf32>
    %27 = arith.addf %26, %25 : vector<128x128xf32>
    %28 = arith.divf %26, %27 : vector<128x128xf32>
    %29 = vector.extract_strided_slice %16 {offsets = [0, 256], sizes = [128, 128], strides = [1, 1]} : vector<128x512xf32> to vector<128x128xf32>
    %30 = math.tanh %29 : vector<128x128xf32>
    %31 = vector.extract_strided_slice %16 {offsets = [0, 384], sizes = [128, 128], strides = [1, 1]} : vector<128x512xf32> to vector<128x128xf32>
    %32 = arith.negf %31 : vector<128x128xf32>
    %33 = math.exp %32 : vector<128x128xf32>
    %cst_17 = arith.constant 1.000000e+00 : f32
    %34 = vector.broadcast %cst_17 : f32 to vector<128x128xf32>
    %35 = arith.addf %34, %33 : vector<128x128xf32>
    %36 = arith.divf %34, %35 : vector<128x128xf32>
    %37 = arith.mulf %28, %10 : vector<128x128xf32>
    %38 = arith.mulf %22, %30 : vector<128x128xf32>
    %39 = arith.addf %37, %38 : vector<128x128xf32>
    %40 = math.tanh %39 : vector<128x128xf32>
    %41 = arith.mulf %36, %40 : vector<128x128xf32>
    %42 = arith.addf %10, %41 : vector<128x128xf32>
    %c1_i32 = arith.constant 1 : i32
    %43 = arith.truncf %41 : vector<128x128xf32> to vector<128x128xbf16>
    %cst_18 = arith.constant dense<0.000000e+00> : vector<128x512xf32>
    %44 = tpu.matmul %43, %9, %cst_18 {dimension_numbers = #tpu.dot_dimension_numbers<[1], [0], [0], [1], [0, 0, 1, 1], [], []>} : vector<128x128xbf16>, vector<128x512xbf16>, vector<128x512xf32> -> vector<128x512xf32>
    %45 = arith.index_cast %c1_i32 : i32 to index
    %c0_19 = arith.constant 0 : index
    %c0_20 = arith.constant 0 : index
    %46 = vector.load %arg6[%45, %c0_19, %c0_20] : memref<8x128x512xf32, #tpu.memory_space<vmem>>, vector<1x128x512xf32>
    %47 = vector.shape_cast %46 : vector<1x128x512xf32> to vector<128x512xf32>
    %48 = arith.addf %44, %47 : vector<128x512xf32>
    %49 = vector.extract_strided_slice %48 {offsets = [0, 0], sizes = [128, 128], strides = [1, 1]} : vector<128x512xf32> to vector<128x128xf32>
    %50 = arith.negf %49 : vector<128x128xf32>
    %51 = math.exp %50 : vector<128x128xf32>
    %cst_21 = arith.constant 1.000000e+00 : f32
    %52 = vector.broadcast %cst_21 : f32 to vector<128x128xf32>
    %53 = arith.addf %52, %51 : vector<128x128xf32>
    %54 = arith.divf %52, %53 : vector<128x128xf32>
    %55 = vector.extract_strided_slice %48 {offsets = [0, 128], sizes = [128, 128], strides = [1, 1]} : vector<128x512xf32> to vector<128x128xf32>
    %56 = arith.negf %55 : vector<128x128xf32>
    %57 = math.exp %56 : vector<128x128xf32>
    %cst_22 = arith.constant 1.000000e+00 : f32
    %58 = vector.broadcast %cst_22 : f32 to vector<128x128xf32>
    %59 = arith.addf %58, %57 : vector<128x128xf32>
    %60 = arith.divf %58, %59 : vector<128x128xf32>
    %61 = vector.extract_strided_slice %48 {offsets = [0, 256], sizes = [128, 128], strides = [1, 1]} : vector<128x512xf32> to vector<128x128xf32>
    %62 = math.tanh %61 : vector<128x128xf32>
    %63 = vector.extract_strided_slice %48 {offsets = [0, 384], sizes = [128, 128], strides = [1, 1]} : vector<128x512xf32> to vector<128x128xf32>
    %64 = arith.negf %63 : vector<128x128xf32>
    %65 = math.exp %64 : vector<128x128xf32>
    %cst_23 = arith.constant 1.000000e+00 : f32
    %66 = vector.broadcast %cst_23 : f32 to vector<128x128xf32>
    %67 = arith.addf %66, %65 : vector<128x128xf32>
    %68 = arith.divf %66, %67 : vector<128x128xf32>
    %69 = arith.mulf %60, %39 : vector<128x128xf32>
    %70 = arith.mulf %54, %62 : vector<128x128xf32>
    %71 = arith.addf %69, %70 : vector<128x128xf32>
    %72 = math.tanh %71 : vector<128x128xf32>
    %73 = arith.mulf %68, %72 : vector<128x128xf32>
    %74 = arith.addf %42, %73 : vector<128x128xf32>
    %c2_i32 = arith.constant 2 : i32
    %75 = arith.truncf %73 : vector<128x128xf32> to vector<128x128xbf16>
    %cst_24 = arith.constant dense<0.000000e+00> : vector<128x512xf32>
    %76 = tpu.matmul %75, %9, %cst_24 {dimension_numbers = #tpu.dot_dimension_numbers<[1], [0], [0], [1], [0, 0, 1, 1], [], []>} : vector<128x128xbf16>, vector<128x512xbf16>, vector<128x512xf32> -> vector<128x512xf32>
    %77 = arith.index_cast %c2_i32 : i32 to index
    %c0_25 = arith.constant 0 : index
    %c0_26 = arith.constant 0 : index
    %78 = vector.load %arg6[%77, %c0_25, %c0_26] : memref<8x128x512xf32, #tpu.memory_space<vmem>>, vector<1x128x512xf32>
    %79 = vector.shape_cast %78 : vector<1x128x512xf32> to vector<128x512xf32>
    %80 = arith.addf %76, %79 : vector<128x512xf32>
    %81 = vector.extract_strided_slice %80 {offsets = [0, 0], sizes = [128, 128], strides = [1, 1]} : vector<128x512xf32> to vector<128x128xf32>
    %82 = arith.negf %81 : vector<128x128xf32>
    %83 = math.exp %82 : vector<128x128xf32>
    %cst_27 = arith.constant 1.000000e+00 : f32
    %84 = vector.broadcast %cst_27 : f32 to vector<128x128xf32>
    %85 = arith.addf %84, %83 : vector<128x128xf32>
    %86 = arith.divf %84, %85 : vector<128x128xf32>
    %87 = vector.extract_strided_slice %80 {offsets = [0, 128], sizes = [128, 128], strides = [1, 1]} : vector<128x512xf32> to vector<128x128xf32>
    %88 = arith.negf %87 : vector<128x128xf32>
    %89 = math.exp %88 : vector<128x128xf32>
    %cst_28 = arith.constant 1.000000e+00 : f32
    %90 = vector.broadcast %cst_28 : f32 to vector<128x128xf32>
    %91 = arith.addf %90, %89 : vector<128x128xf32>
    %92 = arith.divf %90, %91 : vector<128x128xf32>
    %93 = vector.extract_strided_slice %80 {offsets = [0, 256], sizes = [128, 128], strides = [1, 1]} : vector<128x512xf32> to vector<128x128xf32>
    %94 = math.tanh %93 : vector<128x128xf32>
    %95 = vector.extract_strided_slice %80 {offsets = [0, 384], sizes = [128, 128], strides = [1, 1]} : vector<128x512xf32> to vector<128x128xf32>
    %96 = arith.negf %95 : vector<128x128xf32>
    %97 = math.exp %96 : vector<128x128xf32>
    %cst_29 = arith.constant 1.000000e+00 : f32
    %98 = vector.broadcast %cst_29 : f32 to vector<128x128xf32>
    %99 = arith.addf %98, %97 : vector<128x128xf32>
    %100 = arith.divf %98, %99 : vector<128x128xf32>
    %101 = arith.mulf %92, %71 : vector<128x128xf32>
    %102 = arith.mulf %86, %94 : vector<128x128xf32>
    %103 = arith.addf %101, %102 : vector<128x128xf32>
    %104 = math.tanh %103 : vector<128x128xf32>
    %105 = arith.mulf %100, %104 : vector<128x128xf32>
    %106 = arith.addf %74, %105 : vector<128x128xf32>
    %c3_i32 = arith.constant 3 : i32
    %107 = arith.truncf %105 : vector<128x128xf32> to vector<128x128xbf16>
    %cst_30 = arith.constant dense<0.000000e+00> : vector<128x512xf32>
    %108 = tpu.matmul %107, %9, %cst_30 {dimension_numbers = #tpu.dot_dimension_numbers<[1], [0], [0], [1], [0, 0, 1, 1], [], []>} : vector<128x128xbf16>, vector<128x512xbf16>, vector<128x512xf32> -> vector<128x512xf32>
    %109 = arith.index_cast %c3_i32 : i32 to index
    %c0_31 = arith.constant 0 : index
    %c0_32 = arith.constant 0 : index
    %110 = vector.load %arg6[%109, %c0_31, %c0_32] : memref<8x128x512xf32, #tpu.memory_space<vmem>>, vector<1x128x512xf32>
    %111 = vector.shape_cast %110 : vector<1x128x512xf32> to vector<128x512xf32>
    %112 = arith.addf %108, %111 : vector<128x512xf32>
    %113 = vector.extract_strided_slice %112 {offsets = [0, 0], sizes = [128, 128], strides = [1, 1]} : vector<128x512xf32> to vector<128x128xf32>
    %114 = arith.negf %113 : vector<128x128xf32>
    %115 = math.exp %114 : vector<128x128xf32>
    %cst_33 = arith.constant 1.000000e+00 : f32
    %116 = vector.broadcast %cst_33 : f32 to vector<128x128xf32>
    %117 = arith.addf %116, %115 : vector<128x128xf32>
    %118 = arith.divf %116, %117 : vector<128x128xf32>
    %119 = vector.extract_strided_slice %112 {offsets = [0, 128], sizes = [128, 128], strides = [1, 1]} : vector<128x512xf32> to vector<128x128xf32>
    %120 = arith.negf %119 : vector<128x128xf32>
    %121 = math.exp %120 : vector<128x128xf32>
    %cst_34 = arith.constant 1.000000e+00 : f32
    %122 = vector.broadcast %cst_34 : f32 to vector<128x128xf32>
    %123 = arith.addf %122, %121 : vector<128x128xf32>
    %124 = arith.divf %122, %123 : vector<128x128xf32>
    %125 = vector.extract_strided_slice %112 {offsets = [0, 256], sizes = [128, 128], strides = [1, 1]} : vector<128x512xf32> to vector<128x128xf32>
    %126 = math.tanh %125 : vector<128x128xf32>
    %127 = vector.extract_strided_slice %112 {offsets = [0, 384], sizes = [128, 128], strides = [1, 1]} : vector<128x512xf32> to vector<128x128xf32>
    %128 = arith.negf %127 : vector<128x128xf32>
    %129 = math.exp %128 : vector<128x128xf32>
    %cst_35 = arith.constant 1.000000e+00 : f32
    %130 = vector.broadcast %cst_35 : f32 to vector<128x128xf32>
    %131 = arith.addf %130, %129 : vector<128x128xf32>
    %132 = arith.divf %130, %131 : vector<128x128xf32>
    %133 = arith.mulf %124, %103 : vector<128x128xf32>
    %134 = arith.mulf %118, %126 : vector<128x128xf32>
    %135 = arith.addf %133, %134 : vector<128x128xf32>
    %136 = math.tanh %135 : vector<128x128xf32>
    %137 = arith.mulf %132, %136 : vector<128x128xf32>
    %138 = arith.addf %106, %137 : vector<128x128xf32>
    %c4_i32 = arith.constant 4 : i32
    %139 = arith.truncf %137 : vector<128x128xf32> to vector<128x128xbf16>
    %cst_36 = arith.constant dense<0.000000e+00> : vector<128x512xf32>
    %140 = tpu.matmul %139, %9, %cst_36 {dimension_numbers = #tpu.dot_dimension_numbers<[1], [0], [0], [1], [0, 0, 1, 1], [], []>} : vector<128x128xbf16>, vector<128x512xbf16>, vector<128x512xf32> -> vector<128x512xf32>
    %141 = arith.index_cast %c4_i32 : i32 to index
    %c0_37 = arith.constant 0 : index
    %c0_38 = arith.constant 0 : index
    %142 = vector.load %arg6[%141, %c0_37, %c0_38] : memref<8x128x512xf32, #tpu.memory_space<vmem>>, vector<1x128x512xf32>
    %143 = vector.shape_cast %142 : vector<1x128x512xf32> to vector<128x512xf32>
    %144 = arith.addf %140, %143 : vector<128x512xf32>
    %145 = vector.extract_strided_slice %144 {offsets = [0, 0], sizes = [128, 128], strides = [1, 1]} : vector<128x512xf32> to vector<128x128xf32>
    %146 = arith.negf %145 : vector<128x128xf32>
    %147 = math.exp %146 : vector<128x128xf32>
    %cst_39 = arith.constant 1.000000e+00 : f32
    %148 = vector.broadcast %cst_39 : f32 to vector<128x128xf32>
    %149 = arith.addf %148, %147 : vector<128x128xf32>
    %150 = arith.divf %148, %149 : vector<128x128xf32>
    %151 = vector.extract_strided_slice %144 {offsets = [0, 128], sizes = [128, 128], strides = [1, 1]} : vector<128x512xf32> to vector<128x128xf32>
    %152 = arith.negf %151 : vector<128x128xf32>
    %153 = math.exp %152 : vector<128x128xf32>
    %cst_40 = arith.constant 1.000000e+00 : f32
    %154 = vector.broadcast %cst_40 : f32 to vector<128x128xf32>
    %155 = arith.addf %154, %153 : vector<128x128xf32>
    %156 = arith.divf %154, %155 : vector<128x128xf32>
    %157 = vector.extract_strided_slice %144 {offsets = [0, 256], sizes = [128, 128], strides = [1, 1]} : vector<128x512xf32> to vector<128x128xf32>
    %158 = math.tanh %157 : vector<128x128xf32>
    %159 = vector.extract_strided_slice %144 {offsets = [0, 384], sizes = [128, 128], strides = [1, 1]} : vector<128x512xf32> to vector<128x128xf32>
    %160 = arith.negf %159 : vector<128x128xf32>
    %161 = math.exp %160 : vector<128x128xf32>
    %cst_41 = arith.constant 1.000000e+00 : f32
    %162 = vector.broadcast %cst_41 : f32 to vector<128x128xf32>
    %163 = arith.addf %162, %161 : vector<128x128xf32>
    %164 = arith.divf %162, %163 : vector<128x128xf32>
    %165 = arith.mulf %156, %135 : vector<128x128xf32>
    %166 = arith.mulf %150, %158 : vector<128x128xf32>
    %167 = arith.addf %165, %166 : vector<128x128xf32>
    %168 = math.tanh %167 : vector<128x128xf32>
    %169 = arith.mulf %164, %168 : vector<128x128xf32>
    %170 = arith.addf %138, %169 : vector<128x128xf32>
    %c5_i32 = arith.constant 5 : i32
    %171 = arith.truncf %169 : vector<128x128xf32> to vector<128x128xbf16>
    %cst_42 = arith.constant dense<0.000000e+00> : vector<128x512xf32>
    %172 = tpu.matmul %171, %9, %cst_42 {dimension_numbers = #tpu.dot_dimension_numbers<[1], [0], [0], [1], [0, 0, 1, 1], [], []>} : vector<128x128xbf16>, vector<128x512xbf16>, vector<128x512xf32> -> vector<128x512xf32>
    %173 = arith.index_cast %c5_i32 : i32 to index
    %c0_43 = arith.constant 0 : index
    %c0_44 = arith.constant 0 : index
    %174 = vector.load %arg6[%173, %c0_43, %c0_44] : memref<8x128x512xf32, #tpu.memory_space<vmem>>, vector<1x128x512xf32>
    %175 = vector.shape_cast %174 : vector<1x128x512xf32> to vector<128x512xf32>
    %176 = arith.addf %172, %175 : vector<128x512xf32>
    %177 = vector.extract_strided_slice %176 {offsets = [0, 0], sizes = [128, 128], strides = [1, 1]} : vector<128x512xf32> to vector<128x128xf32>
    %178 = arith.negf %177 : vector<128x128xf32>
    %179 = math.exp %178 : vector<128x128xf32>
    %cst_45 = arith.constant 1.000000e+00 : f32
    %180 = vector.broadcast %cst_45 : f32 to vector<128x128xf32>
    %181 = arith.addf %180, %179 : vector<128x128xf32>
    %182 = arith.divf %180, %181 : vector<128x128xf32>
    %183 = vector.extract_strided_slice %176 {offsets = [0, 128], sizes = [128, 128], strides = [1, 1]} : vector<128x512xf32> to vector<128x128xf32>
    %184 = arith.negf %183 : vector<128x128xf32>
    %185 = math.exp %184 : vector<128x128xf32>
    %cst_46 = arith.constant 1.000000e+00 : f32
    %186 = vector.broadcast %cst_46 : f32 to vector<128x128xf32>
    %187 = arith.addf %186, %185 : vector<128x128xf32>
    %188 = arith.divf %186, %187 : vector<128x128xf32>
    %189 = vector.extract_strided_slice %176 {offsets = [0, 256], sizes = [128, 128], strides = [1, 1]} : vector<128x512xf32> to vector<128x128xf32>
    %190 = math.tanh %189 : vector<128x128xf32>
    %191 = vector.extract_strided_slice %176 {offsets = [0, 384], sizes = [128, 128], strides = [1, 1]} : vector<128x512xf32> to vector<128x128xf32>
    %192 = arith.negf %191 : vector<128x128xf32>
    %193 = math.exp %192 : vector<128x128xf32>
    %cst_47 = arith.constant 1.000000e+00 : f32
    %194 = vector.broadcast %cst_47 : f32 to vector<128x128xf32>
    %195 = arith.addf %194, %193 : vector<128x128xf32>
    %196 = arith.divf %194, %195 : vector<128x128xf32>
    %197 = arith.mulf %188, %167 : vector<128x128xf32>
    %198 = arith.mulf %182, %190 : vector<128x128xf32>
    %199 = arith.addf %197, %198 : vector<128x128xf32>
    %200 = math.tanh %199 : vector<128x128xf32>
    %201 = arith.mulf %196, %200 : vector<128x128xf32>
    %202 = arith.addf %170, %201 : vector<128x128xf32>
    %c6_i32 = arith.constant 6 : i32
    %203 = arith.truncf %201 : vector<128x128xf32> to vector<128x128xbf16>
    %cst_48 = arith.constant dense<0.000000e+00> : vector<128x512xf32>
    %204 = tpu.matmul %203, %9, %cst_48 {dimension_numbers = #tpu.dot_dimension_numbers<[1], [0], [0], [1], [0, 0, 1, 1], [], []>} : vector<128x128xbf16>, vector<128x512xbf16>, vector<128x512xf32> -> vector<128x512xf32>
    %205 = arith.index_cast %c6_i32 : i32 to index
    %c0_49 = arith.constant 0 : index
    %c0_50 = arith.constant 0 : index
    %206 = vector.load %arg6[%205, %c0_49, %c0_50] : memref<8x128x512xf32, #tpu.memory_space<vmem>>, vector<1x128x512xf32>
    %207 = vector.shape_cast %206 : vector<1x128x512xf32> to vector<128x512xf32>
    %208 = arith.addf %204, %207 : vector<128x512xf32>
    %209 = vector.extract_strided_slice %208 {offsets = [0, 0], sizes = [128, 128], strides = [1, 1]} : vector<128x512xf32> to vector<128x128xf32>
    %210 = arith.negf %209 : vector<128x128xf32>
    %211 = math.exp %210 : vector<128x128xf32>
    %cst_51 = arith.constant 1.000000e+00 : f32
    %212 = vector.broadcast %cst_51 : f32 to vector<128x128xf32>
    %213 = arith.addf %212, %211 : vector<128x128xf32>
    %214 = arith.divf %212, %213 : vector<128x128xf32>
    %215 = vector.extract_strided_slice %208 {offsets = [0, 128], sizes = [128, 128], strides = [1, 1]} : vector<128x512xf32> to vector<128x128xf32>
    %216 = arith.negf %215 : vector<128x128xf32>
    %217 = math.exp %216 : vector<128x128xf32>
    %cst_52 = arith.constant 1.000000e+00 : f32
    %218 = vector.broadcast %cst_52 : f32 to vector<128x128xf32>
    %219 = arith.addf %218, %217 : vector<128x128xf32>
    %220 = arith.divf %218, %219 : vector<128x128xf32>
    %221 = vector.extract_strided_slice %208 {offsets = [0, 256], sizes = [128, 128], strides = [1, 1]} : vector<128x512xf32> to vector<128x128xf32>
    %222 = math.tanh %221 : vector<128x128xf32>
    %223 = vector.extract_strided_slice %208 {offsets = [0, 384], sizes = [128, 128], strides = [1, 1]} : vector<128x512xf32> to vector<128x128xf32>
    %224 = arith.negf %223 : vector<128x128xf32>
    %225 = math.exp %224 : vector<128x128xf32>
    %cst_53 = arith.constant 1.000000e+00 : f32
    %226 = vector.broadcast %cst_53 : f32 to vector<128x128xf32>
    %227 = arith.addf %226, %225 : vector<128x128xf32>
    %228 = arith.divf %226, %227 : vector<128x128xf32>
    %229 = arith.mulf %220, %199 : vector<128x128xf32>
    %230 = arith.mulf %214, %222 : vector<128x128xf32>
    %231 = arith.addf %229, %230 : vector<128x128xf32>
    %232 = math.tanh %231 : vector<128x128xf32>
    %233 = arith.mulf %228, %232 : vector<128x128xf32>
    %234 = arith.addf %202, %233 : vector<128x128xf32>
    %c7_i32 = arith.constant 7 : i32
    %235 = arith.truncf %233 : vector<128x128xf32> to vector<128x128xbf16>
    %cst_54 = arith.constant dense<0.000000e+00> : vector<128x512xf32>
    %236 = tpu.matmul %235, %9, %cst_54 {dimension_numbers = #tpu.dot_dimension_numbers<[1], [0], [0], [1], [0, 0, 1, 1], [], []>} : vector<128x128xbf16>, vector<128x512xbf16>, vector<128x512xf32> -> vector<128x512xf32>
    %237 = arith.index_cast %c7_i32 : i32 to index
    %c0_55 = arith.constant 0 : index
    %c0_56 = arith.constant 0 : index
    %238 = vector.load %arg6[%237, %c0_55, %c0_56] : memref<8x128x512xf32, #tpu.memory_space<vmem>>, vector<1x128x512xf32>
    %239 = vector.shape_cast %238 : vector<1x128x512xf32> to vector<128x512xf32>
    %240 = arith.addf %236, %239 : vector<128x512xf32>
    %241 = vector.extract_strided_slice %240 {offsets = [0, 0], sizes = [128, 128], strides = [1, 1]} : vector<128x512xf32> to vector<128x128xf32>
    %242 = arith.negf %241 : vector<128x128xf32>
    %243 = math.exp %242 : vector<128x128xf32>
    %cst_57 = arith.constant 1.000000e+00 : f32
    %244 = vector.broadcast %cst_57 : f32 to vector<128x128xf32>
    %245 = arith.addf %244, %243 : vector<128x128xf32>
    %246 = arith.divf %244, %245 : vector<128x128xf32>
    %247 = vector.extract_strided_slice %240 {offsets = [0, 128], sizes = [128, 128], strides = [1, 1]} : vector<128x512xf32> to vector<128x128xf32>
    %248 = arith.negf %247 : vector<128x128xf32>
    %249 = math.exp %248 : vector<128x128xf32>
    %cst_58 = arith.constant 1.000000e+00 : f32
    %250 = vector.broadcast %cst_58 : f32 to vector<128x128xf32>
    %251 = arith.addf %250, %249 : vector<128x128xf32>
    %252 = arith.divf %250, %251 : vector<128x128xf32>
    %253 = vector.extract_strided_slice %240 {offsets = [0, 256], sizes = [128, 128], strides = [1, 1]} : vector<128x512xf32> to vector<128x128xf32>
    %254 = math.tanh %253 : vector<128x128xf32>
    %255 = vector.extract_strided_slice %240 {offsets = [0, 384], sizes = [128, 128], strides = [1, 1]} : vector<128x512xf32> to vector<128x128xf32>
    %256 = arith.negf %255 : vector<128x128xf32>
    %257 = math.exp %256 : vector<128x128xf32>
    %cst_59 = arith.constant 1.000000e+00 : f32
    %258 = vector.broadcast %cst_59 : f32 to vector<128x128xf32>
    %259 = arith.addf %258, %257 : vector<128x128xf32>
    %260 = arith.divf %258, %259 : vector<128x128xf32>
    %261 = arith.mulf %252, %231 : vector<128x128xf32>
    %262 = arith.mulf %246, %254 : vector<128x128xf32>
    %263 = arith.addf %261, %262 : vector<128x128xf32>
    %264 = math.tanh %263 : vector<128x128xf32>
    %265 = arith.mulf %260, %264 : vector<128x128xf32>
    %266 = arith.addf %234, %265 : vector<128x128xf32>
    %c8_i32 = arith.constant 8 : i32
    %cst_60 = arith.constant 1.250000e-01 : f32
    %267 = vector.broadcast %cst_60 : f32 to vector<128x128xf32>
    %268 = arith.mulf %266, %267 : vector<128x128xf32>
    %c0_61 = arith.constant 0 : index
    %c0_62 = arith.constant 0 : index
    %269 = vector.load %arg5[%c0_61, %c0_62] : memref<128x128xf32, #tpu.memory_space<vmem>>, vector<128x128xf32>
    tpu.vector_store %arg5[%c0_61, %c0_62], %268 {strides = array<i32>} : memref<128x128xf32, #tpu.memory_space<vmem>>, vector<128x128xf32>,
    return
  }
  func.func @transform_0(%arg0: i32) -> (i32, i32, i32) {
    %c0_i32 = arith.constant 0 : i32
    %c0_i32_0 = arith.constant 0 : i32
    %c0_i32_1 = arith.constant 0 : i32
    return %c0_i32, %arg0, %c0_i32_0 : i32, i32, i32
  }
  func.func @transform_1(%arg0: i32) -> (i32, i32) {
    %c0_i32 = arith.constant 0 : i32
    %c0_i32_0 = arith.constant 0 : i32
    %c0_i32_1 = arith.constant 0 : i32
    return %c0_i32, %c0_i32_0 : i32, i32
  }
  func.func @transform_2(%arg0: i32) -> (i32, i32) {
    %c0_i32 = arith.constant 0 : i32
    %c0_i32_0 = arith.constant 0 : i32
    %c0_i32_1 = arith.constant 0 : i32
    return %c0_i32, %c0_i32_0 : i32, i32
  }
  func.func @transform_3(%arg0: i32) -> (i32, i32) {
    %c0_i32 = arith.constant 0 : i32
    %c0_i32_0 = arith.constant 0 : i32
    %c0_i32_1 = arith.constant 0 : i32
    return %c0_i32, %c0_i32_0 : i32, i32
  }
  func.func @transform_4(%arg0: i32) -> (i32, i32) {
    %c0_i32 = arith.constant 0 : i32
    %c0_i32_0 = arith.constant 0 : i32
    return %arg0, %c0_i32 : i32, i32
  }
}

</mosaic_0001>

<llo_original>
// kernel: content_aggregation.1
$region0: #{content_aggregation.1}
  #allocation0 [shape = 'u32[]', space=smem, size = 0x4, offset = 0x4, fixed_abs, tag = 'smem constant byte address 0x4 - core index']
  #allocation1 [shape = 'u32[144,128]{1,0:T(1,128)}', space=vmem, size = 0x12000, scoped, tag = 'internal scratch']
  #allocation2 [shape = 'f32[8,128,512]{2,1,0:T(8,128)}', space=vmem, size = 0x200000, scoped, tag = 'scratch operand']
  %s0 = inlined_call_operand.vmem [shape: bf16[8,256,64], index: 0, kind: input, shape index: {}]
  %s1 = inlined_call_operand.vmem [shape: bf16[64,512], index: 1, kind: input, shape index: {}]
  %s2 = inlined_call_operand.vmem [shape: bf16[128,512], index: 2, kind: input, shape index: {}]
  %s3 = inlined_call_operand.vmem [shape: f32[1,512], index: 3, kind: input, shape index: {}]
  %s4 = inlined_call_operand.hbm [shape: f32[256,128], index: 4, kind: output, shape index: {}]
  %s5 = sld [smem:[#allocation0]]
  $region90: #{content_aggregation.1} parent=0
    _
  %s7 = ssub.s32 1, %s5
  %s8 = scalar_select 0, %s7, %s5
  $region1: #{content_aggregation.1} parent=0
    #allocation3 [shape = 'u8[524288]{0}', space=vmem, size = 0x80000, scoped, tag = 'input window, operand 0']
    #allocation4 [shape = 'u8[131072]{0}', space=vmem, size = 0x20000, scoped, tag = 'output window, operand 0']
    #allocation5 [shape = 's32[2]{0}', space=sflag, size = 0x8, scoped, tag = 'scoped memory for content_aggregation.1']
    %9 = vsyncpa [#allocation5], 0
    %s10 = scalar_lea.sflag [#allocation5], 1
    %11 = vsyncpa %s10, 0
    loop: start=0, step=1, limit=4
    $region2: #{content_aggregation.1} parent=1 // loop_pre_header
      _
    $region3: #{content_aggregation.1} parent=1 // loop_header
      %s13 = sphi 0, %s17
      %p14 = scmp.ge.s32.totalorder %s13, 4
      %s23 = sphi 0, %s25
      %s26 = sphi 0, %s23
      %s27 = sphi 0, %s26
      %s43 = sphi 0, %s27
      %s47 = sphi 0, %s47
      %s49 = sphi 0, %s47
      %s50 = sphi 0, %s49
      %s64 = sphi 0, %s50
      %s68 = sphi 0, %s68
      %s70 = sphi 0, %s68
      %s71 = sphi 0, %s70
      %s85 = sphi 0, %s71
      %s89 = sphi 0, %s89
      %s91 = sphi 0, %s89
      %s92 = sphi 0, %s91
      %s106 = sphi 0, %s92
      %s112 = sphi 0, %s114
      %s115 = sphi 0, %s112
      %s116 = sphi 0, %s115
      %s132 = sphi 0, %s116
    $region4: #{content_aggregation.1} parent=1 // loop_header_branch
      %16 = sbr.rel (%p14) target = $region8
    $region5: #{content_aggregation.1} parent=1 // loop_body
      %s18 = ssub.s32 %s13, 1
      %s19 = ssub.s32 %s13, 2
      %s20 = sadd.s32 %s13, 1
      %s21 = ssub.s32 %s13, %s20
      %p22 = scmp.eq.s32.totalorder %s21, 0
      %s24 = sadd.s32 %s23, 1
      %s25 = scalar_select %p22, %s23, %s24
      %p28 = pneg %p22
      %p29 = scmp.eq.s32.totalorder %s13, 1
      %p30 = por %p28, %p29
      %p31 = scmp.ne.s32.totalorder %s23, %s26
      %p32 = scmp.eq.s32.totalorder %s13, 0
      %p33 = por %p31, %p32
      %p34 = scmp.ne.s32.totalorder %s23, %s26
      %p35 = scmp.eq.s32.totalorder %s18, 1
      %p36 = por %p34, %p35
      %p37 = scmp.ne.s32.totalorder %s26, %s27
      %p38 = scmp.eq.s32.totalorder %s18, 0
      %p39 = por %p37, %p38
      %p40 = scmp.ne.s32.totalorder %s26, %s27
      %p41 = scmp.eq.s32.totalorder %s19, 1
      %p42 = por %p40, %p41
      %p44 = scmp.ne.s32.totalorder %s27, %s43
      %p45 = scmp.eq.s32.totalorder %s19, 0
      %p46 = por %p44, %p45
      %s48 = sadd.s32 %s47, 1
      %p51 = scmp.eq.s32.totalorder %s13, 1
      %p52 = scmp.ne.s32.totalorder %s47, %s49
      %p53 = scmp.eq.s32.totalorder %s13, 0
      %p54 = por %p52, %p53
      %p55 = scmp.ne.s32.totalorder %s47, %s49
      %p56 = scmp.eq.s32.totalorder %s18, 1
      %p57 = por %p55, %p56
      %p58 = scmp.ne.s32.totalorder %s49, %s50
      %p59 = scmp.eq.s32.totalorder %s18, 0
      %p60 = por %p58, %p59
      %p61 = scmp.ne.s32.totalorder %s49, %s50
      %p62 = scmp.eq.s32.totalorder %s19, 1
      %p63 = por %p61, %p62
      %p65 = scmp.ne.s32.totalorder %s50, %s64
      %p66 = scmp.eq.s32.totalorder %s19, 0
      %p67 = por %p65, %p66
      %s69 = sadd.s32 %s68, 1
      %p72 = scmp.eq.s32.totalorder %s13, 1
      %p73 = scmp.ne.s32.totalorder %s68, %s70
      %p74 = scmp.eq.s32.totalorder %s13, 0
      %p75 = por %p73, %p74
      %p76 = scmp.ne.s32.totalorder %s68, %s70
      %p77 = scmp.eq.s32.totalorder %s18, 1
      %p78 = por %p76, %p77
      %p79 = scmp.ne.s32.totalorder %s70, %s71
      %p80 = scmp.eq.s32.totalorder %s18, 0
      %p81 = por %p79, %p80
      %p82 = scmp.ne.s32.totalorder %s70, %s71
      %p83 = scmp.eq.s32.totalorder %s19, 1
      %p84 = por %p82, %p83
      %p86 = scmp.ne.s32.totalorder %s71, %s85
      %p87 = scmp.eq.s32.totalorder %s19, 0
      %p88 = por %p86, %p87
      %s90 = sadd.s32 %s89, 1
      %p93 = scmp.eq.s32.totalorder %s13, 1
      %p94 = scmp.ne.s32.totalorder %s89, %s91
      %p95 = scmp.eq.s32.totalorder %s13, 0
      %p96 = por %p94, %p95
      %p97 = scmp.ne.s32.totalorder %s89, %s91
      %p98 = scmp.eq.s32.totalorder %s18, 1
      %p99 = por %p97, %p98
      %p100 = scmp.ne.s32.totalorder %s91, %s92
      %p101 = scmp.eq.s32.totalorder %s18, 0
      %p102 = por %p100, %p101
      %p103 = scmp.ne.s32.totalorder %s91, %s92
      %p104 = scmp.eq.s32.totalorder %s19, 1
      %p105 = por %p103, %p104
      %p107 = scmp.ne.s32.totalorder %s92, %s106
      %p108 = scmp.eq.s32.totalorder %s19, 0
      %p109 = por %p107, %p108
      %s110 = ssub.s32 %s13, %s20
      %p111 = scmp.eq.s32.totalorder %s110, 0
      %s113 = sadd.s32 %s112, 1
      %s114 = scalar_select %p111, %s112, %s113
      %p117 = pneg %p111
      %p118 = scmp.eq.s32.totalorder %s13, 1
      %p119 = por %p117, %p118
      %p120 = scmp.ne.s32.totalorder %s112, %s115
      %p121 = scmp.eq.s32.totalorder %s13, 0
      %p122 = por %p120, %p121
      %p123 = scmp.ne.s32.totalorder %s112, %s115
      %p124 = scmp.eq.s32.totalorder %s18, 1
      %p125 = por %p123, %p124
      %p126 = scmp.ne.s32.totalorder %s115, %s116
      %p127 = scmp.eq.s32.totalorder %s18, 0
      %p128 = por %p126, %p127
      %p129 = scmp.ne.s32.totalorder %s115, %s116
      %p130 = scmp.eq.s32.totalorder %s19, 1
      %p131 = por %p129, %p130
      %p133 = scmp.ne.s32.totalorder %s116, %s132
      %p134 = scmp.eq.s32.totalorder %s19, 0
      %p135 = por %p133, %p134
      %p136 = scmp.le.s32.totalorder 1, %s13
      %p137 = scmp.lt.s32.totalorder %s13, 3
      %p138 = pnand %p136, %p137
      %p139 = pneg %p138
      // Predicated region
      $region9: #{content_aggregation.1} parent=5 // pred_check
        _
      $region10: #{content_aggregation.1} parent=5 // pred_check_branch
        %141 = sbr.rel (%p138) target = $region12
      $region11: #{content_aggregation.1} parent=5 // pred_region
        %s142 = ssub.s32 %s13, 1
        // Predicated region
        $region13: #{content_aggregation.1} parent=11 // pred_check
          %p143 = pneg %p60
        $region14: #{content_aggregation.1} parent=11 // pred_check_branch
          %145 = sbr.rel (%p143) target = $region16
        $region15: #{content_aggregation.1} parent=11 // pred_region
          _
        $region16: #{content_aggregation.1} parent=11 // pred_fallthru
          _
        // Predicated region
        $region17: #{content_aggregation.1} parent=11 // pred_check
          %p146 = pneg %p81
        $region18: #{content_aggregation.1} parent=11 // pred_check_branch
          %148 = sbr.rel (%p146) target = $region20
        $region19: #{content_aggregation.1} parent=11 // pred_region
          _
        $region20: #{content_aggregation.1} parent=11 // pred_fallthru
          _
        // Predicated region
        $region21: #{content_aggregation.1} parent=11 // pred_check
          %p149 = pneg %p102
        $region22: #{content_aggregation.1} parent=11 // pred_check_branch
          %151 = sbr.rel (%p149) target = $region24
        $region23: #{content_aggregation.1} parent=11 // pred_region
          _
        $region24: #{content_aggregation.1} parent=11 // pred_fallthru
          _
      $region12: #{content_aggregation.1} parent=5 // pred_fallthru
        _
      %p152 = scmp.lt.s32.totalorder %s13, 2
      // Predicated region
      $region25: #{content_aggregation.1} parent=5 // pred_check
        %p153 = pneg %p152
      $region26: #{content_aggregation.1} parent=5 // pred_check_branch
        %155 = sbr.rel (%p153) target = $region28
      $region27: #{content_aggregation.1} parent=5 // pred_region
        // Predicated region
        $region29: #{content_aggregation.1} parent=27 // pred_check
          %p156 = pneg %p33
        $region30: #{content_aggregation.1} parent=27 // pred_check_branch
          %158 = sbr.rel (%p156) target = $region32
        $region31: #{content_aggregation.1} parent=27 // pred_region
          %s159 = sand.u32 %s23, 1
          %s160 = sand.u32 %s23, 1
          %s161 = smul.addr %s160, 512
          %s162 = scalar_lea.vmem [#allocation3], %s161
          %s163 = smul.u32 16, %s13
          %s164 = smul.addr %s163, 4
          %s165 = scalar_lea.vmem %s0, %s164
          // Predicated region
          $region33: #{content_aggregation.1} parent=31 // pred_check
            _
          $region34: #{content_aggregation.1} parent=31 // pred_check_branch
            %167 = sbr.rel (0) target = $region36
          $region35: #{content_aggregation.1} parent=31 // pred_region
            // Predicated region
            $region37: #{content_aggregation.1} parent=35 // pred_check
              _
            $region38: #{content_aggregation.1} parent=35 // pred_check_branch
              %169 = sbr.rel target = $region40
            $region39: #{content_aggregation.1} parent=35 // pred_region
              // Predicated region
              $region52: #{content_aggregation.1} parent=39 // pred_check
                _
              $region53: #{content_aggregation.1} parent=39 // pred_check_branch
                %439 = sbr.rel (0) target = $region55
              $region54: #{content_aggregation.1} parent=39 // pred_region
                loop: start=0, step=1, limit=1
                $region56: #{content_aggregation.1} parent=54 // loop_pre_header
                  _
                $region57: #{content_aggregation.1} parent=54 // loop_header
                  %s441 = sphi 0, %s445
                  %p442 = scmp.ge.s32.totalorder %s441, 1
                  %s446 = sphi %s165, %s165
                  %s447 = sphi %s162, %s162
                $region58: #{content_aggregation.1} parent=54 // loop_header_branch
                  %444 = sbr.rel (%p442) target = $region62
                $region59: #{content_aggregation.1} parent=54 // loop_body
                  _
                $region60: #{content_aggregation.1} parent=54 // loop_footer
                  %s445 = sadd.s32 1, %s441
                $region61: #{content_aggregation.1} parent=54 // loop_footer_branch
                  %440 = sbr.rel target = $region57
                $region62: #{content_aggregation.1} parent=54 // loop_exit
                  _
                %s449 = ssub.s32 16, 1
                loop: start=0, step=1, limit=1
                $region63: #{content_aggregation.1} parent=54 // loop_pre_header
                  _
                $region64: #{content_aggregation.1} parent=54 // loop_header
                  %s451 = sphi 0, %s455
                  %p452 = scmp.ge.s32.totalorder %s451, 1
                  %s456 = sphi %s165, %s165
                  %s457 = sphi %s162, %s162
                $region65: #{content_aggregation.1} parent=54 // loop_header_branch
                  %454 = sbr.rel (%p452) target = $region69
                $region66: #{content_aggregation.1} parent=54 // loop_body
                  %v458 = vld [vmem:[%s456] sm:%s449]
                  %459 = vst [vmem:[%s457] sm:%s449] %v458
                  %v460 = vld [vmem:[%s456 + $0x4] sm:%s449]
                  %461 = vst [vmem:[%s457 + $0x4] sm:%s449] %v460
                  %v462 = vld [vmem:[%s456 + $0x8] sm:%s449]
                  %463 = vst [vmem:[%s457 + $0x8] sm:%s449] %v462
                  %v464 = vld [vmem:[%s456 + $0xc] sm:%s449]
                  %465 = vst [vmem:[%s457 + $0xc] sm:%s449] %v464
                  %v466 = vld [vmem:[%s456 + $0x10] sm:%s449]
                  %467 = vst [vmem:[%s457 + $0x10] sm:%s449] %v466
                  %v468 = vld [vmem:[%s456 + $0x14] sm:%s449]
                  %469 = vst [vmem:[%s457 + $0x14] sm:%s449] %v468
                  %v470 = vld [vmem:[%s456 + $0x18] sm:%s449]
                  %471 = vst [vmem:[%s457 + $0x18] sm:%s449] %v470
                  %v472 = vld [vmem:[%s456 + $0x1c] sm:%s449]
                  %473 = vst [vmem:[%s457 + $0x1c] sm:%s449] %v472
                  %v474 = vld [vmem:[%s456 + $0x20] sm:%s449]
                  %475 = vst [vmem:[%s457 + $0x20] sm:%s449] %v474
                  %v476 = vld [vmem:[%s456 + $0x24] sm:%s449]
                  %477 = vst [vmem:[%s457 + $0x24] sm:%s449] %v476
                  %v478 = vld [vmem:[%s456 + $0x28] sm:%s449]
                  %479 = vst [vmem:[%s457 + $0x28] sm:%s449] %v478
                  %v480 = vld [vmem:[%s456 + $0x2c] sm:%s449]
                  %481 = vst [vmem:[%s457 + $0x2c] sm:%s449] %v480
                  %v482 = vld [vmem:[%s456 + $0x30] sm:%s449]
                  %483 = vst [vmem:[%s457 + $0x30] sm:%s449] %v482
                  %v484 = vld [vmem:[%s456 + $0x34] sm:%s449]
                  %485 = vst [vmem:[%s457 + $0x34] sm:%s449] %v484
                  %v486 = vld [vmem:[%s456 + $0x38] sm:%s449]
                  %487 = vst [vmem:[%s457 + $0x38] sm:%s449] %v486
                  %v488 = vld [vmem:[%s456 + $0x3c] sm:%s449]
                  %489 = vst [vmem:[%s457 + $0x3c] sm:%s449] %v488
                  %v490 = vld [vmem:[%s456 + $0x80] sm:%s449]
                  %491 = vst [vmem:[%s457 + $0x40] sm:%s449] %v490
                  %v492 = vld [vmem:[%s456 + $0x84] sm:%s449]
                  %493 = vst [vmem:[%s457 + $0x44] sm:%s449] %v492
                  %v494 = vld [vmem:[%s456 + $0x88] sm:%s449]
                  %495 = vst [vmem:[%s457 + $0x48] sm:%s449] %v494
                  %v496 = vld [vmem:[%s456 + $0x8c] sm:%s449]
                  %497 = vst [vmem:[%s457 + $0x4c] sm:%s449] %v496
                  %v498 = vld [vmem:[%s456 + $0x90] sm:%s449]
                  %499 = vst [vmem:[%s457 + $0x50] sm:%s449] %v498
                  %v500 = vld [vmem:[%s456 + $0x94] sm:%s449]
                  %501 = vst [vmem:[%s457 + $0x54] sm:%s449] %v500
                  %v502 = vld [vmem:[%s456 + $0x98] sm:%s449]
                  %503 = vst [vmem:[%s457 + $0x58] sm:%s449] %v502
                  %v504 = vld [vmem:[%s456 + $0x9c] sm:%s449]
                  %505 = vst [vmem:[%s457 + $0x5c] sm:%s449] %v504
                  %v506 = vld [vmem:[%s456 + $0xa0] sm:%s449]
                  %507 = vst [vmem:[%s457 + $0x60] sm:%s449] %v506
                  %v508 = vld [vmem:[%s456 + $0xa4] sm:%s449]
                  %509 = vst [vmem:[%s457 + $0x64] sm:%s449] %v508
                  %v510 = vld [vmem:[%s456 + $0xa8] sm:%s449]
                  %511 = vst [vmem:[%s457 + $0x68] sm:%s449] %v510
                  %v512 = vld [vmem:[%s456 + $0xac] sm:%s449]
                  %513 = vst [vmem:[%s457 + $0x6c] sm:%s449] %v512
                  %v514 = vld [vmem:[%s456 + $0xb0] sm:%s449]
                  %515 = vst [vmem:[%s457 + $0x70] sm:%s449] %v514
                  %v516 = vld [vmem:[%s456 + $0xb4] sm:%s449]
                  %517 = vst [vmem:[%s457 + $0x74] sm:%s449] %v516
                  %v518 = vld [vmem:[%s456 + $0xb8] sm:%s449]
                  %519 = vst [vmem:[%s457 + $0x78] sm:%s449] %v518
                  %v520 = vld [vmem:[%s456 + $0xbc] sm:%s449]
                  %521 = vst [vmem:[%s457 + $0x7c] sm:%s449] %v520
                  %v522 = vld [vmem:[%s456 + $0x100] sm:%s449]
                  %523 = vst [vmem:[%s457 + $0x80] sm:%s449] %v522
                  %v524 = vld [vmem:[%s456 + $0x104] sm:%s449]
                  %525 = vst [vmem:[%s457 + $0x84] sm:%s449] %v524
                  %v526 = vld [vmem:[%s456 + $0x108] sm:%s449]
                  %527 = vst [vmem:[%s457 + $0x88] sm:%s449] %v526
                  %v528 = vld [vmem:[%s456 + $0x10c] sm:%s449]
                  %529 = vst [vmem:[%s457 + $0x8c] sm:%s449] %v528
                  %v530 = vld [vmem:[%s456 + $0x110] sm:%s449]
                  %531 = vst [vmem:[%s457 + $0x90] sm:%s449] %v530
                  %v532 = vld [vmem:[%s456 + $0x114] sm:%s449]
                  %533 = vst [vmem:[%s457 + $0x94] sm:%s449] %v532
                  %v534 = vld [vmem:[%s456 + $0x118] sm:%s449]
                  %535 = vst [vmem:[%s457 + $0x98] sm:%s449] %v534
                  %v536 = vld [vmem:[%s456 + $0x11c] sm:%s449]
                  %537 = vst [vmem:[%s457 + $0x9c] sm:%s449] %v536
                  %v538 = vld [vmem:[%s456 + $0x120] sm:%s449]
                  %539 = vst [vmem:[%s457 + $0xa0] sm:%s449] %v538
                  %v540 = vld [vmem:[%s456 + $0x124] sm:%s449]
                  %541 = vst [vmem:[%s457 + $0xa4] sm:%s449] %v540
                  %v542 = vld [vmem:[%s456 + $0x128] sm:%s449]
                  %543 = vst [vmem:[%s457 + $0xa8] sm:%s449] %v542
                  %v544 = vld [vmem:[%s456 + $0x12c] sm:%s449]
                  %545 = vst [vmem:[%s457 + $0xac] sm:%s449] %v544
                  %v546 = vld [vmem:[%s456 + $0x130] sm:%s449]
                  %547 = vst [vmem:[%s457 + $0xb0] sm:%s449] %v546
                  %v548 = vld [vmem:[%s456 + $0x134] sm:%s449]
                  %549 = vst [vmem:[%s457 + $0xb4] sm:%s449] %v548
                  %v550 = vld [vmem:[%s456 + $0x138] sm:%s449]
                  %551 = vst [vmem:[%s457 + $0xb8] sm:%s449] %v550
                  %v552 = vld [vmem:[%s456 + $0x13c] sm:%s449]
                  %553 = vst [vmem:[%s457 + $0xbc] sm:%s449] %v552
                  %v554 = vld [vmem:[%s456 + $0x180] sm:%s449]
                  %555 = vst [vmem:[%s457 + $0xc0] sm:%s449] %v554
                  %v556 = vld [vmem:[%s456 + $0x184] sm:%s449]
                  %557 = vst [vmem:[%s457 + $0xc4] sm:%s449] %v556
                  %v558 = vld [vmem:[%s456 + $0x188] sm:%s449]
                  %559 = vst [vmem:[%s457 + $0xc8] sm:%s449] %v558
                  %v560 = vld [vmem:[%s456 + $0x18c] sm:%s449]
                  %561 = vst [vmem:[%s457 + $0xcc] sm:%s449] %v560
                  %v562 = vld [vmem:[%s456 + $0x190] sm:%s449]
                  %563 = vst [vmem:[%s457 + $0xd0] sm:%s449] %v562
                  %v564 = vld [vmem:[%s456 + $0x194] sm:%s449]
                  %565 = vst [vmem:[%s457 + $0xd4] sm:%s449] %v564
                  %v566 = vld [vmem:[%s456 + $0x198] sm:%s449]
                  %567 = vst [vmem:[%s457 + $0xd8] sm:%s449] %v566
                  %v568 = vld [vmem:[%s456 + $0x19c] sm:%s449]
                  %569 = vst [vmem:[%s457 + $0xdc] sm:%s449] %v568
                  %v570 = vld [vmem:[%s456 + $0x1a0] sm:%s449]
                  %571 = vst [vmem:[%s457 + $0xe0] sm:%s449] %v570
                  %v572 = vld [vmem:[%s456 + $0x1a4] sm:%s449]
                  %573 = vst [vmem:[%s457 + $0xe4] sm:%s449] %v572
                  %v574 = vld [vmem:[%s456 + $0x1a8] sm:%s449]
                  %575 = vst [vmem:[%s457 + $0xe8] sm:%s449] %v574
                  %v576 = vld [vmem:[%s456 + $0x1ac] sm:%s449]
                  %577 = vst [vmem:[%s457 + $0xec] sm:%s449] %v576
                  %v578 = vld [vmem:[%s456 + $0x1b0] sm:%s449]
                  %579 = vst [vmem:[%s457 + $0xf0] sm:%s449] %v578
                  %v580 = vld [vmem:[%s456 + $0x1b4] sm:%s449]
                  %581 = vst [vmem:[%s457 + $0xf4] sm:%s449] %v580
                  %v582 = vld [vmem:[%s456 + $0x1b8] sm:%s449]
                  %583 = vst [vmem:[%s457 + $0xf8] sm:%s449] %v582
                  %v584 = vld [vmem:[%s456 + $0x1bc] sm:%s449]
                  %585 = vst [vmem:[%s457 + $0xfc] sm:%s449] %v584
                  %v586 = vld [vmem:[%s456 + $0x200] sm:%s449]
                  %587 = vst [vmem:[%s457 + $0x100] sm:%s449] %v586
                  %v588 = vld [vmem:[%s456 + $0x204] sm:%s449]
                  %589 = vst [vmem:[%s457 + $0x104] sm:%s449] %v588
                  %v590 = vld [vmem:[%s456 + $0x208] sm:%s449]
                  %591 = vst [vmem:[%s457 + $0x108] sm:%s449] %v590
                  %v592 = vld [vmem:[%s456 + $0x20c] sm:%s449]
                  %593 = vst [vmem:[%s457 + $0x10c] sm:%s449] %v592
                  %v594 = vld [vmem:[%s456 + $0x210] sm:%s449]
                  %595 = vst [vmem:[%s457 + $0x110] sm:%s449] %v594
                  %v596 = vld [vmem:[%s456 + $0x214] sm:%s449]
                  %597 = vst [vmem:[%s457 + $0x114] sm:%s449] %v596
                  %v598 = vld [vmem:[%s456 + $0x218] sm:%s449]
                  %599 = vst [vmem:[%s457 + $0x118] sm:%s449] %v598
                  %v600 = vld [vmem:[%s456 + $0x21c] sm:%s449]
                  %601 = vst [vmem:[%s457 + $0x11c] sm:%s449] %v600
                  %v602 = vld [vmem:[%s456 + $0x220] sm:%s449]
                  %603 = vst [vmem:[%s457 + $0x120] sm:%s449] %v602
                  %v604 = vld [vmem:[%s456 + $0x224] sm:%s449]
                  %605 = vst [vmem:[%s457 + $0x124] sm:%s449] %v604
                  %v606 = vld [vmem:[%s456 + $0x228] sm:%s449]
                  %607 = vst [vmem:[%s457 + $0x128] sm:%s449] %v606
                  %v608 = vld [vmem:[%s456 + $0x22c] sm:%s449]
                  %609 = vst [vmem:[%s457 + $0x12c] sm:%s449] %v608
                  %v610 = vld [vmem:[%s456 + $0x230] sm:%s449]
                  %611 = vst [vmem:[%s457 + $0x130] sm:%s449] %v610
                  %v612 = vld [vmem:[%s456 + $0x234] sm:%s449]
                  %613 = vst [vmem:[%s457 + $0x134] sm:%s449] %v612
                  %v614 = vld [vmem:[%s456 + $0x238] sm:%s449]
                  %615 = vst [vmem:[%s457 + $0x138] sm:%s449] %v614
                  %v616 = vld [vmem:[%s456 + $0x23c] sm:%s449]
                  %617 = vst [vmem:[%s457 + $0x13c] sm:%s449] %v616
                  %v618 = vld [vmem:[%s456 + $0x280] sm:%s449]
                  %619 = vst [vmem:[%s457 + $0x140] sm:%s449] %v618
                  %v620 = vld [vmem:[%s456 + $0x284] sm:%s449]
                  %621 = vst [vmem:[%s457 + $0x144] sm:%s449] %v620
                  %v622 = vld [vmem:[%s456 + $0x288] sm:%s449]
                  %623 = vst [vmem:[%s457 + $0x148] sm:%s449] %v622
                  %v624 = vld [vmem:[%s456 + $0x28c] sm:%s449]
                  %625 = vst [vmem:[%s457 + $0x14c] sm:%s449] %v624
                  %v626 = vld [vmem:[%s456 + $0x290] sm:%s449]
                  %627 = vst [vmem:[%s457 + $0x150] sm:%s449] %v626
                  %v628 = vld [vmem:[%s456 + $0x294] sm:%s449]
                  %629 = vst [vmem:[%s457 + $0x154] sm:%s449] %v628
                  %v630 = vld [vmem:[%s456 + $0x298] sm:%s449]
                  %631 = vst [vmem:[%s457 + $0x158] sm:%s449] %v630
                  %v632 = vld [vmem:[%s456 + $0x29c] sm:%s449]
                  %633 = vst [vmem:[%s457 + $0x15c] sm:%s449] %v632
                  %v634 = vld [vmem:[%s456 + $0x2a0] sm:%s449]
                  %635 = vst [vmem:[%s457 + $0x160] sm:%s449] %v634
                  %v636 = vld [vmem:[%s456 + $0x2a4] sm:%s449]
                  %637 = vst [vmem:[%s457 + $0x164] sm:%s449] %v636
                  %v638 = vld [vmem:[%s456 + $0x2a8] sm:%s449]
                  %639 = vst [vmem:[%s457 + $0x168] sm:%s449] %v638
                  %v640 = vld [vmem:[%s456 + $0x2ac] sm:%s449]
                  %641 = vst [vmem:[%s457 + $0x16c] sm:%s449] %v640
                  %v642 = vld [vmem:[%s456 + $0x2b0] sm:%s449]
                  %643 = vst [vmem:[%s457 + $0x170] sm:%s449] %v642
                  %v644 = vld [vmem:[%s456 + $0x2b4] sm:%s449]
                  %645 = vst [vmem:[%s457 + $0x174] sm:%s449] %v644
                  %v646 = vld [vmem:[%s456 + $0x2b8] sm:%s449]
                  %647 = vst [vmem:[%s457 + $0x178] sm:%s449] %v646
                  %v648 = vld [vmem:[%s456 + $0x2bc] sm:%s449]
                  %649 = vst [vmem:[%s457 + $0x17c] sm:%s449] %v648
                  %v650 = vld [vmem:[%s456 + $0x300] sm:%s449]
                  %651 = vst [vmem:[%s457 + $0x180] sm:%s449] %v650
                  %v652 = vld [vmem:[%s456 + $0x304] sm:%s449]
                  %653 = vst [vmem:[%s457 + $0x184] sm:%s449] %v652
                  %v654 = vld [vmem:[%s456 + $0x308] sm:%s449]
                  %655 = vst [vmem:[%s457 + $0x188] sm:%s449] %v654
                  %v656 = vld [vmem:[%s456 + $0x30c] sm:%s449]
                  %657 = vst [vmem:[%s457 + $0x18c] sm:%s449] %v656
                  %v658 = vld [vmem:[%s456 + $0x310] sm:%s449]
                  %659 = vst [vmem:[%s457 + $0x190] sm:%s449] %v658
                  %v660 = vld [vmem:[%s456 + $0x314] sm:%s449]
                  %661 = vst [vmem:[%s457 + $0x194] sm:%s449] %v660
                  %v662 = vld [vmem:[%s456 + $0x318] sm:%s449]
                  %663 = vst [vmem:[%s457 + $0x198] sm:%s449] %v662
                  %v664 = vld [vmem:[%s456 + $0x31c] sm:%s449]
                  %665 = vst [vmem:[%s457 + $0x19c] sm:%s449] %v664
                  %v666 = vld [vmem:[%s456 + $0x320] sm:%s449]
                  %667 = vst [vmem:[%s457 + $0x1a0] sm:%s449] %v666
                  %v668 = vld [vmem:[%s456 + $0x324] sm:%s449]
                  %669 = vst [vmem:[%s457 + $0x1a4] sm:%s449] %v668
                  %v670 = vld [vmem:[%s456 + $0x328] sm:%s449]
                  %671 = vst [vmem:[%s457 + $0x1a8] sm:%s449] %v670
                  %v672 = vld [vmem:[%s456 + $0x32c] sm:%s449]
                  %673 = vst [vmem:[%s457 + $0x1ac] sm:%s449] %v672
                  %v674 = vld [vmem:[%s456 + $0x330] sm:%s449]
                  %675 = vst [vmem:[%s457 + $0x1b0] sm:%s449] %v674
                  %v676 = vld [vmem:[%s456 + $0x334] sm:%s449]
                  %677 = vst [vmem:[%s457 + $0x1b4] sm:%s449] %v676
                  %v678 = vld [vmem:[%s456 + $0x338] sm:%s449]
                  %679 = vst [vmem:[%s457 + $0x1b8] sm:%s449] %v678
                  %v680 = vld [vmem:[%s456 + $0x33c] sm:%s449]
                  %681 = vst [vmem:[%s457 + $0x1bc] sm:%s449] %v680
                  %v682 = vld [vmem:[%s456 + $0x380] sm:%s449]
                  %683 = vst [vmem:[%s457 + $0x1c0] sm:%s449] %v682
                  %v684 = vld [vmem:[%s456 + $0x384] sm:%s449]
                  %685 = vst [vmem:[%s457 + $0x1c4] sm:%s449] %v684
                  %v686 = vld [vmem:[%s456 + $0x388] sm:%s449]
                  %687 = vst [vmem:[%s457 + $0x1c8] sm:%s449] %v686
                  %v688 = vld [vmem:[%s456 + $0x38c] sm:%s449]
                  %689 = vst [vmem:[%s457 + $0x1cc] sm:%s449] %v688
                  %v690 = vld [vmem:[%s456 + $0x390] sm:%s449]
                  %691 = vst [vmem:[%s457 + $0x1d0] sm:%s449] %v690
                  %v692 = vld [vmem:[%s456 + $0x394] sm:%s449]
                  %693 = vst [vmem:[%s457 + $0x1d4] sm:%s449] %v692
                  %v694 = vld [vmem:[%s456 + $0x398] sm:%s449]
                  %695 = vst [vmem:[%s457 + $0x1d8] sm:%s449] %v694
                  %v696 = vld [vmem:[%s456 + $0x39c] sm:%s449]
                  %697 = vst [vmem:[%s457 + $0x1dc] sm:%s449] %v696
                  %v698 = vld [vmem:[%s456 + $0x3a0] sm:%s449]
                  %699 = vst [vmem:[%s457 + $0x1e0] sm:%s449] %v698
                  %v700 = vld [vmem:[%s456 + $0x3a4] sm:%s449]
                  %701 = vst [vmem:[%s457 + $0x1e4] sm:%s449] %v700
                  %v702 = vld [vmem:[%s456 + $0x3a8] sm:%s449]
                  %703 = vst [vmem:[%s457 + $0x1e8] sm:%s449] %v702
                  %v704 = vld [vmem:[%s456 + $0x3ac] sm:%s449]
                  %705 = vst [vmem:[%s457 + $0x1ec] sm:%s449] %v704
                  %v706 = vld [vmem:[%s456 + $0x3b0] sm:%s449]
                  %707 = vst [vmem:[%s457 + $0x1f0] sm:%s449] %v706
                  %v708 = vld [vmem:[%s456 + $0x3b4] sm:%s449]
                  %709 = vst [vmem:[%s457 + $0x1f4] sm:%s449] %v708
                  %v710 = vld [vmem:[%s456 + $0x3b8] sm:%s449]
                  %711 = vst [vmem:[%s457 + $0x1f8] sm:%s449] %v710
                  %v712 = vld [vmem:[%s456 + $0x3bc] sm:%s449]
                  %713 = vst [vmem:[%s457 + $0x1fc] sm:%s449] %v712
                $region67: #{content_aggregation.1} parent=54 // loop_footer
                  %s455 = sadd.s32 1, %s451
                $region68: #{content_aggregation.1} parent=54 // loop_footer_branch
                  %450 = sbr.rel target = $region64
                $region69: #{content_aggregation.1} parent=54 // loop_exit
                  _
              $region55: #{content_aggregation.1} parent=39 // pred_fallthru
                _
            $region40: #{content_aggregation.1} parent=35 // pred_fallthru
              _
            // Predicated region
            $region41: #{content_aggregation.1} parent=35 // pred_check
              _
            $region42: #{content_aggregation.1} parent=35 // pred_check_branch
              %171 = sbr.rel (0) target = $region44
            $region43: #{content_aggregation.1} parent=35 // pred_region
              %s173 = ssub.s32 16, 1
              loop: start=0, step=1, limit=1
              $region45: #{content_aggregation.1} parent=43 // loop_pre_header
                _
              $region46: #{content_aggregation.1} parent=43 // loop_header
                %s175 = sphi 0, %s179
                %p176 = scmp.ge.s32.totalorder %s175, 1
                %s180 = sphi %s165, %s165
                %s181 = sphi %s162, %s162
              $region47: #{content_aggregation.1} parent=43 // loop_header_branch
                %178 = sbr.rel (%p176) target = $region51
              $region48: #{content_aggregation.1} parent=43 // loop_body
                %v182 = vld [vmem:[%s180] sm:%s173]
                %183 = vst [vmem:[%s181] sm:%s173] %v182
                %v184 = vld [vmem:[%s180 + $0x4] sm:%s173]
                %185 = vst [vmem:[%s181 + $0x4] sm:%s173] %v184
                %v186 = vld [vmem:[%s180 + $0x8] sm:%s173]
                %187 = vst [vmem:[%s181 + $0x8] sm:%s173] %v186
                %v188 = vld [vmem:[%s180 + $0xc] sm:%s173]
                %189 = vst [vmem:[%s181 + $0xc] sm:%s173] %v188
                %v190 = vld [vmem:[%s180 + $0x10] sm:%s173]
                %191 = vst [vmem:[%s181 + $0x10] sm:%s173] %v190
                %v192 = vld [vmem:[%s180 + $0x14] sm:%s173]
                %193 = vst [vmem:[%s181 + $0x14] sm:%s173] %v192
                %v194 = vld [vmem:[%s180 + $0x18] sm:%s173]
                %195 = vst [vmem:[%s181 + $0x18] sm:%s173] %v194
                %v196 = vld [vmem:[%s180 + $0x1c] sm:%s173]
                %197 = vst [vmem:[%s181 + $0x1c] sm:%s173] %v196
                %v198 = vld [vmem:[%s180 + $0x20] sm:%s173]
                %199 = vst [vmem:[%s181 + $0x20] sm:%s173] %v198
                %v200 = vld [vmem:[%s180 + $0x24] sm:%s173]
                %201 = vst [vmem:[%s181 + $0x24] sm:%s173] %v200
                %v202 = vld [vmem:[%s180 + $0x28] sm:%s173]
                %203 = vst [vmem:[%s181 + $0x28] sm:%s173] %v202
                %v204 = vld [vmem:[%s180 + $0x2c] sm:%s173]
                %205 = vst [vmem:[%s181 + $0x2c] sm:%s173] %v204
                %v206 = vld [vmem:[%s180 + $0x30] sm:%s173]
                %207 = vst [vmem:[%s181 + $0x30] sm:%s173] %v206
                %v208 = vld [vmem:[%s180 + $0x34] sm:%s173]
                %209 = vst [vmem:[%s181 + $0x34] sm:%s173] %v208
                %v210 = vld [vmem:[%s180 + $0x38] sm:%s173]
                %211 = vst [vmem:[%s181 + $0x38] sm:%s173] %v210
                %v212 = vld [vmem:[%s180 + $0x3c] sm:%s173]
                %213 = vst [vmem:[%s181 + $0x3c] sm:%s173] %v212
                %v214 = vld [vmem:[%s180 + $0x80] sm:%s173]
                %215 = vst [vmem:[%s181 + $0x40] sm:%s173] %v214
                %v216 = vld [vmem:[%s180 + $0x84] sm:%s173]
                %217 = vst [vmem:[%s181 + $0x44] sm:%s173] %v216
                %v218 = vld [vmem:[%s180 + $0x88] sm:%s173]
                %219 = vst [vmem:[%s181 + $0x48] sm:%s173] %v218
                %v220 = vld [vmem:[%s180 + $0x8c] sm:%s173]
                %221 = vst [vmem:[%s181 + $0x4c] sm:%s173] %v220
                %v222 = vld [vmem:[%s180 + $0x90] sm:%s173]
                %223 = vst [vmem:[%s181 + $0x50] sm:%s173] %v222
                %v224 = vld [vmem:[%s180 + $0x94] sm:%s173]
                %225 = vst [vmem:[%s181 + $0x54] sm:%s173] %v224
                %v226 = vld [vmem:[%s180 + $0x98] sm:%s173]
                %227 = vst [vmem:[%s181 + $0x58] sm:%s173] %v226
                %v228 = vld [vmem:[%s180 + $0x9c] sm:%s173]
                %229 = vst [vmem:[%s181 + $0x5c] sm:%s173] %v228
                %v230 = vld [vmem:[%s180 + $0xa0] sm:%s173]
                %231 = vst [vmem:[%s181 + $0x60] sm:%s173] %v230
                %v232 = vld [vmem:[%s180 + $0xa4] sm:%s173]
                %233 = vst [vmem:[%s181 + $0x64] sm:%s173] %v232
                %v234 = vld [vmem:[%s180 + $0xa8] sm:%s173]
                %235 = vst [vmem:[%s181 + $0x68] sm:%s173] %v234
                %v236 = vld [vmem:[%s180 + $0xac] sm:%s173]
                %237 = vst [vmem:[%s181 + $0x6c] sm:%s173] %v236
                %v238 = vld [vmem:[%s180 + $0xb0] sm:%s173]
                %239 = vst [vmem:[%s181 + $0x70] sm:%s173] %v238
                %v240 = vld [vmem:[%s180 + $0xb4] sm:%s173]
                %241 = vst [vmem:[%s181 + $0x74] sm:%s173] %v240
                %v242 = vld [vmem:[%s180 + $0xb8] sm:%s173]
                %243 = vst [vmem:[%s181 + $0x78] sm:%s173] %v242
                %v244 = vld [vmem:[%s180 + $0xbc] sm:%s173]
                %245 = vst [vmem:[%s181 + $0x7c] sm:%s173] %v244
                %v246 = vld [vmem:[%s180 + $0x100] sm:%s173]
                %247 = vst [vmem:[%s181 + $0x80] sm:%s173] %v246
                %v248 = vld [vmem:[%s180 + $0x104] sm:%s173]
                %249 = vst [vmem:[%s181 + $0x84] sm:%s173] %v248
                %v250 = vld [vmem:[%s180 + $0x108] sm:%s173]
                %251 = vst [vmem:[%s181 + $0x88] sm:%s173] %v250
                %v252 = vld [vmem:[%s180 + $0x10c] sm:%s173]
                %253 = vst [vmem:[%s181 + $0x8c] sm:%s173] %v252
                %v254 = vld [vmem:[%s180 + $0x110] sm:%s173]
                %255 = vst [vmem:[%s181 + $0x90] sm:%s173] %v254
                %v256 = vld [vmem:[%s180 + $0x114] sm:%s173]
                %257 = vst [vmem:[%s181 + $0x94] sm:%s173] %v256
                %v258 = vld [vmem:[%s180 + $0x118] sm:%s173]
                %259 = vst [vmem:[%s181 + $0x98] sm:%s173] %v258
                %v260 = vld [vmem:[%s180 + $0x11c] sm:%s173]
                %261 = vst [vmem:[%s181 + $0x9c] sm:%s173] %v260
                %v262 = vld [vmem:[%s180 + $0x120] sm:%s173]
                %263 = vst [vmem:[%s181 + $0xa0] sm:%s173] %v262
                %v264 = vld [vmem:[%s180 + $0x124] sm:%s173]
                %265 = vst [vmem:[%s181 + $0xa4] sm:%s173] %v264
                %v266 = vld [vmem:[%s180 + $0x128] sm:%s173]
                %267 = vst [vmem:[%s181 + $0xa8] sm:%s173] %v266
                %v268 = vld [vmem:[%s180 + $0x12c] sm:%s173]
                %269 = vst [vmem:[%s181 + $0xac] sm:%s173] %v268
                %v270 = vld [vmem:[%s180 + $0x130] sm:%s173]
                %271 = vst [vmem:[%s181 + $0xb0] sm:%s173] %v270
                %v272 = vld [vmem:[%s180 + $0x134] sm:%s173]
                %273 = vst [vmem:[%s181 + $0xb4] sm:%s173] %v272
                %v274 = vld [vmem:[%s180 + $0x138] sm:%s173]
                %275 = vst [vmem:[%s181 + $0xb8] sm:%s173] %v274
                %v276 = vld [vmem:[%s180 + $0x13c] sm:%s173]
                %277 = vst [vmem:[%s181 + $0xbc] sm:%s173] %v276
                %v278 = vld [vmem:[%s180 + $0x180] sm:%s173]
                %279 = vst [vmem:[%s181 + $0xc0] sm:%s173] %v278
                %v280 = vld [vmem:[%s180 + $0x184] sm:%s173]
                %281 = vst [vmem:[%s181 + $0xc4] sm:%s173] %v280
                %v282 = vld [vmem:[%s180 + $0x188] sm:%s173]
                %283 = vst [vmem:[%s181 + $0xc8] sm:%s173] %v282
                %v284 = vld [vmem:[%s180 + $0x18c] sm:%s173]
                %285 = vst [vmem:[%s181 + $0xcc] sm:%s173] %v284
                %v286 = vld [vmem:[%s180 + $0x190] sm:%s173]
                %287 = vst [vmem:[%s181 + $0xd0] sm:%s173] %v286
                %v288 = vld [vmem:[%s180 + $0x194] sm:%s173]
                %289 = vst [vmem:[%s181 + $0xd4] sm:%s173] %v288
                %v290 = vld [vmem:[%s180 + $0x198] sm:%s173]
                %291 = vst [vmem:[%s181 + $0xd8] sm:%s173] %v290
                %v292 = vld [vmem:[%s180 + $0x19c] sm:%s173]
                %293 = vst [vmem:[%s181 + $0xdc] sm:%s173] %v292
                %v294 = vld [vmem:[%s180 + $0x1a0] sm:%s173]
                %295 = vst [vmem:[%s181 + $0xe0] sm:%s173] %v294
                %v296 = vld [vmem:[%s180 + $0x1a4] sm:%s173]
                %297 = vst [vmem:[%s181 + $0xe4] sm:%s173] %v296
                %v298 = vld [vmem:[%s180 + $0x1a8] sm:%s173]
                %299 = vst [vmem:[%s181 + $0xe8] sm:%s173] %v298
                %v300 = vld [vmem:[%s180 + $0x1ac] sm:%s173]
                %301 = vst [vmem:[%s181 + $0xec] sm:%s173] %v300
                %v302 = vld [vmem:[%s180 + $0x1b0] sm:%s173]
                %303 = vst [vmem:[%s181 + $0xf0] sm:%s173] %v302
                %v304 = vld [vmem:[%s180 + $0x1b4] sm:%s173]
                %305 = vst [vmem:[%s181 + $0xf4] sm:%s173] %v304
                %v306 = vld [vmem:[%s180 + $0x1b8] sm:%s173]
                %307 = vst [vmem:[%s181 + $0xf8] sm:%s173] %v306
                %v308 = vld [vmem:[%s180 + $0x1bc] sm:%s173]
                %309 = vst [vmem:[%s181 + $0xfc] sm:%s173] %v308
                %v310 = vld [vmem:[%s180 + $0x200] sm:%s173]
                %311 = vst [vmem:[%s181 + $0x100] sm:%s173] %v310
                %v312 = vld [vmem:[%s180 + $0x204] sm:%s173]
                %313 = vst [vmem:[%s181 + $0x104] sm:%s173] %v312
                %v314 = vld [vmem:[%s180 + $0x208] sm:%s173]
                %315 = vst [vmem:[%s181 + $0x108] sm:%s173] %v314
                %v316 = vld [vmem:[%s180 + $0x20c] sm:%s173]
                %317 = vst [vmem:[%s181 + $0x10c] sm:%s173] %v316
                %v318 = vld [vmem:[%s180 + $0x210] sm:%s173]
                %319 = vst [vmem:[%s181 + $0x110] sm:%s173] %v318
                %v320 = vld [vmem:[%s180 + $0x214] sm:%s173]
                %321 = vst [vmem:[%s181 + $0x114] sm:%s173] %v320
                %v322 = vld [vmem:[%s180 + $0x218] sm:%s173]
                %323 = vst [vmem:[%s181 + $0x118] sm:%s173] %v322
                %v324 = vld [vmem:[%s180 + $0x21c] sm:%s173]
                %325 = vst [vmem:[%s181 + $0x11c] sm:%s173] %v324
                %v326 = vld [vmem:[%s180 + $0x220] sm:%s173]
                %327 = vst [vmem:[%s181 + $0x120] sm:%s173] %v326
                %v328 = vld [vmem:[%s180 + $0x224] sm:%s173]
                %329 = vst [vmem:[%s181 + $0x124] sm:%s173] %v328
                %v330 = vld [vmem:[%s180 + $0x228] sm:%s173]
                %331 = vst [vmem:[%s181 + $0x128] sm:%s173] %v330
                %v332 = vld [vmem:[%s180 + $0x22c] sm:%s173]
                %333 = vst [vmem:[%s181 + $0x12c] sm:%s173] %v332
                %v334 = vld [vmem:[%s180 + $0x230] sm:%s173]
                %335 = vst [vmem:[%s181 + $0x130] sm:%s173] %v334
                %v336 = vld [vmem:[%s180 + $0x234] sm:%s173]
                %337 = vst [vmem:[%s181 + $0x134] sm:%s173] %v336
                %v338 = vld [vmem:[%s180 + $0x238] sm:%s173]
                %339 = vst [vmem:[%s181 + $0x138] sm:%s173] %v338
                %v340 = vld [vmem:[%s180 + $0x23c] sm:%s173]
                %341 = vst [vmem:[%s181 + $0x13c] sm:%s173] %v340
                %v342 = vld [vmem:[%s180 + $0x280] sm:%s173]
                %343 = vst [vmem:[%s181 + $0x140] sm:%s173] %v342
                %v344 = vld [vmem:[%s180 + $0x284] sm:%s173]
                %345 = vst [vmem:[%s181 + $0x144] sm:%s173] %v344
                %v346 = vld [vmem:[%s180 + $0x288] sm:%s173]
                %347 = vst [vmem:[%s181 + $0x148] sm:%s173] %v346
                %v348 = vld [vmem:[%s180 + $0x28c] sm:%s173]
                %349 = vst [vmem:[%s181 + $0x14c] sm:%s173] %v348
                %v350 = vld [vmem:[%s180 + $0x290] sm:%s173]
                %351 = vst [vmem:[%s181 + $0x150] sm:%s173] %v350
                %v352 = vld [vmem:[%s180 + $0x294] sm:%s173]
                %353 = vst [vmem:[%s181 + $0x154] sm:%s173] %v352
                %v354 = vld [vmem:[%s180 + $0x298] sm:%s173]
                %355 = vst [vmem:[%s181 + $0x158] sm:%s173] %v354
                %v356 = vld [vmem:[%s180 + $0x29c] sm:%s173]
                %357 = vst [vmem:[%s181 + $0x15c] sm:%s173] %v356
                %v358 = vld [vmem:[%s180 + $0x2a0] sm:%s173]
                %359 = vst [vmem:[%s181 + $0x160] sm:%s173] %v358
                %v360 = vld [vmem:[%s180 + $0x2a4] sm:%s173]
                %361 = vst [vmem:[%s181 + $0x164] sm:%s173] %v360
                %v362 = vld [vmem:[%s180 + $0x2a8] sm:%s173]
                %363 = vst [vmem:[%s181 + $0x168] sm:%s173] %v362
                %v364 = vld [vmem:[%s180 + $0x2ac] sm:%s173]
                %365 = vst [vmem:[%s181 + $0x16c] sm:%s173] %v364
                %v366 = vld [vmem:[%s180 + $0x2b0] sm:%s173]
                %367 = vst [vmem:[%s181 + $0x170] sm:%s173] %v366
                %v368 = vld [vmem:[%s180 + $0x2b4] sm:%s173]
                %369 = vst [vmem:[%s181 + $0x174] sm:%s173] %v368
                %v370 = vld [vmem:[%s180 + $0x2b8] sm:%s173]
                %371 = vst [vmem:[%s181 + $0x178] sm:%s173] %v370
                %v372 = vld [vmem:[%s180 + $0x2bc] sm:%s173]
                %373 = vst [vmem:[%s181 + $0x17c] sm:%s173] %v372
                %v374 = vld [vmem:[%s180 + $0x300] sm:%s173]
                %375 = vst [vmem:[%s181 + $0x180] sm:%s173] %v374
                %v376 = vld [vmem:[%s180 + $0x304] sm:%s173]
                %377 = vst [vmem:[%s181 + $0x184] sm:%s173] %v376
                %v378 = vld [vmem:[%s180 + $0x308] sm:%s173]
                %379 = vst [vmem:[%s181 + $0x188] sm:%s173] %v378
                %v380 = vld [vmem:[%s180 + $0x30c] sm:%s173]
                %381 = vst [vmem:[%s181 + $0x18c] sm:%s173] %v380
                %v382 = vld [vmem:[%s180 + $0x310] sm:%s173]
                %383 = vst [vmem:[%s181 + $0x190] sm:%s173] %v382
                %v384 = vld [vmem:[%s180 + $0x314] sm:%s173]
                %385 = vst [vmem:[%s181 + $0x194] sm:%s173] %v384
                %v386 = vld [vmem:[%s180 + $0x318] sm:%s173]
                %387 = vst [vmem:[%s181 + $0x198] sm:%s173] %v386
                %v388 = vld [vmem:[%s180 + $0x31c] sm:%s173]
                %389 = vst [vmem:[%s181 + $0x19c] sm:%s173] %v388
                %v390 = vld [vmem:[%s180 + $0x320] sm:%s173]
                %391 = vst [vmem:[%s181 + $0x1a0] sm:%s173] %v390
                %v392 = vld [vmem:[%s180 + $0x324] sm:%s173]
                %393 = vst [vmem:[%s181 + $0x1a4] sm:%s173] %v392
                %v394 = vld [vmem:[%s180 + $0x328] sm:%s173]
                %395 = vst [vmem:[%s181 + $0x1a8] sm:%s173] %v394
                %v396 = vld [vmem:[%s180 + $0x32c] sm:%s173]
                %397 = vst [vmem:[%s181 + $0x1ac] sm:%s173] %v396
                %v398 = vld [vmem:[%s180 + $0x330] sm:%s173]
                %399 = vst [vmem:[%s181 + $0x1b0] sm:%s173] %v398
                %v400 = vld [vmem:[%s180 + $0x334] sm:%s173]
                %401 = vst [vmem:[%s181 + $0x1b4] sm:%s173] %v400
                %v402 = vld [vmem:[%s180 + $0x338] sm:%s173]
                %403 = vst [vmem:[%s181 + $0x1b8] sm:%s173] %v402
                %v404 = vld [vmem:[%s180 + $0x33c] sm:%s173]
                %405 = vst [vmem:[%s181 + $0x1bc] sm:%s173] %v404
                %v406 = vld [vmem:[%s180 + $0x380] sm:%s173]
                %407 = vst [vmem:[%s181 + $0x1c0] sm:%s173] %v406
                %v408 = vld [vmem:[%s180 + $0x384] sm:%s173]
                %409 = vst [vmem:[%s181 + $0x1c4] sm:%s173] %v408
                %v410 = vld [vmem:[%s180 + $0x388] sm:%s173]
                %411 = vst [vmem:[%s181 + $0x1c8] sm:%s173] %v410
                %v412 = vld [vmem:[%s180 + $0x38c] sm:%s173]
                %413 = vst [vmem:[%s181 + $0x1cc] sm:%s173] %v412
                %v414 = vld [vmem:[%s180 + $0x390] sm:%s173]
                %415 = vst [vmem:[%s181 + $0x1d0] sm:%s173] %v414
                %v416 = vld [vmem:[%s180 + $0x394] sm:%s173]
                %417 = vst [vmem:[%s181 + $0x1d4] sm:%s173] %v416
                %v418 = vld [vmem:[%s180 + $0x398] sm:%s173]
                %419 = vst [vmem:[%s181 + $0x1d8] sm:%s173] %v418
                %v420 = vld [vmem:[%s180 + $0x39c] sm:%s173]
                %421 = vst [vmem:[%s181 + $0x1dc] sm:%s173] %v420
                %v422 = vld [vmem:[%s180 + $0x3a0] sm:%s173]
                %423 = vst [vmem:[%s181 + $0x1e0] sm:%s173] %v422
                %v424 = vld [vmem:[%s180 + $0x3a4] sm:%s173]
                %425 = vst [vmem:[%s181 + $0x1e4] sm:%s173] %v424
                %v426 = vld [vmem:[%s180 + $0x3a8] sm:%s173]
                %427 = vst [vmem:[%s181 + $0x1e8] sm:%s173] %v426
                %v428 = vld [vmem:[%s180 + $0x3ac] sm:%s173]
                %429 = vst [vmem:[%s181 + $0x1ec] sm:%s173] %v428
                %v430 = vld [vmem:[%s180 + $0x3b0] sm:%s173]
                %431 = vst [vmem:[%s181 + $0x1f0] sm:%s173] %v430
                %v432 = vld [vmem:[%s180 + $0x3b4] sm:%s173]
                %433 = vst [vmem:[%s181 + $0x1f4] sm:%s173] %v432
                %v434 = vld [vmem:[%s180 + $0x3b8] sm:%s173]
                %435 = vst [vmem:[%s181 + $0x1f8] sm:%s173] %v434
                %v436 = vld [vmem:[%s180 + $0x3bc] sm:%s173]
                %437 = vst [vmem:[%s181 + $0x1fc] sm:%s173] %v436
              $region49: #{content_aggregation.1} parent=43 // loop_footer
                %s179 = sadd.s32 1, %s175
              $region50: #{content_aggregation.1} parent=43 // loop_footer_branch
                %174 = sbr.rel target = $region46
              $region51: #{content_aggregation.1} parent=43 // loop_exit
                _
            $region44: #{content_aggregation.1} parent=35 // pred_fallthru
              _
          $region36: #{content_aggregation.1} parent=31 // pred_fallthru
            _
          %714 = vnop
        $region32: #{content_aggregation.1} parent=27 // pred_fallthru
          _
      $region28: #{content_aggregation.1} parent=5 // pred_fallthru
        _
      %p715 = scmp.le.s32.totalorder 1, %s13
      %p716 = scmp.lt.s32.totalorder %s13, 3
      %p717 = pnand %p715, %p716
      %p718 = pneg %p717
      // Predicated region
      $region70: #{content_aggregation.1} parent=5 // pred_check
        _
      $region71: #{content_aggregation.1} parent=5 // pred_check_branch
        %720 = sbr.rel (%p717) target = $region73
      $region72: #{content_aggregation.1} parent=5 // pred_region
        %s721 = ssub.s32 %s13, 1
        %s722 = sand.u32 %s26, 1
        %s723 = sand.u32 %s26, 1
        %s724 = smul.addr %s723, 512
        %s725 = scalar_lea.vmem [#allocation3], %s724
        // Predicated region
        $region74: #{content_aggregation.1} parent=72 // pred_check
          %p726 = pneg %p39
        $region75: #{content_aggregation.1} parent=72 // pred_check_branch
          %728 = sbr.rel (%p726) target = $region77
        $region76: #{content_aggregation.1} parent=72 // pred_region
          _
        $region77: #{content_aggregation.1} parent=72 // pred_fallthru
          _
        %s729 = sand.u32 %s26, 1
        %s730 = sand.u32 %s26, 1
        %s731 = smul.addr %s730, 512
        %s732 = scalar_lea.vmem [#allocation3], %s731
        %p733 = pneg %p39
        %p734 = pneg %p36
        %p735 = pneg %p60
        %p736 = pneg %p57
        %p737 = pneg %p81
        %p738 = pneg %p78
        %p739 = pneg %p102
        %p740 = pneg %p99
        %p741 = pneg %p128
        %p742 = pneg %p125
        %s743 = sand.u32 %s115, 1
        %s744 = scalar_lea.sflag [#allocation5], %s743
        %s745 = sand.u32 %s115, 1
        %s746 = smul.addr %s745, 128
        %s747 = scalar_lea.vmem [#allocation4], %s746
        %s748 = smul.u32 16, %s18
        %s749 = smul.u32 16, %s18
        %v751 = vld [vmem:[%s725] sm:$0xf]
        %v752 = vld [vmem:[%s725 + $0x4] sm:$0xf]
        %v753 = vld [vmem:[%s725 + $0x8] sm:$0xf]
        %v754 = vld [vmem:[%s725 + $0xc] sm:$0xf]
        %v755 = vld [vmem:[%s725 + $0x10] sm:$0xf]
        %v756 = vld [vmem:[%s725 + $0x14] sm:$0xf]
        %v757 = vld [vmem:[%s725 + $0x18] sm:$0xf]
        %v758 = vld [vmem:[%s725 + $0x1c] sm:$0xf]
        %v759 = vld [vmem:[%s725 + $0x20] sm:$0xf]
        %v760 = vld [vmem:[%s725 + $0x24] sm:$0xf]
        %v761 = vld [vmem:[%s725 + $0x28] sm:$0xf]
        %v762 = vld [vmem:[%s725 + $0x2c] sm:$0xf]
        %v763 = vld [vmem:[%s725 + $0x30] sm:$0xf]
        %v764 = vld [vmem:[%s725 + $0x34] sm:$0xf]
        %v765 = vld [vmem:[%s725 + $0x38] sm:$0xf]
        %v766 = vld [vmem:[%s725 + $0x3c] sm:$0xf]
        %v767 = vld [vmem:[%s725 + $0x40] sm:$0xf]
        %v768 = vld [vmem:[%s725 + $0x44] sm:$0xf]
        %v769 = vld [vmem:[%s725 + $0x48] sm:$0xf]
        %v770 = vld [vmem:[%s725 + $0x4c] sm:$0xf]
        %v771 = vld [vmem:[%s725 + $0x50] sm:$0xf]
        %v772 = vld [vmem:[%s725 + $0x54] sm:$0xf]
        %v773 = vld [vmem:[%s725 + $0x58] sm:$0xf]
        %v774 = vld [vmem:[%s725 + $0x5c] sm:$0xf]
        %v775 = vld [vmem:[%s725 + $0x60] sm:$0xf]
        %v776 = vld [vmem:[%s725 + $0x64] sm:$0xf]
        %v777 = vld [vmem:[%s725 + $0x68] sm:$0xf]
        %v778 = vld [vmem:[%s725 + $0x6c] sm:$0xf]
        %v779 = vld [vmem:[%s725 + $0x70] sm:$0xf]
        %v780 = vld [vmem:[%s725 + $0x74] sm:$0xf]
        %v781 = vld [vmem:[%s725 + $0x78] sm:$0xf]
        %v782 = vld [vmem:[%s725 + $0x7c] sm:$0xf]
        %v783 = vld [vmem:[%s725 + $0x80] sm:$0xf]
        %v784 = vld [vmem:[%s725 + $0x84] sm:$0xf]
        %v785 = vld [vmem:[%s725 + $0x88] sm:$0xf]
        %v786 = vld [vmem:[%s725 + $0x8c] sm:$0xf]
        %v787 = vld [vmem:[%s725 + $0x90] sm:$0xf]
        %v788 = vld [vmem:[%s725 + $0x94] sm:$0xf]
        %v789 = vld [vmem:[%s725 + $0x98] sm:$0xf]
        %v790 = vld [vmem:[%s725 + $0x9c] sm:$0xf]
        %v791 = vld [vmem:[%s725 + $0xa0] sm:$0xf]
        %v792 = vld [vmem:[%s725 + $0xa4] sm:$0xf]
        %v793 = vld [vmem:[%s725 + $0xa8] sm:$0xf]
        %v794 = vld [vmem:[%s725 + $0xac] sm:$0xf]
        %v795 = vld [vmem:[%s725 + $0xb0] sm:$0xf]
        %v796 = vld [vmem:[%s725 + $0xb4] sm:$0xf]
        %v797 = vld [vmem:[%s725 + $0xb8] sm:$0xf]
        %v798 = vld [vmem:[%s725 + $0xbc] sm:$0xf]
        %v799 = vld [vmem:[%s725 + $0xc0] sm:$0xf]
        %v800 = vld [vmem:[%s725 + $0xc4] sm:$0xf]
        %v801 = vld [vmem:[%s725 + $0xc8] sm:$0xf]
        %v802 = vld [vmem:[%s725 + $0xcc] sm:$0xf]
        %v803 = vld [vmem:[%s725 + $0xd0] sm:$0xf]
        %v804 = vld [vmem:[%s725 + $0xd4] sm:$0xf]
        %v805 = vld [vmem:[%s725 + $0xd8] sm:$0xf]
        %v806 = vld [vmem:[%s725 + $0xdc] sm:$0xf]
        %v807 = vld [vmem:[%s725 + $0xe0] sm:$0xf]
        %v808 = vld [vmem:[%s725 + $0xe4] sm:$0xf]
        %v809 = vld [vmem:[%s725 + $0xe8] sm:$0xf]
        %v810 = vld [vmem:[%s725 + $0xec] sm:$0xf]
        %v811 = vld [vmem:[%s725 + $0xf0] sm:$0xf]
        %v812 = vld [vmem:[%s725 + $0xf4] sm:$0xf]
        %v813 = vld [vmem:[%s725 + $0xf8] sm:$0xf]
        %v814 = vld [vmem:[%s725 + $0xfc] sm:$0xf]
        %v815 = vld [vmem:[%s725 + $0x100] sm:$0xf]
        %v816 = vld [vmem:[%s725 + $0x104] sm:$0xf]
        %v817 = vld [vmem:[%s725 + $0x108] sm:$0xf]
        %v818 = vld [vmem:[%s725 + $0x10c] sm:$0xf]
        %v819 = vld [vmem:[%s725 + $0x110] sm:$0xf]
        %v820 = vld [vmem:[%s725 + $0x114] sm:$0xf]
        %v821 = vld [vmem:[%s725 + $0x118] sm:$0xf]
        %v822 = vld [vmem:[%s725 + $0x11c] sm:$0xf]
        %v823 = vld [vmem:[%s725 + $0x120] sm:$0xf]
        %v824 = vld [vmem:[%s725 + $0x124] sm:$0xf]
        %v825 = vld [vmem:[%s725 + $0x128] sm:$0xf]
        %v826 = vld [vmem:[%s725 + $0x12c] sm:$0xf]
        %v827 = vld [vmem:[%s725 + $0x130] sm:$0xf]
        %v828 = vld [vmem:[%s725 + $0x134] sm:$0xf]
        %v829 = vld [vmem:[%s725 + $0x138] sm:$0xf]
        %v830 = vld [vmem:[%s725 + $0x13c] sm:$0xf]
        %v831 = vld [vmem:[%s725 + $0x140] sm:$0xf]
        %v832 = vld [vmem:[%s725 + $0x144] sm:$0xf]
        %v833 = vld [vmem:[%s725 + $0x148] sm:$0xf]
        %v834 = vld [vmem:[%s725 + $0x14c] sm:$0xf]
        %v835 = vld [vmem:[%s725 + $0x150] sm:$0xf]
        %v836 = vld [vmem:[%s725 + $0x154] sm:$0xf]
        %v837 = vld [vmem:[%s725 + $0x158] sm:$0xf]
        %v838 = vld [vmem:[%s725 + $0x15c] sm:$0xf]
        %v839 = vld [vmem:[%s725 + $0x160] sm:$0xf]
        %v840 = vld [vmem:[%s725 + $0x164] sm:$0xf]
        %v841 = vld [vmem:[%s725 + $0x168] sm:$0xf]
        %v842 = vld [vmem:[%s725 + $0x16c] sm:$0xf]
        %v843 = vld [vmem:[%s725 + $0x170] sm:$0xf]
        %v844 = vld [vmem:[%s725 + $0x174] sm:$0xf]
        %v845 = vld [vmem:[%s725 + $0x178] sm:$0xf]
        %v846 = vld [vmem:[%s725 + $0x17c] sm:$0xf]
        %v847 = vld [vmem:[%s725 + $0x180] sm:$0xf]
        %v848 = vld [vmem:[%s725 + $0x184] sm:$0xf]
        %v849 = vld [vmem:[%s725 + $0x188] sm:$0xf]
        %v850 = vld [vmem:[%s725 + $0x18c] sm:$0xf]
        %v851 = vld [vmem:[%s725 + $0x190] sm:$0xf]
        %v852 = vld [vmem:[%s725 + $0x194] sm:$0xf]
        %v853 = vld [vmem:[%s725 + $0x198] sm:$0xf]
        %v854 = vld [vmem:[%s725 + $0x19c] sm:$0xf]
        %v855 = vld [vmem:[%s725 + $0x1a0] sm:$0xf]
        %v856 = vld [vmem:[%s725 + $0x1a4] sm:$0xf]
        %v857 = vld [vmem:[%s725 + $0x1a8] sm:$0xf]
        %v858 = vld [vmem:[%s725 + $0x1ac] sm:$0xf]
        %v859 = vld [vmem:[%s725 + $0x1b0] sm:$0xf]
        %v860 = vld [vmem:[%s725 + $0x1b4] sm:$0xf]
        %v861 = vld [vmem:[%s725 + $0x1b8] sm:$0xf]
        %v862 = vld [vmem:[%s725 + $0x1bc] sm:$0xf]
        %v863 = vld [vmem:[%s725 + $0x1c0] sm:$0xf]
        %v864 = vld [vmem:[%s725 + $0x1c4] sm:$0xf]
        %v865 = vld [vmem:[%s725 + $0x1c8] sm:$0xf]
        %v866 = vld [vmem:[%s725 + $0x1cc] sm:$0xf]
        %v867 = vld [vmem:[%s725 + $0x1d0] sm:$0xf]
        %v868 = vld [vmem:[%s725 + $0x1d4] sm:$0xf]
        %v869 = vld [vmem:[%s725 + $0x1d8] sm:$0xf]
        %v870 = vld [vmem:[%s725 + $0x1dc] sm:$0xf]
        %v871 = vld [vmem:[%s725 + $0x1e0] sm:$0xf]
        %v872 = vld [vmem:[%s725 + $0x1e4] sm:$0xf]
        %v873 = vld [vmem:[%s725 + $0x1e8] sm:$0xf]
        %v874 = vld [vmem:[%s725 + $0x1ec] sm:$0xf]
        %v875 = vld [vmem:[%s725 + $0x1f0] sm:$0xf]
        %v876 = vld [vmem:[%s725 + $0x1f4] sm:$0xf]
        %v877 = vld [vmem:[%s725 + $0x1f8] sm:$0xf]
        %v878 = vld [vmem:[%s725 + $0x1fc] sm:$0xf]
        %v879 = vld [vmem:[%s1] sm:$0xff]
        %v880 = vld [vmem:[%s1 + $0x8] sm:$0xff]
        %v881 = vld [vmem:[%s1 + $0x10] sm:$0xff]
        %v882 = vld [vmem:[%s1 + $0x18] sm:$0xff]
        %v883 = vld [vmem:[%s1 + $0x20] sm:$0xff]
        %v884 = vld [vmem:[%s1 + $0x28] sm:$0xff]
        %v885 = vld [vmem:[%s1 + $0x30] sm:$0xff]
        %v886 = vld [vmem:[%s1 + $0x38] sm:$0xff]
        %v887 = vld [vmem:[%s1 + $0x40] sm:$0xff]
        %v888 = vld [vmem:[%s1 + $0x48] sm:$0xff]
        %v889 = vld [vmem:[%s1 + $0x50] sm:$0xff]
        %v890 = vld [vmem:[%s1 + $0x58] sm:$0xff]
        %v891 = vld [vmem:[%s1 + $0x60] sm:$0xff]
        %v892 = vld [vmem:[%s1 + $0x68] sm:$0xff]
        %v893 = vld [vmem:[%s1 + $0x70] sm:$0xff]
        %v894 = vld [vmem:[%s1 + $0x78] sm:$0xff]
        %v895 = vld [vmem:[%s3] sm:$0xf]
        %v897 = vlaneseq
        %v898 = vshrl.u32 %v897, 7
        %v899 = vsub.s32 0, %v898
        %v900 = vrot.slane %v895, %v899
        %v901 = vlaneseq
        %v902 = vshrl.u32 %v901, 7
        %v903 = vsub.s32 1, %v902
        %v904 = vrot.slane %v895, %v903
        %v905 = vlaneseq
        %v906 = vshrl.u32 %v905, 7
        %v907 = vsub.s32 2, %v906
        %v908 = vrot.slane %v895, %v907
        %v909 = vlaneseq
        %v910 = vshrl.u32 %v909, 7
        %v911 = vsub.s32 3, %v910
        %v912 = vrot.slane %v895, %v911
        %v1045 = vunpack.c.l.b16 %v751
        %v1046 = vunpack.c.l.b16 %v752
        %v1047 = vunpack.c.l.b16 %v753
        %v1048 = vunpack.c.l.b16 %v754
        %v1049 = vunpack.c.l.b16 %v755
        %v1050 = vunpack.c.l.b16 %v756
        %v1051 = vunpack.c.l.b16 %v757
        %v1052 = vunpack.c.l.b16 %v758
        %v1053 = vunpack.c.l.b16 %v759
        %v1054 = vunpack.c.l.b16 %v760
        %v1055 = vunpack.c.l.b16 %v761
        %v1056 = vunpack.c.l.b16 %v762
        %v1057 = vunpack.c.l.b16 %v763
        %v1058 = vunpack.c.l.b16 %v764
        %v1059 = vunpack.c.l.b16 %v765
        %v1060 = vunpack.c.l.b16 %v766
        %v1061 = vunpack.c.l.b16 %v767
        %v1062 = vunpack.c.l.b16 %v768
        %v1063 = vunpack.c.l.b16 %v769
        %v1064 = vunpack.c.l.b16 %v770
        %v1065 = vunpack.c.l.b16 %v771
        %v1066 = vunpack.c.l.b16 %v772
        %v1067 = vunpack.c.l.b16 %v773
        %v1068 = vunpack.c.l.b16 %v774
        %v1069 = vunpack.c.l.b16 %v775
        %v1070 = vunpack.c.l.b16 %v776
        %v1071 = vunpack.c.l.b16 %v777
        %v1072 = vunpack.c.l.b16 %v778
        %v1073 = vunpack.c.l.b16 %v779
        %v1074 = vunpack.c.l.b16 %v780
        %v1075 = vunpack.c.l.b16 %v781
        %v1076 = vunpack.c.l.b16 %v782
        %v1077 = vunpack.c.l.b16 %v783
        %v1078 = vunpack.c.l.b16 %v784
        %v1079 = vunpack.c.l.b16 %v785
        %v1080 = vunpack.c.l.b16 %v786
        %v1081 = vunpack.c.l.b16 %v787
        %v1082 = vunpack.c.l.b16 %v788
        %v1083 = vunpack.c.l.b16 %v789
        %v1084 = vunpack.c.l.b16 %v790
        %v1085 = vunpack.c.l.b16 %v791
        %v1086 = vunpack.c.l.b16 %v792
        %v1087 = vunpack.c.l.b16 %v793
        %v1088 = vunpack.c.l.b16 %v794
        %v1089 = vunpack.c.l.b16 %v795
        %v1090 = vunpack.c.l.b16 %v796
        %v1091 = vunpack.c.l.b16 %v797
        %v1092 = vunpack.c.l.b16 %v798
        %v1093 = vunpack.c.l.b16 %v799
        %v1094 = vunpack.c.l.b16 %v800
        %v1095 = vunpack.c.l.b16 %v801
        %v1096 = vunpack.c.l.b16 %v802
        %v1097 = vunpack.c.l.b16 %v803
        %v1098 = vunpack.c.l.b16 %v804
        %v1099 = vunpack.c.l.b16 %v805
        %v1100 = vunpack.c.l.b16 %v806
        %v1101 = vunpack.c.l.b16 %v807
        %v1102 = vunpack.c.l.b16 %v808
        %v1103 = vunpack.c.l.b16 %v809
        %v1104 = vunpack.c.l.b16 %v810
        %v1105 = vunpack.c.l.b16 %v811
        %v1106 = vunpack.c.l.b16 %v812
        %v1107 = vunpack.c.l.b16 %v813
        %v1108 = vunpack.c.l.b16 %v814
        %v1109 = vunpack.c.l.b16 %v815
        %v1110 = vunpack.c.l.b16 %v816
        %v1111 = vunpack.c.l.b16 %v817
        %v1112 = vunpack.c.l.b16 %v818
        %v1113 = vunpack.c.l.b16 %v819
        %v1114 = vunpack.c.l.b16 %v820
        %v1115 = vunpack.c.l.b16 %v821
        %v1116 = vunpack.c.l.b16 %v822
        %v1117 = vunpack.c.l.b16 %v823
        %v1118 = vunpack.c.l.b16 %v824
        %v1119 = vunpack.c.l.b16 %v825
        %v1120 = vunpack.c.l.b16 %v826
        %v1121 = vunpack.c.l.b16 %v827
        %v1122 = vunpack.c.l.b16 %v828
        %v1123 = vunpack.c.l.b16 %v829
        %v1124 = vunpack.c.l.b16 %v830
        %v1125 = vunpack.c.l.b16 %v831
        %v1126 = vunpack.c.l.b16 %v832
        %v1127 = vunpack.c.l.b16 %v833
        %v1128 = vunpack.c.l.b16 %v834
        %v1129 = vunpack.c.l.b16 %v835
        %v1130 = vunpack.c.l.b16 %v836
        %v1131 = vunpack.c.l.b16 %v837
        %v1132 = vunpack.c.l.b16 %v838
        %v1133 = vunpack.c.l.b16 %v839
        %v1134 = vunpack.c.l.b16 %v840
        %v1135 = vunpack.c.l.b16 %v841
        %v1136 = vunpack.c.l.b16 %v842
        %v1137 = vunpack.c.l.b16 %v843
        %v1138 = vunpack.c.l.b16 %v844
        %v1139 = vunpack.c.l.b16 %v845
        %v1140 = vunpack.c.l.b16 %v846
        %v1141 = vunpack.c.l.b16 %v847
        %v1142 = vunpack.c.l.b16 %v848
        %v1143 = vunpack.c.l.b16 %v849
        %v1144 = vunpack.c.l.b16 %v850
        %v1145 = vunpack.c.l.b16 %v851
        %v1146 = vunpack.c.l.b16 %v852
        %v1147 = vunpack.c.l.b16 %v853
        %v1148 = vunpack.c.l.b16 %v854
        %v1149 = vunpack.c.l.b16 %v855
        %v1150 = vunpack.c.l.b16 %v856
        %v1151 = vunpack.c.l.b16 %v857
        %v1152 = vunpack.c.l.b16 %v858
        %v1153 = vunpack.c.l.b16 %v859
        %v1154 = vunpack.c.l.b16 %v860
        %v1155 = vunpack.c.l.b16 %v861
        %v1156 = vunpack.c.l.b16 %v862
        %v1157 = vunpack.c.l.b16 %v863
        %v1158 = vunpack.c.l.b16 %v864
        %v1159 = vunpack.c.l.b16 %v865
        %v1160 = vunpack.c.l.b16 %v866
        %v1161 = vunpack.c.l.b16 %v867
        %v1162 = vunpack.c.l.b16 %v868
        %v1163 = vunpack.c.l.b16 %v869
        %v1164 = vunpack.c.l.b16 %v870
        %v1165 = vunpack.c.l.b16 %v871
        %v1166 = vunpack.c.l.b16 %v872
        %v1167 = vunpack.c.l.b16 %v873
        %v1168 = vunpack.c.l.b16 %v874
        %v1169 = vunpack.c.l.b16 %v875
        %v1170 = vunpack.c.l.b16 %v876
        %v1171 = vunpack.c.l.b16 %v877
        %v1172 = vunpack.c.l.b16 %v878
        %v1173 = vpack.c.b16 %v1046, %v1045
        %v1174 = vpack.c.b16 %v1048, %v1047
        %v1175 = vpack.c.b16 %v1050, %v1049
        %v1176 = vpack.c.b16 %v1052, %v1051
        %v1177 = vpack.c.b16 %v1054, %v1053
        %v1178 = vpack.c.b16 %v1056, %v1055
        %v1179 = vpack.c.b16 %v1058, %v1057
        %v1180 = vpack.c.b16 %v1060, %v1059
        %v1181 = vpack.c.b16 %v1062, %v1061
        %v1182 = vpack.c.b16 %v1064, %v1063
        %v1183 = vpack.c.b16 %v1066, %v1065
        %v1184 = vpack.c.b16 %v1068, %v1067
        %v1185 = vpack.c.b16 %v1070, %v1069
        %v1186 = vpack.c.b16 %v1072, %v1071
        %v1187 = vpack.c.b16 %v1074, %v1073
        %v1188 = vpack.c.b16 %v1076, %v1075
        %v1189 = vpack.c.b16 %v1078, %v1077
        %v1190 = vpack.c.b16 %v1080, %v1079
        %v1191 = vpack.c.b16 %v1082, %v1081
        %v1192 = vpack.c.b16 %v1084, %v1083
        %v1193 = vpack.c.b16 %v1086, %v1085
        %v1194 = vpack.c.b16 %v1088, %v1087
        %v1195 = vpack.c.b16 %v1090, %v1089
        %v1196 = vpack.c.b16 %v1092, %v1091
        %v1197 = vpack.c.b16 %v1094, %v1093
        %v1198 = vpack.c.b16 %v1096, %v1095
        %v1199 = vpack.c.b16 %v1098, %v1097
        %v1200 = vpack.c.b16 %v1100, %v1099
        %v1201 = vpack.c.b16 %v1102, %v1101
        %v1202 = vpack.c.b16 %v1104, %v1103
        %v1203 = vpack.c.b16 %v1106, %v1105
        %v1204 = vpack.c.b16 %v1108, %v1107
        %v1205 = vpack.c.b16 %v1110, %v1109
        %v1206 = vpack.c.b16 %v1112, %v1111
        %v1207 = vpack.c.b16 %v1114, %v1113
        %v1208 = vpack.c.b16 %v1116, %v1115
        %v1209 = vpack.c.b16 %v1118, %v1117
        %v1210 = vpack.c.b16 %v1120, %v1119
        %v1211 = vpack.c.b16 %v1122, %v1121
        %v1212 = vpack.c.b16 %v1124, %v1123
        %v1213 = vpack.c.b16 %v1126, %v1125
        %v1214 = vpack.c.b16 %v1128, %v1127
        %v1215 = vpack.c.b16 %v1130, %v1129
        %v1216 = vpack.c.b16 %v1132, %v1131
        %v1217 = vpack.c.b16 %v1134, %v1133
        %v1218 = vpack.c.b16 %v1136, %v1135
        %v1219 = vpack.c.b16 %v1138, %v1137
        %v1220 = vpack.c.b16 %v1140, %v1139
        %v1221 = vpack.c.b16 %v1142, %v1141
        %v1222 = vpack.c.b16 %v1144, %v1143
        %v1223 = vpack.c.b16 %v1146, %v1145
        %v1224 = vpack.c.b16 %v1148, %v1147
        %v1225 = vpack.c.b16 %v1150, %v1149
        %v1226 = vpack.c.b16 %v1152, %v1151
        %v1227 = vpack.c.b16 %v1154, %v1153
        %v1228 = vpack.c.b16 %v1156, %v1155
        %v1229 = vpack.c.b16 %v1158, %v1157
        %v1230 = vpack.c.b16 %v1160, %v1159
        %v1231 = vpack.c.b16 %v1162, %v1161
        %v1232 = vpack.c.b16 %v1164, %v1163
        %v1233 = vpack.c.b16 %v1166, %v1165
        %v1234 = vpack.c.b16 %v1168, %v1167
        %v1235 = vpack.c.b16 %v1170, %v1169
        %v1236 = vpack.c.b16 %v1172, %v1171
        %v1253 = vunpack.c.l.b16 %v879
        %v1254 = vunpack.c.h.b16 %v879
        %v1255 = vunpack.c.l.b16 %v880
        %v1256 = vunpack.c.h.b16 %v880
        %v1257 = vunpack.c.l.b16 %v881
        %v1258 = vunpack.c.h.b16 %v881
        %v1259 = vunpack.c.l.b16 %v882
        %v1260 = vunpack.c.h.b16 %v882
        %v1261 = vunpack.c.l.b16 %v883
        %v1262 = vunpack.c.h.b16 %v883
        %v1263 = vunpack.c.l.b16 %v884
        %v1264 = vunpack.c.h.b16 %v884
        %v1265 = vunpack.c.l.b16 %v885
        %v1266 = vunpack.c.h.b16 %v885
        %v1267 = vunpack.c.l.b16 %v886
        %v1268 = vunpack.c.h.b16 %v886
        %v1269 = vunpack.c.l.b16 %v887
        %v1270 = vunpack.c.h.b16 %v887
        %v1271 = vunpack.c.l.b16 %v888
        %v1272 = vunpack.c.h.b16 %v888
        %v1273 = vunpack.c.l.b16 %v889
        %v1274 = vunpack.c.h.b16 %v889
        %v1275 = vunpack.c.l.b16 %v890
        %v1276 = vunpack.c.h.b16 %v890
        %v1277 = vunpack.c.l.b16 %v891
        %v1278 = vunpack.c.h.b16 %v891
        %v1279 = vunpack.c.l.b16 %v892
        %v1280 = vunpack.c.h.b16 %v892
        %v1281 = vunpack.c.l.b16 %v893
        %v1282 = vunpack.c.h.b16 %v893
        %v1283 = vunpack.c.l.b16 %v894
        %v1284 = vunpack.c.h.b16 %v894
        %v1285 = vpack.c.b16 %v1257, %v1253
        %v1286 = vpack.c.b16 %v1258, %v1254
        %v1287 = vpack.c.b16 %v1259, %v1255
        %v1288 = vpack.c.b16 %v1260, %v1256
        %v1289 = vpack.c.b16 %v1265, %v1261
        %v1290 = vpack.c.b16 %v1266, %v1262
        %v1291 = vpack.c.b16 %v1267, %v1263
        %v1292 = vpack.c.b16 %v1268, %v1264
        %v1293 = vpack.c.b16 %v1273, %v1269
        %v1294 = vpack.c.b16 %v1274, %v1270
        %v1295 = vpack.c.b16 %v1275, %v1271
        %v1296 = vpack.c.b16 %v1276, %v1272
        %v1297 = vpack.c.b16 %v1281, %v1277
        %v1298 = vpack.c.b16 %v1282, %v1278
        %v1299 = vpack.c.b16 %v1283, %v1279
        %v1300 = vpack.c.b16 %v1284, %v1280
        %vm1317 = vcmask 523264
        %v1319 = vsel %vm1317, %v1173, 0
        %v1322 = vsel %vm1317, %v1174, 0
        %v1325 = vsel %vm1317, %v1175, 0
        %v1328 = vsel %vm1317, %v1176, 0
        %v1331 = vsel %vm1317, %v1177, 0
        %v1334 = vsel %vm1317, %v1178, 0
        %v1337 = vsel %vm1317, %v1179, 0
        %v1340 = vsel %vm1317, %v1180, 0
        %v1343 = vsel %vm1317, %v1181, 0
        %v1346 = vsel %vm1317, %v1182, 0
        %v1349 = vsel %vm1317, %v1183, 0
        %v1352 = vsel %vm1317, %v1184, 0
        %v1355 = vsel %vm1317, %v1185, 0
        %v1358 = vsel %vm1317, %v1186, 0
        %v1361 = vsel %vm1317, %v1187, 0
        %v1364 = vsel %vm1317, %v1188, 0
        %v1367 = vsel %vm1317, %v1189, 0
        %v1370 = vsel %vm1317, %v1190, 0
        %v1373 = vsel %vm1317, %v1191, 0
        %v1376 = vsel %vm1317, %v1192, 0
        %v1379 = vsel %vm1317, %v1193, 0
        %v1382 = vsel %vm1317, %v1194, 0
        %v1385 = vsel %vm1317, %v1195, 0
        %v1388 = vsel %vm1317, %v1196, 0
        %v1391 = vsel %vm1317, %v1197, 0
        %v1394 = vsel %vm1317, %v1198, 0
        %v1397 = vsel %vm1317, %v1199, 0
        %v1400 = vsel %vm1317, %v1200, 0
        %v1403 = vsel %vm1317, %v1201, 0
        %v1406 = vsel %vm1317, %v1202, 0
        %v1409 = vsel %vm1317, %v1203, 0
        %v1412 = vsel %vm1317, %v1204, 0
        %v1415 = vsel %vm1317, %v1205, 0
        %v1418 = vsel %vm1317, %v1206, 0
        %v1421 = vsel %vm1317, %v1207, 0
        %v1424 = vsel %vm1317, %v1208, 0
        %v1427 = vsel %vm1317, %v1209, 0
        %v1430 = vsel %vm1317, %v1210, 0
        %v1433 = vsel %vm1317, %v1211, 0
        %v1436 = vsel %vm1317, %v1212, 0
        %v1439 = vsel %vm1317, %v1213, 0
        %v1442 = vsel %vm1317, %v1214, 0
        %v1445 = vsel %vm1317, %v1215, 0
        %v1448 = vsel %vm1317, %v1216, 0
        %v1451 = vsel %vm1317, %v1217, 0
        %v1454 = vsel %vm1317, %v1218, 0
        %v1457 = vsel %vm1317, %v1219, 0
        %v1460 = vsel %vm1317, %v1220, 0
        %v1463 = vsel %vm1317, %v1221, 0
        %v1466 = vsel %vm1317, %v1222, 0
        %v1469 = vsel %vm1317, %v1223, 0
        %v1472 = vsel %vm1317, %v1224, 0
        %v1475 = vsel %vm1317, %v1225, 0
        %v1478 = vsel %vm1317, %v1226, 0
        %v1481 = vsel %vm1317, %v1227, 0
        %v1484 = vsel %vm1317, %v1228, 0
        %v1487 = vsel %vm1317, %v1229, 0
        %v1490 = vsel %vm1317, %v1230, 0
        %v1493 = vsel %vm1317, %v1231, 0
        %v1496 = vsel %vm1317, %v1232, 0
        %v1499 = vsel %vm1317, %v1233, 0
        %v1502 = vsel %vm1317, %v1234, 0
        %v1505 = vsel %vm1317, %v1235, 0
        %v1508 = vsel %vm1317, %v1236, 0
        %1510 = vmatprep.subr.bf16.mxu0 0
        %1511 = vmatpush1.bf16.msra.mxu0 0
        %1512 = vmatprep.subr.bf16.mxu0 0
        %1513 = vmatpush1.bf16.msra.mxu0 0
        %1514 = vmatprep.subr.bf16.mxu0 0
        %1515 = vmatpush1.bf16.msra.mxu0 0
        %1516 = vmatprep.subr.bf16.mxu0 0
        %1517 = vmatpush1.bf16.msra.mxu0 0
        %1518 = vmatprep.subr.bf16.mxu0 %v1298
        %1519 = vmatpush1.bf16.msra.mxu0 %v1297
        %1520 = vmatprep.subr.bf16.mxu0 %v1294
        %1521 = vmatpush1.bf16.msra.mxu0 %v1293
        %1522 = vmatprep.subr.bf16.mxu0 %v1290
        %1523 = vmatpush1.bf16.msra.mxu0 %v1289
        %1524 = vmatprep.subr.bf16.mxu0 %v1286
        %1525 = vmatpush1.bf16.msra.mxu0 %v1285
        %1526 = vmatprep.subr.bf16.mxu0 0
        %1527 = vmatpush2.bf16.msra.mxu0 0
        %1528 = vmatprep.subr.bf16.mxu0 0
        %1529 = vmatpush2.bf16.msra.mxu0 0
        %1530 = vmatprep.subr.bf16.mxu0 0
        %1531 = vmatpush2.bf16.msra.mxu0 0
        %1532 = vmatprep.subr.bf16.mxu0 0
        %1533 = vmatpush2.bf16.msra.mxu0 0
        %1534 = vmatprep.subr.bf16.mxu0 0
        %1535 = vmatpush2.bf16.msra.mxu0 0
        %1536 = vmatprep.subr.bf16.mxu0 0
        %1537 = vmatpush2.bf16.msra.mxu0 0
        %1538 = vmatprep.subr.bf16.mxu0 0
        %1539 = vmatpush2.bf16.msra.mxu0 0
        %1540 = vmatprep.subr.bf16.mxu0 0
        %1541 = vmatpush2.bf16.msra.mxu0 0
        %1542 = vmatprep.mubr.bf16.mxu0 0
        %1543 = vmatmul.mubr.bf16.gmra.mxu0 %v1319
        %v1544 = vpop.f32.mrf.mxu0
        %v1545 = vadd.f32 %v900, %v1544
        %v1546 = vpop.f32.mrf.mxu0
        %v1547 = vadd.f32 %v904, %v1546
        %v1548 = vpop.f32.mrf.mxu0
        %v1549 = vadd.f32 %v900, %v1548
        %v1550 = vpop.f32.mrf.mxu0
        %v1551 = vadd.f32 %v904, %v1550
        %1552 = vmatprep.mubr.bf16.mxu0 0
        %1553 = vmatmul.mubr.bf16.gmra.mxu0 %v1322
        %v1554 = vpop.f32.mrf.mxu0
        %v1555 = vadd.f32 %v900, %v1554
        %v1556 = vpop.f32.mrf.mxu0
        %v1557 = vadd.f32 %v904, %v1556
        %v1558 = vpop.f32.mrf.mxu0
        %v1559 = vadd.f32 %v900, %v1558
        %v1560 = vpop.f32.mrf.mxu0
        %v1561 = vadd.f32 %v904, %v1560
        %1562 = vmatprep.mubr.bf16.mxu0 0
        %1563 = vmatmul.mubr.bf16.gmra.mxu0 %v1325
        %v1564 = vpop.f32.mrf.mxu0
        %v1565 = vadd.f32 %v900, %v1564
        %v1566 = vpop.f32.mrf.mxu0
        %v1567 = vadd.f32 %v904, %v1566
        %v1568 = vpop.f32.mrf.mxu0
        %v1569 = vadd.f32 %v900, %v1568
        %v1570 = vpop.f32.mrf.mxu0
        %v1571 = vadd.f32 %v904, %v1570
        %1572 = vmatprep.mubr.bf16.mxu0 0
        %1573 = vmatmul.mubr.bf16.gmra.mxu0 %v1328
        %v1574 = vpop.f32.mrf.mxu0
        %v1575 = vadd.f32 %v900, %v1574
        %v1576 = vpop.f32.mrf.mxu0
        %v1577 = vadd.f32 %v904, %v1576
        %v1578 = vpop.f32.mrf.mxu0
        %v1579 = vadd.f32 %v900, %v1578
        %v1580 = vpop.f32.mrf.mxu0
        %v1581 = vadd.f32 %v904, %v1580
        %1582 = vmatprep.mubr.bf16.mxu0 0
        %1583 = vmatmul.mubr.bf16.gmra.mxu0 %v1331
        %v1584 = vpop.f32.mrf.mxu0
        %v1585 = vadd.f32 %v900, %v1584
        %v1586 = vpop.f32.mrf.mxu0
        %v1587 = vadd.f32 %v904, %v1586
        %v1588 = vpop.f32.mrf.mxu0
        %v1589 = vadd.f32 %v900, %v1588
        %v1590 = vpop.f32.mrf.mxu0
        %v1591 = vadd.f32 %v904, %v1590
        %1592 = vmatprep.mubr.bf16.mxu0 0
        %1593 = vmatmul.mubr.bf16.gmra.mxu0 %v1334
        %v1594 = vpop.f32.mrf.mxu0
        %v1595 = vadd.f32 %v900, %v1594
        %v1596 = vpop.f32.mrf.mxu0
        %v1597 = vadd.f32 %v904, %v1596
        %v1598 = vpop.f32.mrf.mxu0
        %v1599 = vadd.f32 %v900, %v1598
        %v1600 = vpop.f32.mrf.mxu0
        %v1601 = vadd.f32 %v904, %v1600
        %1602 = vmatprep.mubr.bf16.mxu0 0
        %1603 = vmatmul.mubr.bf16.gmra.mxu0 %v1337
        %v1604 = vpop.f32.mrf.mxu0
        %v1605 = vadd.f32 %v900, %v1604
        %v1606 = vpop.f32.mrf.mxu0
        %v1607 = vadd.f32 %v904, %v1606
        %v1608 = vpop.f32.mrf.mxu0
        %v1609 = vadd.f32 %v900, %v1608
        %v1610 = vpop.f32.mrf.mxu0
        %v1611 = vadd.f32 %v904, %v1610
        %1612 = vmatprep.mubr.bf16.mxu0 0
        %1613 = vmatmul.mubr.bf16.gmra.mxu0 %v1340
        %v1614 = vpop.f32.mrf.mxu0
        %v1615 = vadd.f32 %v900, %v1614
        %v1616 = vpop.f32.mrf.mxu0
        %v1617 = vadd.f32 %v904, %v1616
        %v1618 = vpop.f32.mrf.mxu0
        %v1619 = vadd.f32 %v900, %v1618
        %v1620 = vpop.f32.mrf.mxu0
        %v1621 = vadd.f32 %v904, %v1620
        %1622 = vmatprep.mubr.bf16.mxu0 0
        %1623 = vmatmul.mubr.bf16.gmra.mxu0 %v1343
        %v1624 = vpop.f32.mrf.mxu0
        %v1625 = vadd.f32 %v900, %v1624
        %v1626 = vpop.f32.mrf.mxu0
        %v1627 = vadd.f32 %v904, %v1626
        %v1628 = vpop.f32.mrf.mxu0
        %v1629 = vadd.f32 %v900, %v1628
        %v1630 = vpop.f32.mrf.mxu0
        %v1631 = vadd.f32 %v904, %v1630
        %1632 = vmatprep.mubr.bf16.mxu0 0
        %1633 = vmatmul.mubr.bf16.gmra.mxu0 %v1346
        %v1634 = vpop.f32.mrf.mxu0
        %v1635 = vadd.f32 %v900, %v1634
        %v1636 = vpop.f32.mrf.mxu0
        %v1637 = vadd.f32 %v904, %v1636
        %v1638 = vpop.f32.mrf.mxu0
        %v1639 = vadd.f32 %v900, %v1638
        %v1640 = vpop.f32.mrf.mxu0
        %v1641 = vadd.f32 %v904, %v1640
        %1642 = vmatprep.mubr.bf16.mxu0 0
        %1643 = vmatmul.mubr.bf16.gmra.mxu0 %v1349
        %v1644 = vpop.f32.mrf.mxu0
        %v1645 = vadd.f32 %v900, %v1644
        %v1646 = vpop.f32.mrf.mxu0
        %v1647 = vadd.f32 %v904, %v1646
        %v1648 = vpop.f32.mrf.mxu0
        %v1649 = vadd.f32 %v900, %v1648
        %v1650 = vpop.f32.mrf.mxu0
        %v1651 = vadd.f32 %v904, %v1650
        %1652 = vmatprep.mubr.bf16.mxu0 0
        %1653 = vmatmul.mubr.bf16.gmra.mxu0 %v1352
        %v1654 = vpop.f32.mrf.mxu0
        %v1655 = vadd.f32 %v900, %v1654
        %v1656 = vpop.f32.mrf.mxu0
        %v1657 = vadd.f32 %v904, %v1656
        %v1658 = vpop.f32.mrf.mxu0
        %v1659 = vadd.f32 %v900, %v1658
        %v1660 = vpop.f32.mrf.mxu0
        %v1661 = vadd.f32 %v904, %v1660
        %1662 = vmatprep.mubr.bf16.mxu0 0
        %1663 = vmatmul.mubr.bf16.gmra.mxu0 %v1355
        %v1664 = vpop.f32.mrf.mxu0
        %v1665 = vadd.f32 %v900, %v1664
        %v1666 = vpop.f32.mrf.mxu0
        %v1667 = vadd.f32 %v904, %v1666
        %v1668 = vpop.f32.mrf.mxu0
        %v1669 = vadd.f32 %v900, %v1668
        %v1670 = vpop.f32.mrf.mxu0
        %v1671 = vadd.f32 %v904, %v1670
        %1672 = vmatprep.mubr.bf16.mxu0 0
        %1673 = vmatmul.mubr.bf16.gmra.mxu0 %v1358
        %v1674 = vpop.f32.mrf.mxu0
        %v1675 = vadd.f32 %v900, %v1674
        %v1676 = vpop.f32.mrf.mxu0
        %v1677 = vadd.f32 %v904, %v1676
        %v1678 = vpop.f32.mrf.mxu0
        %v1679 = vadd.f32 %v900, %v1678
        %v1680 = vpop.f32.mrf.mxu0
        %v1681 = vadd.f32 %v904, %v1680
        %1682 = vmatprep.mubr.bf16.mxu0 0
        %1683 = vmatmul.mubr.bf16.gmra.mxu0 %v1361
        %v1684 = vpop.f32.mrf.mxu0
        %v1685 = vadd.f32 %v900, %v1684
        %v1686 = vpop.f32.mrf.mxu0
        %v1687 = vadd.f32 %v904, %v1686
        %v1688 = vpop.f32.mrf.mxu0
        %v1689 = vadd.f32 %v900, %v1688
        %v1690 = vpop.f32.mrf.mxu0
        %v1691 = vadd.f32 %v904, %v1690
        %1692 = vmatprep.mubr.bf16.mxu0 0
        %1693 = vmatmul.mubr.bf16.gmra.mxu0 %v1364
        %v1694 = vpop.f32.mrf.mxu0
        %v1695 = vadd.f32 %v900, %v1694
        %v1696 = vpop.f32.mrf.mxu0
        %v1697 = vadd.f32 %v904, %v1696
        %v1698 = vpop.f32.mrf.mxu0
        %v1699 = vadd.f32 %v900, %v1698
        %v1700 = vpop.f32.mrf.mxu0
        %v1701 = vadd.f32 %v904, %v1700
        %1702 = vmatprep.mubr.bf16.mxu0 0
        %1703 = vmatmul.mubr.bf16.gmra.mxu0 %v1367
        %v1704 = vpop.f32.mrf.mxu0
        %v1705 = vadd.f32 %v900, %v1704
        %v1706 = vpop.f32.mrf.mxu0
        %v1707 = vadd.f32 %v904, %v1706
        %v1708 = vpop.f32.mrf.mxu0
        %v1709 = vadd.f32 %v900, %v1708
        %v1710 = vpop.f32.mrf.mxu0
        %v1711 = vadd.f32 %v904, %v1710
        %1712 = vmatprep.mubr.bf16.mxu0 0
        %1713 = vmatmul.mubr.bf16.gmra.mxu0 %v1370
        %v1714 = vpop.f32.mrf.mxu0
        %v1715 = vadd.f32 %v900, %v1714
        %v1716 = vpop.f32.mrf.mxu0
        %v1717 = vadd.f32 %v904, %v1716
        %v1718 = vpop.f32.mrf.mxu0
        %v1719 = vadd.f32 %v900, %v1718
        %v1720 = vpop.f32.mrf.mxu0
        %v1721 = vadd.f32 %v904, %v1720
        %1722 = vmatprep.mubr.bf16.mxu0 0
        %1723 = vmatmul.mubr.bf16.gmra.mxu0 %v1373
        %v1724 = vpop.f32.mrf.mxu0
        %v1725 = vadd.f32 %v900, %v1724
        %v1726 = vpop.f32.mrf.mxu0
        %v1727 = vadd.f32 %v904, %v1726
        %v1728 = vpop.f32.mrf.mxu0
        %v1729 = vadd.f32 %v900, %v1728
        %v1730 = vpop.f32.mrf.mxu0
        %v1731 = vadd.f32 %v904, %v1730
        %1732 = vmatprep.mubr.bf16.mxu0 0
        %1733 = vmatmul.mubr.bf16.gmra.mxu0 %v1376
        %v1734 = vpop.f32.mrf.mxu0
        %v1735 = vadd.f32 %v900, %v1734
        %v1736 = vpop.f32.mrf.mxu0
        %v1737 = vadd.f32 %v904, %v1736
        %v1738 = vpop.f32.mrf.mxu0
        %v1739 = vadd.f32 %v900, %v1738
        %v1740 = vpop.f32.mrf.mxu0
        %v1741 = vadd.f32 %v904, %v1740
        %1742 = vmatprep.mubr.bf16.mxu0 0
        %1743 = vmatmul.mubr.bf16.gmra.mxu0 %v1379
        %v1744 = vpop.f32.mrf.mxu0
        %v1745 = vadd.f32 %v900, %v1744
        %v1746 = vpop.f32.mrf.mxu0
        %v1747 = vadd.f32 %v904, %v1746
        %v1748 = vpop.f32.mrf.mxu0
        %v1749 = vadd.f32 %v900, %v1748
        %v1750 = vpop.f32.mrf.mxu0
        %v1751 = vadd.f32 %v904, %v1750
        %1752 = vmatprep.mubr.bf16.mxu0 0
        %1753 = vmatmul.mubr.bf16.gmra.mxu0 %v1382
        %v1754 = vpop.f32.mrf.mxu0
        %v1755 = vadd.f32 %v900, %v1754
        %v1756 = vpop.f32.mrf.mxu0
        %v1757 = vadd.f32 %v904, %v1756
        %v1758 = vpop.f32.mrf.mxu0
        %v1759 = vadd.f32 %v900, %v1758
        %v1760 = vpop.f32.mrf.mxu0
        %v1761 = vadd.f32 %v904, %v1760
        %1762 = vmatprep.mubr.bf16.mxu0 0
        %1763 = vmatmul.mubr.bf16.gmra.mxu0 %v1385
        %v1764 = vpop.f32.mrf.mxu0
        %v1765 = vadd.f32 %v900, %v1764
        %v1766 = vpop.f32.mrf.mxu0
        %v1767 = vadd.f32 %v904, %v1766
        %v1768 = vpop.f32.mrf.mxu0
        %v1769 = vadd.f32 %v900, %v1768
        %v1770 = vpop.f32.mrf.mxu0
        %v1771 = vadd.f32 %v904, %v1770
        %1772 = vmatprep.mubr.bf16.mxu0 0
        %1773 = vmatmul.mubr.bf16.gmra.mxu0 %v1388
        %v1774 = vpop.f32.mrf.mxu0
        %v1775 = vadd.f32 %v900, %v1774
        %v1776 = vpop.f32.mrf.mxu0
        %v1777 = vadd.f32 %v904, %v1776
        %v1778 = vpop.f32.mrf.mxu0
        %v1779 = vadd.f32 %v900, %v1778
        %v1780 = vpop.f32.mrf.mxu0
        %v1781 = vadd.f32 %v904, %v1780
        %1782 = vmatprep.mubr.bf16.mxu0 0
        %1783 = vmatmul.mubr.bf16.gmra.mxu0 %v1391
        %v1784 = vpop.f32.mrf.mxu0
        %v1785 = vadd.f32 %v900, %v1784
        %v1786 = vpop.f32.mrf.mxu0
        %v1787 = vadd.f32 %v904, %v1786
        %v1788 = vpop.f32.mrf.mxu0
        %v1789 = vadd.f32 %v900, %v1788
        %v1790 = vpop.f32.mrf.mxu0
        %v1791 = vadd.f32 %v904, %v1790
        %1792 = vmatprep.mubr.bf16.mxu0 0
        %1793 = vmatmul.mubr.bf16.gmra.mxu0 %v1394
        %v1794 = vpop.f32.mrf.mxu0
        %v1795 = vadd.f32 %v900, %v1794
        %v1796 = vpop.f32.mrf.mxu0
        %v1797 = vadd.f32 %v904, %v1796
        %v1798 = vpop.f32.mrf.mxu0
        %v1799 = vadd.f32 %v900, %v1798
        %v1800 = vpop.f32.mrf.mxu0
        %v1801 = vadd.f32 %v904, %v1800
        %1802 = vmatprep.mubr.bf16.mxu0 0
        %1803 = vmatmul.mubr.bf16.gmra.mxu0 %v1397
        %v1804 = vpop.f32.mrf.mxu0
        %v1805 = vadd.f32 %v900, %v1804
        %v1806 = vpop.f32.mrf.mxu0
        %v1807 = vadd.f32 %v904, %v1806
        %v1808 = vpop.f32.mrf.mxu0
        %v1809 = vadd.f32 %v900, %v1808
        %v1810 = vpop.f32.mrf.mxu0
        %v1811 = vadd.f32 %v904, %v1810
        %1812 = vmatprep.mubr.bf16.mxu0 0
        %1813 = vmatmul.mubr.bf16.gmra.mxu0 %v1400
        %v1814 = vpop.f32.mrf.mxu0
        %v1815 = vadd.f32 %v900, %v1814
        %v1816 = vpop.f32.mrf.mxu0
        %v1817 = vadd.f32 %v904, %v1816
        %v1818 = vpop.f32.mrf.mxu0
        %v1819 = vadd.f32 %v900, %v1818
        %v1820 = vpop.f32.mrf.mxu0
        %v1821 = vadd.f32 %v904, %v1820
        %1822 = vmatprep.mubr.bf16.mxu0 0
        %1823 = vmatmul.mubr.bf16.gmra.mxu0 %v1403
        %v1824 = vpop.f32.mrf.mxu0
        %v1825 = vadd.f32 %v900, %v1824
        %v1826 = vpop.f32.mrf.mxu0
        %v1827 = vadd.f32 %v904, %v1826
        %v1828 = vpop.f32.mrf.mxu0
        %v1829 = vadd.f32 %v900, %v1828
        %v1830 = vpop.f32.mrf.mxu0
        %v1831 = vadd.f32 %v904, %v1830
        %1832 = vmatprep.mubr.bf16.mxu0 0
        %1833 = vmatmul.mubr.bf16.gmra.mxu0 %v1406
        %v1834 = vpop.f32.mrf.mxu0
        %v1835 = vadd.f32 %v900, %v1834
        %v1836 = vpop.f32.mrf.mxu0
        %v1837 = vadd.f32 %v904, %v1836
        %v1838 = vpop.f32.mrf.mxu0
        %v1839 = vadd.f32 %v900, %v1838
        %v1840 = vpop.f32.mrf.mxu0
        %v1841 = vadd.f32 %v904, %v1840
        %1842 = vmatprep.mubr.bf16.mxu0 0
        %1843 = vmatmul.mubr.bf16.gmra.mxu0 %v1409
        %v1844 = vpop.f32.mrf.mxu0
        %v1845 = vadd.f32 %v900, %v1844
        %v1846 = vpop.f32.mrf.mxu0
        %v1847 = vadd.f32 %v904, %v1846
        %v1848 = vpop.f32.mrf.mxu0
        %v1849 = vadd.f32 %v900, %v1848
        %v1850 = vpop.f32.mrf.mxu0
        %v1851 = vadd.f32 %v904, %v1850
        %1852 = vmatprep.mubr.bf16.mxu0 0
        %1853 = vmatmul.mubr.bf16.gmra.mxu0 %v1412
        %v1854 = vpop.f32.mrf.mxu0
        %v1855 = vadd.f32 %v900, %v1854
        %v1856 = vpop.f32.mrf.mxu0
        %v1857 = vadd.f32 %v904, %v1856
        %v1858 = vpop.f32.mrf.mxu0
        %v1859 = vadd.f32 %v900, %v1858
        %v1860 = vpop.f32.mrf.mxu0
        %v1861 = vadd.f32 %v904, %v1860
        %1862 = vmatprep.mubr.bf16.mxu0 0
        %1863 = vmatmul.mubr.bf16.gmra.mxu0 %v1415
        %v1864 = vpop.f32.mrf.mxu0
        %v1865 = vadd.f32 %v900, %v1864
        %v1866 = vpop.f32.mrf.mxu0
        %v1867 = vadd.f32 %v904, %v1866
        %v1868 = vpop.f32.mrf.mxu0
        %v1869 = vadd.f32 %v900, %v1868
        %v1870 = vpop.f32.mrf.mxu0
        %v1871 = vadd.f32 %v904, %v1870
        %1872 = vmatprep.mubr.bf16.mxu0 0
        %1873 = vmatmul.mubr.bf16.gmra.mxu0 %v1418
        %v1874 = vpop.f32.mrf.mxu0
        %v1875 = vadd.f32 %v900, %v1874
        %v1876 = vpop.f32.mrf.mxu0
        %v1877 = vadd.f32 %v904, %v1876
        %v1878 = vpop.f32.mrf.mxu0
        %v1879 = vadd.f32 %v900, %v1878
        %v1880 = vpop.f32.mrf.mxu0
        %v1881 = vadd.f32 %v904, %v1880
        %1882 = vmatprep.mubr.bf16.mxu0 0
        %1883 = vmatmul.mubr.bf16.gmra.mxu0 %v1421
        %v1884 = vpop.f32.mrf.mxu0
        %v1885 = vadd.f32 %v900, %v1884
        %v1886 = vpop.f32.mrf.mxu0
        %v1887 = vadd.f32 %v904, %v1886
        %v1888 = vpop.f32.mrf.mxu0
        %v1889 = vadd.f32 %v900, %v1888
        %v1890 = vpop.f32.mrf.mxu0
        %v1891 = vadd.f32 %v904, %v1890
        %1892 = vmatprep.mubr.bf16.mxu0 0
        %1893 = vmatmul.mubr.bf16.gmra.mxu0 %v1424
        %v1894 = vpop.f32.mrf.mxu0
        %v1895 = vadd.f32 %v900, %v1894
        %v1896 = vpop.f32.mrf.mxu0
        %v1897 = vadd.f32 %v904, %v1896
        %v1898 = vpop.f32.mrf.mxu0
        %v1899 = vadd.f32 %v900, %v1898
        %v1900 = vpop.f32.mrf.mxu0
        %v1901 = vadd.f32 %v904, %v1900
        %1902 = vmatprep.mubr.bf16.mxu0 0
        %1903 = vmatmul.mubr.bf16.gmra.mxu0 %v1427
        %v1904 = vpop.f32.mrf.mxu0
        %v1905 = vadd.f32 %v900, %v1904
        %v1906 = vpop.f32.mrf.mxu0
        %v1907 = vadd.f32 %v904, %v1906
        %v1908 = vpop.f32.mrf.mxu0
        %v1909 = vadd.f32 %v900, %v1908
        %v1910 = vpop.f32.mrf.mxu0
        %v1911 = vadd.f32 %v904, %v1910
        %1912 = vmatprep.mubr.bf16.mxu0 0
        %1913 = vmatmul.mubr.bf16.gmra.mxu0 %v1430
        %v1914 = vpop.f32.mrf.mxu0
        %v1915 = vadd.f32 %v900, %v1914
        %v1916 = vpop.f32.mrf.mxu0
        %v1917 = vadd.f32 %v904, %v1916
        %v1918 = vpop.f32.mrf.mxu0
        %v1919 = vadd.f32 %v900, %v1918
        %v1920 = vpop.f32.mrf.mxu0
        %v1921 = vadd.f32 %v904, %v1920
        %1922 = vmatprep.mubr.bf16.mxu0 0
        %1923 = vmatmul.mubr.bf16.gmra.mxu0 %v1433
        %v1924 = vpop.f32.mrf.mxu0
        %v1925 = vadd.f32 %v900, %v1924
        %v1926 = vpop.f32.mrf.mxu0
        %v1927 = vadd.f32 %v904, %v1926
        %v1928 = vpop.f32.mrf.mxu0
        %v1929 = vadd.f32 %v900, %v1928
        %v1930 = vpop.f32.mrf.mxu0
        %v1931 = vadd.f32 %v904, %v1930
        %1932 = vmatprep.mubr.bf16.mxu0 0
        %1933 = vmatmul.mubr.bf16.gmra.mxu0 %v1436
        %v1934 = vpop.f32.mrf.mxu0
        %v1935 = vadd.f32 %v900, %v1934
        %v1936 = vpop.f32.mrf.mxu0
        %v1937 = vadd.f32 %v904, %v1936
        %v1938 = vpop.f32.mrf.mxu0
        %v1939 = vadd.f32 %v900, %v1938
        %v1940 = vpop.f32.mrf.mxu0
        %v1941 = vadd.f32 %v904, %v1940
        %1942 = vmatprep.mubr.bf16.mxu0 0
        %1943 = vmatmul.mubr.bf16.gmra.mxu0 %v1439
        %v1944 = vpop.f32.mrf.mxu0
        %v1945 = vadd.f32 %v900, %v1944
        %v1946 = vpop.f32.mrf.mxu0
        %v1947 = vadd.f32 %v904, %v1946
        %v1948 = vpop.f32.mrf.mxu0
        %v1949 = vadd.f32 %v900, %v1948
        %v1950 = vpop.f32.mrf.mxu0
        %v1951 = vadd.f32 %v904, %v1950
        %1952 = vmatprep.mubr.bf16.mxu0 0
        %1953 = vmatmul.mubr.bf16.gmra.mxu0 %v1442
        %v1954 = vpop.f32.mrf.mxu0
        %v1955 = vadd.f32 %v900, %v1954
        %v1956 = vpop.f32.mrf.mxu0
        %v1957 = vadd.f32 %v904, %v1956
        %v1958 = vpop.f32.mrf.mxu0
        %v1959 = vadd.f32 %v900, %v1958
        %v1960 = vpop.f32.mrf.mxu0
        %v1961 = vadd.f32 %v904, %v1960
        %1962 = vmatprep.mubr.bf16.mxu0 0
        %1963 = vmatmul.mubr.bf16.gmra.mxu0 %v1445
        %v1964 = vpop.f32.mrf.mxu0
        %v1965 = vadd.f32 %v900, %v1964
        %v1966 = vpop.f32.mrf.mxu0
        %v1967 = vadd.f32 %v904, %v1966
        %v1968 = vpop.f32.mrf.mxu0
        %v1969 = vadd.f32 %v900, %v1968
        %v1970 = vpop.f32.mrf.mxu0
        %v1971 = vadd.f32 %v904, %v1970
        %1972 = vmatprep.mubr.bf16.mxu0 0
        %1973 = vmatmul.mubr.bf16.gmra.mxu0 %v1448
        %v1974 = vpop.f32.mrf.mxu0
        %v1975 = vadd.f32 %v900, %v1974
        %v1976 = vpop.f32.mrf.mxu0
        %v1977 = vadd.f32 %v904, %v1976
        %v1978 = vpop.f32.mrf.mxu0
        %v1979 = vadd.f32 %v900, %v1978
        %v1980 = vpop.f32.mrf.mxu0
        %v1981 = vadd.f32 %v904, %v1980
        %1982 = vmatprep.mubr.bf16.mxu0 0
        %1983 = vmatmul.mubr.bf16.gmra.mxu0 %v1451
        %v1984 = vpop.f32.mrf.mxu0
        %v1985 = vadd.f32 %v900, %v1984
        %v1986 = vpop.f32.mrf.mxu0
        %v1987 = vadd.f32 %v904, %v1986
        %v1988 = vpop.f32.mrf.mxu0
        %v1989 = vadd.f32 %v900, %v1988
        %v1990 = vpop.f32.mrf.mxu0
        %v1991 = vadd.f32 %v904, %v1990
        %1992 = vmatprep.mubr.bf16.mxu0 0
        %1993 = vmatmul.mubr.bf16.gmra.mxu0 %v1454
        %v1994 = vpop.f32.mrf.mxu0
        %v1995 = vadd.f32 %v900, %v1994
        %v1996 = vpop.f32.mrf.mxu0
        %v1997 = vadd.f32 %v904, %v1996
        %v1998 = vpop.f32.mrf.mxu0
        %v1999 = vadd.f32 %v900, %v1998
        %v2000 = vpop.f32.mrf.mxu0
        %v2001 = vadd.f32 %v904, %v2000
        %2002 = vmatprep.mubr.bf16.mxu0 0
        %2003 = vmatmul.mubr.bf16.gmra.mxu0 %v1457
        %v2004 = vpop.f32.mrf.mxu0
        %v2005 = vadd.f32 %v900, %v2004
        %v2006 = vpop.f32.mrf.mxu0
        %v2007 = vadd.f32 %v904, %v2006
        %v2008 = vpop.f32.mrf.mxu0
        %v2009 = vadd.f32 %v900, %v2008
        %v2010 = vpop.f32.mrf.mxu0
        %v2011 = vadd.f32 %v904, %v2010
        %2012 = vmatprep.mubr.bf16.mxu0 0
        %2013 = vmatmul.mubr.bf16.gmra.mxu0 %v1460
        %v2014 = vpop.f32.mrf.mxu0
        %v2015 = vadd.f32 %v900, %v2014
        %v2016 = vpop.f32.mrf.mxu0
        %v2017 = vadd.f32 %v904, %v2016
        %v2018 = vpop.f32.mrf.mxu0
        %v2019 = vadd.f32 %v900, %v2018
        %v2020 = vpop.f32.mrf.mxu0
        %v2021 = vadd.f32 %v904, %v2020
        %2022 = vmatprep.mubr.bf16.mxu0 0
        %2023 = vmatmul.mubr.bf16.gmra.mxu0 %v1463
        %v2024 = vpop.f32.mrf.mxu0
        %v2025 = vadd.f32 %v900, %v2024
        %v2026 = vpop.f32.mrf.mxu0
        %v2027 = vadd.f32 %v904, %v2026
        %v2028 = vpop.f32.mrf.mxu0
        %v2029 = vadd.f32 %v900, %v2028
        %v2030 = vpop.f32.mrf.mxu0
        %v2031 = vadd.f32 %v904, %v2030
        %2032 = vmatprep.mubr.bf16.mxu0 0
        %2033 = vmatmul.mubr.bf16.gmra.mxu0 %v1466
        %v2034 = vpop.f32.mrf.mxu0
        %v2035 = vadd.f32 %v900, %v2034
        %v2036 = vpop.f32.mrf.mxu0
        %v2037 = vadd.f32 %v904, %v2036
        %v2038 = vpop.f32.mrf.mxu0
        %v2039 = vadd.f32 %v900, %v2038
        %v2040 = vpop.f32.mrf.mxu0
        %v2041 = vadd.f32 %v904, %v2040
        %2042 = vmatprep.mubr.bf16.mxu0 0
        %2043 = vmatmul.mubr.bf16.gmra.mxu0 %v1469
        %v2044 = vpop.f32.mrf.mxu0
        %v2045 = vadd.f32 %v900, %v2044
        %v2046 = vpop.f32.mrf.mxu0
        %v2047 = vadd.f32 %v904, %v2046
        %v2048 = vpop.f32.mrf.mxu0
        %v2049 = vadd.f32 %v900, %v2048
        %v2050 = vpop.f32.mrf.mxu0
        %v2051 = vadd.f32 %v904, %v2050
        %2052 = vmatprep.mubr.bf16.mxu0 0
        %2053 = vmatmul.mubr.bf16.gmra.mxu0 %v1472
        %v2054 = vpop.f32.mrf.mxu0
        %v2055 = vadd.f32 %v900, %v2054
        %v2056 = vpop.f32.mrf.mxu0
        %v2057 = vadd.f32 %v904, %v2056
        %v2058 = vpop.f32.mrf.mxu0
        %v2059 = vadd.f32 %v900, %v2058
        %v2060 = vpop.f32.mrf.mxu0
        %v2061 = vadd.f32 %v904, %v2060
        %2062 = vmatprep.mubr.bf16.mxu0 0
        %2063 = vmatmul.mubr.bf16.gmra.mxu0 %v1475
        %v2064 = vpop.f32.mrf.mxu0
        %v2065 = vadd.f32 %v900, %v2064
        %v2066 = vpop.f32.mrf.mxu0
        %v2067 = vadd.f32 %v904, %v2066
        %v2068 = vpop.f32.mrf.mxu0
        %v2069 = vadd.f32 %v900, %v2068
        %v2070 = vpop.f32.mrf.mxu0
        %v2071 = vadd.f32 %v904, %v2070
        %2072 = vmatprep.mubr.bf16.mxu0 0
        %2073 = vmatmul.mubr.bf16.gmra.mxu0 %v1478
        %v2074 = vpop.f32.mrf.mxu0
        %v2075 = vadd.f32 %v900, %v2074
        %v2076 = vpop.f32.mrf.mxu0
        %v2077 = vadd.f32 %v904, %v2076
        %v2078 = vpop.f32.mrf.mxu0
        %v2079 = vadd.f32 %v900, %v2078
        %v2080 = vpop.f32.mrf.mxu0
        %v2081 = vadd.f32 %v904, %v2080
        %2082 = vmatprep.mubr.bf16.mxu0 0
        %2083 = vmatmul.mubr.bf16.gmra.mxu0 %v1481
        %v2084 = vpop.f32.mrf.mxu0
        %v2085 = vadd.f32 %v900, %v2084
        %v2086 = vpop.f32.mrf.mxu0
        %v2087 = vadd.f32 %v904, %v2086
        %v2088 = vpop.f32.mrf.mxu0
        %v2089 = vadd.f32 %v900, %v2088
        %v2090 = vpop.f32.mrf.mxu0
        %v2091 = vadd.f32 %v904, %v2090
        %2092 = vmatprep.mubr.bf16.mxu0 0
        %2093 = vmatmul.mubr.bf16.gmra.mxu0 %v1484
        %v2094 = vpop.f32.mrf.mxu0
        %v2095 = vadd.f32 %v900, %v2094
        %v2096 = vpop.f32.mrf.mxu0
        %v2097 = vadd.f32 %v904, %v2096
        %v2098 = vpop.f32.mrf.mxu0
        %v2099 = vadd.f32 %v900, %v2098
        %v2100 = vpop.f32.mrf.mxu0
        %v2101 = vadd.f32 %v904, %v2100
        %2102 = vmatprep.mubr.bf16.mxu0 0
        %2103 = vmatmul.mubr.bf16.gmra.mxu0 %v1487
        %v2104 = vpop.f32.mrf.mxu0
        %v2105 = vadd.f32 %v900, %v2104
        %v2106 = vpop.f32.mrf.mxu0
        %v2107 = vadd.f32 %v904, %v2106
        %v2108 = vpop.f32.mrf.mxu0
        %v2109 = vadd.f32 %v900, %v2108
        %v2110 = vpop.f32.mrf.mxu0
        %v2111 = vadd.f32 %v904, %v2110
        %2112 = vmatprep.mubr.bf16.mxu0 0
        %2113 = vmatmul.mubr.bf16.gmra.mxu0 %v1490
        %v2114 = vpop.f32.mrf.mxu0
        %v2115 = vadd.f32 %v900, %v2114
        %v2116 = vpop.f32.mrf.mxu0
        %v2117 = vadd.f32 %v904, %v2116
        %v2118 = vpop.f32.mrf.mxu0
        %v2119 = vadd.f32 %v900, %v2118
        %v2120 = vpop.f32.mrf.mxu0
        %v2121 = vadd.f32 %v904, %v2120
        %2122 = vmatprep.mubr.bf16.mxu0 0
        %2123 = vmatmul.mubr.bf16.gmra.mxu0 %v1493
        %v2124 = vpop.f32.mrf.mxu0
        %v2125 = vadd.f32 %v900, %v2124
        %v2126 = vpop.f32.mrf.mxu0
        %v2127 = vadd.f32 %v904, %v2126
        %v2128 = vpop.f32.mrf.mxu0
        %v2129 = vadd.f32 %v900, %v2128
        %v2130 = vpop.f32.mrf.mxu0
        %v2131 = vadd.f32 %v904, %v2130
        %2132 = vmatprep.mubr.bf16.mxu0 0
        %2133 = vmatmul.mubr.bf16.gmra.mxu0 %v1496
        %v2134 = vpop.f32.mrf.mxu0
        %v2135 = vadd.f32 %v900, %v2134
        %v2136 = vpop.f32.mrf.mxu0
        %v2137 = vadd.f32 %v904, %v2136
        %v2138 = vpop.f32.mrf.mxu0
        %v2139 = vadd.f32 %v900, %v2138
        %v2140 = vpop.f32.mrf.mxu0
        %v2141 = vadd.f32 %v904, %v2140
        %2142 = vmatprep.mubr.bf16.mxu0 0
        %2143 = vmatmul.mubr.bf16.gmra.mxu0 %v1499
        %v2144 = vpop.f32.mrf.mxu0
        %v2145 = vadd.f32 %v900, %v2144
        %v2146 = vpop.f32.mrf.mxu0
        %v2147 = vadd.f32 %v904, %v2146
        %v2148 = vpop.f32.mrf.mxu0
        %v2149 = vadd.f32 %v900, %v2148
        %v2150 = vpop.f32.mrf.mxu0
        %v2151 = vadd.f32 %v904, %v2150
        %2152 = vmatprep.mubr.bf16.mxu0 0
        %2153 = vmatmul.mubr.bf16.gmra.mxu0 %v1502
        %v2154 = vpop.f32.mrf.mxu0
        %v2155 = vadd.f32 %v900, %v2154
        %v2156 = vpop.f32.mrf.mxu0
        %v2157 = vadd.f32 %v904, %v2156
        %v2158 = vpop.f32.mrf.mxu0
        %v2159 = vadd.f32 %v900, %v2158
        %v2160 = vpop.f32.mrf.mxu0
        %v2161 = vadd.f32 %v904, %v2160
        %2162 = vmatprep.mubr.bf16.mxu0 0
        %2163 = vmatmul.mubr.bf16.gmra.mxu0 %v1505
        %v2164 = vpop.f32.mrf.mxu0
        %v2165 = vadd.f32 %v900, %v2164
        %v2166 = vpop.f32.mrf.mxu0
        %v2167 = vadd.f32 %v904, %v2166
        %v2168 = vpop.f32.mrf.mxu0
        %v2169 = vadd.f32 %v900, %v2168
        %v2170 = vpop.f32.mrf.mxu0
        %v2171 = vadd.f32 %v904, %v2170
        %2172 = vmatprep.mubr.bf16.mxu0 0
        %2173 = vmatmul.mubr.bf16.gmra.mxu0 %v1508
        %v2174 = vpop.f32.mrf.mxu0
        %v2175 = vadd.f32 %v900, %v2174
        %v2176 = vpop.f32.mrf.mxu0
        %v2177 = vadd.f32 %v904, %v2176
        %v2178 = vpop.f32.mrf.mxu0
        %v2179 = vadd.f32 %v900, %v2178
        %v2180 = vpop.f32.mrf.mxu0
        %v2181 = vadd.f32 %v904, %v2180
        %2182 = vdwg.mxu0
        %2183 = vmatprep.subr.bf16.mxu0 0
        %2184 = vmatpush1.bf16.msra.mxu0 0
        %2185 = vmatprep.subr.bf16.mxu0 0
        %2186 = vmatpush1.bf16.msra.mxu0 0
        %2187 = vmatprep.subr.bf16.mxu0 0
        %2188 = vmatpush1.bf16.msra.mxu0 0
        %2189 = vmatprep.subr.bf16.mxu0 0
        %2190 = vmatpush1.bf16.msra.mxu0 0
        %2191 = vmatprep.subr.bf16.mxu0 %v1300
        %2192 = vmatpush1.bf16.msra.mxu0 %v1299
        %2193 = vmatprep.subr.bf16.mxu0 %v1296
        %2194 = vmatpush1.bf16.msra.mxu0 %v1295
        %2195 = vmatprep.subr.bf16.mxu0 %v1292
        %2196 = vmatpush1.bf16.msra.mxu0 %v1291
        %2197 = vmatprep.subr.bf16.mxu0 %v1288
        %2198 = vmatpush1.bf16.msra.mxu0 %v1287
        %2199 = vmatprep.subr.bf16.mxu0 0
        %2200 = vmatpush2.bf16.msra.mxu0 0
        %2201 = vmatprep.subr.bf16.mxu0 0
        %2202 = vmatpush2.bf16.msra.mxu0 0
        %2203 = vmatprep.subr.bf16.mxu0 0
        %2204 = vmatpush2.bf16.msra.mxu0 0
        %2205 = vmatprep.subr.bf16.mxu0 0
        %2206 = vmatpush2.bf16.msra.mxu0 0
        %2207 = vmatprep.subr.bf16.mxu0 0
        %2208 = vmatpush2.bf16.msra.mxu0 0
        %2209 = vmatprep.subr.bf16.mxu0 0
        %2210 = vmatpush2.bf16.msra.mxu0 0
        %2211 = vmatprep.subr.bf16.mxu0 0
        %2212 = vmatpush2.bf16.msra.mxu0 0
        %2213 = vmatprep.subr.bf16.mxu0 0
        %2214 = vmatpush2.bf16.msra.mxu0 0
        %2215 = vmatprep.mubr.bf16.mxu0 0
        %2216 = vmatmul.mubr.bf16.gmra.mxu0 %v1319
        %v2217 = vpop.f32.mrf.mxu0
        %v2218 = vadd.f32 %v908, %v2217
        %v2219 = vpop.f32.mrf.mxu0
        %v2220 = vadd.f32 %v912, %v2219
        %v2221 = vpop.f32.mrf.mxu0
        %v2222 = vadd.f32 %v908, %v2221
        %v2223 = vpop.f32.mrf.mxu0
        %v2224 = vadd.f32 %v912, %v2223
        %2225 = vmatprep.mubr.bf16.mxu0 0
        %2226 = vmatmul.mubr.bf16.gmra.mxu0 %v1322
        %v2227 = vpop.f32.mrf.mxu0
        %v2228 = vadd.f32 %v908, %v2227
        %v2229 = vpop.f32.mrf.mxu0
        %v2230 = vadd.f32 %v912, %v2229
        %v2231 = vpop.f32.mrf.mxu0
        %v2232 = vadd.f32 %v908, %v2231
        %v2233 = vpop.f32.mrf.mxu0
        %v2234 = vadd.f32 %v912, %v2233
        %2235 = vmatprep.mubr.bf16.mxu0 0
        %2236 = vmatmul.mubr.bf16.gmra.mxu0 %v1325
        %v2237 = vpop.f32.mrf.mxu0
        %v2238 = vadd.f32 %v908, %v2237
        %v2239 = vpop.f32.mrf.mxu0
        %v2240 = vadd.f32 %v912, %v2239
        %v2241 = vpop.f32.mrf.mxu0
        %v2242 = vadd.f32 %v908, %v2241
        %v2243 = vpop.f32.mrf.mxu0
        %v2244 = vadd.f32 %v912, %v2243
        %2245 = vmatprep.mubr.bf16.mxu0 0
        %2246 = vmatmul.mubr.bf16.gmra.mxu0 %v1328
        %v2247 = vpop.f32.mrf.mxu0
        %v2248 = vadd.f32 %v908, %v2247
        %v2249 = vpop.f32.mrf.mxu0
        %v2250 = vadd.f32 %v912, %v2249
        %v2251 = vpop.f32.mrf.mxu0
        %v2252 = vadd.f32 %v908, %v2251
        %v2253 = vpop.f32.mrf.mxu0
        %v2254 = vadd.f32 %v912, %v2253
        %2255 = vmatprep.mubr.bf16.mxu0 0
        %2256 = vmatmul.mubr.bf16.gmra.mxu0 %v1331
        %v2257 = vpop.f32.mrf.mxu0
        %v2258 = vadd.f32 %v908, %v2257
        %v2259 = vpop.f32.mrf.mxu0
        %v2260 = vadd.f32 %v912, %v2259
        %v2261 = vpop.f32.mrf.mxu0
        %v2262 = vadd.f32 %v908, %v2261
        %v2263 = vpop.f32.mrf.mxu0
        %v2264 = vadd.f32 %v912, %v2263
        %2265 = vmatprep.mubr.bf16.mxu0 0
        %2266 = vmatmul.mubr.bf16.gmra.mxu0 %v1334
        %v2267 = vpop.f32.mrf.mxu0
        %v2268 = vadd.f32 %v908, %v2267
        %v2269 = vpop.f32.mrf.mxu0
        %v2270 = vadd.f32 %v912, %v2269
        %v2271 = vpop.f32.mrf.mxu0
        %v2272 = vadd.f32 %v908, %v2271
        %v2273 = vpop.f32.mrf.mxu0
        %v2274 = vadd.f32 %v912, %v2273
        %2275 = vmatprep.mubr.bf16.mxu0 0
        %2276 = vmatmul.mubr.bf16.gmra.mxu0 %v1337
        %v2277 = vpop.f32.mrf.mxu0
        %v2278 = vadd.f32 %v908, %v2277
        %v2279 = vpop.f32.mrf.mxu0
        %v2280 = vadd.f32 %v912, %v2279
        %v2281 = vpop.f32.mrf.mxu0
        %v2282 = vadd.f32 %v908, %v2281
        %v2283 = vpop.f32.mrf.mxu0
        %v2284 = vadd.f32 %v912, %v2283
        %2285 = vmatprep.mubr.bf16.mxu0 0
        %2286 = vmatmul.mubr.bf16.gmra.mxu0 %v1340
        %v2287 = vpop.f32.mrf.mxu0
        %v2288 = vadd.f32 %v908, %v2287
        %v2289 = vpop.f32.mrf.mxu0
        %v2290 = vadd.f32 %v912, %v2289
        %v2291 = vpop.f32.mrf.mxu0
        %v2292 = vadd.f32 %v908, %v2291
        %v2293 = vpop.f32.mrf.mxu0
        %v2294 = vadd.f32 %v912, %v2293
        %2295 = vmatprep.mubr.bf16.mxu0 0
        %2296 = vmatmul.mubr.bf16.gmra.mxu0 %v1343
        %v2297 = vpop.f32.mrf.mxu0
        %v2298 = vadd.f32 %v908, %v2297
        %v2299 = vpop.f32.mrf.mxu0
        %v2300 = vadd.f32 %v912, %v2299
        %v2301 = vpop.f32.mrf.mxu0
        %v2302 = vadd.f32 %v908, %v2301
        %v2303 = vpop.f32.mrf.mxu0
        %v2304 = vadd.f32 %v912, %v2303
        %2305 = vmatprep.mubr.bf16.mxu0 0
        %2306 = vmatmul.mubr.bf16.gmra.mxu0 %v1346
        %v2307 = vpop.f32.mrf.mxu0
        %v2308 = vadd.f32 %v908, %v2307
        %v2309 = vpop.f32.mrf.mxu0
        %v2310 = vadd.f32 %v912, %v2309
        %v2311 = vpop.f32.mrf.mxu0
        %v2312 = vadd.f32 %v908, %v2311
        %v2313 = vpop.f32.mrf.mxu0
        %v2314 = vadd.f32 %v912, %v2313
        %2315 = vmatprep.mubr.bf16.mxu0 0
        %2316 = vmatmul.mubr.bf16.gmra.mxu0 %v1349
        %v2317 = vpop.f32.mrf.mxu0
        %v2318 = vadd.f32 %v908, %v2317
        %v2319 = vpop.f32.mrf.mxu0
        %v2320 = vadd.f32 %v912, %v2319
        %v2321 = vpop.f32.mrf.mxu0
        %v2322 = vadd.f32 %v908, %v2321
        %v2323 = vpop.f32.mrf.mxu0
        %v2324 = vadd.f32 %v912, %v2323
        %2325 = vmatprep.mubr.bf16.mxu0 0
        %2326 = vmatmul.mubr.bf16.gmra.mxu0 %v1352
        %v2327 = vpop.f32.mrf.mxu0
        %v2328 = vadd.f32 %v908, %v2327
        %v2329 = vpop.f32.mrf.mxu0
        %v2330 = vadd.f32 %v912, %v2329
        %v2331 = vpop.f32.mrf.mxu0
        %v2332 = vadd.f32 %v908, %v2331
        %v2333 = vpop.f32.mrf.mxu0
        %v2334 = vadd.f32 %v912, %v2333
        %2335 = vmatprep.mubr.bf16.mxu0 0
        %2336 = vmatmul.mubr.bf16.gmra.mxu0 %v1355
        %v2337 = vpop.f32.mrf.mxu0
        %v2338 = vadd.f32 %v908, %v2337
        %v2339 = vpop.f32.mrf.mxu0
        %v2340 = vadd.f32 %v912, %v2339
        %v2341 = vpop.f32.mrf.mxu0
        %v2342 = vadd.f32 %v908, %v2341
        %v2343 = vpop.f32.mrf.mxu0
        %v2344 = vadd.f32 %v912, %v2343
        %2345 = vmatprep.mubr.bf16.mxu0 0
        %2346 = vmatmul.mubr.bf16.gmra.mxu0 %v1358
        %v2347 = vpop.f32.mrf.mxu0
        %v2348 = vadd.f32 %v908, %v2347
        %v2349 = vpop.f32.mrf.mxu0
        %v2350 = vadd.f32 %v912, %v2349
        %v2351 = vpop.f32.mrf.mxu0
        %v2352 = vadd.f32 %v908, %v2351
        %v2353 = vpop.f32.mrf.mxu0
        %v2354 = vadd.f32 %v912, %v2353
        %2355 = vmatprep.mubr.bf16.mxu0 0
        %2356 = vmatmul.mubr.bf16.gmra.mxu0 %v1361
        %v2357 = vpop.f32.mrf.mxu0
        %v2358 = vadd.f32 %v908, %v2357
        %v2359 = vpop.f32.mrf.mxu0
        %v2360 = vadd.f32 %v912, %v2359
        %v2361 = vpop.f32.mrf.mxu0
        %v2362 = vadd.f32 %v908, %v2361
        %v2363 = vpop.f32.mrf.mxu0
        %v2364 = vadd.f32 %v912, %v2363
        %2365 = vmatprep.mubr.bf16.mxu0 0
        %2366 = vmatmul.mubr.bf16.gmra.mxu0 %v1364
        %v2367 = vpop.f32.mrf.mxu0
        %v2368 = vadd.f32 %v908, %v2367
        %v2369 = vpop.f32.mrf.mxu0
        %v2370 = vadd.f32 %v912, %v2369
        %v2371 = vpop.f32.mrf.mxu0
        %v2372 = vadd.f32 %v908, %v2371
        %v2373 = vpop.f32.mrf.mxu0
        %v2374 = vadd.f32 %v912, %v2373
        %2375 = vmatprep.mubr.bf16.mxu0 0
        %2376 = vmatmul.mubr.bf16.gmra.mxu0 %v1367
        %v2377 = vpop.f32.mrf.mxu0
        %v2378 = vadd.f32 %v908, %v2377
        %v2379 = vpop.f32.mrf.mxu0
        %v2380 = vadd.f32 %v912, %v2379
        %v2381 = vpop.f32.mrf.mxu0
        %v2382 = vadd.f32 %v908, %v2381
        %v2383 = vpop.f32.mrf.mxu0
        %v2384 = vadd.f32 %v912, %v2383
        %2385 = vmatprep.mubr.bf16.mxu0 0
        %2386 = vmatmul.mubr.bf16.gmra.mxu0 %v1370
        %v2387 = vpop.f32.mrf.mxu0
        %v2388 = vadd.f32 %v908, %v2387
        %v2389 = vpop.f32.mrf.mxu0
        %v2390 = vadd.f32 %v912, %v2389
        %v2391 = vpop.f32.mrf.mxu0
        %v2392 = vadd.f32 %v908, %v2391
        %v2393 = vpop.f32.mrf.mxu0
        %v2394 = vadd.f32 %v912, %v2393
        %2395 = vmatprep.mubr.bf16.mxu0 0
        %2396 = vmatmul.mubr.bf16.gmra.mxu0 %v1373
        %v2397 = vpop.f32.mrf.mxu0
        %v2398 = vadd.f32 %v908, %v2397
        %v2399 = vpop.f32.mrf.mxu0
        %v2400 = vadd.f32 %v912, %v2399
        %v2401 = vpop.f32.mrf.mxu0
        %v2402 = vadd.f32 %v908, %v2401
        %v2403 = vpop.f32.mrf.mxu0
        %v2404 = vadd.f32 %v912, %v2403
        %2405 = vmatprep.mubr.bf16.mxu0 0
        %2406 = vmatmul.mubr.bf16.gmra.mxu0 %v1376
        %v2407 = vpop.f32.mrf.mxu0
        %v2408 = vadd.f32 %v908, %v2407
        %v2409 = vpop.f32.mrf.mxu0
        %v2410 = vadd.f32 %v912, %v2409
        %v2411 = vpop.f32.mrf.mxu0
        %v2412 = vadd.f32 %v908, %v2411
        %v2413 = vpop.f32.mrf.mxu0
        %v2414 = vadd.f32 %v912, %v2413
        %2415 = vmatprep.mubr.bf16.mxu0 0
        %2416 = vmatmul.mubr.bf16.gmra.mxu0 %v1379
        %v2417 = vpop.f32.mrf.mxu0
        %v2418 = vadd.f32 %v908, %v2417
        %v2419 = vpop.f32.mrf.mxu0
        %v2420 = vadd.f32 %v912, %v2419
        %v2421 = vpop.f32.mrf.mxu0
        %v2422 = vadd.f32 %v908, %v2421
        %v2423 = vpop.f32.mrf.mxu0
        %v2424 = vadd.f32 %v912, %v2423
        %2425 = vmatprep.mubr.bf16.mxu0 0
        %2426 = vmatmul.mubr.bf16.gmra.mxu0 %v1382
        %v2427 = vpop.f32.mrf.mxu0
        %v2428 = vadd.f32 %v908, %v2427
        %v2429 = vpop.f32.mrf.mxu0
        %v2430 = vadd.f32 %v912, %v2429
        %v2431 = vpop.f32.mrf.mxu0
        %v2432 = vadd.f32 %v908, %v2431
        %v2433 = vpop.f32.mrf.mxu0
        %v2434 = vadd.f32 %v912, %v2433
        %2435 = vmatprep.mubr.bf16.mxu0 0
        %2436 = vmatmul.mubr.bf16.gmra.mxu0 %v1385
        %v2437 = vpop.f32.mrf.mxu0
        %v2438 = vadd.f32 %v908, %v2437
        %v2439 = vpop.f32.mrf.mxu0
        %v2440 = vadd.f32 %v912, %v2439
        %v2441 = vpop.f32.mrf.mxu0
        %v2442 = vadd.f32 %v908, %v2441
        %v2443 = vpop.f32.mrf.mxu0
        %v2444 = vadd.f32 %v912, %v2443
        %2445 = vmatprep.mubr.bf16.mxu0 0
        %2446 = vmatmul.mubr.bf16.gmra.mxu0 %v1388
        %v2447 = vpop.f32.mrf.mxu0
        %v2448 = vadd.f32 %v908, %v2447
        %v2449 = vpop.f32.mrf.mxu0
        %v2450 = vadd.f32 %v912, %v2449
        %v2451 = vpop.f32.mrf.mxu0
        %v2452 = vadd.f32 %v908, %v2451
        %v2453 = vpop.f32.mrf.mxu0
        %v2454 = vadd.f32 %v912, %v2453
        %2455 = vmatprep.mubr.bf16.mxu0 0
        %2456 = vmatmul.mubr.bf16.gmra.mxu0 %v1391
        %v2457 = vpop.f32.mrf.mxu0
        %v2458 = vadd.f32 %v908, %v2457
        %v2459 = vpop.f32.mrf.mxu0
        %v2460 = vadd.f32 %v912, %v2459
        %v2461 = vpop.f32.mrf.mxu0
        %v2462 = vadd.f32 %v908, %v2461
        %v2463 = vpop.f32.mrf.mxu0
        %v2464 = vadd.f32 %v912, %v2463
        %2465 = vmatprep.mubr.bf16.mxu0 0
        %2466 = vmatmul.mubr.bf16.gmra.mxu0 %v1394
        %v2467 = vpop.f32.mrf.mxu0
        %v2468 = vadd.f32 %v908, %v2467
        %v2469 = vpop.f32.mrf.mxu0
        %v2470 = vadd.f32 %v912, %v2469
        %v2471 = vpop.f32.mrf.mxu0
        %v2472 = vadd.f32 %v908, %v2471
        %v2473 = vpop.f32.mrf.mxu0
        %v2474 = vadd.f32 %v912, %v2473
        %2475 = vmatprep.mubr.bf16.mxu0 0
        %2476 = vmatmul.mubr.bf16.gmra.mxu0 %v1397
        %v2477 = vpop.f32.mrf.mxu0
        %v2478 = vadd.f32 %v908, %v2477
        %v2479 = vpop.f32.mrf.mxu0
        %v2480 = vadd.f32 %v912, %v2479
        %v2481 = vpop.f32.mrf.mxu0
        %v2482 = vadd.f32 %v908, %v2481
        %v2483 = vpop.f32.mrf.mxu0
        %v2484 = vadd.f32 %v912, %v2483
        %2485 = vmatprep.mubr.bf16.mxu0 0
        %2486 = vmatmul.mubr.bf16.gmra.mxu0 %v1400
        %v2487 = vpop.f32.mrf.mxu0
        %v2488 = vadd.f32 %v908, %v2487
        %v2489 = vpop.f32.mrf.mxu0
        %v2490 = vadd.f32 %v912, %v2489
        %v2491 = vpop.f32.mrf.mxu0
        %v2492 = vadd.f32 %v908, %v2491
        %v2493 = vpop.f32.mrf.mxu0
        %v2494 = vadd.f32 %v912, %v2493
        %2495 = vmatprep.mubr.bf16.mxu0 0
        %2496 = vmatmul.mubr.bf16.gmra.mxu0 %v1403
        %v2497 = vpop.f32.mrf.mxu0
        %v2498 = vadd.f32 %v908, %v2497
        %v2499 = vpop.f32.mrf.mxu0
        %v2500 = vadd.f32 %v912, %v2499
        %v2501 = vpop.f32.mrf.mxu0
        %v2502 = vadd.f32 %v908, %v2501
        %v2503 = vpop.f32.mrf.mxu0
        %v2504 = vadd.f32 %v912, %v2503
        %2505 = vmatprep.mubr.bf16.mxu0 0
        %2506 = vmatmul.mubr.bf16.gmra.mxu0 %v1406
        %v2507 = vpop.f32.mrf.mxu0
        %v2508 = vadd.f32 %v908, %v2507
        %v2509 = vpop.f32.mrf.mxu0
        %v2510 = vadd.f32 %v912, %v2509
        %v2511 = vpop.f32.mrf.mxu0
        %v2512 = vadd.f32 %v908, %v2511
        %v2513 = vpop.f32.mrf.mxu0
        %v2514 = vadd.f32 %v912, %v2513
        %2515 = vmatprep.mubr.bf16.mxu0 0
        %2516 = vmatmul.mubr.bf16.gmra.mxu0 %v1409
        %v2517 = vpop.f32.mrf.mxu0
        %v2518 = vadd.f32 %v908, %v2517
        %v2519 = vpop.f32.mrf.mxu0
        %v2520 = vadd.f32 %v912, %v2519
        %v2521 = vpop.f32.mrf.mxu0
        %v2522 = vadd.f32 %v908, %v2521
        %v2523 = vpop.f32.mrf.mxu0
        %v2524 = vadd.f32 %v912, %v2523
        %2525 = vmatprep.mubr.bf16.mxu0 0
        %2526 = vmatmul.mubr.bf16.gmra.mxu0 %v1412
        %v2527 = vpop.f32.mrf.mxu0
        %v2528 = vadd.f32 %v908, %v2527
        %v2529 = vpop.f32.mrf.mxu0
        %v2530 = vadd.f32 %v912, %v2529
        %v2531 = vpop.f32.mrf.mxu0
        %v2532 = vadd.f32 %v908, %v2531
        %v2533 = vpop.f32.mrf.mxu0
        %v2534 = vadd.f32 %v912, %v2533
        %2535 = vmatprep.mubr.bf16.mxu0 0
        %2536 = vmatmul.mubr.bf16.gmra.mxu0 %v1415
        %v2537 = vpop.f32.mrf.mxu0
        %v2538 = vadd.f32 %v908, %v2537
        %v2539 = vpop.f32.mrf.mxu0
        %v2540 = vadd.f32 %v912, %v2539
        %v2541 = vpop.f32.mrf.mxu0
        %v2542 = vadd.f32 %v908, %v2541
        %v2543 = vpop.f32.mrf.mxu0
        %v2544 = vadd.f32 %v912, %v2543
        %2545 = vmatprep.mubr.bf16.mxu0 0
        %2546 = vmatmul.mubr.bf16.gmra.mxu0 %v1418
        %v2547 = vpop.f32.mrf.mxu0
        %v2548 = vadd.f32 %v908, %v2547
        %v2549 = vpop.f32.mrf.mxu0
        %v2550 = vadd.f32 %v912, %v2549
        %v2551 = vpop.f32.mrf.mxu0
        %v2552 = vadd.f32 %v908, %v2551
        %v2553 = vpop.f32.mrf.mxu0
        %v2554 = vadd.f32 %v912, %v2553
        %2555 = vmatprep.mubr.bf16.mxu0 0
        %2556 = vmatmul.mubr.bf16.gmra.mxu0 %v1421
        %v2557 = vpop.f32.mrf.mxu0
        %v2558 = vadd.f32 %v908, %v2557
        %v2559 = vpop.f32.mrf.mxu0
        %v2560 = vadd.f32 %v912, %v2559
        %v2561 = vpop.f32.mrf.mxu0
        %v2562 = vadd.f32 %v908, %v2561
        %v2563 = vpop.f32.mrf.mxu0
        %v2564 = vadd.f32 %v912, %v2563
        %2565 = vmatprep.mubr.bf16.mxu0 0
        %2566 = vmatmul.mubr.bf16.gmra.mxu0 %v1424
        %v2567 = vpop.f32.mrf.mxu0
        %v2568 = vadd.f32 %v908, %v2567
        %v2569 = vpop.f32.mrf.mxu0
        %v2570 = vadd.f32 %v912, %v2569
        %v2571 = vpop.f32.mrf.mxu0
        %v2572 = vadd.f32 %v908, %v2571
        %v2573 = vpop.f32.mrf.mxu0
        %v2574 = vadd.f32 %v912, %v2573
        %2575 = vmatprep.mubr.bf16.mxu0 0
        %2576 = vmatmul.mubr.bf16.gmra.mxu0 %v1427
        %v2577 = vpop.f32.mrf.mxu0
        %v2578 = vadd.f32 %v908, %v2577
        %v2579 = vpop.f32.mrf.mxu0
        %v2580 = vadd.f32 %v912, %v2579
        %v2581 = vpop.f32.mrf.mxu0
        %v2582 = vadd.f32 %v908, %v2581
        %v2583 = vpop.f32.mrf.mxu0
        %v2584 = vadd.f32 %v912, %v2583
        %2585 = vmatprep.mubr.bf16.mxu0 0
        %2586 = vmatmul.mubr.bf16.gmra.mxu0 %v1430
        %v2587 = vpop.f32.mrf.mxu0
        %v2588 = vadd.f32 %v908, %v2587
        %v2589 = vpop.f32.mrf.mxu0
        %v2590 = vadd.f32 %v912, %v2589
        %v2591 = vpop.f32.mrf.mxu0
        %v2592 = vadd.f32 %v908, %v2591
        %v2593 = vpop.f32.mrf.mxu0
        %v2594 = vadd.f32 %v912, %v2593
        %2595 = vmatprep.mubr.bf16.mxu0 0
        %2596 = vmatmul.mubr.bf16.gmra.mxu0 %v1433
        %v2597 = vpop.f32.mrf.mxu0
        %v2598 = vadd.f32 %v908, %v2597
        %v2599 = vpop.f32.mrf.mxu0
        %v2600 = vadd.f32 %v912, %v2599
        %v2601 = vpop.f32.mrf.mxu0
        %v2602 = vadd.f32 %v908, %v2601
        %v2603 = vpop.f32.mrf.mxu0
        %v2604 = vadd.f32 %v912, %v2603
        %2605 = vmatprep.mubr.bf16.mxu0 0
        %2606 = vmatmul.mubr.bf16.gmra.mxu0 %v1436
        %v2607 = vpop.f32.mrf.mxu0
        %v2608 = vadd.f32 %v908, %v2607
        %v2609 = vpop.f32.mrf.mxu0
        %v2610 = vadd.f32 %v912, %v2609
        %v2611 = vpop.f32.mrf.mxu0
        %v2612 = vadd.f32 %v908, %v2611
        %v2613 = vpop.f32.mrf.mxu0
        %v2614 = vadd.f32 %v912, %v2613
        %2615 = vmatprep.mubr.bf16.mxu0 0
        %2616 = vmatmul.mubr.bf16.gmra.mxu0 %v1439
        %v2617 = vpop.f32.mrf.mxu0
        %v2618 = vadd.f32 %v908, %v2617
        %v2619 = vpop.f32.mrf.mxu0
        %v2620 = vadd.f32 %v912, %v2619
        %v2621 = vpop.f32.mrf.mxu0
        %v2622 = vadd.f32 %v908, %v2621
        %v2623 = vpop.f32.mrf.mxu0
        %v2624 = vadd.f32 %v912, %v2623
        %2625 = vmatprep.mubr.bf16.mxu0 0
        %2626 = vmatmul.mubr.bf16.gmra.mxu0 %v1442
        %v2627 = vpop.f32.mrf.mxu0
        %v2628 = vadd.f32 %v908, %v2627
        %v2629 = vpop.f32.mrf.mxu0
        %v2630 = vadd.f32 %v912, %v2629
        %v2631 = vpop.f32.mrf.mxu0
        %v2632 = vadd.f32 %v908, %v2631
        %v2633 = vpop.f32.mrf.mxu0
        %v2634 = vadd.f32 %v912, %v2633
        %2635 = vmatprep.mubr.bf16.mxu0 0
        %2636 = vmatmul.mubr.bf16.gmra.mxu0 %v1445
        %v2637 = vpop.f32.mrf.mxu0
        %v2638 = vadd.f32 %v908, %v2637
        %v2639 = vpop.f32.mrf.mxu0
        %v2640 = vadd.f32 %v912, %v2639
        %v2641 = vpop.f32.mrf.mxu0
        %v2642 = vadd.f32 %v908, %v2641
        %v2643 = vpop.f32.mrf.mxu0
        %v2644 = vadd.f32 %v912, %v2643
        %2645 = vmatprep.mubr.bf16.mxu0 0
        %2646 = vmatmul.mubr.bf16.gmra.mxu0 %v1448
        %v2647 = vpop.f32.mrf.mxu0
        %v2648 = vadd.f32 %v908, %v2647
        %v2649 = vpop.f32.mrf.mxu0
        %v2650 = vadd.f32 %v912, %v2649
        %v2651 = vpop.f32.mrf.mxu0
        %v2652 = vadd.f32 %v908, %v2651
        %v2653 = vpop.f32.mrf.mxu0
        %v2654 = vadd.f32 %v912, %v2653
        %2655 = vmatprep.mubr.bf16.mxu0 0
        %2656 = vmatmul.mubr.bf16.gmra.mxu0 %v1451
        %v2657 = vpop.f32.mrf.mxu0
        %v2658 = vadd.f32 %v908, %v2657
        %v2659 = vpop.f32.mrf.mxu0
        %v2660 = vadd.f32 %v912, %v2659
        %v2661 = vpop.f32.mrf.mxu0
        %v2662 = vadd.f32 %v908, %v2661
        %v2663 = vpop.f32.mrf.mxu0
        %v2664 = vadd.f32 %v912, %v2663
        %2665 = vmatprep.mubr.bf16.mxu0 0
        %2666 = vmatmul.mubr.bf16.gmra.mxu0 %v1454
        %v2667 = vpop.f32.mrf.mxu0
        %v2668 = vadd.f32 %v908, %v2667
        %v2669 = vpop.f32.mrf.mxu0
        %v2670 = vadd.f32 %v912, %v2669
        %v2671 = vpop.f32.mrf.mxu0
        %v2672 = vadd.f32 %v908, %v2671
        %v2673 = vpop.f32.mrf.mxu0
        %v2674 = vadd.f32 %v912, %v2673
        %2675 = vmatprep.mubr.bf16.mxu0 0
        %2676 = vmatmul.mubr.bf16.gmra.mxu0 %v1457
        %v2677 = vpop.f32.mrf.mxu0
        %v2678 = vadd.f32 %v908, %v2677
        %v2679 = vpop.f32.mrf.mxu0
        %v2680 = vadd.f32 %v912, %v2679
        %v2681 = vpop.f32.mrf.mxu0
        %v2682 = vadd.f32 %v908, %v2681
        %v2683 = vpop.f32.mrf.mxu0
        %v2684 = vadd.f32 %v912, %v2683
        %2685 = vmatprep.mubr.bf16.mxu0 0
        %2686 = vmatmul.mubr.bf16.gmra.mxu0 %v1460
        %v2687 = vpop.f32.mrf.mxu0
        %v2688 = vadd.f32 %v908, %v2687
        %v2689 = vpop.f32.mrf.mxu0
        %v2690 = vadd.f32 %v912, %v2689
        %v2691 = vpop.f32.mrf.mxu0
        %v2692 = vadd.f32 %v908, %v2691
        %v2693 = vpop.f32.mrf.mxu0
        %v2694 = vadd.f32 %v912, %v2693
        %2695 = vmatprep.mubr.bf16.mxu0 0
        %2696 = vmatmul.mubr.bf16.gmra.mxu0 %v1463
        %v2697 = vpop.f32.mrf.mxu0
        %v2698 = vadd.f32 %v908, %v2697
        %v2699 = vpop.f32.mrf.mxu0
        %v2700 = vadd.f32 %v912, %v2699
        %v2701 = vpop.f32.mrf.mxu0
        %v2702 = vadd.f32 %v908, %v2701
        %v2703 = vpop.f32.mrf.mxu0
        %v2704 = vadd.f32 %v912, %v2703
        %2705 = vmatprep.mubr.bf16.mxu0 0
        %2706 = vmatmul.mubr.bf16.gmra.mxu0 %v1466
        %v2707 = vpop.f32.mrf.mxu0
        %v2708 = vadd.f32 %v908, %v2707
        %v2709 = vpop.f32.mrf.mxu0
        %v2710 = vadd.f32 %v912, %v2709
        %v2711 = vpop.f32.mrf.mxu0
        %v2712 = vadd.f32 %v908, %v2711
        %v2713 = vpop.f32.mrf.mxu0
        %v2714 = vadd.f32 %v912, %v2713
        %2715 = vmatprep.mubr.bf16.mxu0 0
        %2716 = vmatmul.mubr.bf16.gmra.mxu0 %v1469
        %v2717 = vpop.f32.mrf.mxu0
        %v2718 = vadd.f32 %v908, %v2717
        %v2719 = vpop.f32.mrf.mxu0
        %v2720 = vadd.f32 %v912, %v2719
        %v2721 = vpop.f32.mrf.mxu0
        %v2722 = vadd.f32 %v908, %v2721
        %v2723 = vpop.f32.mrf.mxu0
        %v2724 = vadd.f32 %v912, %v2723
        %2725 = vmatprep.mubr.bf16.mxu0 0
        %2726 = vmatmul.mubr.bf16.gmra.mxu0 %v1472
        %v2727 = vpop.f32.mrf.mxu0
        %v2728 = vadd.f32 %v908, %v2727
        %v2729 = vpop.f32.mrf.mxu0
        %v2730 = vadd.f32 %v912, %v2729
        %v2731 = vpop.f32.mrf.mxu0
        %v2732 = vadd.f32 %v908, %v2731
        %v2733 = vpop.f32.mrf.mxu0
        %v2734 = vadd.f32 %v912, %v2733
        %2735 = vmatprep.mubr.bf16.mxu0 0
        %2736 = vmatmul.mubr.bf16.gmra.mxu0 %v1475
        %v2737 = vpop.f32.mrf.mxu0
        %v2738 = vadd.f32 %v908, %v2737
        %v2739 = vpop.f32.mrf.mxu0
        %v2740 = vadd.f32 %v912, %v2739
        %v2741 = vpop.f32.mrf.mxu0
        %v2742 = vadd.f32 %v908, %v2741
        %v2743 = vpop.f32.mrf.mxu0
        %v2744 = vadd.f32 %v912, %v2743
        %2745 = vmatprep.mubr.bf16.mxu0 0
        %2746 = vmatmul.mubr.bf16.gmra.mxu0 %v1478
        %v2747 = vpop.f32.mrf.mxu0
        %v2748 = vadd.f32 %v908, %v2747
        %v2749 = vpop.f32.mrf.mxu0
        %v2750 = vadd.f32 %v912, %v2749
        %v2751 = vpop.f32.mrf.mxu0
        %v2752 = vadd.f32 %v908, %v2751
        %v2753 = vpop.f32.mrf.mxu0
        %v2754 = vadd.f32 %v912, %v2753
        %2755 = vmatprep.mubr.bf16.mxu0 0
        %2756 = vmatmul.mubr.bf16.gmra.mxu0 %v1481
        %v2757 = vpop.f32.mrf.mxu0
        %v2758 = vadd.f32 %v908, %v2757
        %v2759 = vpop.f32.mrf.mxu0
        %v2760 = vadd.f32 %v912, %v2759
        %v2761 = vpop.f32.mrf.mxu0
        %v2762 = vadd.f32 %v908, %v2761
        %v2763 = vpop.f32.mrf.mxu0
        %v2764 = vadd.f32 %v912, %v2763
        %2765 = vmatprep.mubr.bf16.mxu0 0
        %2766 = vmatmul.mubr.bf16.gmra.mxu0 %v1484
        %v2767 = vpop.f32.mrf.mxu0
        %v2768 = vadd.f32 %v908, %v2767
        %v2769 = vpop.f32.mrf.mxu0
        %v2770 = vadd.f32 %v912, %v2769
        %v2771 = vpop.f32.mrf.mxu0
        %v2772 = vadd.f32 %v908, %v2771
        %v2773 = vpop.f32.mrf.mxu0
        %v2774 = vadd.f32 %v912, %v2773
        %2775 = vmatprep.mubr.bf16.mxu0 0
        %2776 = vmatmul.mubr.bf16.gmra.mxu0 %v1487
        %v2777 = vpop.f32.mrf.mxu0
        %v2778 = vadd.f32 %v908, %v2777
        %v2779 = vpop.f32.mrf.mxu0
        %v2780 = vadd.f32 %v912, %v2779
        %v2781 = vpop.f32.mrf.mxu0
        %v2782 = vadd.f32 %v908, %v2781
        %v2783 = vpop.f32.mrf.mxu0
        %v2784 = vadd.f32 %v912, %v2783
        %2785 = vmatprep.mubr.bf16.mxu0 0
        %2786 = vmatmul.mubr.bf16.gmra.mxu0 %v1490
        %v2787 = vpop.f32.mrf.mxu0
        %v2788 = vadd.f32 %v908, %v2787
        %v2789 = vpop.f32.mrf.mxu0
        %v2790 = vadd.f32 %v912, %v2789
        %v2791 = vpop.f32.mrf.mxu0
        %v2792 = vadd.f32 %v908, %v2791
        %v2793 = vpop.f32.mrf.mxu0
        %v2794 = vadd.f32 %v912, %v2793
        %2795 = vmatprep.mubr.bf16.mxu0 0
        %2796 = vmatmul.mubr.bf16.gmra.mxu0 %v1493
        %v2797 = vpop.f32.mrf.mxu0
        %v2798 = vadd.f32 %v908, %v2797
        %v2799 = vpop.f32.mrf.mxu0
        %v2800 = vadd.f32 %v912, %v2799
        %v2801 = vpop.f32.mrf.mxu0
        %v2802 = vadd.f32 %v908, %v2801
        %v2803 = vpop.f32.mrf.mxu0
        %v2804 = vadd.f32 %v912, %v2803
        %2805 = vmatprep.mubr.bf16.mxu0 0
        %2806 = vmatmul.mubr.bf16.gmra.mxu0 %v1496
        %v2807 = vpop.f32.mrf.mxu0
        %v2808 = vadd.f32 %v908, %v2807
        %v2809 = vpop.f32.mrf.mxu0
        %v2810 = vadd.f32 %v912, %v2809
        %v2811 = vpop.f32.mrf.mxu0
        %v2812 = vadd.f32 %v908, %v2811
        %v2813 = vpop.f32.mrf.mxu0
        %v2814 = vadd.f32 %v912, %v2813
        %2815 = vmatprep.mubr.bf16.mxu0 0
        %2816 = vmatmul.mubr.bf16.gmra.mxu0 %v1499
        %v2817 = vpop.f32.mrf.mxu0
        %v2818 = vadd.f32 %v908, %v2817
        %v2819 = vpop.f32.mrf.mxu0
        %v2820 = vadd.f32 %v912, %v2819
        %v2821 = vpop.f32.mrf.mxu0
        %v2822 = vadd.f32 %v908, %v2821
        %v2823 = vpop.f32.mrf.mxu0
        %v2824 = vadd.f32 %v912, %v2823
        %2825 = vmatprep.mubr.bf16.mxu0 0
        %2826 = vmatmul.mubr.bf16.gmra.mxu0 %v1502
        %v2827 = vpop.f32.mrf.mxu0
        %v2828 = vadd.f32 %v908, %v2827
        %v2829 = vpop.f32.mrf.mxu0
        %v2830 = vadd.f32 %v912, %v2829
        %v2831 = vpop.f32.mrf.mxu0
        %v2832 = vadd.f32 %v908, %v2831
        %v2833 = vpop.f32.mrf.mxu0
        %v2834 = vadd.f32 %v912, %v2833
        %2835 = vmatprep.mubr.bf16.mxu0 0
        %2836 = vmatmul.mubr.bf16.gmra.mxu0 %v1505
        %v2837 = vpop.f32.mrf.mxu0
        %v2838 = vadd.f32 %v908, %v2837
        %v2839 = vpop.f32.mrf.mxu0
        %v2840 = vadd.f32 %v912, %v2839
        %v2841 = vpop.f32.mrf.mxu0
        %v2842 = vadd.f32 %v908, %v2841
        %v2843 = vpop.f32.mrf.mxu0
        %v2844 = vadd.f32 %v912, %v2843
        %2845 = vmatprep.mubr.bf16.mxu0 0
        %2846 = vmatmul.mubr.bf16.gmra.mxu0 %v1508
        %v2847 = vpop.f32.mrf.mxu0
        %v2848 = vadd.f32 %v908, %v2847
        %v2849 = vpop.f32.mrf.mxu0
        %v2850 = vadd.f32 %v912, %v2849
        %v2851 = vpop.f32.mrf.mxu0
        %v2852 = vadd.f32 %v908, %v2851
        %v2853 = vpop.f32.mrf.mxu0
        %v2854 = vadd.f32 %v912, %v2853
        %2855 = vdwg.mxu0
        %2856 = vst [vmem:[#allocation2] sm:$0xff] %v1545
        %2857 = vst [vmem:[#allocation2 + $0x8] sm:$0xff] %v1547
        %2858 = vst [vmem:[#allocation2 + $0x10] sm:$0xff] %v2218
        %2859 = vst [vmem:[#allocation2 + $0x18] sm:$0xff] %v2220
        %2860 = vst [vmem:[#allocation2 + $0x20] sm:$0xff] %v1549
        %2861 = vst [vmem:[#allocation2 + $0x28] sm:$0xff] %v1551
        %2862 = vst [vmem:[#allocation2 + $0x30] sm:$0xff] %v2222
        %2863 = vst [vmem:[#allocation2 + $0x38] sm:$0xff] %v2224
        %2864 = vst [vmem:[#allocation2 + $0x40] sm:$0xff] %v1555
        %2865 = vst [vmem:[#allocation2 + $0x48] sm:$0xff] %v1557
        %2866 = vst [vmem:[#allocation2 + $0x50] sm:$0xff] %v2228
        %2867 = vst [vmem:[#allocation2 + $0x58] sm:$0xff] %v2230
        %2868 = vst [vmem:[#allocation2 + $0x60] sm:$0xff] %v1559
        %2869 = vst [vmem:[#allocation2 + $0x68] sm:$0xff] %v1561
        %2870 = vst [vmem:[#allocation2 + $0x70] sm:$0xff] %v2232
        %2871 = vst [vmem:[#allocation2 + $0x78] sm:$0xff] %v2234
        %2872 = vst [vmem:[#allocation2 + $0x80] sm:$0xff] %v1565
        %2873 = vst [vmem:[#allocation2 + $0x88] sm:$0xff] %v1567
        %2874 = vst [vmem:[#allocation2 + $0x90] sm:$0xff] %v2238
        %2875 = vst [vmem:[#allocation2 + $0x98] sm:$0xff] %v2240
        %2876 = vst [vmem:[#allocation2 + $0xa0] sm:$0xff] %v1569
        %2877 = vst [vmem:[#allocation2 + $0xa8] sm:$0xff] %v1571
        %2878 = vst [vmem:[#allocation2 + $0xb0] sm:$0xff] %v2242
        %2879 = vst [vmem:[#allocation2 + $0xb8] sm:$0xff] %v2244
        %2880 = vst [vmem:[#allocation2 + $0xc0] sm:$0xff] %v1575
        %2881 = vst [vmem:[#allocation2 + $0xc8] sm:$0xff] %v1577
        %2882 = vst [vmem:[#allocation2 + $0xd0] sm:$0xff] %v2248
        %2883 = vst [vmem:[#allocation2 + $0xd8] sm:$0xff] %v2250
        %2884 = vst [vmem:[#allocation2 + $0xe0] sm:$0xff] %v1579
        %2885 = vst [vmem:[#allocation2 + $0xe8] sm:$0xff] %v1581
        %2886 = vst [vmem:[#allocation2 + $0xf0] sm:$0xff] %v2252
        %2887 = vst [vmem:[#allocation2 + $0xf8] sm:$0xff] %v2254
        %2888 = vst [vmem:[#allocation2 + $0x100] sm:$0xff] %v1585
        %2889 = vst [vmem:[#allocation2 + $0x108] sm:$0xff] %v1587
        %2890 = vst [vmem:[#allocation2 + $0x110] sm:$0xff] %v2258
        %2891 = vst [vmem:[#allocation2 + $0x118] sm:$0xff] %v2260
        %2892 = vst [vmem:[#allocation2 + $0x120] sm:$0xff] %v1589
        %2893 = vst [vmem:[#allocation2 + $0x128] sm:$0xff] %v1591
        %2894 = vst [vmem:[#allocation2 + $0x130] sm:$0xff] %v2262
        %2895 = vst [vmem:[#allocation2 + $0x138] sm:$0xff] %v2264
        %2896 = vst [vmem:[#allocation2 + $0x140] sm:$0xff] %v1595
        %2897 = vst [vmem:[#allocation2 + $0x148] sm:$0xff] %v1597
        %2898 = vst [vmem:[#allocation2 + $0x150] sm:$0xff] %v2268
        %2899 = vst [vmem:[#allocation2 + $0x158] sm:$0xff] %v2270
        %2900 = vst [vmem:[#allocation2 + $0x160] sm:$0xff] %v1599
        %2901 = vst [vmem:[#allocation2 + $0x168] sm:$0xff] %v1601
        %2902 = vst [vmem:[#allocation2 + $0x170] sm:$0xff] %v2272
        %2903 = vst [vmem:[#allocation2 + $0x178] sm:$0xff] %v2274
        %2904 = vst [vmem:[#allocation2 + $0x180] sm:$0xff] %v1605
        %2905 = vst [vmem:[#allocation2 + $0x188] sm:$0xff] %v1607
        %2906 = vst [vmem:[#allocation2 + $0x190] sm:$0xff] %v2278
        %2907 = vst [vmem:[#allocation2 + $0x198] sm:$0xff] %v2280
        %2908 = vst [vmem:[#allocation2 + $0x1a0] sm:$0xff] %v1609
        %2909 = vst [vmem:[#allocation2 + $0x1a8] sm:$0xff] %v1611
        %2910 = vst [vmem:[#allocation2 + $0x1b0] sm:$0xff] %v2282
        %2911 = vst [vmem:[#allocation2 + $0x1b8] sm:$0xff] %v2284
        %2912 = vst [vmem:[#allocation2 + $0x1c0] sm:$0xff] %v1615
        %2913 = vst [vmem:[#allocation2 + $0x1c8] sm:$0xff] %v1617
        %2914 = vst [vmem:[#allocation2 + $0x1d0] sm:$0xff] %v2288
        %2915 = vst [vmem:[#allocation2 + $0x1d8] sm:$0xff] %v2290
        %2916 = vst [vmem:[#allocation2 + $0x1e0] sm:$0xff] %v1619
        %2917 = vst [vmem:[#allocation2 + $0x1e8] sm:$0xff] %v1621
        %2918 = vst [vmem:[#allocation2 + $0x1f0] sm:$0xff] %v2292
        %2919 = vst [vmem:[#allocation2 + $0x1f8] sm:$0xff] %v2294
        %2920 = vst [vmem:[#allocation2 + $0x200] sm:$0xff] %v1625
        %2921 = vst [vmem:[#allocation2 + $0x208] sm:$0xff] %v1627
        %2922 = vst [vmem:[#allocation2 + $0x210] sm:$0xff] %v2298
        %2923 = vst [vmem:[#allocation2 + $0x218] sm:$0xff] %v2300
        %2924 = vst [vmem:[#allocation2 + $0x220] sm:$0xff] %v1629
        %2925 = vst [vmem:[#allocation2 + $0x228] sm:$0xff] %v1631
        %2926 = vst [vmem:[#allocation2 + $0x230] sm:$0xff] %v2302
        %2927 = vst [vmem:[#allocation2 + $0x238] sm:$0xff] %v2304
        %2928 = vst [vmem:[#allocation2 + $0x240] sm:$0xff] %v1635
        %2929 = vst [vmem:[#allocation2 + $0x248] sm:$0xff] %v1637
        %2930 = vst [vmem:[#allocation2 + $0x250] sm:$0xff] %v2308
        %2931 = vst [vmem:[#allocation2 + $0x258] sm:$0xff] %v2310
        %2932 = vst [vmem:[#allocation2 + $0x260] sm:$0xff] %v1639
        %2933 = vst [vmem:[#allocation2 + $0x268] sm:$0xff] %v1641
        %2934 = vst [vmem:[#allocation2 + $0x270] sm:$0xff] %v2312
        %2935 = vst [vmem:[#allocation2 + $0x278] sm:$0xff] %v2314
        %2936 = vst [vmem:[#allocation2 + $0x280] sm:$0xff] %v1645
        %2937 = vst [vmem:[#allocation2 + $0x288] sm:$0xff] %v1647
        %2938 = vst [vmem:[#allocation2 + $0x290] sm:$0xff] %v2318
        %2939 = vst [vmem:[#allocation2 + $0x298] sm:$0xff] %v2320
        %2940 = vst [vmem:[#allocation2 + $0x2a0] sm:$0xff] %v1649
        %2941 = vst [vmem:[#allocation2 + $0x2a8] sm:$0xff] %v1651
        %2942 = vst [vmem:[#allocation2 + $0x2b0] sm:$0xff] %v2322
        %2943 = vst [vmem:[#allocation2 + $0x2b8] sm:$0xff] %v2324
        %2944 = vst [vmem:[#allocation2 + $0x2c0] sm:$0xff] %v1655
        %2945 = vst [vmem:[#allocation2 + $0x2c8] sm:$0xff] %v1657
        %2946 = vst [vmem:[#allocation2 + $0x2d0] sm:$0xff] %v2328
        %2947 = vst [vmem:[#allocation2 + $0x2d8] sm:$0xff] %v2330
        %2948 = vst [vmem:[#allocation2 + $0x2e0] sm:$0xff] %v1659
        %2949 = vst [vmem:[#allocation2 + $0x2e8] sm:$0xff] %v1661
        %2950 = vst [vmem:[#allocation2 + $0x2f0] sm:$0xff] %v2332
        %2951 = vst [vmem:[#allocation2 + $0x2f8] sm:$0xff] %v2334
        %2952 = vst [vmem:[#allocation2 + $0x300] sm:$0xff] %v1665
        %2953 = vst [vmem:[#allocation2 + $0x308] sm:$0xff] %v1667
        %2954 = vst [vmem:[#allocation2 + $0x310] sm:$0xff] %v2338
        %2955 = vst [vmem:[#allocation2 + $0x318] sm:$0xff] %v2340
        %2956 = vst [vmem:[#allocation2 + $0x320] sm:$0xff] %v1669
        %2957 = vst [vmem:[#allocation2 + $0x328] sm:$0xff] %v1671
        %2958 = vst [vmem:[#allocation2 + $0x330] sm:$0xff] %v2342
        %2959 = vst [vmem:[#allocation2 + $0x338] sm:$0xff] %v2344
        %2960 = vst [vmem:[#allocation2 + $0x340] sm:$0xff] %v1675
        %2961 = vst [vmem:[#allocation2 + $0x348] sm:$0xff] %v1677
        %2962 = vst [vmem:[#allocation2 + $0x350] sm:$0xff] %v2348
        %2963 = vst [vmem:[#allocation2 + $0x358] sm:$0xff] %v2350
        %2964 = vst [vmem:[#allocation2 + $0x360] sm:$0xff] %v1679
        %2965 = vst [vmem:[#allocation2 + $0x368] sm:$0xff] %v1681
        %2966 = vst [vmem:[#allocation2 + $0x370] sm:$0xff] %v2352
        %2967 = vst [vmem:[#allocation2 + $0x378] sm:$0xff] %v2354
        %2968 = vst [vmem:[#allocation2 + $0x380] sm:$0xff] %v1685
        %2969 = vst [vmem:[#allocation2 + $0x388] sm:$0xff] %v1687
        %2970 = vst [vmem:[#allocation2 + $0x390] sm:$0xff] %v2358
        %2971 = vst [vmem:[#allocation2 + $0x398] sm:$0xff] %v2360
        %2972 = vst [vmem:[#allocation2 + $0x3a0] sm:$0xff] %v1689
        %2973 = vst [vmem:[#allocation2 + $0x3a8] sm:$0xff] %v1691
        %2974 = vst [vmem:[#allocation2 + $0x3b0] sm:$0xff] %v2362
        %2975 = vst [vmem:[#allocation2 + $0x3b8] sm:$0xff] %v2364
        %2976 = vst [vmem:[#allocation2 + $0x3c0] sm:$0xff] %v1695
        %2977 = vst [vmem:[#allocation2 + $0x3c8] sm:$0xff] %v1697
        %2978 = vst [vmem:[#allocation2 + $0x3d0] sm:$0xff] %v2368
        %2979 = vst [vmem:[#allocation2 + $0x3d8] sm:$0xff] %v2370
        %2980 = vst [vmem:[#allocation2 + $0x3e0] sm:$0xff] %v1699
        %2981 = vst [vmem:[#allocation2 + $0x3e8] sm:$0xff] %v1701
        %2982 = vst [vmem:[#allocation2 + $0x3f0] sm:$0xff] %v2372
        %2983 = vst [vmem:[#allocation2 + $0x3f8] sm:$0xff] %v2374
        %2984 = vst [vmem:[#allocation2 + $0x400] sm:$0xff] %v1705
        %2985 = vst [vmem:[#allocation2 + $0x408] sm:$0xff] %v1707
        %2986 = vst [vmem:[#allocation2 + $0x410] sm:$0xff] %v2378
        %2987 = vst [vmem:[#allocation2 + $0x418] sm:$0xff] %v2380
        %2988 = vst [vmem:[#allocation2 + $0x420] sm:$0xff] %v1709
        %2989 = vst [vmem:[#allocation2 + $0x428] sm:$0xff] %v1711
        %2990 = vst [vmem:[#allocation2 + $0x430] sm:$0xff] %v2382
        %2991 = vst [vmem:[#allocation2 + $0x438] sm:$0xff] %v2384
        %2992 = vst [vmem:[#allocation2 + $0x440] sm:$0xff] %v1715
        %2993 = vst [vmem:[#allocation2 + $0x448] sm:$0xff] %v1717
        %2994 = vst [vmem:[#allocation2 + $0x450] sm:$0xff] %v2388
        %2995 = vst [vmem:[#allocation2 + $0x458] sm:$0xff] %v2390
        %2996 = vst [vmem:[#allocation2 + $0x460] sm:$0xff] %v1719
        %2997 = vst [vmem:[#allocation2 + $0x468] sm:$0xff] %v1721
        %2998 = vst [vmem:[#allocation2 + $0x470] sm:$0xff] %v2392
        %2999 = vst [vmem:[#allocation2 + $0x478] sm:$0xff] %v2394
        %3000 = vst [vmem:[#allocation2 + $0x480] sm:$0xff] %v1725
        %3001 = vst [vmem:[#allocation2 + $0x488] sm:$0xff] %v1727
        %3002 = vst [vmem:[#allocation2 + $0x490] sm:$0xff] %v2398
        %3003 = vst [vmem:[#allocation2 + $0x498] sm:$0xff] %v2400
        %3004 = vst [vmem:[#allocation2 + $0x4a0] sm:$0xff] %v1729
        %3005 = vst [vmem:[#allocation2 + $0x4a8] sm:$0xff] %v1731
        %3006 = vst [vmem:[#allocation2 + $0x4b0] sm:$0xff] %v2402
        %3007 = vst [vmem:[#allocation2 + $0x4b8] sm:$0xff] %v2404
        %3008 = vst [vmem:[#allocation2 + $0x4c0] sm:$0xff] %v1735
        %3009 = vst [vmem:[#allocation2 + $0x4c8] sm:$0xff] %v1737
        %3010 = vst [vmem:[#allocation2 + $0x4d0] sm:$0xff] %v2408
        %3011 = vst [vmem:[#allocation2 + $0x4d8] sm:$0xff] %v2410
        %3012 = vst [vmem:[#allocation2 + $0x4e0] sm:$0xff] %v1739
        %3013 = vst [vmem:[#allocation2 + $0x4e8] sm:$0xff] %v1741
        %3014 = vst [vmem:[#allocation2 + $0x4f0] sm:$0xff] %v2412
        %3015 = vst [vmem:[#allocation2 + $0x4f8] sm:$0xff] %v2414
        %3016 = vst [vmem:[#allocation2 + $0x500] sm:$0xff] %v1745
        %3017 = vst [vmem:[#allocation2 + $0x508] sm:$0xff] %v1747
        %3018 = vst [vmem:[#allocation2 + $0x510] sm:$0xff] %v2418
        %3019 = vst [vmem:[#allocation2 + $0x518] sm:$0xff] %v2420
        %3020 = vst [vmem:[#allocation2 + $0x520] sm:$0xff] %v1749
        %3021 = vst [vmem:[#allocation2 + $0x528] sm:$0xff] %v1751
        %3022 = vst [vmem:[#allocation2 + $0x530] sm:$0xff] %v2422
        %3023 = vst [vmem:[#allocation2 + $0x538] sm:$0xff] %v2424
        %3024 = vst [vmem:[#allocation2 + $0x540] sm:$0xff] %v1755
        %3025 = vst [vmem:[#allocation2 + $0x548] sm:$0xff] %v1757
        %3026 = vst [vmem:[#allocation2 + $0x550] sm:$0xff] %v2428
        %3027 = vst [vmem:[#allocation2 + $0x558] sm:$0xff] %v2430
        %3028 = vst [vmem:[#allocation2 + $0x560] sm:$0xff] %v1759
        %3029 = vst [vmem:[#allocation2 + $0x568] sm:$0xff] %v1761
        %3030 = vst [vmem:[#allocation2 + $0x570] sm:$0xff] %v2432
        %3031 = vst [vmem:[#allocation2 + $0x578] sm:$0xff] %v2434
        %3032 = vst [vmem:[#allocation2 + $0x580] sm:$0xff] %v1765
        %3033 = vst [vmem:[#allocation2 + $0x588] sm:$0xff] %v1767
        %3034 = vst [vmem:[#allocation2 + $0x590] sm:$0xff] %v2438
        %3035 = vst [vmem:[#allocation2 + $0x598] sm:$0xff] %v2440
        %3036 = vst [vmem:[#allocation2 + $0x5a0] sm:$0xff] %v1769
        %3037 = vst [vmem:[#allocation2 + $0x5a8] sm:$0xff] %v1771
        %3038 = vst [vmem:[#allocation2 + $0x5b0] sm:$0xff] %v2442
        %3039 = vst [vmem:[#allocation2 + $0x5b8] sm:$0xff] %v2444
        %3040 = vst [vmem:[#allocation2 + $0x5c0] sm:$0xff] %v1775
        %3041 = vst [vmem:[#allocation2 + $0x5c8] sm:$0xff] %v1777
        %3042 = vst [vmem:[#allocation2 + $0x5d0] sm:$0xff] %v2448
        %3043 = vst [vmem:[#allocation2 + $0x5d8] sm:$0xff] %v2450
        %3044 = vst [vmem:[#allocation2 + $0x5e0] sm:$0xff] %v1779
        %3045 = vst [vmem:[#allocation2 + $0x5e8] sm:$0xff] %v1781
        %3046 = vst [vmem:[#allocation2 + $0x5f0] sm:$0xff] %v2452
        %3047 = vst [vmem:[#allocation2 + $0x5f8] sm:$0xff] %v2454
        %3048 = vst [vmem:[#allocation2 + $0x600] sm:$0xff] %v1785
        %3049 = vst [vmem:[#allocation2 + $0x608] sm:$0xff] %v1787
        %3050 = vst [vmem:[#allocation2 + $0x610] sm:$0xff] %v2458
        %3051 = vst [vmem:[#allocation2 + $0x618] sm:$0xff] %v2460
        %3052 = vst [vmem:[#allocation2 + $0x620] sm:$0xff] %v1789
        %3053 = vst [vmem:[#allocation2 + $0x628] sm:$0xff] %v1791
        %3054 = vst [vmem:[#allocation2 + $0x630] sm:$0xff] %v2462
        %3055 = vst [vmem:[#allocation2 + $0x638] sm:$0xff] %v2464
        %3056 = vst [vmem:[#allocation2 + $0x640] sm:$0xff] %v1795
        %3057 = vst [vmem:[#allocation2 + $0x648] sm:$0xff] %v1797
        %3058 = vst [vmem:[#allocation2 + $0x650] sm:$0xff] %v2468
        %3059 = vst [vmem:[#allocation2 + $0x658] sm:$0xff] %v2470
        %3060 = vst [vmem:[#allocation2 + $0x660] sm:$0xff] %v1799
        %3061 = vst [vmem:[#allocation2 + $0x668] sm:$0xff] %v1801
        %3062 = vst [vmem:[#allocation2 + $0x670] sm:$0xff] %v2472
        %3063 = vst [vmem:[#allocation2 + $0x678] sm:$0xff] %v2474
        %3064 = vst [vmem:[#allocation2 + $0x680] sm:$0xff] %v1805
        %3065 = vst [vmem:[#allocation2 + $0x688] sm:$0xff] %v1807
        %3066 = vst [vmem:[#allocation2 + $0x690] sm:$0xff] %v2478
        %3067 = vst [vmem:[#allocation2 + $0x698] sm:$0xff] %v2480
        %3068 = vst [vmem:[#allocation2 + $0x6a0] sm:$0xff] %v1809
        %3069 = vst [vmem:[#allocation2 + $0x6a8] sm:$0xff] %v1811
        %3070 = vst [vmem:[#allocation2 + $0x6b0] sm:$0xff] %v2482
        %3071 = vst [vmem:[#allocation2 + $0x6b8] sm:$0xff] %v2484
        %3072 = vst [vmem:[#allocation2 + $0x6c0] sm:$0xff] %v1815
        %3073 = vst [vmem:[#allocation2 + $0x6c8] sm:$0xff] %v1817
        %3074 = vst [vmem:[#allocation2 + $0x6d0] sm:$0xff] %v2488
        %3075 = vst [vmem:[#allocation2 + $0x6d8] sm:$0xff] %v2490
        %3076 = vst [vmem:[#allocation2 + $0x6e0] sm:$0xff] %v1819
        %3077 = vst [vmem:[#allocation2 + $0x6e8] sm:$0xff] %v1821
        %3078 = vst [vmem:[#allocation2 + $0x6f0] sm:$0xff] %v2492
        %3079 = vst [vmem:[#allocation2 + $0x6f8] sm:$0xff] %v2494
        %3080 = vst [vmem:[#allocation2 + $0x700] sm:$0xff] %v1825
        %3081 = vst [vmem:[#allocation2 + $0x708] sm:$0xff] %v1827
        %3082 = vst [vmem:[#allocation2 + $0x710] sm:$0xff] %v2498
        %3083 = vst [vmem:[#allocation2 + $0x718] sm:$0xff] %v2500
        %3084 = vst [vmem:[#allocation2 + $0x720] sm:$0xff] %v1829
        %3085 = vst [vmem:[#allocation2 + $0x728] sm:$0xff] %v1831
        %3086 = vst [vmem:[#allocation2 + $0x730] sm:$0xff] %v2502
        %3087 = vst [vmem:[#allocation2 + $0x738] sm:$0xff] %v2504
        %3088 = vst [vmem:[#allocation2 + $0x740] sm:$0xff] %v1835
        %3089 = vst [vmem:[#allocation2 + $0x748] sm:$0xff] %v1837
        %3090 = vst [vmem:[#allocation2 + $0x750] sm:$0xff] %v2508
        %3091 = vst [vmem:[#allocation2 + $0x758] sm:$0xff] %v2510
        %3092 = vst [vmem:[#allocation2 + $0x760] sm:$0xff] %v1839
        %3093 = vst [vmem:[#allocation2 + $0x768] sm:$0xff] %v1841
        %3094 = vst [vmem:[#allocation2 + $0x770] sm:$0xff] %v2512
        %3095 = vst [vmem:[#allocation2 + $0x778] sm:$0xff] %v2514
        %3096 = vst [vmem:[#allocation2 + $0x780] sm:$0xff] %v1845
        %3097 = vst [vmem:[#allocation2 + $0x788] sm:$0xff] %v1847
        %3098 = vst [vmem:[#allocation2 + $0x790] sm:$0xff] %v2518
        %3099 = vst [vmem:[#allocation2 + $0x798] sm:$0xff] %v2520
        %3100 = vst [vmem:[#allocation2 + $0x7a0] sm:$0xff] %v1849
        %3101 = vst [vmem:[#allocation2 + $0x7a8] sm:$0xff] %v1851
        %3102 = vst [vmem:[#allocation2 + $0x7b0] sm:$0xff] %v2522
        %3103 = vst [vmem:[#allocation2 + $0x7b8] sm:$0xff] %v2524
        %3104 = vst [vmem:[#allocation2 + $0x7c0] sm:$0xff] %v1855
        %3105 = vst [vmem:[#allocation2 + $0x7c8] sm:$0xff] %v1857
        %3106 = vst [vmem:[#allocation2 + $0x7d0] sm:$0xff] %v2528
        %3107 = vst [vmem:[#allocation2 + $0x7d8] sm:$0xff] %v2530
        %3108 = vst [vmem:[#allocation2 + $0x7e0] sm:$0xff] %v1859
        %3109 = vst [vmem:[#allocation2 + $0x7e8] sm:$0xff] %v1861
        %3110 = vst [vmem:[#allocation2 + $0x7f0] sm:$0xff] %v2532
        %3111 = vst [vmem:[#allocation2 + $0x7f8] sm:$0xff] %v2534
        %3112 = vst [vmem:[#allocation2 + $0x800] sm:$0xff] %v1865
        %3113 = vst [vmem:[#allocation2 + $0x808] sm:$0xff] %v1867
        %3114 = vst [vmem:[#allocation2 + $0x810] sm:$0xff] %v2538
        %3115 = vst [vmem:[#allocation2 + $0x818] sm:$0xff] %v2540
        %3116 = vst [vmem:[#allocation2 + $0x820] sm:$0xff] %v1869
        %3117 = vst [vmem:[#allocation2 + $0x828] sm:$0xff] %v1871
        %3118 = vst [vmem:[#allocation2 + $0x830] sm:$0xff] %v2542
        %3119 = vst [vmem:[#allocation2 + $0x838] sm:$0xff] %v2544
        %3120 = vst [vmem:[#allocation2 + $0x840] sm:$0xff] %v1875
        %3121 = vst [vmem:[#allocation2 + $0x848] sm:$0xff] %v1877
        %3122 = vst [vmem:[#allocation2 + $0x850] sm:$0xff] %v2548
        %3123 = vst [vmem:[#allocation2 + $0x858] sm:$0xff] %v2550
        %3124 = vst [vmem:[#allocation2 + $0x860] sm:$0xff] %v1879
        %3125 = vst [vmem:[#allocation2 + $0x868] sm:$0xff] %v1881
        %3126 = vst [vmem:[#allocation2 + $0x870] sm:$0xff] %v2552
        %3127 = vst [vmem:[#allocation2 + $0x878] sm:$0xff] %v2554
        %3128 = vst [vmem:[#allocation2 + $0x880] sm:$0xff] %v1885
        %3129 = vst [vmem:[#allocation2 + $0x888] sm:$0xff] %v1887
        %3130 = vst [vmem:[#allocation2 + $0x890] sm:$0xff] %v2558
        %3131 = vst [vmem:[#allocation2 + $0x898] sm:$0xff] %v2560
        %3132 = vst [vmem:[#allocation2 + $0x8a0] sm:$0xff] %v1889
        %3133 = vst [vmem:[#allocation2 + $0x8a8] sm:$0xff] %v1891
        %3134 = vst [vmem:[#allocation2 + $0x8b0] sm:$0xff] %v2562
        %3135 = vst [vmem:[#allocation2 + $0x8b8] sm:$0xff] %v2564
        %3136 = vst [vmem:[#allocation2 + $0x8c0] sm:$0xff] %v1895
        %3137 = vst [vmem:[#allocation2 + $0x8c8] sm:$0xff] %v1897
        %3138 = vst [vmem:[#allocation2 + $0x8d0] sm:$0xff] %v2568
        %3139 = vst [vmem:[#allocation2 + $0x8d8] sm:$0xff] %v2570
        %3140 = vst [vmem:[#allocation2 + $0x8e0] sm:$0xff] %v1899
        %3141 = vst [vmem:[#allocation2 + $0x8e8] sm:$0xff] %v1901
        %3142 = vst [vmem:[#allocation2 + $0x8f0] sm:$0xff] %v2572
        %3143 = vst [vmem:[#allocation2 + $0x8f8] sm:$0xff] %v2574
        %3144 = vst [vmem:[#allocation2 + $0x900] sm:$0xff] %v1905
        %3145 = vst [vmem:[#allocation2 + $0x908] sm:$0xff] %v1907
        %3146 = vst [vmem:[#allocation2 + $0x910] sm:$0xff] %v2578
        %3147 = vst [vmem:[#allocation2 + $0x918] sm:$0xff] %v2580
        %3148 = vst [vmem:[#allocation2 + $0x920] sm:$0xff] %v1909
        %3149 = vst [vmem:[#allocation2 + $0x928] sm:$0xff] %v1911
        %3150 = vst [vmem:[#allocation2 + $0x930] sm:$0xff] %v2582
        %3151 = vst [vmem:[#allocation2 + $0x938] sm:$0xff] %v2584
        %3152 = vst [vmem:[#allocation2 + $0x940] sm:$0xff] %v1915
        %3153 = vst [vmem:[#allocation2 + $0x948] sm:$0xff] %v1917
        %3154 = vst [vmem:[#allocation2 + $0x950] sm:$0xff] %v2588
        %3155 = vst [vmem:[#allocation2 + $0x958] sm:$0xff] %v2590
        %3156 = vst [vmem:[#allocation2 + $0x960] sm:$0xff] %v1919
        %3157 = vst [vmem:[#allocation2 + $0x968] sm:$0xff] %v1921
        %3158 = vst [vmem:[#allocation2 + $0x970] sm:$0xff] %v2592
        %3159 = vst [vmem:[#allocation2 + $0x978] sm:$0xff] %v2594
        %3160 = vst [vmem:[#allocation2 + $0x980] sm:$0xff] %v1925
        %3161 = vst [vmem:[#allocation2 + $0x988] sm:$0xff] %v1927
        %3162 = vst [vmem:[#allocation2 + $0x990] sm:$0xff] %v2598
        %3163 = vst [vmem:[#allocation2 + $0x998] sm:$0xff] %v2600
        %3164 = vst [vmem:[#allocation2 + $0x9a0] sm:$0xff] %v1929
        %3165 = vst [vmem:[#allocation2 + $0x9a8] sm:$0xff] %v1931
        %3166 = vst [vmem:[#allocation2 + $0x9b0] sm:$0xff] %v2602
        %3167 = vst [vmem:[#allocation2 + $0x9b8] sm:$0xff] %v2604
        %3168 = vst [vmem:[#allocation2 + $0x9c0] sm:$0xff] %v1935
        %3169 = vst [vmem:[#allocation2 + $0x9c8] sm:$0xff] %v1937
        %3170 = vst [vmem:[#allocation2 + $0x9d0] sm:$0xff] %v2608
        %3171 = vst [vmem:[#allocation2 + $0x9d8] sm:$0xff] %v2610
        %3172 = vst [vmem:[#allocation2 + $0x9e0] sm:$0xff] %v1939
        %3173 = vst [vmem:[#allocation2 + $0x9e8] sm:$0xff] %v1941
        %3174 = vst [vmem:[#allocation2 + $0x9f0] sm:$0xff] %v2612
        %3175 = vst [vmem:[#allocation2 + $0x9f8] sm:$0xff] %v2614
        %3176 = vst [vmem:[#allocation2 + $0xa00] sm:$0xff] %v1945
        %3177 = vst [vmem:[#allocation2 + $0xa08] sm:$0xff] %v1947
        %3178 = vst [vmem:[#allocation2 + $0xa10] sm:$0xff] %v2618
        %3179 = vst [vmem:[#allocation2 + $0xa18] sm:$0xff] %v2620
        %3180 = vst [vmem:[#allocation2 + $0xa20] sm:$0xff] %v1949
        %3181 = vst [vmem:[#allocation2 + $0xa28] sm:$0xff] %v1951
        %3182 = vst [vmem:[#allocation2 + $0xa30] sm:$0xff] %v2622
        %3183 = vst [vmem:[#allocation2 + $0xa38] sm:$0xff] %v2624
        %3184 = vst [vmem:[#allocation2 + $0xa40] sm:$0xff] %v1955
        %3185 = vst [vmem:[#allocation2 + $0xa48] sm:$0xff] %v1957
        %3186 = vst [vmem:[#allocation2 + $0xa50] sm:$0xff] %v2628
        %3187 = vst [vmem:[#allocation2 + $0xa58] sm:$0xff] %v2630
        %3188 = vst [vmem:[#allocation2 + $0xa60] sm:$0xff] %v1959
        %3189 = vst [vmem:[#allocation2 + $0xa68] sm:$0xff] %v1961
        %3190 = vst [vmem:[#allocation2 + $0xa70] sm:$0xff] %v2632
        %3191 = vst [vmem:[#allocation2 + $0xa78] sm:$0xff] %v2634
        %3192 = vst [vmem:[#allocation2 + $0xa80] sm:$0xff] %v1965
        %3193 = vst [vmem:[#allocation2 + $0xa88] sm:$0xff] %v1967
        %3194 = vst [vmem:[#allocation2 + $0xa90] sm:$0xff] %v2638
        %3195 = vst [vmem:[#allocation2 + $0xa98] sm:$0xff] %v2640
        %3196 = vst [vmem:[#allocation2 + $0xaa0] sm:$0xff] %v1969
        %3197 = vst [vmem:[#allocation2 + $0xaa8] sm:$0xff] %v1971
        %3198 = vst [vmem:[#allocation2 + $0xab0] sm:$0xff] %v2642
        %3199 = vst [vmem:[#allocation2 + $0xab8] sm:$0xff] %v2644
        %3200 = vst [vmem:[#allocation2 + $0xac0] sm:$0xff] %v1975
        %3201 = vst [vmem:[#allocation2 + $0xac8] sm:$0xff] %v1977
        %3202 = vst [vmem:[#allocation2 + $0xad0] sm:$0xff] %v2648
        %3203 = vst [vmem:[#allocation2 + $0xad8] sm:$0xff] %v2650
        %3204 = vst [vmem:[#allocation2 + $0xae0] sm:$0xff] %v1979
        %3205 = vst [vmem:[#allocation2 + $0xae8] sm:$0xff] %v1981
        %3206 = vst [vmem:[#allocation2 + $0xaf0] sm:$0xff] %v2652
        %3207 = vst [vmem:[#allocation2 + $0xaf8] sm:$0xff] %v2654
        %3208 = vst [vmem:[#allocation2 + $0xb00] sm:$0xff] %v1985
        %3209 = vst [vmem:[#allocation2 + $0xb08] sm:$0xff] %v1987
        %3210 = vst [vmem:[#allocation2 + $0xb10] sm:$0xff] %v2658
        %3211 = vst [vmem:[#allocation2 + $0xb18] sm:$0xff] %v2660
        %3212 = vst [vmem:[#allocation2 + $0xb20] sm:$0xff] %v1989
        %3213 = vst [vmem:[#allocation2 + $0xb28] sm:$0xff] %v1991
        %3214 = vst [vmem:[#allocation2 + $0xb30] sm:$0xff] %v2662
        %3215 = vst [vmem:[#allocation2 + $0xb38] sm:$0xff] %v2664
        %3216 = vst [vmem:[#allocation2 + $0xb40] sm:$0xff] %v1995
        %3217 = vst [vmem:[#allocation2 + $0xb48] sm:$0xff] %v1997
        %3218 = vst [vmem:[#allocation2 + $0xb50] sm:$0xff] %v2668
        %3219 = vst [vmem:[#allocation2 + $0xb58] sm:$0xff] %v2670
        %3220 = vst [vmem:[#allocation2 + $0xb60] sm:$0xff] %v1999
        %3221 = vst [vmem:[#allocation2 + $0xb68] sm:$0xff] %v2001
        %3222 = vst [vmem:[#allocation2 + $0xb70] sm:$0xff] %v2672
        %3223 = vst [vmem:[#allocation2 + $0xb78] sm:$0xff] %v2674
        %3224 = vst [vmem:[#allocation2 + $0xb80] sm:$0xff] %v2005
        %3225 = vst [vmem:[#allocation2 + $0xb88] sm:$0xff] %v2007
        %3226 = vst [vmem:[#allocation2 + $0xb90] sm:$0xff] %v2678
        %3227 = vst [vmem:[#allocation2 + $0xb98] sm:$0xff] %v2680
        %3228 = vst [vmem:[#allocation2 + $0xba0] sm:$0xff] %v2009
        %3229 = vst [vmem:[#allocation2 + $0xba8] sm:$0xff] %v2011
        %3230 = vst [vmem:[#allocation2 + $0xbb0] sm:$0xff] %v2682
        %3231 = vst [vmem:[#allocation2 + $0xbb8] sm:$0xff] %v2684
        %3232 = vst [vmem:[#allocation2 + $0xbc0] sm:$0xff] %v2015
        %3233 = vst [vmem:[#allocation2 + $0xbc8] sm:$0xff] %v2017
        %3234 = vst [vmem:[#allocation2 + $0xbd0] sm:$0xff] %v2688
        %3235 = vst [vmem:[#allocation2 + $0xbd8] sm:$0xff] %v2690
        %3236 = vst [vmem:[#allocation2 + $0xbe0] sm:$0xff] %v2019
        %3237 = vst [vmem:[#allocation2 + $0xbe8] sm:$0xff] %v2021
        %3238 = vst [vmem:[#allocation2 + $0xbf0] sm:$0xff] %v2692
        %3239 = vst [vmem:[#allocation2 + $0xbf8] sm:$0xff] %v2694
        %3240 = vst [vmem:[#allocation2 + $0xc00] sm:$0xff] %v2025
        %3241 = vst [vmem:[#allocation2 + $0xc08] sm:$0xff] %v2027
        %3242 = vst [vmem:[#allocation2 + $0xc10] sm:$0xff] %v2698
        %3243 = vst [vmem:[#allocation2 + $0xc18] sm:$0xff] %v2700
        %3244 = vst [vmem:[#allocation2 + $0xc20] sm:$0xff] %v2029
        %3245 = vst [vmem:[#allocation2 + $0xc28] sm:$0xff] %v2031
        %3246 = vst [vmem:[#allocation2 + $0xc30] sm:$0xff] %v2702
        %3247 = vst [vmem:[#allocation2 + $0xc38] sm:$0xff] %v2704
        %3248 = vst [vmem:[#allocation2 + $0xc40] sm:$0xff] %v2035
        %3249 = vst [vmem:[#allocation2 + $0xc48] sm:$0xff] %v2037
        %3250 = vst [vmem:[#allocation2 + $0xc50] sm:$0xff] %v2708
        %3251 = vst [vmem:[#allocation2 + $0xc58] sm:$0xff] %v2710
        %3252 = vst [vmem:[#allocation2 + $0xc60] sm:$0xff] %v2039
        %3253 = vst [vmem:[#allocation2 + $0xc68] sm:$0xff] %v2041
        %3254 = vst [vmem:[#allocation2 + $0xc70] sm:$0xff] %v2712
        %3255 = vst [vmem:[#allocation2 + $0xc78] sm:$0xff] %v2714
        %3256 = vst [vmem:[#allocation2 + $0xc80] sm:$0xff] %v2045
        %3257 = vst [vmem:[#allocation2 + $0xc88] sm:$0xff] %v2047
        %3258 = vst [vmem:[#allocation2 + $0xc90] sm:$0xff] %v2718
        %3259 = vst [vmem:[#allocation2 + $0xc98] sm:$0xff] %v2720
        %3260 = vst [vmem:[#allocation2 + $0xca0] sm:$0xff] %v2049
        %3261 = vst [vmem:[#allocation2 + $0xca8] sm:$0xff] %v2051
        %3262 = vst [vmem:[#allocation2 + $0xcb0] sm:$0xff] %v2722
        %3263 = vst [vmem:[#allocation2 + $0xcb8] sm:$0xff] %v2724
        %3264 = vst [vmem:[#allocation2 + $0xcc0] sm:$0xff] %v2055
        %3265 = vst [vmem:[#allocation2 + $0xcc8] sm:$0xff] %v2057
        %3266 = vst [vmem:[#allocation2 + $0xcd0] sm:$0xff] %v2728
        %3267 = vst [vmem:[#allocation2 + $0xcd8] sm:$0xff] %v2730
        %3268 = vst [vmem:[#allocation2 + $0xce0] sm:$0xff] %v2059
        %3269 = vst [vmem:[#allocation2 + $0xce8] sm:$0xff] %v2061
        %3270 = vst [vmem:[#allocation2 + $0xcf0] sm:$0xff] %v2732
        %3271 = vst [vmem:[#allocation2 + $0xcf8] sm:$0xff] %v2734
        %3272 = vst [vmem:[#allocation2 + $0xd00] sm:$0xff] %v2065
        %3273 = vst [vmem:[#allocation2 + $0xd08] sm:$0xff] %v2067
        %3274 = vst [vmem:[#allocation2 + $0xd10] sm:$0xff] %v2738
        %3275 = vst [vmem:[#allocation2 + $0xd18] sm:$0xff] %v2740
        %3276 = vst [vmem:[#allocation2 + $0xd20] sm:$0xff] %v2069
        %3277 = vst [vmem:[#allocation2 + $0xd28] sm:$0xff] %v2071
        %3278 = vst [vmem:[#allocation2 + $0xd30] sm:$0xff] %v2742
        %3279 = vst [vmem:[#allocation2 + $0xd38] sm:$0xff] %v2744
        %3280 = vst [vmem:[#allocation2 + $0xd40] sm:$0xff] %v2075
        %3281 = vst [vmem:[#allocation2 + $0xd48] sm:$0xff] %v2077
        %3282 = vst [vmem:[#allocation2 + $0xd50] sm:$0xff] %v2748
        %3283 = vst [vmem:[#allocation2 + $0xd58] sm:$0xff] %v2750
        %3284 = vst [vmem:[#allocation2 + $0xd60] sm:$0xff] %v2079
        %3285 = vst [vmem:[#allocation2 + $0xd68] sm:$0xff] %v2081
        %3286 = vst [vmem:[#allocation2 + $0xd70] sm:$0xff] %v2752
        %3287 = vst [vmem:[#allocation2 + $0xd78] sm:$0xff] %v2754
        %3288 = vst [vmem:[#allocation2 + $0xd80] sm:$0xff] %v2085
        %3289 = vst [vmem:[#allocation2 + $0xd88] sm:$0xff] %v2087
        %3290 = vst [vmem:[#allocation2 + $0xd90] sm:$0xff] %v2758
        %3291 = vst [vmem:[#allocation2 + $0xd98] sm:$0xff] %v2760
        %3292 = vst [vmem:[#allocation2 + $0xda0] sm:$0xff] %v2089
        %3293 = vst [vmem:[#allocation2 + $0xda8] sm:$0xff] %v2091
        %3294 = vst [vmem:[#allocation2 + $0xdb0] sm:$0xff] %v2762
        %3295 = vst [vmem:[#allocation2 + $0xdb8] sm:$0xff] %v2764
        %3296 = vst [vmem:[#allocation2 + $0xdc0] sm:$0xff] %v2095
        %3297 = vst [vmem:[#allocation2 + $0xdc8] sm:$0xff] %v2097
        %3298 = vst [vmem:[#allocation2 + $0xdd0] sm:$0xff] %v2768
        %3299 = vst [vmem:[#allocation2 + $0xdd8] sm:$0xff] %v2770
        %3300 = vst [vmem:[#allocation2 + $0xde0] sm:$0xff] %v2099
        %3301 = vst [vmem:[#allocation2 + $0xde8] sm:$0xff] %v2101
        %3302 = vst [vmem:[#allocation2 + $0xdf0] sm:$0xff] %v2772
        %3303 = vst [vmem:[#allocation2 + $0xdf8] sm:$0xff] %v2774
        %3304 = vst [vmem:[#allocation2 + $0xe00] sm:$0xff] %v2105
        %3305 = vst [vmem:[#allocation2 + $0xe08] sm:$0xff] %v2107
        %3306 = vst [vmem:[#allocation2 + $0xe10] sm:$0xff] %v2778
        %3307 = vst [vmem:[#allocation2 + $0xe18] sm:$0xff] %v2780
        %3308 = vst [vmem:[#allocation2 + $0xe20] sm:$0xff] %v2109
        %3309 = vst [vmem:[#allocation2 + $0xe28] sm:$0xff] %v2111
        %3310 = vst [vmem:[#allocation2 + $0xe30] sm:$0xff] %v2782
        %3311 = vst [vmem:[#allocation2 + $0xe38] sm:$0xff] %v2784
        %3312 = vst [vmem:[#allocation2 + $0xe40] sm:$0xff] %v2115
        %3313 = vst [vmem:[#allocation2 + $0xe48] sm:$0xff] %v2117
        %3314 = vst [vmem:[#allocation2 + $0xe50] sm:$0xff] %v2788
        %3315 = vst [vmem:[#allocation2 + $0xe58] sm:$0xff] %v2790
        %3316 = vst [vmem:[#allocation2 + $0xe60] sm:$0xff] %v2119
        %3317 = vst [vmem:[#allocation2 + $0xe68] sm:$0xff] %v2121
        %3318 = vst [vmem:[#allocation2 + $0xe70] sm:$0xff] %v2792
        %3319 = vst [vmem:[#allocation2 + $0xe78] sm:$0xff] %v2794
        %3320 = vst [vmem:[#allocation2 + $0xe80] sm:$0xff] %v2125
        %3321 = vst [vmem:[#allocation2 + $0xe88] sm:$0xff] %v2127
        %3322 = vst [vmem:[#allocation2 + $0xe90] sm:$0xff] %v2798
        %3323 = vst [vmem:[#allocation2 + $0xe98] sm:$0xff] %v2800
        %3324 = vst [vmem:[#allocation2 + $0xea0] sm:$0xff] %v2129
        %3325 = vst [vmem:[#allocation2 + $0xea8] sm:$0xff] %v2131
        %3326 = vst [vmem:[#allocation2 + $0xeb0] sm:$0xff] %v2802
        %3327 = vst [vmem:[#allocation2 + $0xeb8] sm:$0xff] %v2804
        %3328 = vst [vmem:[#allocation2 + $0xec0] sm:$0xff] %v2135
        %3329 = vst [vmem:[#allocation2 + $0xec8] sm:$0xff] %v2137
        %3330 = vst [vmem:[#allocation2 + $0xed0] sm:$0xff] %v2808
        %3331 = vst [vmem:[#allocation2 + $0xed8] sm:$0xff] %v2810
        %3332 = vst [vmem:[#allocation2 + $0xee0] sm:$0xff] %v2139
        %3333 = vst [vmem:[#allocation2 + $0xee8] sm:$0xff] %v2141
        %3334 = vst [vmem:[#allocation2 + $0xef0] sm:$0xff] %v2812
        %3335 = vst [vmem:[#allocation2 + $0xef8] sm:$0xff] %v2814
        %3336 = vst [vmem:[#allocation2 + $0xf00] sm:$0xff] %v2145
        %3337 = vst [vmem:[#allocation2 + $0xf08] sm:$0xff] %v2147
        %3338 = vst [vmem:[#allocation2 + $0xf10] sm:$0xff] %v2818
        %3339 = vst [vmem:[#allocation2 + $0xf18] sm:$0xff] %v2820
        %3340 = vst [vmem:[#allocation2 + $0xf20] sm:$0xff] %v2149
        %3341 = vst [vmem:[#allocation2 + $0xf28] sm:$0xff] %v2151
        %3342 = vst [vmem:[#allocation2 + $0xf30] sm:$0xff] %v2822
        %3343 = vst [vmem:[#allocation2 + $0xf38] sm:$0xff] %v2824
        %3344 = vst [vmem:[#allocation2 + $0xf40] sm:$0xff] %v2155
        %3345 = vst [vmem:[#allocation2 + $0xf48] sm:$0xff] %v2157
        %3346 = vst [vmem:[#allocation2 + $0xf50] sm:$0xff] %v2828
        %3347 = vst [vmem:[#allocation2 + $0xf58] sm:$0xff] %v2830
        %3348 = vst [vmem:[#allocation2 + $0xf60] sm:$0xff] %v2159
        %3349 = vst [vmem:[#allocation2 + $0xf68] sm:$0xff] %v2161
        %3350 = vst [vmem:[#allocation2 + $0xf70] sm:$0xff] %v2832
        %3351 = vst [vmem:[#allocation2 + $0xf78] sm:$0xff] %v2834
        %3352 = vst [vmem:[#allocation2 + $0xf80] sm:$0xff] %v2165
        %3353 = vst [vmem:[#allocation2 + $0xf88] sm:$0xff] %v2167
        %3354 = vst [vmem:[#allocation2 + $0xf90] sm:$0xff] %v2838
        %3355 = vst [vmem:[#allocation2 + $0xf98] sm:$0xff] %v2840
        %3356 = vst [vmem:[#allocation2 + $0xfa0] sm:$0xff] %v2169
        %3357 = vst [vmem:[#allocation2 + $0xfa8] sm:$0xff] %v2171
        %3358 = vst [vmem:[#allocation2 + $0xfb0] sm:$0xff] %v2842
        %3359 = vst [vmem:[#allocation2 + $0xfb8] sm:$0xff] %v2844
        %3360 = vst [vmem:[#allocation2 + $0xfc0] sm:$0xff] %v2175
        %3361 = vst [vmem:[#allocation2 + $0xfc8] sm:$0xff] %v2177
        %3362 = vst [vmem:[#allocation2 + $0xfd0] sm:$0xff] %v2848
        %3363 = vst [vmem:[#allocation2 + $0xfd8] sm:$0xff] %v2850
        %3364 = vst [vmem:[#allocation2 + $0xfe0] sm:$0xff] %v2179
        %3365 = vst [vmem:[#allocation2 + $0xfe8] sm:$0xff] %v2181
        %3366 = vst [vmem:[#allocation2 + $0xff0] sm:$0xff] %v2852
        %3367 = vst [vmem:[#allocation2 + $0xff8] sm:$0xff] %v2854
        %v3368 = vld [vmem:[%s2] sm:$0xff]
        %v3369 = vld [vmem:[%s2 + $0x8] sm:$0xff]
        %v3370 = vld [vmem:[%s2 + $0x10] sm:$0xff]
        %v3371 = vld [vmem:[%s2 + $0x18] sm:$0xff]
        %v3372 = vld [vmem:[%s2 + $0x20] sm:$0xff]
        %v3373 = vld [vmem:[%s2 + $0x28] sm:$0xff]
        %v3374 = vld [vmem:[%s2 + $0x30] sm:$0xff]
        %v3375 = vld [vmem:[%s2 + $0x38] sm:$0xff]
        %v3376 = vld [vmem:[%s2 + $0x40] sm:$0xff]
        %v3377 = vld [vmem:[%s2 + $0x48] sm:$0xff]
        %v3378 = vld [vmem:[%s2 + $0x50] sm:$0xff]
        %v3379 = vld [vmem:[%s2 + $0x58] sm:$0xff]
        %v3380 = vld [vmem:[%s2 + $0x60] sm:$0xff]
        %v3381 = vld [vmem:[%s2 + $0x68] sm:$0xff]
        %v3382 = vld [vmem:[%s2 + $0x70] sm:$0xff]
        %v3383 = vld [vmem:[%s2 + $0x78] sm:$0xff]
        %v3384 = vld [vmem:[%s2 + $0x80] sm:$0xff]
        %v3385 = vld [vmem:[%s2 + $0x88] sm:$0xff]
        %v3386 = vld [vmem:[%s2 + $0x90] sm:$0xff]
        %v3387 = vld [vmem:[%s2 + $0x98] sm:$0xff]
        %v3388 = vld [vmem:[%s2 + $0xa0] sm:$0xff]
        %v3389 = vld [vmem:[%s2 + $0xa8] sm:$0xff]
        %v3390 = vld [vmem:[%s2 + $0xb0] sm:$0xff]
        %v3391 = vld [vmem:[%s2 + $0xb8] sm:$0xff]
        %v3392 = vld [vmem:[%s2 + $0xc0] sm:$0xff]
        %v3393 = vld [vmem:[%s2 + $0xc8] sm:$0xff]
        %v3394 = vld [vmem:[%s2 + $0xd0] sm:$0xff]
        %v3395 = vld [vmem:[%s2 + $0xd8] sm:$0xff]
        %v3396 = vld [vmem:[%s2 + $0xe0] sm:$0xff]
        %v3397 = vld [vmem:[%s2 + $0xe8] sm:$0xff]
        %v3398 = vld [vmem:[%s2 + $0xf0] sm:$0xff]
        %v3399 = vld [vmem:[%s2 + $0xf8] sm:$0xff]
        %v3400 = vld [vmem:[#allocation2] sm:$0xff]
        %v3401 = vld [vmem:[#allocation2 + $0x8] sm:$0xff]
        %v3402 = vld [vmem:[#allocation2 + $0x10] sm:$0xff]
        %v3403 = vld [vmem:[#allocation2 + $0x18] sm:$0xff]
        %v3404 = vld [vmem:[#allocation2 + $0x20] sm:$0xff]
        %v3405 = vld [vmem:[#allocation2 + $0x28] sm:$0xff]
        %v3406 = vld [vmem:[#allocation2 + $0x30] sm:$0xff]
        %v3407 = vld [vmem:[#allocation2 + $0x38] sm:$0xff]
        %v3408 = vld [vmem:[#allocation2 + $0x40] sm:$0xff]
        %v3409 = vld [vmem:[#allocation2 + $0x48] sm:$0xff]
        %v3410 = vld [vmem:[#allocation2 + $0x50] sm:$0xff]
        %v3411 = vld [vmem:[#allocation2 + $0x58] sm:$0xff]
        %v3412 = vld [vmem:[#allocation2 + $0x60] sm:$0xff]
        %v3413 = vld [vmem:[#allocation2 + $0x68] sm:$0xff]
        %v3414 = vld [vmem:[#allocation2 + $0x70] sm:$0xff]
        %v3415 = vld [vmem:[#allocation2 + $0x78] sm:$0xff]
        %v3416 = vld [vmem:[#allocation2 + $0x80] sm:$0xff]
        %v3417 = vld [vmem:[#allocation2 + $0x88] sm:$0xff]
        %v3418 = vld [vmem:[#allocation2 + $0x90] sm:$0xff]
        %v3419 = vld [vmem:[#allocation2 + $0x98] sm:$0xff]
        %v3420 = vld [vmem:[#allocation2 + $0xa0] sm:$0xff]
        %v3421 = vld [vmem:[#allocation2 + $0xa8] sm:$0xff]
        %v3422 = vld [vmem:[#allocation2 + $0xb0] sm:$0xff]
        %v3423 = vld [vmem:[#allocation2 + $0xb8] sm:$0xff]
        %v3424 = vld [vmem:[#allocation2 + $0xc0] sm:$0xff]
        %v3425 = vld [vmem:[#allocation2 + $0xc8] sm:$0xff]
        %v3426 = vld [vmem:[#allocation2 + $0xd0] sm:$0xff]
        %v3427 = vld [vmem:[#allocation2 + $0xd8] sm:$0xff]
        %v3428 = vld [vmem:[#allocation2 + $0xe0] sm:$0xff]
        %v3429 = vld [vmem:[#allocation2 + $0xe8] sm:$0xff]
        %v3430 = vld [vmem:[#allocation2 + $0xf0] sm:$0xff]
        %v3431 = vld [vmem:[#allocation2 + $0xf8] sm:$0xff]
        %v3432 = vld [vmem:[#allocation2 + $0x100] sm:$0xff]
        %v3433 = vld [vmem:[#allocation2 + $0x108] sm:$0xff]
        %v3434 = vld [vmem:[#allocation2 + $0x110] sm:$0xff]
        %v3435 = vld [vmem:[#allocation2 + $0x118] sm:$0xff]
        %v3436 = vld [vmem:[#allocation2 + $0x120] sm:$0xff]
        %v3437 = vld [vmem:[#allocation2 + $0x128] sm:$0xff]
        %v3438 = vld [vmem:[#allocation2 + $0x130] sm:$0xff]
        %v3439 = vld [vmem:[#allocation2 + $0x138] sm:$0xff]
        %v3440 = vld [vmem:[#allocation2 + $0x140] sm:$0xff]
        %v3441 = vld [vmem:[#allocation2 + $0x148] sm:$0xff]
        %v3442 = vld [vmem:[#allocation2 + $0x150] sm:$0xff]
        %v3443 = vld [vmem:[#allocation2 + $0x158] sm:$0xff]
        %v3444 = vld [vmem:[#allocation2 + $0x160] sm:$0xff]
        %v3445 = vld [vmem:[#allocation2 + $0x168] sm:$0xff]
        %v3446 = vld [vmem:[#allocation2 + $0x170] sm:$0xff]
        %v3447 = vld [vmem:[#allocation2 + $0x178] sm:$0xff]
        %v3448 = vld [vmem:[#allocation2 + $0x180] sm:$0xff]
        %v3449 = vld [vmem:[#allocation2 + $0x188] sm:$0xff]
        %v3450 = vld [vmem:[#allocation2 + $0x190] sm:$0xff]
        %v3451 = vld [vmem:[#allocation2 + $0x198] sm:$0xff]
        %v3452 = vld [vmem:[#allocation2 + $0x1a0] sm:$0xff]
        %v3453 = vld [vmem:[#allocation2 + $0x1a8] sm:$0xff]
        %v3454 = vld [vmem:[#allocation2 + $0x1b0] sm:$0xff]
        %v3455 = vld [vmem:[#allocation2 + $0x1b8] sm:$0xff]
        %v3456 = vld [vmem:[#allocation2 + $0x1c0] sm:$0xff]
        %v3457 = vld [vmem:[#allocation2 + $0x1c8] sm:$0xff]
        %v3458 = vld [vmem:[#allocation2 + $0x1d0] sm:$0xff]
        %v3459 = vld [vmem:[#allocation2 + $0x1d8] sm:$0xff]
        %v3460 = vld [vmem:[#allocation2 + $0x1e0] sm:$0xff]
        %v3461 = vld [vmem:[#allocation2 + $0x1e8] sm:$0xff]
        %v3462 = vld [vmem:[#allocation2 + $0x1f0] sm:$0xff]
        %v3463 = vld [vmem:[#allocation2 + $0x1f8] sm:$0xff]
        %v3496 = vunpack.c.l.b16 %v3368
        %v3497 = vunpack.c.h.b16 %v3368
        %v3498 = vunpack.c.l.b16 %v3369
        %v3499 = vunpack.c.h.b16 %v3369
        %v3500 = vunpack.c.l.b16 %v3370
        %v3501 = vunpack.c.h.b16 %v3370
        %v3502 = vunpack.c.l.b16 %v3371
        %v3503 = vunpack.c.h.b16 %v3371
        %v3504 = vunpack.c.l.b16 %v3372
        %v3505 = vunpack.c.h.b16 %v3372
        %v3506 = vunpack.c.l.b16 %v3373
        %v3507 = vunpack.c.h.b16 %v3373
        %v3508 = vunpack.c.l.b16 %v3374
        %v3509 = vunpack.c.h.b16 %v3374
        %v3510 = vunpack.c.l.b16 %v3375
        %v3511 = vunpack.c.h.b16 %v3375
        %v3512 = vunpack.c.l.b16 %v3376
        %v3513 = vunpack.c.h.b16 %v3376
        %v3514 = vunpack.c.l.b16 %v3377
        %v3515 = vunpack.c.h.b16 %v3377
        %v3516 = vunpack.c.l.b16 %v3378
        %v3517 = vunpack.c.h.b16 %v3378
        %v3518 = vunpack.c.l.b16 %v3379
        %v3519 = vunpack.c.h.b16 %v3379
        %v3520 = vunpack.c.l.b16 %v3380
        %v3521 = vunpack.c.h.b16 %v3380
        %v3522 = vunpack.c.l.b16 %v3381
        %v3523 = vunpack.c.h.b16 %v3381
        %v3524 = vunpack.c.l.b16 %v3382
        %v3525 = vunpack.c.h.b16 %v3382
        %v3526 = vunpack.c.l.b16 %v3383
        %v3527 = vunpack.c.h.b16 %v3383
        %v3528 = vunpack.c.l.b16 %v3384
        %v3529 = vunpack.c.h.b16 %v3384
        %v3530 = vunpack.c.l.b16 %v3385
        %v3531 = vunpack.c.h.b16 %v3385
        %v3532 = vunpack.c.l.b16 %v3386
        %v3533 = vunpack.c.h.b16 %v3386
        %v3534 = vunpack.c.l.b16 %v3387
        %v3535 = vunpack.c.h.b16 %v3387
        %v3536 = vunpack.c.l.b16 %v3388
        %v3537 = vunpack.c.h.b16 %v3388
        %v3538 = vunpack.c.l.b16 %v3389
        %v3539 = vunpack.c.h.b16 %v3389
        %v3540 = vunpack.c.l.b16 %v3390
        %v3541 = vunpack.c.h.b16 %v3390
        %v3542 = vunpack.c.l.b16 %v3391
        %v3543 = vunpack.c.h.b16 %v3391
        %v3544 = vunpack.c.l.b16 %v3392
        %v3545 = vunpack.c.h.b16 %v3392
        %v3546 = vunpack.c.l.b16 %v3393
        %v3547 = vunpack.c.h.b16 %v3393
        %v3548 = vunpack.c.l.b16 %v3394
        %v3549 = vunpack.c.h.b16 %v3394
        %v3550 = vunpack.c.l.b16 %v3395
        %v3551 = vunpack.c.h.b16 %v3395
        %v3552 = vunpack.c.l.b16 %v3396
        %v3553 = vunpack.c.h.b16 %v3396
        %v3554 = vunpack.c.l.b16 %v3397
        %v3555 = vunpack.c.h.b16 %v3397
        %v3556 = vunpack.c.l.b16 %v3398
        %v3557 = vunpack.c.h.b16 %v3398
        %v3558 = vunpack.c.l.b16 %v3399
        %v3559 = vunpack.c.h.b16 %v3399
        %v3560 = vpack.c.b16 %v3500, %v3496
        %v3561 = vpack.c.b16 %v3501, %v3497
        %v3562 = vpack.c.b16 %v3502, %v3498
        %v3563 = vpack.c.b16 %v3503, %v3499
        %v3564 = vpack.c.b16 %v3508, %v3504
        %v3565 = vpack.c.b16 %v3509, %v3505
        %v3566 = vpack.c.b16 %v3510, %v3506
        %v3567 = vpack.c.b16 %v3511, %v3507
        %v3568 = vpack.c.b16 %v3516, %v3512
        %v3569 = vpack.c.b16 %v3517, %v3513
        %v3570 = vpack.c.b16 %v3518, %v3514
        %v3571 = vpack.c.b16 %v3519, %v3515
        %v3572 = vpack.c.b16 %v3524, %v3520
        %v3573 = vpack.c.b16 %v3525, %v3521
        %v3574 = vpack.c.b16 %v3526, %v3522
        %v3575 = vpack.c.b16 %v3527, %v3523
        %v3576 = vpack.c.b16 %v3532, %v3528
        %v3577 = vpack.c.b16 %v3533, %v3529
        %v3578 = vpack.c.b16 %v3534, %v3530
        %v3579 = vpack.c.b16 %v3535, %v3531
        %v3580 = vpack.c.b16 %v3540, %v3536
        %v3581 = vpack.c.b16 %v3541, %v3537
        %v3582 = vpack.c.b16 %v3542, %v3538
        %v3583 = vpack.c.b16 %v3543, %v3539
        %v3584 = vpack.c.b16 %v3548, %v3544
        %v3585 = vpack.c.b16 %v3549, %v3545
        %v3586 = vpack.c.b16 %v3550, %v3546
        %v3587 = vpack.c.b16 %v3551, %v3547
        %v3588 = vpack.c.b16 %v3556, %v3552
        %v3589 = vpack.c.b16 %v3557, %v3553
        %v3590 = vpack.c.b16 %v3558, %v3554
        %v3591 = vpack.c.b16 %v3559, %v3555
        %3624 = vmatprep.subr.bf16.mxu0 %v3589
        %3625 = vmatpush1.bf16.msra.mxu0 %v3588
        %3626 = vmatprep.subr.bf16.mxu0 %v3585
        %3627 = vmatpush1.bf16.msra.mxu0 %v3584
        %3628 = vmatprep.subr.bf16.mxu0 %v3581
        %3629 = vmatpush1.bf16.msra.mxu0 %v3580
        %3630 = vmatprep.subr.bf16.mxu0 %v3577
        %3631 = vmatpush1.bf16.msra.mxu0 %v3576
        %3632 = vmatprep.subr.bf16.mxu0 %v3573
        %3633 = vmatpush1.bf16.msra.mxu0 %v3572
        %3634 = vmatprep.subr.bf16.mxu0 %v3569
        %3635 = vmatpush1.bf16.msra.mxu0 %v3568
        %3636 = vmatprep.subr.bf16.mxu0 %v3565
        %3637 = vmatpush1.bf16.msra.mxu0 %v3564
        %3638 = vmatprep.subr.bf16.mxu0 %v3561
        %3639 = vmatpush1.bf16.msra.mxu0 %v3560
        %3640 = vmatprep.subr.bf16.mxu0 0
        %3641 = vmatpush2.bf16.msra.mxu0 0
        %3642 = vmatprep.subr.bf16.mxu0 0
        %3643 = vmatpush2.bf16.msra.mxu0 0
        %3644 = vmatprep.subr.bf16.mxu0 0
        %3645 = vmatpush2.bf16.msra.mxu0 0
        %3646 = vmatprep.subr.bf16.mxu0 0
        %3647 = vmatpush2.bf16.msra.mxu0 0
        %3648 = vmatprep.subr.bf16.mxu0 0
        %3649 = vmatpush2.bf16.msra.mxu0 0
        %3650 = vmatprep.subr.bf16.mxu0 0
        %3651 = vmatpush2.bf16.msra.mxu0 0
        %3652 = vmatprep.subr.bf16.mxu0 0
        %3653 = vmatpush2.bf16.msra.mxu0 0
        %3654 = vmatprep.subr.bf16.mxu0 0
        %3655 = vmatpush2.bf16.msra.mxu0 0
        %3656 = vmatprep.mubr.bf16.mxu0 0
        %3657 = vmatmul.mubr.bf16.gmra.mxu0 0
        %v3658 = vpop.f32.mrf.mxu0
        %v3659 = vadd.f32 %v3400, %v3658
        %v3660 = vpop.f32.mrf.mxu0
        %v3661 = vadd.f32 %v3401, %v3660
        %v3662 = vpop.f32.mrf.mxu0
        %v3663 = vadd.f32 %v3404, %v3662
        %v3664 = vpop.f32.mrf.mxu0
        %v3665 = vadd.f32 %v3405, %v3664
        %3666 = vmatprep.mubr.bf16.mxu0 0
        %3667 = vmatmul.mubr.bf16.gmra.mxu0 0
        %v3668 = vpop.f32.mrf.mxu0
        %v3669 = vadd.f32 %v3408, %v3668
        %v3670 = vpop.f32.mrf.mxu0
        %v3671 = vadd.f32 %v3409, %v3670
        %v3672 = vpop.f32.mrf.mxu0
        %v3673 = vadd.f32 %v3412, %v3672
        %v3674 = vpop.f32.mrf.mxu0
        %v3675 = vadd.f32 %v3413, %v3674
        %3676 = vmatprep.mubr.bf16.mxu0 0
        %3677 = vmatmul.mubr.bf16.gmra.mxu0 0
        %v3678 = vpop.f32.mrf.mxu0
        %v3679 = vadd.f32 %v3416, %v3678
        %v3680 = vpop.f32.mrf.mxu0
        %v3681 = vadd.f32 %v3417, %v3680
        %v3682 = vpop.f32.mrf.mxu0
        %v3683 = vadd.f32 %v3420, %v3682
        %v3684 = vpop.f32.mrf.mxu0
        %v3685 = vadd.f32 %v3421, %v3684
        %3686 = vmatprep.mubr.bf16.mxu0 0
        %3687 = vmatmul.mubr.bf16.gmra.mxu0 0
        %v3688 = vpop.f32.mrf.mxu0
        %v3689 = vadd.f32 %v3424, %v3688
        %v3690 = vpop.f32.mrf.mxu0
        %v3691 = vadd.f32 %v3425, %v3690
        %v3692 = vpop.f32.mrf.mxu0
        %v3693 = vadd.f32 %v3428, %v3692
        %v3694 = vpop.f32.mrf.mxu0
        %v3695 = vadd.f32 %v3429, %v3694
        %3696 = vmatprep.mubr.bf16.mxu0 0
        %3697 = vmatmul.mubr.bf16.gmra.mxu0 0
        %v3698 = vpop.f32.mrf.mxu0
        %v3699 = vadd.f32 %v3432, %v3698
        %v3700 = vpop.f32.mrf.mxu0
        %v3701 = vadd.f32 %v3433, %v3700
        %v3702 = vpop.f32.mrf.mxu0
        %v3703 = vadd.f32 %v3436, %v3702
        %v3704 = vpop.f32.mrf.mxu0
        %v3705 = vadd.f32 %v3437, %v3704
        %3706 = vmatprep.mubr.bf16.mxu0 0
        %3707 = vmatmul.mubr.bf16.gmra.mxu0 0
        %v3708 = vpop.f32.mrf.mxu0
        %v3709 = vadd.f32 %v3440, %v3708
        %v3710 = vpop.f32.mrf.mxu0
        %v3711 = vadd.f32 %v3441, %v3710
        %v3712 = vpop.f32.mrf.mxu0
        %v3713 = vadd.f32 %v3444, %v3712
        %v3714 = vpop.f32.mrf.mxu0
        %v3715 = vadd.f32 %v3445, %v3714
        %3716 = vmatprep.mubr.bf16.mxu0 0
        %3717 = vmatmul.mubr.bf16.gmra.mxu0 0
        %v3718 = vpop.f32.mrf.mxu0
        %v3719 = vadd.f32 %v3448, %v3718
        %v3720 = vpop.f32.mrf.mxu0
        %v3721 = vadd.f32 %v3449, %v3720
        %v3722 = vpop.f32.mrf.mxu0
        %v3723 = vadd.f32 %v3452, %v3722
        %v3724 = vpop.f32.mrf.mxu0
        %v3725 = vadd.f32 %v3453, %v3724
        %3726 = vmatprep.mubr.bf16.mxu0 0
        %3727 = vmatmul.mubr.bf16.gmra.mxu0 0
        %v3728 = vpop.f32.mrf.mxu0
        %v3729 = vadd.f32 %v3456, %v3728
        %v3730 = vpop.f32.mrf.mxu0
        %v3731 = vadd.f32 %v3457, %v3730
        %v3732 = vpop.f32.mrf.mxu0
        %v3733 = vadd.f32 %v3460, %v3732
        %v3734 = vpop.f32.mrf.mxu0
        %v3735 = vadd.f32 %v3461, %v3734
        %3736 = vdwg.mxu0
        %3737 = vmatprep.subr.bf16.mxu0 %v3591
        %3738 = vmatpush1.bf16.msra.mxu0 %v3590
        %3739 = vmatprep.subr.bf16.mxu0 %v3587
        %3740 = vmatpush1.bf16.msra.mxu0 %v3586
        %3741 = vmatprep.subr.bf16.mxu0 %v3583
        %3742 = vmatpush1.bf16.msra.mxu0 %v3582
        %3743 = vmatprep.subr.bf16.mxu0 %v3579
        %3744 = vmatpush1.bf16.msra.mxu0 %v3578
        %3745 = vmatprep.subr.bf16.mxu0 %v3575
        %3746 = vmatpush1.bf16.msra.mxu0 %v3574
        %3747 = vmatprep.subr.bf16.mxu0 %v3571
        %3748 = vmatpush1.bf16.msra.mxu0 %v3570
        %3749 = vmatprep.subr.bf16.mxu0 %v3567
        %3750 = vmatpush1.bf16.msra.mxu0 %v3566
        %3751 = vmatprep.subr.bf16.mxu0 %v3563
        %3752 = vmatpush1.bf16.msra.mxu0 %v3562
        %3753 = vmatprep.subr.bf16.mxu0 0
        %3754 = vmatpush2.bf16.msra.mxu0 0
        %3755 = vmatprep.subr.bf16.mxu0 0
        %3756 = vmatpush2.bf16.msra.mxu0 0
        %3757 = vmatprep.subr.bf16.mxu0 0
        %3758 = vmatpush2.bf16.msra.mxu0 0
        %3759 = vmatprep.subr.bf16.mxu0 0
        %3760 = vmatpush2.bf16.msra.mxu0 0
        %3761 = vmatprep.subr.bf16.mxu0 0
        %3762 = vmatpush2.bf16.msra.mxu0 0
        %3763 = vmatprep.subr.bf16.mxu0 0
        %3764 = vmatpush2.bf16.msra.mxu0 0
        %3765 = vmatprep.subr.bf16.mxu0 0
        %3766 = vmatpush2.bf16.msra.mxu0 0
        %3767 = vmatprep.subr.bf16.mxu0 0
        %3768 = vmatpush2.bf16.msra.mxu0 0
        %3769 = vmatprep.mubr.bf16.mxu0 0
        %3770 = vmatmul.mubr.bf16.gmra.mxu0 0
        %v3771 = vpop.f32.mrf.mxu0
        %v3772 = vadd.f32 %v3402, %v3771
        %v3773 = vpop.f32.mrf.mxu0
        %v3774 = vadd.f32 %v3403, %v3773
        %v3775 = vpop.f32.mrf.mxu0
        %v3776 = vadd.f32 %v3406, %v3775
        %v3777 = vpop.f32.mrf.mxu0
        %v3778 = vadd.f32 %v3407, %v3777
        %3779 = vmatprep.mubr.bf16.mxu0 0
        %3780 = vmatmul.mubr.bf16.gmra.mxu0 0
        %v3781 = vpop.f32.mrf.mxu0
        %v3782 = vadd.f32 %v3410, %v3781
        %v3783 = vpop.f32.mrf.mxu0
        %v3784 = vadd.f32 %v3411, %v3783
        %v3785 = vpop.f32.mrf.mxu0
        %v3786 = vadd.f32 %v3414, %v3785
        %v3787 = vpop.f32.mrf.mxu0
        %v3788 = vadd.f32 %v3415, %v3787
        %3789 = vmatprep.mubr.bf16.mxu0 0
        %3790 = vmatmul.mubr.bf16.gmra.mxu0 0
        %v3791 = vpop.f32.mrf.mxu0
        %v3792 = vadd.f32 %v3418, %v3791
        %v3793 = vpop.f32.mrf.mxu0
        %v3794 = vadd.f32 %v3419, %v3793
        %v3795 = vpop.f32.mrf.mxu0
        %v3796 = vadd.f32 %v3422, %v3795
        %v3797 = vpop.f32.mrf.mxu0
        %v3798 = vadd.f32 %v3423, %v3797
        %3799 = vmatprep.mubr.bf16.mxu0 0
        %3800 = vmatmul.mubr.bf16.gmra.mxu0 0
        %v3801 = vpop.f32.mrf.mxu0
        %v3802 = vadd.f32 %v3426, %v3801
        %v3803 = vpop.f32.mrf.mxu0
        %v3804 = vadd.f32 %v3427, %v3803
        %v3805 = vpop.f32.mrf.mxu0
        %v3806 = vadd.f32 %v3430, %v3805
        %v3807 = vpop.f32.mrf.mxu0
        %v3808 = vadd.f32 %v3431, %v3807
        %3809 = vmatprep.mubr.bf16.mxu0 0
        %3810 = vmatmul.mubr.bf16.gmra.mxu0 0
        %v3811 = vpop.f32.mrf.mxu0
        %v3812 = vadd.f32 %v3434, %v3811
        %v3813 = vpop.f32.mrf.mxu0
        %v3814 = vadd.f32 %v3435, %v3813
        %v3815 = vpop.f32.mrf.mxu0
        %v3816 = vadd.f32 %v3438, %v3815
        %v3817 = vpop.f32.mrf.mxu0
        %v3818 = vadd.f32 %v3439, %v3817
        %3819 = vmatprep.mubr.bf16.mxu0 0
        %3820 = vmatmul.mubr.bf16.gmra.mxu0 0
        %v3821 = vpop.f32.mrf.mxu0
        %v3822 = vadd.f32 %v3442, %v3821
        %v3823 = vpop.f32.mrf.mxu0
        %v3824 = vadd.f32 %v3443, %v3823
        %v3825 = vpop.f32.mrf.mxu0
        %v3826 = vadd.f32 %v3446, %v3825
        %v3827 = vpop.f32.mrf.mxu0
        %v3828 = vadd.f32 %v3447, %v3827
        %3829 = vmatprep.mubr.bf16.mxu0 0
        %3830 = vmatmul.mubr.bf16.gmra.mxu0 0
        %v3831 = vpop.f32.mrf.mxu0
        %v3832 = vadd.f32 %v3450, %v3831
        %v3833 = vpop.f32.mrf.mxu0
        %v3834 = vadd.f32 %v3451, %v3833
        %v3835 = vpop.f32.mrf.mxu0
        %v3836 = vadd.f32 %v3454, %v3835
        %v3837 = vpop.f32.mrf.mxu0
        %v3838 = vadd.f32 %v3455, %v3837
        %3839 = vmatprep.mubr.bf16.mxu0 0
        %3840 = vmatmul.mubr.bf16.gmra.mxu0 0
        %v3841 = vpop.f32.mrf.mxu0
        %v3842 = vadd.f32 %v3458, %v3841
        %v3843 = vpop.f32.mrf.mxu0
        %v3844 = vadd.f32 %v3459, %v3843
        %v3845 = vpop.f32.mrf.mxu0
        %v3846 = vadd.f32 %v3462, %v3845
        %v3847 = vpop.f32.mrf.mxu0
        %v3848 = vadd.f32 %v3463, %v3847
        %3849 = vdwg.mxu0
        %v3850 = vxor.u32 %v3659, 2147483648
        %v3851 = vxor.u32 %v3663, 2147483648
        %v3852 = vxor.u32 %v3669, 2147483648
        %v3853 = vxor.u32 %v3673, 2147483648
        %v3854 = vxor.u32 %v3679, 2147483648
        %v3855 = vxor.u32 %v3683, 2147483648
        %v3856 = vxor.u32 %v3689, 2147483648
        %v3857 = vxor.u32 %v3693, 2147483648
        %v3858 = vxor.u32 %v3699, 2147483648
        %v3859 = vxor.u32 %v3703, 2147483648
        %v3860 = vxor.u32 %v3709, 2147483648
        %v3861 = vxor.u32 %v3713, 2147483648
        %v3862 = vxor.u32 %v3719, 2147483648
        %v3863 = vxor.u32 %v3723, 2147483648
        %v3864 = vxor.u32 %v3729, 2147483648
        %v3865 = vxor.u32 %v3733, 2147483648
        %v3866 = vmul.f32 %v3850, 1.442695
        %v3867 = vpow.pop %v3866
        %v3868 = vmul.f32 %v3851, 1.442695
        %v3869 = vpow.pop %v3868
        %v3870 = vmul.f32 %v3852, 1.442695
        %v3871 = vpow.pop %v3870
        %v3872 = vmul.f32 %v3853, 1.442695
        %v3873 = vpow.pop %v3872
        %v3874 = vmul.f32 %v3854, 1.442695
        %v3875 = vpow.pop %v3874
        %v3876 = vmul.f32 %v3855, 1.442695
        %v3877 = vpow.pop %v3876
        %v3878 = vmul.f32 %v3856, 1.442695
        %v3879 = vpow.pop %v3878
        %v3880 = vmul.f32 %v3857, 1.442695
        %v3881 = vpow.pop %v3880
        %v3882 = vmul.f32 %v3858, 1.442695
        %v3883 = vpow.pop %v3882
        %v3884 = vmul.f32 %v3859, 1.442695
        %v3885 = vpow.pop %v3884
        %v3886 = vmul.f32 %v3860, 1.442695
        %v3887 = vpow.pop %v3886
        %v3888 = vmul.f32 %v3861, 1.442695
        %v3889 = vpow.pop %v3888
        %v3890 = vmul.f32 %v3862, 1.442695
        %v3891 = vpow.pop %v3890
        %v3892 = vmul.f32 %v3863, 1.442695
        %v3893 = vpow.pop %v3892
        %v3894 = vmul.f32 %v3864, 1.442695
        %v3895 = vpow.pop %v3894
        %v3896 = vmul.f32 %v3865, 1.442695
        %v3897 = vpow.pop %v3896
        %v3898 = vadd.f32 %v3867, 1.0
        %v3899 = vadd.f32 %v3869, 1.0
        %v3900 = vadd.f32 %v3871, 1.0
        %v3901 = vadd.f32 %v3873, 1.0
        %v3902 = vadd.f32 %v3875, 1.0
        %v3903 = vadd.f32 %v3877, 1.0
        %v3904 = vadd.f32 %v3879, 1.0
        %v3905 = vadd.f32 %v3881, 1.0
        %v3906 = vadd.f32 %v3883, 1.0
        %v3907 = vadd.f32 %v3885, 1.0
        %v3908 = vadd.f32 %v3887, 1.0
        %v3909 = vadd.f32 %v3889, 1.0
        %v3910 = vadd.f32 %v3891, 1.0
        %v3911 = vadd.f32 %v3893, 1.0
        %v3912 = vadd.f32 %v3895, 1.0
        %v3913 = vadd.f32 %v3897, 1.0
        %v3914 = vrcp.pop %v3898
        %v3915 = vmul.f32 1.0, %v3914
        %v3916 = vrcp.pop %v3899
        %v3917 = vmul.f32 1.0, %v3916
        %v3918 = vrcp.pop %v3900
        %v3919 = vmul.f32 1.0, %v3918
        %v3920 = vrcp.pop %v3901
        %v3921 = vmul.f32 1.0, %v3920
        %v3922 = vrcp.pop %v3902
        %v3923 = vmul.f32 1.0, %v3922
        %v3924 = vrcp.pop %v3903
        %v3925 = vmul.f32 1.0, %v3924
        %v3926 = vrcp.pop %v3904
        %v3927 = vmul.f32 1.0, %v3926
        %v3928 = vrcp.pop %v3905
        %v3929 = vmul.f32 1.0, %v3928
        %v3930 = vrcp.pop %v3906
        %v3931 = vmul.f32 1.0, %v3930
        %v3932 = vrcp.pop %v3907
        %v3933 = vmul.f32 1.0, %v3932
        %v3934 = vrcp.pop %v3908
        %v3935 = vmul.f32 1.0, %v3934
        %v3936 = vrcp.pop %v3909
        %v3937 = vmul.f32 1.0, %v3936
        %v3938 = vrcp.pop %v3910
        %v3939 = vmul.f32 1.0, %v3938
        %v3940 = vrcp.pop %v3911
        %v3941 = vmul.f32 1.0, %v3940
        %v3942 = vrcp.pop %v3912
        %v3943 = vmul.f32 1.0, %v3942
        %v3944 = vrcp.pop %v3913
        %v3945 = vmul.f32 1.0, %v3944
        %v3946 = vxor.u32 %v3661, 2147483648
        %v3947 = vxor.u32 %v3665, 2147483648
        %v3948 = vxor.u32 %v3671, 2147483648
        %v3949 = vxor.u32 %v3675, 2147483648
        %v3950 = vxor.u32 %v3681, 2147483648
        %v3951 = vxor.u32 %v3685, 2147483648
        %v3952 = vxor.u32 %v3691, 2147483648
        %v3953 = vxor.u32 %v3695, 2147483648
        %v3954 = vxor.u32 %v3701, 2147483648
        %v3955 = vxor.u32 %v3705, 2147483648
        %v3956 = vxor.u32 %v3711, 2147483648
        %v3957 = vxor.u32 %v3715, 2147483648
        %v3958 = vxor.u32 %v3721, 2147483648
        %v3959 = vxor.u32 %v3725, 2147483648
        %v3960 = vxor.u32 %v3731, 2147483648
        %v3961 = vxor.u32 %v3735, 2147483648
        %v3962 = vmul.f32 %v3946, 1.442695
        %v3963 = vpow.pop %v3962
        %v3964 = vmul.f32 %v3947, 1.442695
        %v3965 = vpow.pop %v3964
        %v3966 = vmul.f32 %v3948, 1.442695
        %v3967 = vpow.pop %v3966
        %v3968 = vmul.f32 %v3949, 1.442695
        %v3969 = vpow.pop %v3968
        %v3970 = vmul.f32 %v3950, 1.442695
        %v3971 = vpow.pop %v3970
        %v3972 = vmul.f32 %v3951, 1.442695
        %v3973 = vpow.pop %v3972
        %v3974 = vmul.f32 %v3952, 1.442695
        %v3975 = vpow.pop %v3974
        %v3976 = vmul.f32 %v3953, 1.442695
        %v3977 = vpow.pop %v3976
        %v3978 = vmul.f32 %v3954, 1.442695
        %v3979 = vpow.pop %v3978
        %v3980 = vmul.f32 %v3955, 1.442695
        %v3981 = vpow.pop %v3980
        %v3982 = vmul.f32 %v3956, 1.442695
        %v3983 = vpow.pop %v3982
        %v3984 = vmul.f32 %v3957, 1.442695
        %v3985 = vpow.pop %v3984
        %v3986 = vmul.f32 %v3958, 1.442695
        %v3987 = vpow.pop %v3986
        %v3988 = vmul.f32 %v3959, 1.442695
        %v3989 = vpow.pop %v3988
        %v3990 = vmul.f32 %v3960, 1.442695
        %v3991 = vpow.pop %v3990
        %v3992 = vmul.f32 %v3961, 1.442695
        %v3993 = vpow.pop %v3992
        %v3994 = vadd.f32 %v3963, 1.0
        %v3995 = vadd.f32 %v3965, 1.0
        %v3996 = vadd.f32 %v3967, 1.0
        %v3997 = vadd.f32 %v3969, 1.0
        %v3998 = vadd.f32 %v3971, 1.0
        %v3999 = vadd.f32 %v3973, 1.0
        %v4000 = vadd.f32 %v3975, 1.0
        %v4001 = vadd.f32 %v3977, 1.0
        %v4002 = vadd.f32 %v3979, 1.0
        %v4003 = vadd.f32 %v3981, 1.0
        %v4004 = vadd.f32 %v3983, 1.0
        %v4005 = vadd.f32 %v3985, 1.0
        %v4006 = vadd.f32 %v3987, 1.0
        %v4007 = vadd.f32 %v3989, 1.0
        %v4008 = vadd.f32 %v3991, 1.0
        %v4009 = vadd.f32 %v3993, 1.0
        %v4010 = vrcp.pop %v3994
        %v4011 = vmul.f32 1.0, %v4010
        %v4012 = vrcp.pop %v3995
        %v4013 = vmul.f32 1.0, %v4012
        %v4014 = vrcp.pop %v3996
        %v4015 = vmul.f32 1.0, %v4014
        %v4016 = vrcp.pop %v3997
        %v4017 = vmul.f32 1.0, %v4016
        %v4018 = vrcp.pop %v3998
        %v4019 = vmul.f32 1.0, %v4018
        %v4020 = vrcp.pop %v3999
        %v4021 = vmul.f32 1.0, %v4020
        %v4022 = vrcp.pop %v4000
        %v4023 = vmul.f32 1.0, %v4022
        %v4024 = vrcp.pop %v4001
        %v4025 = vmul.f32 1.0, %v4024
        %v4026 = vrcp.pop %v4002
        %v4027 = vmul.f32 1.0, %v4026
        %v4028 = vrcp.pop %v4003
        %v4029 = vmul.f32 1.0, %v4028
        %v4030 = vrcp.pop %v4004
        %v4031 = vmul.f32 1.0, %v4030
        %v4032 = vrcp.pop %v4005
        %v4033 = vmul.f32 1.0, %v4032
        %v4034 = vrcp.pop %v4006
        %v4035 = vmul.f32 1.0, %v4034
        %v4036 = vrcp.pop %v4007
        %v4037 = vmul.f32 1.0, %v4036
        %v4038 = vrcp.pop %v4008
        %v4039 = vmul.f32 1.0, %v4038
        %v4040 = vrcp.pop %v4009
        %v4041 = vmul.f32 1.0, %v4040
        %v4042 = vtanh.pop %v3772
        %v4043 = vtanh.pop %v3776
        %v4044 = vtanh.pop %v3782
        %v4045 = vtanh.pop %v3786
        %v4046 = vtanh.pop %v3792
        %v4047 = vtanh.pop %v3796
        %v4048 = vtanh.pop %v3802
        %v4049 = vtanh.pop %v3806
        %v4050 = vtanh.pop %v3812
        %v4051 = vtanh.pop %v3816
        %v4052 = vtanh.pop %v3822
        %v4053 = vtanh.pop %v3826
        %v4054 = vtanh.pop %v3832
        %v4055 = vtanh.pop %v3836
        %v4056 = vtanh.pop %v3842
        %v4057 = vtanh.pop %v3846
        %v4058 = vxor.u32 %v3774, 2147483648
        %v4059 = vxor.u32 %v3778, 2147483648
        %v4060 = vxor.u32 %v3784, 2147483648
        %v4061 = vxor.u32 %v3788, 2147483648
        %v4062 = vxor.u32 %v3794, 2147483648
        %v4063 = vxor.u32 %v3798, 2147483648
        %v4064 = vxor.u32 %v3804, 2147483648
        %v4065 = vxor.u32 %v3808, 2147483648
        %v4066 = vxor.u32 %v3814, 2147483648
        %v4067 = vxor.u32 %v3818, 2147483648
        %v4068 = vxor.u32 %v3824, 2147483648
        %v4069 = vxor.u32 %v3828, 2147483648
        %v4070 = vxor.u32 %v3834, 2147483648
        %v4071 = vxor.u32 %v3838, 2147483648
        %v4072 = vxor.u32 %v3844, 2147483648
        %v4073 = vxor.u32 %v3848, 2147483648
        %v4074 = vmul.f32 %v4058, 1.442695
        %v4075 = vpow.pop %v4074
        %v4076 = vmul.f32 %v4059, 1.442695
        %v4077 = vpow.pop %v4076
        %v4078 = vmul.f32 %v4060, 1.442695
        %v4079 = vpow.pop %v4078
        %v4080 = vmul.f32 %v4061, 1.442695
        %v4081 = vpow.pop %v4080
        %v4082 = vmul.f32 %v4062, 1.442695
        %v4083 = vpow.pop %v4082
        %v4084 = vmul.f32 %v4063, 1.442695
        %v4085 = vpow.pop %v4084
        %v4086 = vmul.f32 %v4064, 1.442695
        %v4087 = vpow.pop %v4086
        %v4088 = vmul.f32 %v4065, 1.442695
        %v4089 = vpow.pop %v4088
        %v4090 = vmul.f32 %v4066, 1.442695
        %v4091 = vpow.pop %v4090
        %v4092 = vmul.f32 %v4067, 1.442695
        %v4093 = vpow.pop %v4092
        %v4094 = vmul.f32 %v4068, 1.442695
        %v4095 = vpow.pop %v4094
        %v4096 = vmul.f32 %v4069, 1.442695
        %v4097 = vpow.pop %v4096
        %v4098 = vmul.f32 %v4070, 1.442695
        %v4099 = vpow.pop %v4098
        %v4100 = vmul.f32 %v4071, 1.442695
        %v4101 = vpow.pop %v4100
        %v4102 = vmul.f32 %v4072, 1.442695
        %v4103 = vpow.pop %v4102
        %v4104 = vmul.f32 %v4073, 1.442695
        %v4105 = vpow.pop %v4104
        %v4106 = vadd.f32 %v4075, 1.0
        %v4107 = vadd.f32 %v4077, 1.0
        %v4108 = vadd.f32 %v4079, 1.0
        %v4109 = vadd.f32 %v4081, 1.0
        %v4110 = vadd.f32 %v4083, 1.0
        %v4111 = vadd.f32 %v4085, 1.0
        %v4112 = vadd.f32 %v4087, 1.0
        %v4113 = vadd.f32 %v4089, 1.0
        %v4114 = vadd.f32 %v4091, 1.0
        %v4115 = vadd.f32 %v4093, 1.0
        %v4116 = vadd.f32 %v4095, 1.0
        %v4117 = vadd.f32 %v4097, 1.0
        %v4118 = vadd.f32 %v4099, 1.0
        %v4119 = vadd.f32 %v4101, 1.0
        %v4120 = vadd.f32 %v4103, 1.0
        %v4121 = vadd.f32 %v4105, 1.0
        %v4122 = vrcp.pop %v4106
        %v4123 = vmul.f32 1.0, %v4122
        %v4124 = vrcp.pop %v4107
        %v4125 = vmul.f32 1.0, %v4124
        %v4126 = vrcp.pop %v4108
        %v4127 = vmul.f32 1.0, %v4126
        %v4128 = vrcp.pop %v4109
        %v4129 = vmul.f32 1.0, %v4128
        %v4130 = vrcp.pop %v4110
        %v4131 = vmul.f32 1.0, %v4130
        %v4132 = vrcp.pop %v4111
        %v4133 = vmul.f32 1.0, %v4132
        %v4134 = vrcp.pop %v4112
        %v4135 = vmul.f32 1.0, %v4134
        %v4136 = vrcp.pop %v4113
        %v4137 = vmul.f32 1.0, %v4136
        %v4138 = vrcp.pop %v4114
        %v4139 = vmul.f32 1.0, %v4138
        %v4140 = vrcp.pop %v4115
        %v4141 = vmul.f32 1.0, %v4140
        %v4142 = vrcp.pop %v4116
        %v4143 = vmul.f32 1.0, %v4142
        %v4144 = vrcp.pop %v4117
        %v4145 = vmul.f32 1.0, %v4144
        %v4146 = vrcp.pop %v4118
        %v4147 = vmul.f32 1.0, %v4146
        %v4148 = vrcp.pop %v4119
        %v4149 = vmul.f32 1.0, %v4148
        %v4150 = vrcp.pop %v4120
        %v4151 = vmul.f32 1.0, %v4150
        %v4152 = vrcp.pop %v4121
        %v4153 = vmul.f32 1.0, %v4152
        %v4154 = vmul.f32 %v4011, 0.0
        %v4155 = vmul.f32 %v4013, 0.0
        %v4156 = vmul.f32 %v4015, 0.0
        %v4157 = vmul.f32 %v4017, 0.0
        %v4158 = vmul.f32 %v4019, 0.0
        %v4159 = vmul.f32 %v4021, 0.0
        %v4160 = vmul.f32 %v4023, 0.0
        %v4161 = vmul.f32 %v4025, 0.0
        %v4162 = vmul.f32 %v4027, 0.0
        %v4163 = vmul.f32 %v4029, 0.0
        %v4164 = vmul.f32 %v4031, 0.0
        %v4165 = vmul.f32 %v4033, 0.0
        %v4166 = vmul.f32 %v4035, 0.0
        %v4167 = vmul.f32 %v4037, 0.0
        %v4168 = vmul.f32 %v4039, 0.0
        %v4169 = vmul.f32 %v4041, 0.0
        %v4170 = vmul.f32 %v3915, %v4042
        %v4171 = vmul.f32 %v3917, %v4043
        %v4172 = vmul.f32 %v3919, %v4044
        %v4173 = vmul.f32 %v3921, %v4045
        %v4174 = vmul.f32 %v3923, %v4046
        %v4175 = vmul.f32 %v3925, %v4047
        %v4176 = vmul.f32 %v3927, %v4048
        %v4177 = vmul.f32 %v3929, %v4049
        %v4178 = vmul.f32 %v3931, %v4050
        %v4179 = vmul.f32 %v3933, %v4051
        %v4180 = vmul.f32 %v3935, %v4052
        %v4181 = vmul.f32 %v3937, %v4053
        %v4182 = vmul.f32 %v3939, %v4054
        %v4183 = vmul.f32 %v3941, %v4055
        %v4184 = vmul.f32 %v3943, %v4056
        %v4185 = vmul.f32 %v3945, %v4057
        %v4186 = vadd.f32 %v4154, %v4170
        %v4187 = vadd.f32 %v4155, %v4171
        %v4188 = vadd.f32 %v4156, %v4172
        %v4189 = vadd.f32 %v4157, %v4173
        %v4190 = vadd.f32 %v4158, %v4174
        %v4191 = vadd.f32 %v4159, %v4175
        %v4192 = vadd.f32 %v4160, %v4176
        %v4193 = vadd.f32 %v4161, %v4177
        %v4194 = vadd.f32 %v4162, %v4178
        %v4195 = vadd.f32 %v4163, %v4179
        %v4196 = vadd.f32 %v4164, %v4180
        %v4197 = vadd.f32 %v4165, %v4181
        %v4198 = vadd.f32 %v4166, %v4182
        %v4199 = vadd.f32 %v4167, %v4183
        %v4200 = vadd.f32 %v4168, %v4184
        %v4201 = vadd.f32 %v4169, %v4185
        %v4202 = vtanh.pop %v4186
        %v4203 = vtanh.pop %v4187
        %v4204 = vtanh.pop %v4188
        %v4205 = vtanh.pop %v4189
        %v4206 = vtanh.pop %v4190
        %v4207 = vtanh.pop %v4191
        %v4208 = vtanh.pop %v4192
        %v4209 = vtanh.pop %v4193
        %v4210 = vtanh.pop %v4194
        %v4211 = vtanh.pop %v4195
        %v4212 = vtanh.pop %v4196
        %v4213 = vtanh.pop %v4197
        %v4214 = vtanh.pop %v4198
        %v4215 = vtanh.pop %v4199
        %v4216 = vtanh.pop %v4200
        %v4217 = vtanh.pop %v4201
        %v4218 = vmul.f32 %v4123, %v4202
        %v4219 = vmul.f32 %v4125, %v4203
        %v4220 = vmul.f32 %v4127, %v4204
        %v4221 = vmul.f32 %v4129, %v4205
        %v4222 = vmul.f32 %v4131, %v4206
        %v4223 = vmul.f32 %v4133, %v4207
        %v4224 = vmul.f32 %v4135, %v4208
        %v4225 = vmul.f32 %v4137, %v4209
        %v4226 = vmul.f32 %v4139, %v4210
        %v4227 = vmul.f32 %v4141, %v4211
        %v4228 = vmul.f32 %v4143, %v4212
        %v4229 = vmul.f32 %v4145, %v4213
        %v4230 = vmul.f32 %v4147, %v4214
        %v4231 = vmul.f32 %v4149, %v4215
        %v4232 = vmul.f32 %v4151, %v4216
        %v4233 = vmul.f32 %v4153, %v4217
        %v4234 = vadd.f32 %v4218, 0.0
        %v4235 = vadd.f32 %v4219, 0.0
        %v4236 = vadd.f32 %v4220, 0.0
        %v4237 = vadd.f32 %v4221, 0.0
        %v4238 = vadd.f32 %v4222, 0.0
        %v4239 = vadd.f32 %v4223, 0.0
        %v4240 = vadd.f32 %v4224, 0.0
        %v4241 = vadd.f32 %v4225, 0.0
        %v4242 = vadd.f32 %v4226, 0.0
        %v4243 = vadd.f32 %v4227, 0.0
        %v4244 = vadd.f32 %v4228, 0.0
        %v4245 = vadd.f32 %v4229, 0.0
        %v4246 = vadd.f32 %v4230, 0.0
        %v4247 = vadd.f32 %v4231, 0.0
        %v4248 = vadd.f32 %v4232, 0.0
        %v4249 = vadd.f32 %v4233, 0.0
        %v4250 = vpack.c.bf16 %v4219, %v4218
        %v4251 = vpack.c.bf16 %v4221, %v4220
        %v4252 = vpack.c.bf16 %v4223, %v4222
        %v4253 = vpack.c.bf16 %v4225, %v4224
        %v4254 = vpack.c.bf16 %v4227, %v4226
        %v4255 = vpack.c.bf16 %v4229, %v4228
        %v4256 = vpack.c.bf16 %v4231, %v4230
        %v4257 = vpack.c.bf16 %v4233, %v4232
        %s4258 = scalar_lea.vmem [#allocation2], 512
        %v4259 = vld [vmem:[%s4258] sm:$0xff]
        %v4260 = vld [vmem:[%s4258 + $0x8] sm:$0xff]
        %v4261 = vld [vmem:[%s4258 + $0x10] sm:$0xff]
        %v4262 = vld [vmem:[%s4258 + $0x18] sm:$0xff]
        %v4263 = vld [vmem:[%s4258 + $0x20] sm:$0xff]
        %v4264 = vld [vmem:[%s4258 + $0x28] sm:$0xff]
        %v4265 = vld [vmem:[%s4258 + $0x30] sm:$0xff]
        %v4266 = vld [vmem:[%s4258 + $0x38] sm:$0xff]
        %v4267 = vld [vmem:[%s4258 + $0x40] sm:$0xff]
        %v4268 = vld [vmem:[%s4258 + $0x48] sm:$0xff]
        %v4269 = vld [vmem:[%s4258 + $0x50] sm:$0xff]
        %v4270 = vld [vmem:[%s4258 + $0x58] sm:$0xff]
        %v4271 = vld [vmem:[%s4258 + $0x60] sm:$0xff]
        %v4272 = vld [vmem:[%s4258 + $0x68] sm:$0xff]
        %v4273 = vld [vmem:[%s4258 + $0x70] sm:$0xff]
        %v4274 = vld [vmem:[%s4258 + $0x78] sm:$0xff]
        %v4275 = vld [vmem:[%s4258 + $0x80] sm:$0xff]
        %v4276 = vld [vmem:[%s4258 + $0x88] sm:$0xff]
        %v4277 = vld [vmem:[%s4258 + $0x90] sm:$0xff]
        %v4278 = vld [vmem:[%s4258 + $0x98] sm:$0xff]
        %v4279 = vld [vmem:[%s4258 + $0xa0] sm:$0xff]
        %v4280 = vld [vmem:[%s4258 + $0xa8] sm:$0xff]
        %v4281 = vld [vmem:[%s4258 + $0xb0] sm:$0xff]
        %v4282 = vld [vmem:[%s4258 + $0xb8] sm:$0xff]
        %v4283 = vld [vmem:[%s4258 + $0xc0] sm:$0xff]
        %v4284 = vld [vmem:[%s4258 + $0xc8] sm:$0xff]
        %v4285 = vld [vmem:[%s4258 + $0xd0] sm:$0xff]
        %v4286 = vld [vmem:[%s4258 + $0xd8] sm:$0xff]
        %v4287 = vld [vmem:[%s4258 + $0xe0] sm:$0xff]
        %v4288 = vld [vmem:[%s4258 + $0xe8] sm:$0xff]
        %v4289 = vld [vmem:[%s4258 + $0xf0] sm:$0xff]
        %v4290 = vld [vmem:[%s4258 + $0xf8] sm:$0xff]
        %v4291 = vld [vmem:[%s4258 + $0x100] sm:$0xff]
        %v4292 = vld [vmem:[%s4258 + $0x108] sm:$0xff]
        %v4293 = vld [vmem:[%s4258 + $0x110] sm:$0xff]
        %v4294 = vld [vmem:[%s4258 + $0x118] sm:$0xff]
        %v4295 = vld [vmem:[%s4258 + $0x120] sm:$0xff]
        %v4296 = vld [vmem:[%s4258 + $0x128] sm:$0xff]
        %v4297 = vld [vmem:[%s4258 + $0x130] sm:$0xff]
        %v4298 = vld [vmem:[%s4258 + $0x138] sm:$0xff]
        %v4299 = vld [vmem:[%s4258 + $0x140] sm:$0xff]
        %v4300 = vld [vmem:[%s4258 + $0x148] sm:$0xff]
        %v4301 = vld [vmem:[%s4258 + $0x150] sm:$0xff]
        %v4302 = vld [vmem:[%s4258 + $0x158] sm:$0xff]
        %v4303 = vld [vmem:[%s4258 + $0x160] sm:$0xff]
        %v4304 = vld [vmem:[%s4258 + $0x168] sm:$0xff]
        %v4305 = vld [vmem:[%s4258 + $0x170] sm:$0xff]
        %v4306 = vld [vmem:[%s4258 + $0x178] sm:$0xff]
        %v4307 = vld [vmem:[%s4258 + $0x180] sm:$0xff]
        %v4308 = vld [vmem:[%s4258 + $0x188] sm:$0xff]
        %v4309 = vld [vmem:[%s4258 + $0x190] sm:$0xff]
        %v4310 = vld [vmem:[%s4258 + $0x198] sm:$0xff]
        %v4311 = vld [vmem:[%s4258 + $0x1a0] sm:$0xff]
        %v4312 = vld [vmem:[%s4258 + $0x1a8] sm:$0xff]
        %v4313 = vld [vmem:[%s4258 + $0x1b0] sm:$0xff]
        %v4314 = vld [vmem:[%s4258 + $0x1b8] sm:$0xff]
        %v4315 = vld [vmem:[%s4258 + $0x1c0] sm:$0xff]
        %v4316 = vld [vmem:[%s4258 + $0x1c8] sm:$0xff]
        %v4317 = vld [vmem:[%s4258 + $0x1d0] sm:$0xff]
        %v4318 = vld [vmem:[%s4258 + $0x1d8] sm:$0xff]
        %v4319 = vld [vmem:[%s4258 + $0x1e0] sm:$0xff]
        %v4320 = vld [vmem:[%s4258 + $0x1e8] sm:$0xff]
        %v4321 = vld [vmem:[%s4258 + $0x1f0] sm:$0xff]
        %v4322 = vld [vmem:[%s4258 + $0x1f8] sm:$0xff]
        %4323 = vmatprep.subr.bf16.mxu0 %v3589
        %4324 = vmatpush1.bf16.msra.mxu0 %v3588
        %4325 = vmatprep.subr.bf16.mxu0 %v3585
        %4326 = vmatpush1.bf16.msra.mxu0 %v3584
        %4327 = vmatprep.subr.bf16.mxu0 %v3581
        %4328 = vmatpush1.bf16.msra.mxu0 %v3580
        %4329 = vmatprep.subr.bf16.mxu0 %v3577
        %4330 = vmatpush1.bf16.msra.mxu0 %v3576
        %4331 = vmatprep.subr.bf16.mxu0 %v3573
        %4332 = vmatpush1.bf16.msra.mxu0 %v3572
        %4333 = vmatprep.subr.bf16.mxu0 %v3569
        %4334 = vmatpush1.bf16.msra.mxu0 %v3568
        %4335 = vmatprep.subr.bf16.mxu0 %v3565
        %4336 = vmatpush1.bf16.msra.mxu0 %v3564
        %4337 = vmatprep.subr.bf16.mxu0 %v3561
        %4338 = vmatpush1.bf16.msra.mxu0 %v3560
        %4339 = vmatprep.subr.bf16.mxu0 0
        %4340 = vmatpush2.bf16.msra.mxu0 0
        %4341 = vmatprep.subr.bf16.mxu0 0
        %4342 = vmatpush2.bf16.msra.mxu0 0
        %4343 = vmatprep.subr.bf16.mxu0 0
        %4344 = vmatpush2.bf16.msra.mxu0 0
        %4345 = vmatprep.subr.bf16.mxu0 0
        %4346 = vmatpush2.bf16.msra.mxu0 0
        %4347 = vmatprep.subr.bf16.mxu0 0
        %4348 = vmatpush2.bf16.msra.mxu0 0
        %4349 = vmatprep.subr.bf16.mxu0 0
        %4350 = vmatpush2.bf16.msra.mxu0 0
        %4351 = vmatprep.subr.bf16.mxu0 0
        %4352 = vmatpush2.bf16.msra.mxu0 0
        %4353 = vmatprep.subr.bf16.mxu0 0
        %4354 = vmatpush2.bf16.msra.mxu0 0
        %4355 = vmatprep.mubr.bf16.mxu0 0
        %4356 = vmatmul.mubr.bf16.gmra.mxu0 %v4250
        %v4357 = vpop.f32.mrf.mxu0
        %v4358 = vadd.f32 %v4259, %v4357
        %v4359 = vpop.f32.mrf.mxu0
        %v4360 = vadd.f32 %v4260, %v4359
        %v4361 = vpop.f32.mrf.mxu0
        %v4362 = vadd.f32 %v4263, %v4361
        %v4363 = vpop.f32.mrf.mxu0
        %v4364 = vadd.f32 %v4264, %v4363
        %4365 = vmatprep.mubr.bf16.mxu0 0
        %4366 = vmatmul.mubr.bf16.gmra.mxu0 %v4251
        %v4367 = vpop.f32.mrf.mxu0
        %v4368 = vadd.f32 %v4267, %v4367
        %v4369 = vpop.f32.mrf.mxu0
        %v4370 = vadd.f32 %v4268, %v4369
        %v4371 = vpop.f32.mrf.mxu0
        %v4372 = vadd.f32 %v4271, %v4371
        %v4373 = vpop.f32.mrf.mxu0
        %v4374 = vadd.f32 %v4272, %v4373
        %4375 = vmatprep.mubr.bf16.mxu0 0
        %4376 = vmatmul.mubr.bf16.gmra.mxu0 %v4252
        %v4377 = vpop.f32.mrf.mxu0
        %v4378 = vadd.f32 %v4275, %v4377
        %v4379 = vpop.f32.mrf.mxu0
        %v4380 = vadd.f32 %v4276, %v4379
        %v4381 = vpop.f32.mrf.mxu0
        %v4382 = vadd.f32 %v4279, %v4381
        %v4383 = vpop.f32.mrf.mxu0
        %v4384 = vadd.f32 %v4280, %v4383
        %4385 = vmatprep.mubr.bf16.mxu0 0
        %4386 = vmatmul.mubr.bf16.gmra.mxu0 %v4253
        %v4387 = vpop.f32.mrf.mxu0
        %v4388 = vadd.f32 %v4283, %v4387
        %v4389 = vpop.f32.mrf.mxu0
        %v4390 = vadd.f32 %v4284, %v4389
        %v4391 = vpop.f32.mrf.mxu0
        %v4392 = vadd.f32 %v4287, %v4391
        %v4393 = vpop.f32.mrf.mxu0
        %v4394 = vadd.f32 %v4288, %v4393
        %4395 = vmatprep.mubr.bf16.mxu0 0
        %4396 = vmatmul.mubr.bf16.gmra.mxu0 %v4254
        %v4397 = vpop.f32.mrf.mxu0
        %v4398 = vadd.f32 %v4291, %v4397
        %v4399 = vpop.f32.mrf.mxu0
        %v4400 = vadd.f32 %v4292, %v4399
        %v4401 = vpop.f32.mrf.mxu0
        %v4402 = vadd.f32 %v4295, %v4401
        %v4403 = vpop.f32.mrf.mxu0
        %v4404 = vadd.f32 %v4296, %v4403
        %4405 = vmatprep.mubr.bf16.mxu0 0
        %4406 = vmatmul.mubr.bf16.gmra.mxu0 %v4255
        %v4407 = vpop.f32.mrf.mxu0
        %v4408 = vadd.f32 %v4299, %v4407
        %v4409 = vpop.f32.mrf.mxu0
        %v4410 = vadd.f32 %v4300, %v4409
        %v4411 = vpop.f32.mrf.mxu0
        %v4412 = vadd.f32 %v4303, %v4411
        %v4413 = vpop.f32.mrf.mxu0
        %v4414 = vadd.f32 %v4304, %v4413
        %4415 = vmatprep.mubr.bf16.mxu0 0
        %4416 = vmatmul.mubr.bf16.gmra.mxu0 %v4256
        %v4417 = vpop.f32.mrf.mxu0
        %v4418 = vadd.f32 %v4307, %v4417
        %v4419 = vpop.f32.mrf.mxu0
        %v4420 = vadd.f32 %v4308, %v4419
        %v4421 = vpop.f32.mrf.mxu0
        %v4422 = vadd.f32 %v4311, %v4421
        %v4423 = vpop.f32.mrf.mxu0
        %v4424 = vadd.f32 %v4312, %v4423
        %4425 = vmatprep.mubr.bf16.mxu0 0
        %4426 = vmatmul.mubr.bf16.gmra.mxu0 %v4257
        %v4427 = vpop.f32.mrf.mxu0
        %v4428 = vadd.f32 %v4315, %v4427
        %v4429 = vpop.f32.mrf.mxu0
        %v4430 = vadd.f32 %v4316, %v4429
        %v4431 = vpop.f32.mrf.mxu0
        %v4432 = vadd.f32 %v4319, %v4431
        %v4433 = vpop.f32.mrf.mxu0
        %v4434 = vadd.f32 %v4320, %v4433
        %4435 = vdwg.mxu0
        %4436 = vmatprep.subr.bf16.mxu0 %v3591
        %4437 = vmatpush1.bf16.msra.mxu0 %v3590
        %4438 = vmatprep.subr.bf16.mxu0 %v3587
        %4439 = vmatpush1.bf16.msra.mxu0 %v3586
        %4440 = vmatprep.subr.bf16.mxu0 %v3583
        %4441 = vmatpush1.bf16.msra.mxu0 %v3582
        %4442 = vmatprep.subr.bf16.mxu0 %v3579
        %4443 = vmatpush1.bf16.msra.mxu0 %v3578
        %4444 = vmatprep.subr.bf16.mxu0 %v3575
        %4445 = vmatpush1.bf16.msra.mxu0 %v3574
        %4446 = vmatprep.subr.bf16.mxu0 %v3571
        %4447 = vmatpush1.bf16.msra.mxu0 %v3570
        %4448 = vmatprep.subr.bf16.mxu0 %v3567
        %4449 = vmatpush1.bf16.msra.mxu0 %v3566
        %4450 = vmatprep.subr.bf16.mxu0 %v3563
        %4451 = vmatpush1.bf16.msra.mxu0 %v3562
        %4452 = vmatprep.subr.bf16.mxu0 0
        %4453 = vmatpush2.bf16.msra.mxu0 0
        %4454 = vmatprep.subr.bf16.mxu0 0
        %4455 = vmatpush2.bf16.msra.mxu0 0
        %4456 = vmatprep.subr.bf16.mxu0 0
        %4457 = vmatpush2.bf16.msra.mxu0 0
        %4458 = vmatprep.subr.bf16.mxu0 0
        %4459 = vmatpush2.bf16.msra.mxu0 0
        %4460 = vmatprep.subr.bf16.mxu0 0
        %4461 = vmatpush2.bf16.msra.mxu0 0
        %4462 = vmatprep.subr.bf16.mxu0 0
        %4463 = vmatpush2.bf16.msra.mxu0 0
        %4464 = vmatprep.subr.bf16.mxu0 0
        %4465 = vmatpush2.bf16.msra.mxu0 0
        %4466 = vmatprep.subr.bf16.mxu0 0
        %4467 = vmatpush2.bf16.msra.mxu0 0
        %4468 = vmatprep.mubr.bf16.mxu0 0
        %4469 = vmatmul.mubr.bf16.gmra.mxu0 %v4250
        %v4470 = vpop.f32.mrf.mxu0
        %v4471 = vadd.f32 %v4261, %v4470
        %v4472 = vpop.f32.mrf.mxu0
        %v4473 = vadd.f32 %v4262, %v4472
        %v4474 = vpop.f32.mrf.mxu0
        %v4475 = vadd.f32 %v4265, %v4474
        %v4476 = vpop.f32.mrf.mxu0
        %v4477 = vadd.f32 %v4266, %v4476
        %4478 = vmatprep.mubr.bf16.mxu0 0
        %4479 = vmatmul.mubr.bf16.gmra.mxu0 %v4251
        %v4480 = vpop.f32.mrf.mxu0
        %v4481 = vadd.f32 %v4269, %v4480
        %v4482 = vpop.f32.mrf.mxu0
        %v4483 = vadd.f32 %v4270, %v4482
        %v4484 = vpop.f32.mrf.mxu0
        %v4485 = vadd.f32 %v4273, %v4484
        %v4486 = vpop.f32.mrf.mxu0
        %v4487 = vadd.f32 %v4274, %v4486
        %4488 = vmatprep.mubr.bf16.mxu0 0
        %4489 = vmatmul.mubr.bf16.gmra.mxu0 %v4252
        %v4490 = vpop.f32.mrf.mxu0
        %v4491 = vadd.f32 %v4277, %v4490
        %v4492 = vpop.f32.mrf.mxu0
        %v4493 = vadd.f32 %v4278, %v4492
        %v4494 = vpop.f32.mrf.mxu0
        %v4495 = vadd.f32 %v4281, %v4494
        %v4496 = vpop.f32.mrf.mxu0
        %v4497 = vadd.f32 %v4282, %v4496
        %4498 = vmatprep.mubr.bf16.mxu0 0
        %4499 = vmatmul.mubr.bf16.gmra.mxu0 %v4253
        %v4500 = vpop.f32.mrf.mxu0
        %v4501 = vadd.f32 %v4285, %v4500
        %v4502 = vpop.f32.mrf.mxu0
        %v4503 = vadd.f32 %v4286, %v4502
        %v4504 = vpop.f32.mrf.mxu0
        %v4505 = vadd.f32 %v4289, %v4504
        %v4506 = vpop.f32.mrf.mxu0
        %v4507 = vadd.f32 %v4290, %v4506
        %4508 = vmatprep.mubr.bf16.mxu0 0
        %4509 = vmatmul.mubr.bf16.gmra.mxu0 %v4254
        %v4510 = vpop.f32.mrf.mxu0
        %v4511 = vadd.f32 %v4293, %v4510
        %v4512 = vpop.f32.mrf.mxu0
        %v4513 = vadd.f32 %v4294, %v4512
        %v4514 = vpop.f32.mrf.mxu0
        %v4515 = vadd.f32 %v4297, %v4514
        %v4516 = vpop.f32.mrf.mxu0
        %v4517 = vadd.f32 %v4298, %v4516
        %4518 = vmatprep.mubr.bf16.mxu0 0
        %4519 = vmatmul.mubr.bf16.gmra.mxu0 %v4255
        %v4520 = vpop.f32.mrf.mxu0
        %v4521 = vadd.f32 %v4301, %v4520
        %v4522 = vpop.f32.mrf.mxu0
        %v4523 = vadd.f32 %v4302, %v4522
        %v4524 = vpop.f32.mrf.mxu0
        %v4525 = vadd.f32 %v4305, %v4524
        %v4526 = vpop.f32.mrf.mxu0
        %v4527 = vadd.f32 %v4306, %v4526
        %4528 = vmatprep.mubr.bf16.mxu0 0
        %4529 = vmatmul.mubr.bf16.gmra.mxu0 %v4256
        %v4530 = vpop.f32.mrf.mxu0
        %v4531 = vadd.f32 %v4309, %v4530
        %v4532 = vpop.f32.mrf.mxu0
        %v4533 = vadd.f32 %v4310, %v4532
        %v4534 = vpop.f32.mrf.mxu0
        %v4535 = vadd.f32 %v4313, %v4534
        %v4536 = vpop.f32.mrf.mxu0
        %v4537 = vadd.f32 %v4314, %v4536
        %4538 = vmatprep.mubr.bf16.mxu0 0
        %4539 = vmatmul.mubr.bf16.gmra.mxu0 %v4257
        %v4540 = vpop.f32.mrf.mxu0
        %v4541 = vadd.f32 %v4317, %v4540
        %v4542 = vpop.f32.mrf.mxu0
        %v4543 = vadd.f32 %v4318, %v4542
        %v4544 = vpop.f32.mrf.mxu0
        %v4545 = vadd.f32 %v4321, %v4544
        %v4546 = vpop.f32.mrf.mxu0
        %v4547 = vadd.f32 %v4322, %v4546
        %4548 = vdwg.mxu0
        %v4549 = vxor.u32 %v4358, 2147483648
        %v4550 = vxor.u32 %v4362, 2147483648
        %v4551 = vxor.u32 %v4368, 2147483648
        %v4552 = vxor.u32 %v4372, 2147483648
        %v4553 = vxor.u32 %v4378, 2147483648
        %v4554 = vxor.u32 %v4382, 2147483648
        %v4555 = vxor.u32 %v4388, 2147483648
        %v4556 = vxor.u32 %v4392, 2147483648
        %v4557 = vxor.u32 %v4398, 2147483648
        %v4558 = vxor.u32 %v4402, 2147483648
        %v4559 = vxor.u32 %v4408, 2147483648
        %v4560 = vxor.u32 %v4412, 2147483648
        %v4561 = vxor.u32 %v4418, 2147483648
        %v4562 = vxor.u32 %v4422, 2147483648
        %v4563 = vxor.u32 %v4428, 2147483648
        %v4564 = vxor.u32 %v4432, 2147483648
        %v4565 = vmul.f32 %v4549, 1.442695
        %v4566 = vpow.pop %v4565
        %v4567 = vmul.f32 %v4550, 1.442695
        %v4568 = vpow.pop %v4567
        %v4569 = vmul.f32 %v4551, 1.442695
        %v4570 = vpow.pop %v4569
        %v4571 = vmul.f32 %v4552, 1.442695
        %v4572 = vpow.pop %v4571
        %v4573 = vmul.f32 %v4553, 1.442695
        %v4574 = vpow.pop %v4573
        %v4575 = vmul.f32 %v4554, 1.442695
        %v4576 = vpow.pop %v4575
        %v4577 = vmul.f32 %v4555, 1.442695
        %v4578 = vpow.pop %v4577
        %v4579 = vmul.f32 %v4556, 1.442695
        %v4580 = vpow.pop %v4579
        %v4581 = vmul.f32 %v4557, 1.442695
        %v4582 = vpow.pop %v4581
        %v4583 = vmul.f32 %v4558, 1.442695
        %v4584 = vpow.pop %v4583
        %v4585 = vmul.f32 %v4559, 1.442695
        %v4586 = vpow.pop %v4585
        %v4587 = vmul.f32 %v4560, 1.442695
        %v4588 = vpow.pop %v4587
        %v4589 = vmul.f32 %v4561, 1.442695
        %v4590 = vpow.pop %v4589
        %v4591 = vmul.f32 %v4562, 1.442695
        %v4592 = vpow.pop %v4591
        %v4593 = vmul.f32 %v4563, 1.442695
        %v4594 = vpow.pop %v4593
        %v4595 = vmul.f32 %v4564, 1.442695
        %v4596 = vpow.pop %v4595
        %v4597 = vadd.f32 %v4566, 1.0
        %v4598 = vadd.f32 %v4568, 1.0
        %v4599 = vadd.f32 %v4570, 1.0
        %v4600 = vadd.f32 %v4572, 1.0
        %v4601 = vadd.f32 %v4574, 1.0
        %v4602 = vadd.f32 %v4576, 1.0
        %v4603 = vadd.f32 %v4578, 1.0
        %v4604 = vadd.f32 %v4580, 1.0
        %v4605 = vadd.f32 %v4582, 1.0
        %v4606 = vadd.f32 %v4584, 1.0
        %v4607 = vadd.f32 %v4586, 1.0
        %v4608 = vadd.f32 %v4588, 1.0
        %v4609 = vadd.f32 %v4590, 1.0
        %v4610 = vadd.f32 %v4592, 1.0
        %v4611 = vadd.f32 %v4594, 1.0
        %v4612 = vadd.f32 %v4596, 1.0
        %v4613 = vrcp.pop %v4597
        %v4614 = vmul.f32 1.0, %v4613
        %v4615 = vrcp.pop %v4598
        %v4616 = vmul.f32 1.0, %v4615
        %v4617 = vrcp.pop %v4599
        %v4618 = vmul.f32 1.0, %v4617
        %v4619 = vrcp.pop %v4600
        %v4620 = vmul.f32 1.0, %v4619
        %v4621 = vrcp.pop %v4601
        %v4622 = vmul.f32 1.0, %v4621
        %v4623 = vrcp.pop %v4602
        %v4624 = vmul.f32 1.0, %v4623
        %v4625 = vrcp.pop %v4603
        %v4626 = vmul.f32 1.0, %v4625
        %v4627 = vrcp.pop %v4604
        %v4628 = vmul.f32 1.0, %v4627
        %v4629 = vrcp.pop %v4605
        %v4630 = vmul.f32 1.0, %v4629
        %v4631 = vrcp.pop %v4606
        %v4632 = vmul.f32 1.0, %v4631
        %v4633 = vrcp.pop %v4607
        %v4634 = vmul.f32 1.0, %v4633
        %v4635 = vrcp.pop %v4608
        %v4636 = vmul.f32 1.0, %v4635
        %v4637 = vrcp.pop %v4609
        %v4638 = vmul.f32 1.0, %v4637
        %v4639 = vrcp.pop %v4610
        %v4640 = vmul.f32 1.0, %v4639
        %v4641 = vrcp.pop %v4611
        %v4642 = vmul.f32 1.0, %v4641
        %v4643 = vrcp.pop %v4612
        %v4644 = vmul.f32 1.0, %v4643
        %v4645 = vxor.u32 %v4360, 2147483648
        %v4646 = vxor.u32 %v4364, 2147483648
        %v4647 = vxor.u32 %v4370, 2147483648
        %v4648 = vxor.u32 %v4374, 2147483648
        %v4649 = vxor.u32 %v4380, 2147483648
        %v4650 = vxor.u32 %v4384, 2147483648
        %v4651 = vxor.u32 %v4390, 2147483648
        %v4652 = vxor.u32 %v4394, 2147483648
        %v4653 = vxor.u32 %v4400, 2147483648
        %v4654 = vxor.u32 %v4404, 2147483648
        %v4655 = vxor.u32 %v4410, 2147483648
        %v4656 = vxor.u32 %v4414, 2147483648
        %v4657 = vxor.u32 %v4420, 2147483648
        %v4658 = vxor.u32 %v4424, 2147483648
        %v4659 = vxor.u32 %v4430, 2147483648
        %v4660 = vxor.u32 %v4434, 2147483648
        %v4661 = vmul.f32 %v4645, 1.442695
        %v4662 = vpow.pop %v4661
        %v4663 = vmul.f32 %v4646, 1.442695
        %v4664 = vpow.pop %v4663
        %v4665 = vmul.f32 %v4647, 1.442695
        %v4666 = vpow.pop %v4665
        %v4667 = vmul.f32 %v4648, 1.442695
        %v4668 = vpow.pop %v4667
        %v4669 = vmul.f32 %v4649, 1.442695
        %v4670 = vpow.pop %v4669
        %v4671 = vmul.f32 %v4650, 1.442695
        %v4672 = vpow.pop %v4671
        %v4673 = vmul.f32 %v4651, 1.442695
        %v4674 = vpow.pop %v4673
        %v4675 = vmul.f32 %v4652, 1.442695
        %v4676 = vpow.pop %v4675
        %v4677 = vmul.f32 %v4653, 1.442695
        %v4678 = vpow.pop %v4677
        %v4679 = vmul.f32 %v4654, 1.442695
        %v4680 = vpow.pop %v4679
        %v4681 = vmul.f32 %v4655, 1.442695
        %v4682 = vpow.pop %v4681
        %v4683 = vmul.f32 %v4656, 1.442695
        %v4684 = vpow.pop %v4683
        %v4685 = vmul.f32 %v4657, 1.442695
        %v4686 = vpow.pop %v4685
        %v4687 = vmul.f32 %v4658, 1.442695
        %v4688 = vpow.pop %v4687
        %v4689 = vmul.f32 %v4659, 1.442695
        %v4690 = vpow.pop %v4689
        %v4691 = vmul.f32 %v4660, 1.442695
        %v4692 = vpow.pop %v4691
        %v4693 = vadd.f32 %v4662, 1.0
        %v4694 = vadd.f32 %v4664, 1.0
        %v4695 = vadd.f32 %v4666, 1.0
        %v4696 = vadd.f32 %v4668, 1.0
        %v4697 = vadd.f32 %v4670, 1.0
        %v4698 = vadd.f32 %v4672, 1.0
        %v4699 = vadd.f32 %v4674, 1.0
        %v4700 = vadd.f32 %v4676, 1.0
        %v4701 = vadd.f32 %v4678, 1.0
        %v4702 = vadd.f32 %v4680, 1.0
        %v4703 = vadd.f32 %v4682, 1.0
        %v4704 = vadd.f32 %v4684, 1.0
        %v4705 = vadd.f32 %v4686, 1.0
        %v4706 = vadd.f32 %v4688, 1.0
        %v4707 = vadd.f32 %v4690, 1.0
        %v4708 = vadd.f32 %v4692, 1.0
        %v4709 = vrcp.pop %v4693
        %v4710 = vmul.f32 1.0, %v4709
        %v4711 = vrcp.pop %v4694
        %v4712 = vmul.f32 1.0, %v4711
        %v4713 = vrcp.pop %v4695
        %v4714 = vmul.f32 1.0, %v4713
        %v4715 = vrcp.pop %v4696
        %v4716 = vmul.f32 1.0, %v4715
        %v4717 = vrcp.pop %v4697
        %v4718 = vmul.f32 1.0, %v4717
        %v4719 = vrcp.pop %v4698
        %v4720 = vmul.f32 1.0, %v4719
        %v4721 = vrcp.pop %v4699
        %v4722 = vmul.f32 1.0, %v4721
        %v4723 = vrcp.pop %v4700
        %v4724 = vmul.f32 1.0, %v4723
        %v4725 = vrcp.pop %v4701
        %v4726 = vmul.f32 1.0, %v4725
        %v4727 = vrcp.pop %v4702
        %v4728 = vmul.f32 1.0, %v4727
        %v4729 = vrcp.pop %v4703
        %v4730 = vmul.f32 1.0, %v4729
        %v4731 = vrcp.pop %v4704
        %v4732 = vmul.f32 1.0, %v4731
        %v4733 = vrcp.pop %v4705
        %v4734 = vmul.f32 1.0, %v4733
        %v4735 = vrcp.pop %v4706
        %v4736 = vmul.f32 1.0, %v4735
        %v4737 = vrcp.pop %v4707
        %v4738 = vmul.f32 1.0, %v4737
        %v4739 = vrcp.pop %v4708
        %v4740 = vmul.f32 1.0, %v4739
        %v4741 = vtanh.pop %v4471
        %v4742 = vtanh.pop %v4475
        %v4743 = vtanh.pop %v4481
        %v4744 = vtanh.pop %v4485
        %v4745 = vtanh.pop %v4491
        %v4746 = vtanh.pop %v4495
        %v4747 = vtanh.pop %v4501
        %v4748 = vtanh.pop %v4505
        %v4749 = vtanh.pop %v4511
        %v4750 = vtanh.pop %v4515
        %v4751 = vtanh.pop %v4521
        %v4752 = vtanh.pop %v4525
        %v4753 = vtanh.pop %v4531
        %v4754 = vtanh.pop %v4535
        %v4755 = vtanh.pop %v4541
        %v4756 = vtanh.pop %v4545
        %v4757 = vxor.u32 %v4473, 2147483648
        %v4758 = vxor.u32 %v4477, 2147483648
        %v4759 = vxor.u32 %v4483, 2147483648
        %v4760 = vxor.u32 %v4487, 2147483648
        %v4761 = vxor.u32 %v4493, 2147483648
        %v4762 = vxor.u32 %v4497, 2147483648
        %v4763 = vxor.u32 %v4503, 2147483648
        %v4764 = vxor.u32 %v4507, 2147483648
        %v4765 = vxor.u32 %v4513, 2147483648
        %v4766 = vxor.u32 %v4517, 2147483648
        %v4767 = vxor.u32 %v4523, 2147483648
        %v4768 = vxor.u32 %v4527, 2147483648
        %v4769 = vxor.u32 %v4533, 2147483648
        %v4770 = vxor.u32 %v4537, 2147483648
        %v4771 = vxor.u32 %v4543, 2147483648
        %v4772 = vxor.u32 %v4547, 2147483648
        %v4773 = vmul.f32 %v4757, 1.442695
        %v4774 = vpow.pop %v4773
        %v4775 = vmul.f32 %v4758, 1.442695
        %v4776 = vpow.pop %v4775
        %v4777 = vmul.f32 %v4759, 1.442695
        %v4778 = vpow.pop %v4777
        %v4779 = vmul.f32 %v4760, 1.442695
        %v4780 = vpow.pop %v4779
        %v4781 = vmul.f32 %v4761, 1.442695
        %v4782 = vpow.pop %v4781
        %v4783 = vmul.f32 %v4762, 1.442695
        %v4784 = vpow.pop %v4783
        %v4785 = vmul.f32 %v4763, 1.442695
        %v4786 = vpow.pop %v4785
        %v4787 = vmul.f32 %v4764, 1.442695
        %v4788 = vpow.pop %v4787
        %v4789 = vmul.f32 %v4765, 1.442695
        %v4790 = vpow.pop %v4789
        %v4791 = vmul.f32 %v4766, 1.442695
        %v4792 = vpow.pop %v4791
        %v4793 = vmul.f32 %v4767, 1.442695
        %v4794 = vpow.pop %v4793
        %v4795 = vmul.f32 %v4768, 1.442695
        %v4796 = vpow.pop %v4795
        %v4797 = vmul.f32 %v4769, 1.442695
        %v4798 = vpow.pop %v4797
        %v4799 = vmul.f32 %v4770, 1.442695
        %v4800 = vpow.pop %v4799
        %v4801 = vmul.f32 %v4771, 1.442695
        %v4802 = vpow.pop %v4801
        %v4803 = vmul.f32 %v4772, 1.442695
        %v4804 = vpow.pop %v4803
        %v4805 = vadd.f32 %v4774, 1.0
        %v4806 = vadd.f32 %v4776, 1.0
        %v4807 = vadd.f32 %v4778, 1.0
        %v4808 = vadd.f32 %v4780, 1.0
        %v4809 = vadd.f32 %v4782, 1.0
        %v4810 = vadd.f32 %v4784, 1.0
        %v4811 = vadd.f32 %v4786, 1.0
        %v4812 = vadd.f32 %v4788, 1.0
        %v4813 = vadd.f32 %v4790, 1.0
        %v4814 = vadd.f32 %v4792, 1.0
        %v4815 = vadd.f32 %v4794, 1.0
        %v4816 = vadd.f32 %v4796, 1.0
        %v4817 = vadd.f32 %v4798, 1.0
        %v4818 = vadd.f32 %v4800, 1.0
        %v4819 = vadd.f32 %v4802, 1.0
        %v4820 = vadd.f32 %v4804, 1.0
        %v4821 = vrcp.pop %v4805
        %v4822 = vmul.f32 1.0, %v4821
        %v4823 = vrcp.pop %v4806
        %v4824 = vmul.f32 1.0, %v4823
        %v4825 = vrcp.pop %v4807
        %v4826 = vmul.f32 1.0, %v4825
        %v4827 = vrcp.pop %v4808
        %v4828 = vmul.f32 1.0, %v4827
        %v4829 = vrcp.pop %v4809
        %v4830 = vmul.f32 1.0, %v4829
        %v4831 = vrcp.pop %v4810
        %v4832 = vmul.f32 1.0, %v4831
        %v4833 = vrcp.pop %v4811
        %v4834 = vmul.f32 1.0, %v4833
        %v4835 = vrcp.pop %v4812
        %v4836 = vmul.f32 1.0, %v4835
        %v4837 = vrcp.pop %v4813
        %v4838 = vmul.f32 1.0, %v4837
        %v4839 = vrcp.pop %v4814
        %v4840 = vmul.f32 1.0, %v4839
        %v4841 = vrcp.pop %v4815
        %v4842 = vmul.f32 1.0, %v4841
        %v4843 = vrcp.pop %v4816
        %v4844 = vmul.f32 1.0, %v4843
        %v4845 = vrcp.pop %v4817
        %v4846 = vmul.f32 1.0, %v4845
        %v4847 = vrcp.pop %v4818
        %v4848 = vmul.f32 1.0, %v4847
        %v4849 = vrcp.pop %v4819
        %v4850 = vmul.f32 1.0, %v4849
        %v4851 = vrcp.pop %v4820
        %v4852 = vmul.f32 1.0, %v4851
        %v4853 = vmul.f32 %v4710, %v4186
        %v4854 = vmul.f32 %v4712, %v4187
        %v4855 = vmul.f32 %v4714, %v4188
        %v4856 = vmul.f32 %v4716, %v4189
        %v4857 = vmul.f32 %v4718, %v4190
        %v4858 = vmul.f32 %v4720, %v4191
        %v4859 = vmul.f32 %v4722, %v4192
        %v4860 = vmul.f32 %v4724, %v4193
        %v4861 = vmul.f32 %v4726, %v4194
        %v4862 = vmul.f32 %v4728, %v4195
        %v4863 = vmul.f32 %v4730, %v4196
        %v4864 = vmul.f32 %v4732, %v4197
        %v4865 = vmul.f32 %v4734, %v4198
        %v4866 = vmul.f32 %v4736, %v4199
        %v4867 = vmul.f32 %v4738, %v4200
        %v4868 = vmul.f32 %v4740, %v4201
        %v4869 = vmul.f32 %v4614, %v4741
        %v4870 = vmul.f32 %v4616, %v4742
        %v4871 = vmul.f32 %v4618, %v4743
        %v4872 = vmul.f32 %v4620, %v4744
        %v4873 = vmul.f32 %v4622, %v4745
        %v4874 = vmul.f32 %v4624, %v4746
        %v4875 = vmul.f32 %v4626, %v4747
        %v4876 = vmul.f32 %v4628, %v4748
        %v4877 = vmul.f32 %v4630, %v4749
        %v4878 = vmul.f32 %v4632, %v4750
        %v4879 = vmul.f32 %v4634, %v4751
        %v4880 = vmul.f32 %v4636, %v4752
        %v4881 = vmul.f32 %v4638, %v4753
        %v4882 = vmul.f32 %v4640, %v4754
        %v4883 = vmul.f32 %v4642, %v4755
        %v4884 = vmul.f32 %v4644, %v4756
        %v4885 = vadd.f32 %v4853, %v4869
        %v4886 = vadd.f32 %v4854, %v4870
        %v4887 = vadd.f32 %v4855, %v4871
        %v4888 = vadd.f32 %v4856, %v4872
        %v4889 = vadd.f32 %v4857, %v4873
        %v4890 = vadd.f32 %v4858, %v4874
        %v4891 = vadd.f32 %v4859, %v4875
        %v4892 = vadd.f32 %v4860, %v4876
        %v4893 = vadd.f32 %v4861, %v4877
        %v4894 = vadd.f32 %v4862, %v4878
        %v4895 = vadd.f32 %v4863, %v4879
        %v4896 = vadd.f32 %v4864, %v4880
        %v4897 = vadd.f32 %v4865, %v4881
        %v4898 = vadd.f32 %v4866, %v4882
        %v4899 = vadd.f32 %v4867, %v4883
        %v4900 = vadd.f32 %v4868, %v4884
        %v4901 = vtanh.pop %v4885
        %v4902 = vtanh.pop %v4886
        %v4903 = vtanh.pop %v4887
        %v4904 = vtanh.pop %v4888
        %v4905 = vtanh.pop %v4889
        %v4906 = vtanh.pop %v4890
        %v4907 = vtanh.pop %v4891
        %v4908 = vtanh.pop %v4892
        %v4909 = vtanh.pop %v4893
        %v4910 = vtanh.pop %v4894
        %v4911 = vtanh.pop %v4895
        %v4912 = vtanh.pop %v4896
        %v4913 = vtanh.pop %v4897
        %v4914 = vtanh.pop %v4898
        %v4915 = vtanh.pop %v4899
        %v4916 = vtanh.pop %v4900
        %v4917 = vmul.f32 %v4822, %v4901
        %v4918 = vmul.f32 %v4824, %v4902
        %v4919 = vmul.f32 %v4826, %v4903
        %v4920 = vmul.f32 %v4828, %v4904
        %v4921 = vmul.f32 %v4830, %v4905
        %v4922 = vmul.f32 %v4832, %v4906
        %v4923 = vmul.f32 %v4834, %v4907
        %v4924 = vmul.f32 %v4836, %v4908
        %v4925 = vmul.f32 %v4838, %v4909
        %v4926 = vmul.f32 %v4840, %v4910
        %v4927 = vmul.f32 %v4842, %v4911
        %v4928 = vmul.f32 %v4844, %v4912
        %v4929 = vmul.f32 %v4846, %v4913
        %v4930 = vmul.f32 %v4848, %v4914
        %v4931 = vmul.f32 %v4850, %v4915
        %v4932 = vmul.f32 %v4852, %v4916
        %v4933 = vadd.f32 %v4234, %v4917
        %v4934 = vadd.f32 %v4235, %v4918
        %v4935 = vadd.f32 %v4236, %v4919
        %v4936 = vadd.f32 %v4237, %v4920
        %v4937 = vadd.f32 %v4238, %v4921
        %v4938 = vadd.f32 %v4239, %v4922
        %v4939 = vadd.f32 %v4240, %v4923
        %v4940 = vadd.f32 %v4241, %v4924
        %v4941 = vadd.f32 %v4242, %v4925
        %v4942 = vadd.f32 %v4243, %v4926
        %v4943 = vadd.f32 %v4244, %v4927
        %v4944 = vadd.f32 %v4245, %v4928
        %v4945 = vadd.f32 %v4246, %v4929
        %v4946 = vadd.f32 %v4247, %v4930
        %v4947 = vadd.f32 %v4248, %v4931
        %v4948 = vadd.f32 %v4249, %v4932
        %v4949 = vpack.c.bf16 %v4918, %v4917
        %v4950 = vpack.c.bf16 %v4920, %v4919
        %v4951 = vpack.c.bf16 %v4922, %v4921
        %v4952 = vpack.c.bf16 %v4924, %v4923
        %v4953 = vpack.c.bf16 %v4926, %v4925
        %v4954 = vpack.c.bf16 %v4928, %v4927
        %v4955 = vpack.c.bf16 %v4930, %v4929
        %v4956 = vpack.c.bf16 %v4932, %v4931
        %s4957 = scalar_lea.vmem [#allocation2], 1024
        %v4958 = vld [vmem:[%s4957] sm:$0xff]
        %v4959 = vld [vmem:[%s4957 + $0x8] sm:$0xff]
        %v4960 = vld [vmem:[%s4957 + $0x10] sm:$0xff]
        %v4961 = vld [vmem:[%s4957 + $0x18] sm:$0xff]
        %v4962 = vld [vmem:[%s4957 + $0x20] sm:$0xff]
        %v4963 = vld [vmem:[%s4957 + $0x28] sm:$0xff]
        %v4964 = vld [vmem:[%s4957 + $0x30] sm:$0xff]
        %v4965 = vld [vmem:[%s4957 + $0x38] sm:$0xff]
        %v4966 = vld [vmem:[%s4957 + $0x40] sm:$0xff]
        %v4967 = vld [vmem:[%s4957 + $0x48] sm:$0xff]
        %v4968 = vld [vmem:[%s4957 + $0x50] sm:$0xff]
        %v4969 = vld [vmem:[%s4957 + $0x58] sm:$0xff]
        %v4970 = vld [vmem:[%s4957 + $0x60] sm:$0xff]
        %v4971 = vld [vmem:[%s4957 + $0x68] sm:$0xff]
        %v4972 = vld [vmem:[%s4957 + $0x70] sm:$0xff]
        %v4973 = vld [vmem:[%s4957 + $0x78] sm:$0xff]
        %v4974 = vld [vmem:[%s4957 + $0x80] sm:$0xff]
        %v4975 = vld [vmem:[%s4957 + $0x88] sm:$0xff]
        %v4976 = vld [vmem:[%s4957 + $0x90] sm:$0xff]
        %v4977 = vld [vmem:[%s4957 + $0x98] sm:$0xff]
        %v4978 = vld [vmem:[%s4957 + $0xa0] sm:$0xff]
        %v4979 = vld [vmem:[%s4957 + $0xa8] sm:$0xff]
        %v4980 = vld [vmem:[%s4957 + $0xb0] sm:$0xff]
        %v4981 = vld [vmem:[%s4957 + $0xb8] sm:$0xff]
        %v4982 = vld [vmem:[%s4957 + $0xc0] sm:$0xff]
        %v4983 = vld [vmem:[%s4957 + $0xc8] sm:$0xff]
        %v4984 = vld [vmem:[%s4957 + $0xd0] sm:$0xff]
        %v4985 = vld [vmem:[%s4957 + $0xd8] sm:$0xff]
        %v4986 = vld [vmem:[%s4957 + $0xe0] sm:$0xff]
        %v4987 = vld [vmem:[%s4957 + $0xe8] sm:$0xff]
        %v4988 = vld [vmem:[%s4957 + $0xf0] sm:$0xff]
        %v4989 = vld [vmem:[%s4957 + $0xf8] sm:$0xff]
        %v4990 = vld [vmem:[%s4957 + $0x100] sm:$0xff]
        %v4991 = vld [vmem:[%s4957 + $0x108] sm:$0xff]
        %v4992 = vld [vmem:[%s4957 + $0x110] sm:$0xff]
        %v4993 = vld [vmem:[%s4957 + $0x118] sm:$0xff]
        %v4994 = vld [vmem:[%s4957 + $0x120] sm:$0xff]
        %v4995 = vld [vmem:[%s4957 + $0x128] sm:$0xff]
        %v4996 = vld [vmem:[%s4957 + $0x130] sm:$0xff]
        %v4997 = vld [vmem:[%s4957 + $0x138] sm:$0xff]
        %v4998 = vld [vmem:[%s4957 + $0x140] sm:$0xff]
        %v4999 = vld [vmem:[%s4957 + $0x148] sm:$0xff]
        %v5000 = vld [vmem:[%s4957 + $0x150] sm:$0xff]
        %v5001 = vld [vmem:[%s4957 + $0x158] sm:$0xff]
        %v5002 = vld [vmem:[%s4957 + $0x160] sm:$0xff]
        %v5003 = vld [vmem:[%s4957 + $0x168] sm:$0xff]
        %v5004 = vld [vmem:[%s4957 + $0x170] sm:$0xff]
        %v5005 = vld [vmem:[%s4957 + $0x178] sm:$0xff]
        %v5006 = vld [vmem:[%s4957 + $0x180] sm:$0xff]
        %v5007 = vld [vmem:[%s4957 + $0x188] sm:$0xff]
        %v5008 = vld [vmem:[%s4957 + $0x190] sm:$0xff]
        %v5009 = vld [vmem:[%s4957 + $0x198] sm:$0xff]
        %v5010 = vld [vmem:[%s4957 + $0x1a0] sm:$0xff]
        %v5011 = vld [vmem:[%s4957 + $0x1a8] sm:$0xff]
        %v5012 = vld [vmem:[%s4957 + $0x1b0] sm:$0xff]
        %v5013 = vld [vmem:[%s4957 + $0x1b8] sm:$0xff]
        %v5014 = vld [vmem:[%s4957 + $0x1c0] sm:$0xff]
        %v5015 = vld [vmem:[%s4957 + $0x1c8] sm:$0xff]
        %v5016 = vld [vmem:[%s4957 + $0x1d0] sm:$0xff]
        %v5017 = vld [vmem:[%s4957 + $0x1d8] sm:$0xff]
        %v5018 = vld [vmem:[%s4957 + $0x1e0] sm:$0xff]
        %v5019 = vld [vmem:[%s4957 + $0x1e8] sm:$0xff]
        %v5020 = vld [vmem:[%s4957 + $0x1f0] sm:$0xff]
        %v5021 = vld [vmem:[%s4957 + $0x1f8] sm:$0xff]
        %5022 = vmatprep.subr.bf16.mxu0 %v3589
        %5023 = vmatpush1.bf16.msra.mxu0 %v3588
        %5024 = vmatprep.subr.bf16.mxu0 %v3585
        %5025 = vmatpush1.bf16.msra.mxu0 %v3584
        %5026 = vmatprep.subr.bf16.mxu0 %v3581
        %5027 = vmatpush1.bf16.msra.mxu0 %v3580
        %5028 = vmatprep.subr.bf16.mxu0 %v3577
        %5029 = vmatpush1.bf16.msra.mxu0 %v3576
        %5030 = vmatprep.subr.bf16.mxu0 %v3573
        %5031 = vmatpush1.bf16.msra.mxu0 %v3572
        %5032 = vmatprep.subr.bf16.mxu0 %v3569
        %5033 = vmatpush1.bf16.msra.mxu0 %v3568
        %5034 = vmatprep.subr.bf16.mxu0 %v3565
        %5035 = vmatpush1.bf16.msra.mxu0 %v3564
        %5036 = vmatprep.subr.bf16.mxu0 %v3561
        %5037 = vmatpush1.bf16.msra.mxu0 %v3560
        %5038 = vmatprep.subr.bf16.mxu0 0
        %5039 = vmatpush2.bf16.msra.mxu0 0
        %5040 = vmatprep.subr.bf16.mxu0 0
        %5041 = vmatpush2.bf16.msra.mxu0 0
        %5042 = vmatprep.subr.bf16.mxu0 0
        %5043 = vmatpush2.bf16.msra.mxu0 0
        %5044 = vmatprep.subr.bf16.mxu0 0
        %5045 = vmatpush2.bf16.msra.mxu0 0
        %5046 = vmatprep.subr.bf16.mxu0 0
        %5047 = vmatpush2.bf16.msra.mxu0 0
        %5048 = vmatprep.subr.bf16.mxu0 0
        %5049 = vmatpush2.bf16.msra.mxu0 0
        %5050 = vmatprep.subr.bf16.mxu0 0
        %5051 = vmatpush2.bf16.msra.mxu0 0
        %5052 = vmatprep.subr.bf16.mxu0 0
        %5053 = vmatpush2.bf16.msra.mxu0 0
        %5054 = vmatprep.mubr.bf16.mxu0 0
        %5055 = vmatmul.mubr.bf16.gmra.mxu0 %v4949
        %v5056 = vpop.f32.mrf.mxu0
        %v5057 = vadd.f32 %v4958, %v5056
        %v5058 = vpop.f32.mrf.mxu0
        %v5059 = vadd.f32 %v4959, %v5058
        %v5060 = vpop.f32.mrf.mxu0
        %v5061 = vadd.f32 %v4962, %v5060
        %v5062 = vpop.f32.mrf.mxu0
        %v5063 = vadd.f32 %v4963, %v5062
        %5064 = vmatprep.mubr.bf16.mxu0 0
        %5065 = vmatmul.mubr.bf16.gmra.mxu0 %v4950
        %v5066 = vpop.f32.mrf.mxu0
        %v5067 = vadd.f32 %v4966, %v5066
        %v5068 = vpop.f32.mrf.mxu0
        %v5069 = vadd.f32 %v4967, %v5068
        %v5070 = vpop.f32.mrf.mxu0
        %v5071 = vadd.f32 %v4970, %v5070
        %v5072 = vpop.f32.mrf.mxu0
        %v5073 = vadd.f32 %v4971, %v5072
        %5074 = vmatprep.mubr.bf16.mxu0 0
        %5075 = vmatmul.mubr.bf16.gmra.mxu0 %v4951
        %v5076 = vpop.f32.mrf.mxu0
        %v5077 = vadd.f32 %v4974, %v5076
        %v5078 = vpop.f32.mrf.mxu0
        %v5079 = vadd.f32 %v4975, %v5078
        %v5080 = vpop.f32.mrf.mxu0
        %v5081 = vadd.f32 %v4978, %v5080
        %v5082 = vpop.f32.mrf.mxu0
        %v5083 = vadd.f32 %v4979, %v5082
        %5084 = vmatprep.mubr.bf16.mxu0 0
        %5085 = vmatmul.mubr.bf16.gmra.mxu0 %v4952
        %v5086 = vpop.f32.mrf.mxu0
        %v5087 = vadd.f32 %v4982, %v5086
        %v5088 = vpop.f32.mrf.mxu0
        %v5089 = vadd.f32 %v4983, %v5088
        %v5090 = vpop.f32.mrf.mxu0
        %v5091 = vadd.f32 %v4986, %v5090
        %v5092 = vpop.f32.mrf.mxu0
        %v5093 = vadd.f32 %v4987, %v5092
        %5094 = vmatprep.mubr.bf16.mxu0 0
        %5095 = vmatmul.mubr.bf16.gmra.mxu0 %v4953
        %v5096 = vpop.f32.mrf.mxu0
        %v5097 = vadd.f32 %v4990, %v5096
        %v5098 = vpop.f32.mrf.mxu0
        %v5099 = vadd.f32 %v4991, %v5098
        %v5100 = vpop.f32.mrf.mxu0
        %v5101 = vadd.f32 %v4994, %v5100
        %v5102 = vpop.f32.mrf.mxu0
        %v5103 = vadd.f32 %v4995, %v5102
        %5104 = vmatprep.mubr.bf16.mxu0 0
        %5105 = vmatmul.mubr.bf16.gmra.mxu0 %v4954
        %v5106 = vpop.f32.mrf.mxu0
        %v5107 = vadd.f32 %v4998, %v5106
        %v5108 = vpop.f32.mrf.mxu0
        %v5109 = vadd.f32 %v4999, %v5108
        %v5110 = vpop.f32.mrf.mxu0
        %v5111 = vadd.f32 %v5002, %v5110
        %v5112 = vpop.f32.mrf.mxu0
        %v5113 = vadd.f32 %v5003, %v5112
        %5114 = vmatprep.mubr.bf16.mxu0 0
        %5115 = vmatmul.mubr.bf16.gmra.mxu0 %v4955
        %v5116 = vpop.f32.mrf.mxu0
        %v5117 = vadd.f32 %v5006, %v5116
        %v5118 = vpop.f32.mrf.mxu0
        %v5119 = vadd.f32 %v5007, %v5118
        %v5120 = vpop.f32.mrf.mxu0
        %v5121 = vadd.f32 %v5010, %v5120
        %v5122 = vpop.f32.mrf.mxu0
        %v5123 = vadd.f32 %v5011, %v5122
        %5124 = vmatprep.mubr.bf16.mxu0 0
        %5125 = vmatmul.mubr.bf16.gmra.mxu0 %v4956
        %v5126 = vpop.f32.mrf.mxu0
        %v5127 = vadd.f32 %v5014, %v5126
        %v5128 = vpop.f32.mrf.mxu0
        %v5129 = vadd.f32 %v5015, %v5128
        %v5130 = vpop.f32.mrf.mxu0
        %v5131 = vadd.f32 %v5018, %v5130
        %v5132 = vpop.f32.mrf.mxu0
        %v5133 = vadd.f32 %v5019, %v5132
        %5134 = vdwg.mxu0
        %5135 = vmatprep.subr.bf16.mxu0 %v3591
        %5136 = vmatpush1.bf16.msra.mxu0 %v3590
        %5137 = vmatprep.subr.bf16.mxu0 %v3587
        %5138 = vmatpush1.bf16.msra.mxu0 %v3586
        %5139 = vmatprep.subr.bf16.mxu0 %v3583
        %5140 = vmatpush1.bf16.msra.mxu0 %v3582
        %5141 = vmatprep.subr.bf16.mxu0 %v3579
        %5142 = vmatpush1.bf16.msra.mxu0 %v3578
        %5143 = vmatprep.subr.bf16.mxu0 %v3575
        %5144 = vmatpush1.bf16.msra.mxu0 %v3574
        %5145 = vmatprep.subr.bf16.mxu0 %v3571
        %5146 = vmatpush1.bf16.msra.mxu0 %v3570
        %5147 = vmatprep.subr.bf16.mxu0 %v3567
        %5148 = vmatpush1.bf16.msra.mxu0 %v3566
        %5149 = vmatprep.subr.bf16.mxu0 %v3563
        %5150 = vmatpush1.bf16.msra.mxu0 %v3562
        %5151 = vmatprep.subr.bf16.mxu0 0
        %5152 = vmatpush2.bf16.msra.mxu0 0
        %5153 = vmatprep.subr.bf16.mxu0 0
        %5154 = vmatpush2.bf16.msra.mxu0 0
        %5155 = vmatprep.subr.bf16.mxu0 0
        %5156 = vmatpush2.bf16.msra.mxu0 0
        %5157 = vmatprep.subr.bf16.mxu0 0
        %5158 = vmatpush2.bf16.msra.mxu0 0
        %5159 = vmatprep.subr.bf16.mxu0 0
        %5160 = vmatpush2.bf16.msra.mxu0 0
        %5161 = vmatprep.subr.bf16.mxu0 0
        %5162 = vmatpush2.bf16.msra.mxu0 0
        %5163 = vmatprep.subr.bf16.mxu0 0
        %5164 = vmatpush2.bf16.msra.mxu0 0
        %5165 = vmatprep.subr.bf16.mxu0 0
        %5166 = vmatpush2.bf16.msra.mxu0 0
        %5167 = vmatprep.mubr.bf16.mxu0 0
        %5168 = vmatmul.mubr.bf16.gmra.mxu0 %v4949
        %v5169 = vpop.f32.mrf.mxu0
        %v5170 = vadd.f32 %v4960, %v5169
        %v5171 = vpop.f32.mrf.mxu0
        %v5172 = vadd.f32 %v4961, %v5171
        %v5173 = vpop.f32.mrf.mxu0
        %v5174 = vadd.f32 %v4964, %v5173
        %v5175 = vpop.f32.mrf.mxu0
        %v5176 = vadd.f32 %v4965, %v5175
        %5177 = vmatprep.mubr.bf16.mxu0 0
        %5178 = vmatmul.mubr.bf16.gmra.mxu0 %v4950
        %v5179 = vpop.f32.mrf.mxu0
        %v5180 = vadd.f32 %v4968, %v5179
        %v5181 = vpop.f32.mrf.mxu0
        %v5182 = vadd.f32 %v4969, %v5181
        %v5183 = vpop.f32.mrf.mxu0
        %v5184 = vadd.f32 %v4972, %v5183
        %v5185 = vpop.f32.mrf.mxu0
        %v5186 = vadd.f32 %v4973, %v5185
        %5187 = vmatprep.mubr.bf16.mxu0 0
        %5188 = vmatmul.mubr.bf16.gmra.mxu0 %v4951
        %v5189 = vpop.f32.mrf.mxu0
        %v5190 = vadd.f32 %v4976, %v5189
        %v5191 = vpop.f32.mrf.mxu0
        %v5192 = vadd.f32 %v4977, %v5191
        %v5193 = vpop.f32.mrf.mxu0
        %v5194 = vadd.f32 %v4980, %v5193
        %v5195 = vpop.f32.mrf.mxu0
        %v5196 = vadd.f32 %v4981, %v5195
        %5197 = vmatprep.mubr.bf16.mxu0 0
        %5198 = vmatmul.mubr.bf16.gmra.mxu0 %v4952
        %v5199 = vpop.f32.mrf.mxu0
        %v5200 = vadd.f32 %v4984, %v5199
        %v5201 = vpop.f32.mrf.mxu0
        %v5202 = vadd.f32 %v4985, %v5201
        %v5203 = vpop.f32.mrf.mxu0
        %v5204 = vadd.f32 %v4988, %v5203
        %v5205 = vpop.f32.mrf.mxu0
        %v5206 = vadd.f32 %v4989, %v5205
        %5207 = vmatprep.mubr.bf16.mxu0 0
        %5208 = vmatmul.mubr.bf16.gmra.mxu0 %v4953
        %v5209 = vpop.f32.mrf.mxu0
        %v5210 = vadd.f32 %v4992, %v5209
        %v5211 = vpop.f32.mrf.mxu0
        %v5212 = vadd.f32 %v4993, %v5211
        %v5213 = vpop.f32.mrf.mxu0
        %v5214 = vadd.f32 %v4996, %v5213
        %v5215 = vpop.f32.mrf.mxu0
        %v5216 = vadd.f32 %v4997, %v5215
        %5217 = vmatprep.mubr.bf16.mxu0 0
        %5218 = vmatmul.mubr.bf16.gmra.mxu0 %v4954
        %v5219 = vpop.f32.mrf.mxu0
        %v5220 = vadd.f32 %v5000, %v5219
        %v5221 = vpop.f32.mrf.mxu0
        %v5222 = vadd.f32 %v5001, %v5221
        %v5223 = vpop.f32.mrf.mxu0
        %v5224 = vadd.f32 %v5004, %v5223
        %v5225 = vpop.f32.mrf.mxu0
        %v5226 = vadd.f32 %v5005, %v5225
        %5227 = vmatprep.mubr.bf16.mxu0 0
        %5228 = vmatmul.mubr.bf16.gmra.mxu0 %v4955
        %v5229 = vpop.f32.mrf.mxu0
        %v5230 = vadd.f32 %v5008, %v5229
        %v5231 = vpop.f32.mrf.mxu0
        %v5232 = vadd.f32 %v5009, %v5231
        %v5233 = vpop.f32.mrf.mxu0
        %v5234 = vadd.f32 %v5012, %v5233
        %v5235 = vpop.f32.mrf.mxu0
        %v5236 = vadd.f32 %v5013, %v5235
        %5237 = vmatprep.mubr.bf16.mxu0 0
        %5238 = vmatmul.mubr.bf16.gmra.mxu0 %v4956
        %v5239 = vpop.f32.mrf.mxu0
        %v5240 = vadd.f32 %v5016, %v5239
        %v5241 = vpop.f32.mrf.mxu0
        %v5242 = vadd.f32 %v5017, %v5241
        %v5243 = vpop.f32.mrf.mxu0
        %v5244 = vadd.f32 %v5020, %v5243
        %v5245 = vpop.f32.mrf.mxu0
        %v5246 = vadd.f32 %v5021, %v5245
        %5247 = vdwg.mxu0
        %v5248 = vxor.u32 %v5057, 2147483648
        %v5249 = vxor.u32 %v5061, 2147483648
        %v5250 = vxor.u32 %v5067, 2147483648
        %v5251 = vxor.u32 %v5071, 2147483648
        %v5252 = vxor.u32 %v5077, 2147483648
        %v5253 = vxor.u32 %v5081, 2147483648
        %v5254 = vxor.u32 %v5087, 2147483648
        %v5255 = vxor.u32 %v5091, 2147483648
        %v5256 = vxor.u32 %v5097, 2147483648
        %v5257 = vxor.u32 %v5101, 2147483648
        %v5258 = vxor.u32 %v5107, 2147483648
        %v5259 = vxor.u32 %v5111, 2147483648
        %v5260 = vxor.u32 %v5117, 2147483648
        %v5261 = vxor.u32 %v5121, 2147483648
        %v5262 = vxor.u32 %v5127, 2147483648
        %v5263 = vxor.u32 %v5131, 2147483648
        %v5264 = vmul.f32 %v5248, 1.442695
        %v5265 = vpow.pop %v5264
        %v5266 = vmul.f32 %v5249, 1.442695
        %v5267 = vpow.pop %v5266
        %v5268 = vmul.f32 %v5250, 1.442695
        %v5269 = vpow.pop %v5268
        %v5270 = vmul.f32 %v5251, 1.442695
        %v5271 = vpow.pop %v5270
        %v5272 = vmul.f32 %v5252, 1.442695
        %v5273 = vpow.pop %v5272
        %v5274 = vmul.f32 %v5253, 1.442695
        %v5275 = vpow.pop %v5274
        %v5276 = vmul.f32 %v5254, 1.442695
        %v5277 = vpow.pop %v5276
        %v5278 = vmul.f32 %v5255, 1.442695
        %v5279 = vpow.pop %v5278
        %v5280 = vmul.f32 %v5256, 1.442695
        %v5281 = vpow.pop %v5280
        %v5282 = vmul.f32 %v5257, 1.442695
        %v5283 = vpow.pop %v5282
        %v5284 = vmul.f32 %v5258, 1.442695
        %v5285 = vpow.pop %v5284
        %v5286 = vmul.f32 %v5259, 1.442695
        %v5287 = vpow.pop %v5286
        %v5288 = vmul.f32 %v5260, 1.442695
        %v5289 = vpow.pop %v5288
        %v5290 = vmul.f32 %v5261, 1.442695
        %v5291 = vpow.pop %v5290
        %v5292 = vmul.f32 %v5262, 1.442695
        %v5293 = vpow.pop %v5292
        %v5294 = vmul.f32 %v5263, 1.442695
        %v5295 = vpow.pop %v5294
        %v5296 = vadd.f32 %v5265, 1.0
        %v5297 = vadd.f32 %v5267, 1.0
        %v5298 = vadd.f32 %v5269, 1.0
        %v5299 = vadd.f32 %v5271, 1.0
        %v5300 = vadd.f32 %v5273, 1.0
        %v5301 = vadd.f32 %v5275, 1.0
        %v5302 = vadd.f32 %v5277, 1.0
        %v5303 = vadd.f32 %v5279, 1.0
        %v5304 = vadd.f32 %v5281, 1.0
        %v5305 = vadd.f32 %v5283, 1.0
        %v5306 = vadd.f32 %v5285, 1.0
        %v5307 = vadd.f32 %v5287, 1.0
        %v5308 = vadd.f32 %v5289, 1.0
        %v5309 = vadd.f32 %v5291, 1.0
        %v5310 = vadd.f32 %v5293, 1.0
        %v5311 = vadd.f32 %v5295, 1.0
        %v5312 = vrcp.pop %v5296
        %v5313 = vmul.f32 1.0, %v5312
        %v5314 = vrcp.pop %v5297
        %v5315 = vmul.f32 1.0, %v5314
        %v5316 = vrcp.pop %v5298
        %v5317 = vmul.f32 1.0, %v5316
        %v5318 = vrcp.pop %v5299
        %v5319 = vmul.f32 1.0, %v5318
        %v5320 = vrcp.pop %v5300
        %v5321 = vmul.f32 1.0, %v5320
        %v5322 = vrcp.pop %v5301
        %v5323 = vmul.f32 1.0, %v5322
        %v5324 = vrcp.pop %v5302
        %v5325 = vmul.f32 1.0, %v5324
        %v5326 = vrcp.pop %v5303
        %v5327 = vmul.f32 1.0, %v5326
        %v5328 = vrcp.pop %v5304
        %v5329 = vmul.f32 1.0, %v5328
        %v5330 = vrcp.pop %v5305
        %v5331 = vmul.f32 1.0, %v5330
        %v5332 = vrcp.pop %v5306
        %v5333 = vmul.f32 1.0, %v5332
        %v5334 = vrcp.pop %v5307
        %v5335 = vmul.f32 1.0, %v5334
        %v5336 = vrcp.pop %v5308
        %v5337 = vmul.f32 1.0, %v5336
        %v5338 = vrcp.pop %v5309
        %v5339 = vmul.f32 1.0, %v5338
        %v5340 = vrcp.pop %v5310
        %v5341 = vmul.f32 1.0, %v5340
        %v5342 = vrcp.pop %v5311
        %v5343 = vmul.f32 1.0, %v5342
        %v5344 = vxor.u32 %v5059, 2147483648
        %v5345 = vxor.u32 %v5063, 2147483648
        %v5346 = vxor.u32 %v5069, 2147483648
        %v5347 = vxor.u32 %v5073, 2147483648
        %v5348 = vxor.u32 %v5079, 2147483648
        %v5349 = vxor.u32 %v5083, 2147483648
        %v5350 = vxor.u32 %v5089, 2147483648
        %v5351 = vxor.u32 %v5093, 2147483648
        %v5352 = vxor.u32 %v5099, 2147483648
        %v5353 = vxor.u32 %v5103, 2147483648
        %v5354 = vxor.u32 %v5109, 2147483648
        %v5355 = vxor.u32 %v5113, 2147483648
        %v5356 = vxor.u32 %v5119, 2147483648
        %v5357 = vxor.u32 %v5123, 2147483648
        %v5358 = vxor.u32 %v5129, 2147483648
        %v5359 = vxor.u32 %v5133, 2147483648
        %v5360 = vmul.f32 %v5344, 1.442695
        %v5361 = vpow.pop %v5360
        %v5362 = vmul.f32 %v5345, 1.442695
        %v5363 = vpow.pop %v5362
        %v5364 = vmul.f32 %v5346, 1.442695
        %v5365 = vpow.pop %v5364
        %v5366 = vmul.f32 %v5347, 1.442695
        %v5367 = vpow.pop %v5366
        %v5368 = vmul.f32 %v5348, 1.442695
        %v5369 = vpow.pop %v5368
        %v5370 = vmul.f32 %v5349, 1.442695
        %v5371 = vpow.pop %v5370
        %v5372 = vmul.f32 %v5350, 1.442695
        %v5373 = vpow.pop %v5372
        %v5374 = vmul.f32 %v5351, 1.442695
        %v5375 = vpow.pop %v5374
        %v5376 = vmul.f32 %v5352, 1.442695
        %v5377 = vpow.pop %v5376
        %v5378 = vmul.f32 %v5353, 1.442695
        %v5379 = vpow.pop %v5378
        %v5380 = vmul.f32 %v5354, 1.442695
        %v5381 = vpow.pop %v5380
        %v5382 = vmul.f32 %v5355, 1.442695
        %v5383 = vpow.pop %v5382
        %v5384 = vmul.f32 %v5356, 1.442695
        %v5385 = vpow.pop %v5384
        %v5386 = vmul.f32 %v5357, 1.442695
        %v5387 = vpow.pop %v5386
        %v5388 = vmul.f32 %v5358, 1.442695
        %v5389 = vpow.pop %v5388
        %v5390 = vmul.f32 %v5359, 1.442695
        %v5391 = vpow.pop %v5390
        %v5392 = vadd.f32 %v5361, 1.0
        %v5393 = vadd.f32 %v5363, 1.0
        %v5394 = vadd.f32 %v5365, 1.0
        %v5395 = vadd.f32 %v5367, 1.0
        %v5396 = vadd.f32 %v5369, 1.0
        %v5397 = vadd.f32 %v5371, 1.0
        %v5398 = vadd.f32 %v5373, 1.0
        %v5399 = vadd.f32 %v5375, 1.0
        %v5400 = vadd.f32 %v5377, 1.0
        %v5401 = vadd.f32 %v5379, 1.0
        %v5402 = vadd.f32 %v5381, 1.0
        %v5403 = vadd.f32 %v5383, 1.0
        %v5404 = vadd.f32 %v5385, 1.0
        %v5405 = vadd.f32 %v5387, 1.0
        %v5406 = vadd.f32 %v5389, 1.0
        %v5407 = vadd.f32 %v5391, 1.0
        %v5408 = vrcp.pop %v5392
        %v5409 = vmul.f32 1.0, %v5408
        %v5410 = vrcp.pop %v5393
        %v5411 = vmul.f32 1.0, %v5410
        %v5412 = vrcp.pop %v5394
        %v5413 = vmul.f32 1.0, %v5412
        %v5414 = vrcp.pop %v5395
        %v5415 = vmul.f32 1.0, %v5414
        %v5416 = vrcp.pop %v5396
        %v5417 = vmul.f32 1.0, %v5416
        %v5418 = vrcp.pop %v5397
        %v5419 = vmul.f32 1.0, %v5418
        %v5420 = vrcp.pop %v5398
        %v5421 = vmul.f32 1.0, %v5420
        %v5422 = vrcp.pop %v5399
        %v5423 = vmul.f32 1.0, %v5422
        %v5424 = vrcp.pop %v5400
        %v5425 = vmul.f32 1.0, %v5424
        %v5426 = vrcp.pop %v5401
        %v5427 = vmul.f32 1.0, %v5426
        %v5428 = vrcp.pop %v5402
        %v5429 = vmul.f32 1.0, %v5428
        %v5430 = vrcp.pop %v5403
        %v5431 = vmul.f32 1.0, %v5430
        %v5432 = vrcp.pop %v5404
        %v5433 = vmul.f32 1.0, %v5432
        %v5434 = vrcp.pop %v5405
        %v5435 = vmul.f32 1.0, %v5434
        %v5436 = vrcp.pop %v5406
        %v5437 = vmul.f32 1.0, %v5436
        %v5438 = vrcp.pop %v5407
        %v5439 = vmul.f32 1.0, %v5438
        %v5440 = vtanh.pop %v5170
        %v5441 = vtanh.pop %v5174
        %v5442 = vtanh.pop %v5180
        %v5443 = vtanh.pop %v5184
        %v5444 = vtanh.pop %v5190
        %v5445 = vtanh.pop %v5194
        %v5446 = vtanh.pop %v5200
        %v5447 = vtanh.pop %v5204
        %v5448 = vtanh.pop %v5210
        %v5449 = vtanh.pop %v5214
        %v5450 = vtanh.pop %v5220
        %v5451 = vtanh.pop %v5224
        %v5452 = vtanh.pop %v5230
        %v5453 = vtanh.pop %v5234
        %v5454 = vtanh.pop %v5240
        %v5455 = vtanh.pop %v5244
        %v5456 = vxor.u32 %v5172, 2147483648
        %v5457 = vxor.u32 %v5176, 2147483648
        %v5458 = vxor.u32 %v5182, 2147483648
        %v5459 = vxor.u32 %v5186, 2147483648
        %v5460 = vxor.u32 %v5192, 2147483648
        %v5461 = vxor.u32 %v5196, 2147483648
        %v5462 = vxor.u32 %v5202, 2147483648
        %v5463 = vxor.u32 %v5206, 2147483648
        %v5464 = vxor.u32 %v5212, 2147483648
        %v5465 = vxor.u32 %v5216, 2147483648
        %v5466 = vxor.u32 %v5222, 2147483648
        %v5467 = vxor.u32 %v5226, 2147483648
        %v5468 = vxor.u32 %v5232, 2147483648
        %v5469 = vxor.u32 %v5236, 2147483648
        %v5470 = vxor.u32 %v5242, 2147483648
        %v5471 = vxor.u32 %v5246, 2147483648
        %v5472 = vmul.f32 %v5456, 1.442695
        %v5473 = vpow.pop %v5472
        %v5474 = vmul.f32 %v5457, 1.442695
        %v5475 = vpow.pop %v5474
        %v5476 = vmul.f32 %v5458, 1.442695
        %v5477 = vpow.pop %v5476
        %v5478 = vmul.f32 %v5459, 1.442695
        %v5479 = vpow.pop %v5478
        %v5480 = vmul.f32 %v5460, 1.442695
        %v5481 = vpow.pop %v5480
        %v5482 = vmul.f32 %v5461, 1.442695
        %v5483 = vpow.pop %v5482
        %v5484 = vmul.f32 %v5462, 1.442695
        %v5485 = vpow.pop %v5484
        %v5486 = vmul.f32 %v5463, 1.442695
        %v5487 = vpow.pop %v5486
        %v5488 = vmul.f32 %v5464, 1.442695
        %v5489 = vpow.pop %v5488
        %v5490 = vmul.f32 %v5465, 1.442695
        %v5491 = vpow.pop %v5490
        %v5492 = vmul.f32 %v5466, 1.442695
        %v5493 = vpow.pop %v5492
        %v5494 = vmul.f32 %v5467, 1.442695
        %v5495 = vpow.pop %v5494
        %v5496 = vmul.f32 %v5468, 1.442695
        %v5497 = vpow.pop %v5496
        %v5498 = vmul.f32 %v5469, 1.442695
        %v5499 = vpow.pop %v5498
        %v5500 = vmul.f32 %v5470, 1.442695
        %v5501 = vpow.pop %v5500
        %v5502 = vmul.f32 %v5471, 1.442695
        %v5503 = vpow.pop %v5502
        %v5504 = vadd.f32 %v5473, 1.0
        %v5505 = vadd.f32 %v5475, 1.0
        %v5506 = vadd.f32 %v5477, 1.0
        %v5507 = vadd.f32 %v5479, 1.0
        %v5508 = vadd.f32 %v5481, 1.0
        %v5509 = vadd.f32 %v5483, 1.0
        %v5510 = vadd.f32 %v5485, 1.0
        %v5511 = vadd.f32 %v5487, 1.0
        %v5512 = vadd.f32 %v5489, 1.0
        %v5513 = vadd.f32 %v5491, 1.0
        %v5514 = vadd.f32 %v5493, 1.0
        %v5515 = vadd.f32 %v5495, 1.0
        %v5516 = vadd.f32 %v5497, 1.0
        %v5517 = vadd.f32 %v5499, 1.0
        %v5518 = vadd.f32 %v5501, 1.0
        %v5519 = vadd.f32 %v5503, 1.0
        %v5520 = vrcp.pop %v5504
        %v5521 = vmul.f32 1.0, %v5520
        %v5522 = vrcp.pop %v5505
        %v5523 = vmul.f32 1.0, %v5522
        %v5524 = vrcp.pop %v5506
        %v5525 = vmul.f32 1.0, %v5524
        %v5526 = vrcp.pop %v5507
        %v5527 = vmul.f32 1.0, %v5526
        %v5528 = vrcp.pop %v5508
        %v5529 = vmul.f32 1.0, %v5528
        %v5530 = vrcp.pop %v5509
        %v5531 = vmul.f32 1.0, %v5530
        %v5532 = vrcp.pop %v5510
        %v5533 = vmul.f32 1.0, %v5532
        %v5534 = vrcp.pop %v5511
        %v5535 = vmul.f32 1.0, %v5534
        %v5536 = vrcp.pop %v5512
        %v5537 = vmul.f32 1.0, %v5536
        %v5538 = vrcp.pop %v5513
        %v5539 = vmul.f32 1.0, %v5538
        %v5540 = vrcp.pop %v5514
        %v5541 = vmul.f32 1.0, %v5540
        %v5542 = vrcp.pop %v5515
        %v5543 = vmul.f32 1.0, %v5542
        %v5544 = vrcp.pop %v5516
        %v5545 = vmul.f32 1.0, %v5544
        %v5546 = vrcp.pop %v5517
        %v5547 = vmul.f32 1.0, %v5546
        %v5548 = vrcp.pop %v5518
        %v5549 = vmul.f32 1.0, %v5548
        %v5550 = vrcp.pop %v5519
        %v5551 = vmul.f32 1.0, %v5550
        %v5552 = vmul.f32 %v5409, %v4885
        %v5553 = vmul.f32 %v5411, %v4886
        %v5554 = vmul.f32 %v5413, %v4887
        %v5555 = vmul.f32 %v5415, %v4888
        %v5556 = vmul.f32 %v5417, %v4889
        %v5557 = vmul.f32 %v5419, %v4890
        %v5558 = vmul.f32 %v5421, %v4891
        %v5559 = vmul.f32 %v5423, %v4892
        %v5560 = vmul.f32 %v5425, %v4893
        %v5561 = vmul.f32 %v5427, %v4894
        %v5562 = vmul.f32 %v5429, %v4895
        %v5563 = vmul.f32 %v5431, %v4896
        %v5564 = vmul.f32 %v5433, %v4897
        %v5565 = vmul.f32 %v5435, %v4898
        %v5566 = vmul.f32 %v5437, %v4899
        %v5567 = vmul.f32 %v5439, %v4900
        %v5568 = vmul.f32 %v5313, %v5440
        %v5569 = vmul.f32 %v5315, %v5441
        %v5570 = vmul.f32 %v5317, %v5442
        %v5571 = vmul.f32 %v5319, %v5443
        %v5572 = vmul.f32 %v5321, %v5444
        %v5573 = vmul.f32 %v5323, %v5445
        %v5574 = vmul.f32 %v5325, %v5446
        %v5575 = vmul.f32 %v5327, %v5447
        %v5576 = vmul.f32 %v5329, %v5448
        %v5577 = vmul.f32 %v5331, %v5449
        %v5578 = vmul.f32 %v5333, %v5450
        %v5579 = vmul.f32 %v5335, %v5451
        %v5580 = vmul.f32 %v5337, %v5452
        %v5581 = vmul.f32 %v5339, %v5453
        %v5582 = vmul.f32 %v5341, %v5454
        %v5583 = vmul.f32 %v5343, %v5455
        %v5584 = vadd.f32 %v5552, %v5568
        %v5585 = vadd.f32 %v5553, %v5569
        %v5586 = vadd.f32 %v5554, %v5570
        %v5587 = vadd.f32 %v5555, %v5571
        %v5588 = vadd.f32 %v5556, %v5572
        %v5589 = vadd.f32 %v5557, %v5573
        %v5590 = vadd.f32 %v5558, %v5574
        %v5591 = vadd.f32 %v5559, %v5575
        %v5592 = vadd.f32 %v5560, %v5576
        %v5593 = vadd.f32 %v5561, %v5577
        %v5594 = vadd.f32 %v5562, %v5578
        %v5595 = vadd.f32 %v5563, %v5579
        %v5596 = vadd.f32 %v5564, %v5580
        %v5597 = vadd.f32 %v5565, %v5581
        %v5598 = vadd.f32 %v5566, %v5582
        %v5599 = vadd.f32 %v5567, %v5583
        %v5600 = vtanh.pop %v5584
        %v5601 = vtanh.pop %v5585
        %v5602 = vtanh.pop %v5586
        %v5603 = vtanh.pop %v5587
        %v5604 = vtanh.pop %v5588
        %v5605 = vtanh.pop %v5589
        %v5606 = vtanh.pop %v5590
        %v5607 = vtanh.pop %v5591
        %v5608 = vtanh.pop %v5592
        %v5609 = vtanh.pop %v5593
        %v5610 = vtanh.pop %v5594
        %v5611 = vtanh.pop %v5595
        %v5612 = vtanh.pop %v5596
        %v5613 = vtanh.pop %v5597
        %v5614 = vtanh.pop %v5598
        %v5615 = vtanh.pop %v5599
        %v5616 = vmul.f32 %v5521, %v5600
        %v5617 = vmul.f32 %v5523, %v5601
        %v5618 = vmul.f32 %v5525, %v5602
        %v5619 = vmul.f32 %v5527, %v5603
        %v5620 = vmul.f32 %v5529, %v5604
        %v5621 = vmul.f32 %v5531, %v5605
        %v5622 = vmul.f32 %v5533, %v5606
        %v5623 = vmul.f32 %v5535, %v5607
        %v5624 = vmul.f32 %v5537, %v5608
        %v5625 = vmul.f32 %v5539, %v5609
        %v5626 = vmul.f32 %v5541, %v5610
        %v5627 = vmul.f32 %v5543, %v5611
        %v5628 = vmul.f32 %v5545, %v5612
        %v5629 = vmul.f32 %v5547, %v5613
        %v5630 = vmul.f32 %v5549, %v5614
        %v5631 = vmul.f32 %v5551, %v5615
        %v5632 = vadd.f32 %v4933, %v5616
        %v5633 = vadd.f32 %v4934, %v5617
        %v5634 = vadd.f32 %v4935, %v5618
        %v5635 = vadd.f32 %v4936, %v5619
        %v5636 = vadd.f32 %v4937, %v5620
        %v5637 = vadd.f32 %v4938, %v5621
        %v5638 = vadd.f32 %v4939, %v5622
        %v5639 = vadd.f32 %v4940, %v5623
        %v5640 = vadd.f32 %v4941, %v5624
        %v5641 = vadd.f32 %v4942, %v5625
        %v5642 = vadd.f32 %v4943, %v5626
        %v5643 = vadd.f32 %v4944, %v5627
        %v5644 = vadd.f32 %v4945, %v5628
        %v5645 = vadd.f32 %v4946, %v5629
        %v5646 = vadd.f32 %v4947, %v5630
        %v5647 = vadd.f32 %v4948, %v5631
        %v5648 = vpack.c.bf16 %v5617, %v5616
        %v5649 = vpack.c.bf16 %v5619, %v5618
        %v5650 = vpack.c.bf16 %v5621, %v5620
        %v5651 = vpack.c.bf16 %v5623, %v5622
        %v5652 = vpack.c.bf16 %v5625, %v5624
        %v5653 = vpack.c.bf16 %v5627, %v5626
        %v5654 = vpack.c.bf16 %v5629, %v5628
        %v5655 = vpack.c.bf16 %v5631, %v5630
        %s5656 = scalar_lea.vmem [#allocation2], 1536
        %v5657 = vld [vmem:[%s5656] sm:$0xff]
        %v5658 = vld [vmem:[%s5656 + $0x8] sm:$0xff]
        %v5659 = vld [vmem:[%s5656 + $0x10] sm:$0xff]
        %v5660 = vld [vmem:[%s5656 + $0x18] sm:$0xff]
        %v5661 = vld [vmem:[%s5656 + $0x20] sm:$0xff]
        %v5662 = vld [vmem:[%s5656 + $0x28] sm:$0xff]
        %v5663 = vld [vmem:[%s5656 + $0x30] sm:$0xff]
        %v5664 = vld [vmem:[%s5656 + $0x38] sm:$0xff]
        %v5665 = vld [vmem:[%s5656 + $0x40] sm:$0xff]
        %v5666 = vld [vmem:[%s5656 + $0x48] sm:$0xff]
        %v5667 = vld [vmem:[%s5656 + $0x50] sm:$0xff]
        %v5668 = vld [vmem:[%s5656 + $0x58] sm:$0xff]
        %v5669 = vld [vmem:[%s5656 + $0x60] sm:$0xff]
        %v5670 = vld [vmem:[%s5656 + $0x68] sm:$0xff]
        %v5671 = vld [vmem:[%s5656 + $0x70] sm:$0xff]
        %v5672 = vld [vmem:[%s5656 + $0x78] sm:$0xff]
        %v5673 = vld [vmem:[%s5656 + $0x80] sm:$0xff]
        %v5674 = vld [vmem:[%s5656 + $0x88] sm:$0xff]
        %v5675 = vld [vmem:[%s5656 + $0x90] sm:$0xff]
        %v5676 = vld [vmem:[%s5656 + $0x98] sm:$0xff]
        %v5677 = vld [vmem:[%s5656 + $0xa0] sm:$0xff]
        %v5678 = vld [vmem:[%s5656 + $0xa8] sm:$0xff]
        %v5679 = vld [vmem:[%s5656 + $0xb0] sm:$0xff]
        %v5680 = vld [vmem:[%s5656 + $0xb8] sm:$0xff]
        %v5681 = vld [vmem:[%s5656 + $0xc0] sm:$0xff]
        %v5682 = vld [vmem:[%s5656 + $0xc8] sm:$0xff]
        %v5683 = vld [vmem:[%s5656 + $0xd0] sm:$0xff]
        %v5684 = vld [vmem:[%s5656 + $0xd8] sm:$0xff]
        %v5685 = vld [vmem:[%s5656 + $0xe0] sm:$0xff]
        %v5686 = vld [vmem:[%s5656 + $0xe8] sm:$0xff]
        %v5687 = vld [vmem:[%s5656 + $0xf0] sm:$0xff]
        %v5688 = vld [vmem:[%s5656 + $0xf8] sm:$0xff]
        %v5689 = vld [vmem:[%s5656 + $0x100] sm:$0xff]
        %v5690 = vld [vmem:[%s5656 + $0x108] sm:$0xff]
        %v5691 = vld [vmem:[%s5656 + $0x110] sm:$0xff]
        %v5692 = vld [vmem:[%s5656 + $0x118] sm:$0xff]
        %v5693 = vld [vmem:[%s5656 + $0x120] sm:$0xff]
        %v5694 = vld [vmem:[%s5656 + $0x128] sm:$0xff]
        %v5695 = vld [vmem:[%s5656 + $0x130] sm:$0xff]
        %v5696 = vld [vmem:[%s5656 + $0x138] sm:$0xff]
        %v5697 = vld [vmem:[%s5656 + $0x140] sm:$0xff]
        %v5698 = vld [vmem:[%s5656 + $0x148] sm:$0xff]
        %v5699 = vld [vmem:[%s5656 + $0x150] sm:$0xff]
        %v5700 = vld [vmem:[%s5656 + $0x158] sm:$0xff]
        %v5701 = vld [vmem:[%s5656 + $0x160] sm:$0xff]
        %v5702 = vld [vmem:[%s5656 + $0x168] sm:$0xff]
        %v5703 = vld [vmem:[%s5656 + $0x170] sm:$0xff]
        %v5704 = vld [vmem:[%s5656 + $0x178] sm:$0xff]
        %v5705 = vld [vmem:[%s5656 + $0x180] sm:$0xff]
        %v5706 = vld [vmem:[%s5656 + $0x188] sm:$0xff]
        %v5707 = vld [vmem:[%s5656 + $0x190] sm:$0xff]
        %v5708 = vld [vmem:[%s5656 + $0x198] sm:$0xff]
        %v5709 = vld [vmem:[%s5656 + $0x1a0] sm:$0xff]
        %v5710 = vld [vmem:[%s5656 + $0x1a8] sm:$0xff]
        %v5711 = vld [vmem:[%s5656 + $0x1b0] sm:$0xff]
        %v5712 = vld [vmem:[%s5656 + $0x1b8] sm:$0xff]
        %v5713 = vld [vmem:[%s5656 + $0x1c0] sm:$0xff]
        %v5714 = vld [vmem:[%s5656 + $0x1c8] sm:$0xff]
        %v5715 = vld [vmem:[%s5656 + $0x1d0] sm:$0xff]
        %v5716 = vld [vmem:[%s5656 + $0x1d8] sm:$0xff]
        %v5717 = vld [vmem:[%s5656 + $0x1e0] sm:$0xff]
        %v5718 = vld [vmem:[%s5656 + $0x1e8] sm:$0xff]
        %v5719 = vld [vmem:[%s5656 + $0x1f0] sm:$0xff]
        %v5720 = vld [vmem:[%s5656 + $0x1f8] sm:$0xff]
        %5721 = vmatprep.subr.bf16.mxu0 %v3589
        %5722 = vmatpush1.bf16.msra.mxu0 %v3588
        %5723 = vmatprep.subr.bf16.mxu0 %v3585
        %5724 = vmatpush1.bf16.msra.mxu0 %v3584
        %5725 = vmatprep.subr.bf16.mxu0 %v3581
        %5726 = vmatpush1.bf16.msra.mxu0 %v3580
        %5727 = vmatprep.subr.bf16.mxu0 %v3577
        %5728 = vmatpush1.bf16.msra.mxu0 %v3576
        %5729 = vmatprep.subr.bf16.mxu0 %v3573
        %5730 = vmatpush1.bf16.msra.mxu0 %v3572
        %5731 = vmatprep.subr.bf16.mxu0 %v3569
        %5732 = vmatpush1.bf16.msra.mxu0 %v3568
        %5733 = vmatprep.subr.bf16.mxu0 %v3565
        %5734 = vmatpush1.bf16.msra.mxu0 %v3564
        %5735 = vmatprep.subr.bf16.mxu0 %v3561
        %5736 = vmatpush1.bf16.msra.mxu0 %v3560
        %5737 = vmatprep.subr.bf16.mxu0 0
        %5738 = vmatpush2.bf16.msra.mxu0 0
        %5739 = vmatprep.subr.bf16.mxu0 0
        %5740 = vmatpush2.bf16.msra.mxu0 0
        %5741 = vmatprep.subr.bf16.mxu0 0
        %5742 = vmatpush2.bf16.msra.mxu0 0
        %5743 = vmatprep.subr.bf16.mxu0 0
        %5744 = vmatpush2.bf16.msra.mxu0 0
        %5745 = vmatprep.subr.bf16.mxu0 0
        %5746 = vmatpush2.bf16.msra.mxu0 0
        %5747 = vmatprep.subr.bf16.mxu0 0
        %5748 = vmatpush2.bf16.msra.mxu0 0
        %5749 = vmatprep.subr.bf16.mxu0 0
        %5750 = vmatpush2.bf16.msra.mxu0 0
        %5751 = vmatprep.subr.bf16.mxu0 0
        %5752 = vmatpush2.bf16.msra.mxu0 0
        %5753 = vmatprep.mubr.bf16.mxu0 0
        %5754 = vmatmul.mubr.bf16.gmra.mxu0 %v5648
        %v5755 = vpop.f32.mrf.mxu0
        %v5756 = vadd.f32 %v5657, %v5755
        %v5757 = vpop.f32.mrf.mxu0
        %v5758 = vadd.f32 %v5658, %v5757
        %v5759 = vpop.f32.mrf.mxu0
        %v5760 = vadd.f32 %v5661, %v5759
        %v5761 = vpop.f32.mrf.mxu0
        %v5762 = vadd.f32 %v5662, %v5761
        %5763 = vmatprep.mubr.bf16.mxu0 0
        %5764 = vmatmul.mubr.bf16.gmra.mxu0 %v5649
        %v5765 = vpop.f32.mrf.mxu0
        %v5766 = vadd.f32 %v5665, %v5765
        %v5767 = vpop.f32.mrf.mxu0
        %v5768 = vadd.f32 %v5666, %v5767
        %v5769 = vpop.f32.mrf.mxu0
        %v5770 = vadd.f32 %v5669, %v5769
        %v5771 = vpop.f32.mrf.mxu0
        %v5772 = vadd.f32 %v5670, %v5771
        %5773 = vmatprep.mubr.bf16.mxu0 0
        %5774 = vmatmul.mubr.bf16.gmra.mxu0 %v5650
        %v5775 = vpop.f32.mrf.mxu0
        %v5776 = vadd.f32 %v5673, %v5775
        %v5777 = vpop.f32.mrf.mxu0
        %v5778 = vadd.f32 %v5674, %v5777
        %v5779 = vpop.f32.mrf.mxu0
        %v5780 = vadd.f32 %v5677, %v5779
        %v5781 = vpop.f32.mrf.mxu0
        %v5782 = vadd.f32 %v5678, %v5781
        %5783 = vmatprep.mubr.bf16.mxu0 0
        %5784 = vmatmul.mubr.bf16.gmra.mxu0 %v5651
        %v5785 = vpop.f32.mrf.mxu0
        %v5786 = vadd.f32 %v5681, %v5785
        %v5787 = vpop.f32.mrf.mxu0
        %v5788 = vadd.f32 %v5682, %v5787
        %v5789 = vpop.f32.mrf.mxu0
        %v5790 = vadd.f32 %v5685, %v5789
        %v5791 = vpop.f32.mrf.mxu0
        %v5792 = vadd.f32 %v5686, %v5791
        %5793 = vmatprep.mubr.bf16.mxu0 0
        %5794 = vmatmul.mubr.bf16.gmra.mxu0 %v5652
        %v5795 = vpop.f32.mrf.mxu0
        %v5796 = vadd.f32 %v5689, %v5795
        %v5797 = vpop.f32.mrf.mxu0
        %v5798 = vadd.f32 %v5690, %v5797
        %v5799 = vpop.f32.mrf.mxu0
        %v5800 = vadd.f32 %v5693, %v5799
        %v5801 = vpop.f32.mrf.mxu0
        %v5802 = vadd.f32 %v5694, %v5801
        %5803 = vmatprep.mubr.bf16.mxu0 0
        %5804 = vmatmul.mubr.bf16.gmra.mxu0 %v5653
        %v5805 = vpop.f32.mrf.mxu0
        %v5806 = vadd.f32 %v5697, %v5805
        %v5807 = vpop.f32.mrf.mxu0
        %v5808 = vadd.f32 %v5698, %v5807
        %v5809 = vpop.f32.mrf.mxu0
        %v5810 = vadd.f32 %v5701, %v5809
        %v5811 = vpop.f32.mrf.mxu0
        %v5812 = vadd.f32 %v5702, %v5811
        %5813 = vmatprep.mubr.bf16.mxu0 0
        %5814 = vmatmul.mubr.bf16.gmra.mxu0 %v5654
        %v5815 = vpop.f32.mrf.mxu0
        %v5816 = vadd.f32 %v5705, %v5815
        %v5817 = vpop.f32.mrf.mxu0
        %v5818 = vadd.f32 %v5706, %v5817
        %v5819 = vpop.f32.mrf.mxu0
        %v5820 = vadd.f32 %v5709, %v5819
        %v5821 = vpop.f32.mrf.mxu0
        %v5822 = vadd.f32 %v5710, %v5821
        %5823 = vmatprep.mubr.bf16.mxu0 0
        %5824 = vmatmul.mubr.bf16.gmra.mxu0 %v5655
        %v5825 = vpop.f32.mrf.mxu0
        %v5826 = vadd.f32 %v5713, %v5825
        %v5827 = vpop.f32.mrf.mxu0
        %v5828 = vadd.f32 %v5714, %v5827
        %v5829 = vpop.f32.mrf.mxu0
        %v5830 = vadd.f32 %v5717, %v5829
        %v5831 = vpop.f32.mrf.mxu0
        %v5832 = vadd.f32 %v5718, %v5831
        %5833 = vdwg.mxu0
        %5834 = vmatprep.subr.bf16.mxu0 %v3591
        %5835 = vmatpush1.bf16.msra.mxu0 %v3590
        %5836 = vmatprep.subr.bf16.mxu0 %v3587
        %5837 = vmatpush1.bf16.msra.mxu0 %v3586
        %5838 = vmatprep.subr.bf16.mxu0 %v3583
        %5839 = vmatpush1.bf16.msra.mxu0 %v3582
        %5840 = vmatprep.subr.bf16.mxu0 %v3579
        %5841 = vmatpush1.bf16.msra.mxu0 %v3578
        %5842 = vmatprep.subr.bf16.mxu0 %v3575
        %5843 = vmatpush1.bf16.msra.mxu0 %v3574
        %5844 = vmatprep.subr.bf16.mxu0 %v3571
        %5845 = vmatpush1.bf16.msra.mxu0 %v3570
        %5846 = vmatprep.subr.bf16.mxu0 %v3567
        %5847 = vmatpush1.bf16.msra.mxu0 %v3566
        %5848 = vmatprep.subr.bf16.mxu0 %v3563
        %5849 = vmatpush1.bf16.msra.mxu0 %v3562
        %5850 = vmatprep.subr.bf16.mxu0 0
        %5851 = vmatpush2.bf16.msra.mxu0 0
        %5852 = vmatprep.subr.bf16.mxu0 0
        %5853 = vmatpush2.bf16.msra.mxu0 0
        %5854 = vmatprep.subr.bf16.mxu0 0
        %5855 = vmatpush2.bf16.msra.mxu0 0
        %5856 = vmatprep.subr.bf16.mxu0 0
        %5857 = vmatpush2.bf16.msra.mxu0 0
        %5858 = vmatprep.subr.bf16.mxu0 0
        %5859 = vmatpush2.bf16.msra.mxu0 0
        %5860 = vmatprep.subr.bf16.mxu0 0
        %5861 = vmatpush2.bf16.msra.mxu0 0
        %5862 = vmatprep.subr.bf16.mxu0 0
        %5863 = vmatpush2.bf16.msra.mxu0 0
        %5864 = vmatprep.subr.bf16.mxu0 0
        %5865 = vmatpush2.bf16.msra.mxu0 0
        %5866 = vmatprep.mubr.bf16.mxu0 0
        %5867 = vmatmul.mubr.bf16.gmra.mxu0 %v5648
        %v5868 = vpop.f32.mrf.mxu0
        %v5869 = vadd.f32 %v5659, %v5868
        %v5870 = vpop.f32.mrf.mxu0
        %v5871 = vadd.f32 %v5660, %v5870
        %v5872 = vpop.f32.mrf.mxu0
        %v5873 = vadd.f32 %v5663, %v5872
        %v5874 = vpop.f32.mrf.mxu0
        %v5875 = vadd.f32 %v5664, %v5874
        %5876 = vmatprep.mubr.bf16.mxu0 0
        %5877 = vmatmul.mubr.bf16.gmra.mxu0 %v5649
        %v5878 = vpop.f32.mrf.mxu0
        %v5879 = vadd.f32 %v5667, %v5878
        %v5880 = vpop.f32.mrf.mxu0
        %v5881 = vadd.f32 %v5668, %v5880
        %v5882 = vpop.f32.mrf.mxu0
        %v5883 = vadd.f32 %v5671, %v5882
        %v5884 = vpop.f32.mrf.mxu0
        %v5885 = vadd.f32 %v5672, %v5884
        %5886 = vmatprep.mubr.bf16.mxu0 0
        %5887 = vmatmul.mubr.bf16.gmra.mxu0 %v5650
        %v5888 = vpop.f32.mrf.mxu0
        %v5889 = vadd.f32 %v5675, %v5888
        %v5890 = vpop.f32.mrf.mxu0
        %v5891 = vadd.f32 %v5676, %v5890
        %v5892 = vpop.f32.mrf.mxu0
        %v5893 = vadd.f32 %v5679, %v5892
        %v5894 = vpop.f32.mrf.mxu0
        %v5895 = vadd.f32 %v5680, %v5894
        %5896 = vmatprep.mubr.bf16.mxu0 0
        %5897 = vmatmul.mubr.bf16.gmra.mxu0 %v5651
        %v5898 = vpop.f32.mrf.mxu0
        %v5899 = vadd.f32 %v5683, %v5898
        %v5900 = vpop.f32.mrf.mxu0
        %v5901 = vadd.f32 %v5684, %v5900
        %v5902 = vpop.f32.mrf.mxu0
        %v5903 = vadd.f32 %v5687, %v5902
        %v5904 = vpop.f32.mrf.mxu0
        %v5905 = vadd.f32 %v5688, %v5904
        %5906 = vmatprep.mubr.bf16.mxu0 0
        %5907 = vmatmul.mubr.bf16.gmra.mxu0 %v5652
        %v5908 = vpop.f32.mrf.mxu0
        %v5909 = vadd.f32 %v5691, %v5908
        %v5910 = vpop.f32.mrf.mxu0
        %v5911 = vadd.f32 %v5692, %v5910
        %v5912 = vpop.f32.mrf.mxu0
        %v5913 = vadd.f32 %v5695, %v5912
        %v5914 = vpop.f32.mrf.mxu0
        %v5915 = vadd.f32 %v5696, %v5914
        %5916 = vmatprep.mubr.bf16.mxu0 0
        %5917 = vmatmul.mubr.bf16.gmra.mxu0 %v5653
        %v5918 = vpop.f32.mrf.mxu0
        %v5919 = vadd.f32 %v5699, %v5918
        %v5920 = vpop.f32.mrf.mxu0
        %v5921 = vadd.f32 %v5700, %v5920
        %v5922 = vpop.f32.mrf.mxu0
        %v5923 = vadd.f32 %v5703, %v5922
        %v5924 = vpop.f32.mrf.mxu0
        %v5925 = vadd.f32 %v5704, %v5924
        %5926 = vmatprep.mubr.bf16.mxu0 0
        %5927 = vmatmul.mubr.bf16.gmra.mxu0 %v5654
        %v5928 = vpop.f32.mrf.mxu0
        %v5929 = vadd.f32 %v5707, %v5928
        %v5930 = vpop.f32.mrf.mxu0
        %v5931 = vadd.f32 %v5708, %v5930
        %v5932 = vpop.f32.mrf.mxu0
        %v5933 = vadd.f32 %v5711, %v5932
        %v5934 = vpop.f32.mrf.mxu0
        %v5935 = vadd.f32 %v5712, %v5934
        %5936 = vmatprep.mubr.bf16.mxu0 0
        %5937 = vmatmul.mubr.bf16.gmra.mxu0 %v5655
        %v5938 = vpop.f32.mrf.mxu0
        %v5939 = vadd.f32 %v5715, %v5938
        %v5940 = vpop.f32.mrf.mxu0
        %v5941 = vadd.f32 %v5716, %v5940
        %v5942 = vpop.f32.mrf.mxu0
        %v5943 = vadd.f32 %v5719, %v5942
        %v5944 = vpop.f32.mrf.mxu0
        %v5945 = vadd.f32 %v5720, %v5944
        %5946 = vdwg.mxu0
        %v5947 = vxor.u32 %v5756, 2147483648
        %v5948 = vxor.u32 %v5760, 2147483648
        %v5949 = vxor.u32 %v5766, 2147483648
        %v5950 = vxor.u32 %v5770, 2147483648
        %v5951 = vxor.u32 %v5776, 2147483648
        %v5952 = vxor.u32 %v5780, 2147483648
        %v5953 = vxor.u32 %v5786, 2147483648
        %v5954 = vxor.u32 %v5790, 2147483648
        %v5955 = vxor.u32 %v5796, 2147483648
        %v5956 = vxor.u32 %v5800, 2147483648
        %v5957 = vxor.u32 %v5806, 2147483648
        %v5958 = vxor.u32 %v5810, 2147483648
        %v5959 = vxor.u32 %v5816, 2147483648
        %v5960 = vxor.u32 %v5820, 2147483648
        %v5961 = vxor.u32 %v5826, 2147483648
        %v5962 = vxor.u32 %v5830, 2147483648
        %v5963 = vmul.f32 %v5947, 1.442695
        %v5964 = vpow.pop %v5963
        %v5965 = vmul.f32 %v5948, 1.442695
        %v5966 = vpow.pop %v5965
        %v5967 = vmul.f32 %v5949, 1.442695
        %v5968 = vpow.pop %v5967
        %v5969 = vmul.f32 %v5950, 1.442695
        %v5970 = vpow.pop %v5969
        %v5971 = vmul.f32 %v5951, 1.442695
        %v5972 = vpow.pop %v5971
        %v5973 = vmul.f32 %v5952, 1.442695
        %v5974 = vpow.pop %v5973
        %v5975 = vmul.f32 %v5953, 1.442695
        %v5976 = vpow.pop %v5975
        %v5977 = vmul.f32 %v5954, 1.442695
        %v5978 = vpow.pop %v5977
        %v5979 = vmul.f32 %v5955, 1.442695
        %v5980 = vpow.pop %v5979
        %v5981 = vmul.f32 %v5956, 1.442695
        %v5982 = vpow.pop %v5981
        %v5983 = vmul.f32 %v5957, 1.442695
        %v5984 = vpow.pop %v5983
        %v5985 = vmul.f32 %v5958, 1.442695
        %v5986 = vpow.pop %v5985
        %v5987 = vmul.f32 %v5959, 1.442695
        %v5988 = vpow.pop %v5987
        %v5989 = vmul.f32 %v5960, 1.442695
        %v5990 = vpow.pop %v5989
        %v5991 = vmul.f32 %v5961, 1.442695
        %v5992 = vpow.pop %v5991
        %v5993 = vmul.f32 %v5962, 1.442695
        %v5994 = vpow.pop %v5993
        %v5995 = vadd.f32 %v5964, 1.0
        %v5996 = vadd.f32 %v5966, 1.0
        %v5997 = vadd.f32 %v5968, 1.0
        %v5998 = vadd.f32 %v5970, 1.0
        %v5999 = vadd.f32 %v5972, 1.0
        %v6000 = vadd.f32 %v5974, 1.0
        %v6001 = vadd.f32 %v5976, 1.0
        %v6002 = vadd.f32 %v5978, 1.0
        %v6003 = vadd.f32 %v5980, 1.0
        %v6004 = vadd.f32 %v5982, 1.0
        %v6005 = vadd.f32 %v5984, 1.0
        %v6006 = vadd.f32 %v5986, 1.0
        %v6007 = vadd.f32 %v5988, 1.0
        %v6008 = vadd.f32 %v5990, 1.0
        %v6009 = vadd.f32 %v5992, 1.0
        %v6010 = vadd.f32 %v5994, 1.0
        %v6011 = vrcp.pop %v5995
        %v6012 = vmul.f32 1.0, %v6011
        %v6013 = vrcp.pop %v5996
        %v6014 = vmul.f32 1.0, %v6013
        %v6015 = vrcp.pop %v5997
        %v6016 = vmul.f32 1.0, %v6015
        %v6017 = vrcp.pop %v5998
        %v6018 = vmul.f32 1.0, %v6017
        %v6019 = vrcp.pop %v5999
        %v6020 = vmul.f32 1.0, %v6019
        %v6021 = vrcp.pop %v6000
        %v6022 = vmul.f32 1.0, %v6021
        %v6023 = vrcp.pop %v6001
        %v6024 = vmul.f32 1.0, %v6023
        %v6025 = vrcp.pop %v6002
        %v6026 = vmul.f32 1.0, %v6025
        %v6027 = vrcp.pop %v6003
        %v6028 = vmul.f32 1.0, %v6027
        %v6029 = vrcp.pop %v6004
        %v6030 = vmul.f32 1.0, %v6029
        %v6031 = vrcp.pop %v6005
        %v6032 = vmul.f32 1.0, %v6031
        %v6033 = vrcp.pop %v6006
        %v6034 = vmul.f32 1.0, %v6033
        %v6035 = vrcp.pop %v6007
        %v6036 = vmul.f32 1.0, %v6035
        %v6037 = vrcp.pop %v6008
        %v6038 = vmul.f32 1.0, %v6037
        %v6039 = vrcp.pop %v6009
        %v6040 = vmul.f32 1.0, %v6039
        %v6041 = vrcp.pop %v6010
        %v6042 = vmul.f32 1.0, %v6041
        %v6043 = vxor.u32 %v5758, 2147483648
        %v6044 = vxor.u32 %v5762, 2147483648
        %v6045 = vxor.u32 %v5768, 2147483648
        %v6046 = vxor.u32 %v5772, 2147483648
        %v6047 = vxor.u32 %v5778, 2147483648
        %v6048 = vxor.u32 %v5782, 2147483648
        %v6049 = vxor.u32 %v5788, 2147483648
        %v6050 = vxor.u32 %v5792, 2147483648
        %v6051 = vxor.u32 %v5798, 2147483648
        %v6052 = vxor.u32 %v5802, 2147483648
        %v6053 = vxor.u32 %v5808, 2147483648
        %v6054 = vxor.u32 %v5812, 2147483648
        %v6055 = vxor.u32 %v5818, 2147483648
        %v6056 = vxor.u32 %v5822, 2147483648
        %v6057 = vxor.u32 %v5828, 2147483648
        %v6058 = vxor.u32 %v5832, 2147483648
        %v6059 = vmul.f32 %v6043, 1.442695
        %v6060 = vpow.pop %v6059
        %v6061 = vmul.f32 %v6044, 1.442695
        %v6062 = vpow.pop %v6061
        %v6063 = vmul.f32 %v6045, 1.442695
        %v6064 = vpow.pop %v6063
        %v6065 = vmul.f32 %v6046, 1.442695
        %v6066 = vpow.pop %v6065
        %v6067 = vmul.f32 %v6047, 1.442695
        %v6068 = vpow.pop %v6067
        %v6069 = vmul.f32 %v6048, 1.442695
        %v6070 = vpow.pop %v6069
        %v6071 = vmul.f32 %v6049, 1.442695
        %v6072 = vpow.pop %v6071
        %v6073 = vmul.f32 %v6050, 1.442695
        %v6074 = vpow.pop %v6073
        %v6075 = vmul.f32 %v6051, 1.442695
        %v6076 = vpow.pop %v6075
        %v6077 = vmul.f32 %v6052, 1.442695
        %v6078 = vpow.pop %v6077
        %v6079 = vmul.f32 %v6053, 1.442695
        %v6080 = vpow.pop %v6079
        %v6081 = vmul.f32 %v6054, 1.442695
        %v6082 = vpow.pop %v6081
        %v6083 = vmul.f32 %v6055, 1.442695
        %v6084 = vpow.pop %v6083
        %v6085 = vmul.f32 %v6056, 1.442695
        %v6086 = vpow.pop %v6085
        %v6087 = vmul.f32 %v6057, 1.442695
        %v6088 = vpow.pop %v6087
        %v6089 = vmul.f32 %v6058, 1.442695
        %v6090 = vpow.pop %v6089
        %v6091 = vadd.f32 %v6060, 1.0
        %v6092 = vadd.f32 %v6062, 1.0
        %v6093 = vadd.f32 %v6064, 1.0
        %v6094 = vadd.f32 %v6066, 1.0
        %v6095 = vadd.f32 %v6068, 1.0
        %v6096 = vadd.f32 %v6070, 1.0
        %v6097 = vadd.f32 %v6072, 1.0
        %v6098 = vadd.f32 %v6074, 1.0
        %v6099 = vadd.f32 %v6076, 1.0
        %v6100 = vadd.f32 %v6078, 1.0
        %v6101 = vadd.f32 %v6080, 1.0
        %v6102 = vadd.f32 %v6082, 1.0
        %v6103 = vadd.f32 %v6084, 1.0
        %v6104 = vadd.f32 %v6086, 1.0
        %v6105 = vadd.f32 %v6088, 1.0
        %v6106 = vadd.f32 %v6090, 1.0
        %v6107 = vrcp.pop %v6091
        %v6108 = vmul.f32 1.0, %v6107
        %v6109 = vrcp.pop %v6092
        %v6110 = vmul.f32 1.0, %v6109
        %v6111 = vrcp.pop %v6093
        %v6112 = vmul.f32 1.0, %v6111
        %v6113 = vrcp.pop %v6094
        %v6114 = vmul.f32 1.0, %v6113
        %v6115 = vrcp.pop %v6095
        %v6116 = vmul.f32 1.0, %v6115
        %v6117 = vrcp.pop %v6096
        %v6118 = vmul.f32 1.0, %v6117
        %v6119 = vrcp.pop %v6097
        %v6120 = vmul.f32 1.0, %v6119
        %v6121 = vrcp.pop %v6098
        %v6122 = vmul.f32 1.0, %v6121
        %v6123 = vrcp.pop %v6099
        %v6124 = vmul.f32 1.0, %v6123
        %v6125 = vrcp.pop %v6100
        %v6126 = vmul.f32 1.0, %v6125
        %v6127 = vrcp.pop %v6101
        %v6128 = vmul.f32 1.0, %v6127
        %v6129 = vrcp.pop %v6102
        %v6130 = vmul.f32 1.0, %v6129
        %v6131 = vrcp.pop %v6103
        %v6132 = vmul.f32 1.0, %v6131
        %v6133 = vrcp.pop %v6104
        %v6134 = vmul.f32 1.0, %v6133
        %v6135 = vrcp.pop %v6105
        %v6136 = vmul.f32 1.0, %v6135
        %v6137 = vrcp.pop %v6106
        %v6138 = vmul.f32 1.0, %v6137
        %v6139 = vtanh.pop %v5869
        %v6140 = vtanh.pop %v5873
        %v6141 = vtanh.pop %v5879
        %v6142 = vtanh.pop %v5883
        %v6143 = vtanh.pop %v5889
        %v6144 = vtanh.pop %v5893
        %v6145 = vtanh.pop %v5899
        %v6146 = vtanh.pop %v5903
        %v6147 = vtanh.pop %v5909
        %v6148 = vtanh.pop %v5913
        %v6149 = vtanh.pop %v5919
        %v6150 = vtanh.pop %v5923
        %v6151 = vtanh.pop %v5929
        %v6152 = vtanh.pop %v5933
        %v6153 = vtanh.pop %v5939
        %v6154 = vtanh.pop %v5943
        %v6155 = vxor.u32 %v5871, 2147483648
        %v6156 = vxor.u32 %v5875, 2147483648
        %v6157 = vxor.u32 %v5881, 2147483648
        %v6158 = vxor.u32 %v5885, 2147483648
        %v6159 = vxor.u32 %v5891, 2147483648
        %v6160 = vxor.u32 %v5895, 2147483648
        %v6161 = vxor.u32 %v5901, 2147483648
        %v6162 = vxor.u32 %v5905, 2147483648
        %v6163 = vxor.u32 %v5911, 2147483648
        %v6164 = vxor.u32 %v5915, 2147483648
        %v6165 = vxor.u32 %v5921, 2147483648
        %v6166 = vxor.u32 %v5925, 2147483648
        %v6167 = vxor.u32 %v5931, 2147483648
        %v6168 = vxor.u32 %v5935, 2147483648
        %v6169 = vxor.u32 %v5941, 2147483648
        %v6170 = vxor.u32 %v5945, 2147483648
        %v6171 = vmul.f32 %v6155, 1.442695
        %v6172 = vpow.pop %v6171
        %v6173 = vmul.f32 %v6156, 1.442695
        %v6174 = vpow.pop %v6173
        %v6175 = vmul.f32 %v6157, 1.442695
        %v6176 = vpow.pop %v6175
        %v6177 = vmul.f32 %v6158, 1.442695
        %v6178 = vpow.pop %v6177
        %v6179 = vmul.f32 %v6159, 1.442695
        %v6180 = vpow.pop %v6179
        %v6181 = vmul.f32 %v6160, 1.442695
        %v6182 = vpow.pop %v6181
        %v6183 = vmul.f32 %v6161, 1.442695
        %v6184 = vpow.pop %v6183
        %v6185 = vmul.f32 %v6162, 1.442695
        %v6186 = vpow.pop %v6185
        %v6187 = vmul.f32 %v6163, 1.442695
        %v6188 = vpow.pop %v6187
        %v6189 = vmul.f32 %v6164, 1.442695
        %v6190 = vpow.pop %v6189
        %v6191 = vmul.f32 %v6165, 1.442695
        %v6192 = vpow.pop %v6191
        %v6193 = vmul.f32 %v6166, 1.442695
        %v6194 = vpow.pop %v6193
        %v6195 = vmul.f32 %v6167, 1.442695
        %v6196 = vpow.pop %v6195
        %v6197 = vmul.f32 %v6168, 1.442695
        %v6198 = vpow.pop %v6197
        %v6199 = vmul.f32 %v6169, 1.442695
        %v6200 = vpow.pop %v6199
        %v6201 = vmul.f32 %v6170, 1.442695
        %v6202 = vpow.pop %v6201
        %v6203 = vadd.f32 %v6172, 1.0
        %v6204 = vadd.f32 %v6174, 1.0
        %v6205 = vadd.f32 %v6176, 1.0
        %v6206 = vadd.f32 %v6178, 1.0
        %v6207 = vadd.f32 %v6180, 1.0
        %v6208 = vadd.f32 %v6182, 1.0
        %v6209 = vadd.f32 %v6184, 1.0
        %v6210 = vadd.f32 %v6186, 1.0
        %v6211 = vadd.f32 %v6188, 1.0
        %v6212 = vadd.f32 %v6190, 1.0
        %v6213 = vadd.f32 %v6192, 1.0
        %v6214 = vadd.f32 %v6194, 1.0
        %v6215 = vadd.f32 %v6196, 1.0
        %v6216 = vadd.f32 %v6198, 1.0
        %v6217 = vadd.f32 %v6200, 1.0
        %v6218 = vadd.f32 %v6202, 1.0
        %v6219 = vrcp.pop %v6203
        %v6220 = vmul.f32 1.0, %v6219
        %v6221 = vrcp.pop %v6204
        %v6222 = vmul.f32 1.0, %v6221
        %v6223 = vrcp.pop %v6205
        %v6224 = vmul.f32 1.0, %v6223
        %v6225 = vrcp.pop %v6206
        %v6226 = vmul.f32 1.0, %v6225
        %v6227 = vrcp.pop %v6207
        %v6228 = vmul.f32 1.0, %v6227
        %v6229 = vrcp.pop %v6208
        %v6230 = vmul.f32 1.0, %v6229
        %v6231 = vrcp.pop %v6209
        %v6232 = vmul.f32 1.0, %v6231
        %v6233 = vrcp.pop %v6210
        %v6234 = vmul.f32 1.0, %v6233
        %v6235 = vrcp.pop %v6211
        %v6236 = vmul.f32 1.0, %v6235
        %v6237 = vrcp.pop %v6212
        %v6238 = vmul.f32 1.0, %v6237
        %v6239 = vrcp.pop %v6213
        %v6240 = vmul.f32 1.0, %v6239
        %v6241 = vrcp.pop %v6214
        %v6242 = vmul.f32 1.0, %v6241
        %v6243 = vrcp.pop %v6215
        %v6244 = vmul.f32 1.0, %v6243
        %v6245 = vrcp.pop %v6216
        %v6246 = vmul.f32 1.0, %v6245
        %v6247 = vrcp.pop %v6217
        %v6248 = vmul.f32 1.0, %v6247
        %v6249 = vrcp.pop %v6218
        %v6250 = vmul.f32 1.0, %v6249
        %v6251 = vmul.f32 %v6108, %v5584
        %v6252 = vmul.f32 %v6110, %v5585
        %v6253 = vmul.f32 %v6112, %v5586
        %v6254 = vmul.f32 %v6114, %v5587
        %v6255 = vmul.f32 %v6116, %v5588
        %v6256 = vmul.f32 %v6118, %v5589
        %v6257 = vmul.f32 %v6120, %v5590
        %v6258 = vmul.f32 %v6122, %v5591
        %v6259 = vmul.f32 %v6124, %v5592
        %v6260 = vmul.f32 %v6126, %v5593
        %v6261 = vmul.f32 %v6128, %v5594
        %v6262 = vmul.f32 %v6130, %v5595
        %v6263 = vmul.f32 %v6132, %v5596
        %v6264 = vmul.f32 %v6134, %v5597
        %v6265 = vmul.f32 %v6136, %v5598
        %v6266 = vmul.f32 %v6138, %v5599
        %v6267 = vmul.f32 %v6012, %v6139
        %v6268 = vmul.f32 %v6014, %v6140
        %v6269 = vmul.f32 %v6016, %v6141
        %v6270 = vmul.f32 %v6018, %v6142
        %v6271 = vmul.f32 %v6020, %v6143
        %v6272 = vmul.f32 %v6022, %v6144
        %v6273 = vmul.f32 %v6024, %v6145
        %v6274 = vmul.f32 %v6026, %v6146
        %v6275 = vmul.f32 %v6028, %v6147
        %v6276 = vmul.f32 %v6030, %v6148
        %v6277 = vmul.f32 %v6032, %v6149
        %v6278 = vmul.f32 %v6034, %v6150
        %v6279 = vmul.f32 %v6036, %v6151
        %v6280 = vmul.f32 %v6038, %v6152
        %v6281 = vmul.f32 %v6040, %v6153
        %v6282 = vmul.f32 %v6042, %v6154
        %v6283 = vadd.f32 %v6251, %v6267
        %v6284 = vadd.f32 %v6252, %v6268
        %v6285 = vadd.f32 %v6253, %v6269
        %v6286 = vadd.f32 %v6254, %v6270
        %v6287 = vadd.f32 %v6255, %v6271
        %v6288 = vadd.f32 %v6256, %v6272
        %v6289 = vadd.f32 %v6257, %v6273
        %v6290 = vadd.f32 %v6258, %v6274
        %v6291 = vadd.f32 %v6259, %v6275
        %v6292 = vadd.f32 %v6260, %v6276
        %v6293 = vadd.f32 %v6261, %v6277
        %v6294 = vadd.f32 %v6262, %v6278
        %v6295 = vadd.f32 %v6263, %v6279
        %v6296 = vadd.f32 %v6264, %v6280
        %v6297 = vadd.f32 %v6265, %v6281
        %v6298 = vadd.f32 %v6266, %v6282
        %v6299 = vtanh.pop %v6283
        %v6300 = vtanh.pop %v6284
        %v6301 = vtanh.pop %v6285
        %v6302 = vtanh.pop %v6286
        %v6303 = vtanh.pop %v6287
        %v6304 = vtanh.pop %v6288
        %v6305 = vtanh.pop %v6289
        %v6306 = vtanh.pop %v6290
        %v6307 = vtanh.pop %v6291
        %v6308 = vtanh.pop %v6292
        %v6309 = vtanh.pop %v6293
        %v6310 = vtanh.pop %v6294
        %v6311 = vtanh.pop %v6295
        %v6312 = vtanh.pop %v6296
        %v6313 = vtanh.pop %v6297
        %v6314 = vtanh.pop %v6298
        %v6315 = vmul.f32 %v6220, %v6299
        %v6316 = vmul.f32 %v6222, %v6300
        %v6317 = vmul.f32 %v6224, %v6301
        %v6318 = vmul.f32 %v6226, %v6302
        %v6319 = vmul.f32 %v6228, %v6303
        %v6320 = vmul.f32 %v6230, %v6304
        %v6321 = vmul.f32 %v6232, %v6305
        %v6322 = vmul.f32 %v6234, %v6306
        %v6323 = vmul.f32 %v6236, %v6307
        %v6324 = vmul.f32 %v6238, %v6308
        %v6325 = vmul.f32 %v6240, %v6309
        %v6326 = vmul.f32 %v6242, %v6310
        %v6327 = vmul.f32 %v6244, %v6311
        %v6328 = vmul.f32 %v6246, %v6312
        %v6329 = vmul.f32 %v6248, %v6313
        %v6330 = vmul.f32 %v6250, %v6314
        %v6331 = vadd.f32 %v5632, %v6315
        %v6332 = vadd.f32 %v5633, %v6316
        %v6333 = vadd.f32 %v5634, %v6317
        %v6334 = vadd.f32 %v5635, %v6318
        %v6335 = vadd.f32 %v5636, %v6319
        %v6336 = vadd.f32 %v5637, %v6320
        %v6337 = vadd.f32 %v5638, %v6321
        %v6338 = vadd.f32 %v5639, %v6322
        %v6339 = vadd.f32 %v5640, %v6323
        %v6340 = vadd.f32 %v5641, %v6324
        %v6341 = vadd.f32 %v5642, %v6325
        %v6342 = vadd.f32 %v5643, %v6326
        %v6343 = vadd.f32 %v5644, %v6327
        %v6344 = vadd.f32 %v5645, %v6328
        %v6345 = vadd.f32 %v5646, %v6329
        %v6346 = vadd.f32 %v5647, %v6330
        %v6347 = vpack.c.bf16 %v6316, %v6315
        %v6348 = vpack.c.bf16 %v6318, %v6317
        %v6349 = vpack.c.bf16 %v6320, %v6319
        %v6350 = vpack.c.bf16 %v6322, %v6321
        %v6351 = vpack.c.bf16 %v6324, %v6323
        %v6352 = vpack.c.bf16 %v6326, %v6325
        %v6353 = vpack.c.bf16 %v6328, %v6327
        %v6354 = vpack.c.bf16 %v6330, %v6329
        %s6355 = scalar_lea.vmem [#allocation2], 2048
        %v6356 = vld [vmem:[%s6355] sm:$0xff]
        %v6357 = vld [vmem:[%s6355 + $0x8] sm:$0xff]
        %v6358 = vld [vmem:[%s6355 + $0x10] sm:$0xff]
        %v6359 = vld [vmem:[%s6355 + $0x18] sm:$0xff]
        %v6360 = vld [vmem:[%s6355 + $0x20] sm:$0xff]
        %v6361 = vld [vmem:[%s6355 + $0x28] sm:$0xff]
        %v6362 = vld [vmem:[%s6355 + $0x30] sm:$0xff]
        %v6363 = vld [vmem:[%s6355 + $0x38] sm:$0xff]
        %v6364 = vld [vmem:[%s6355 + $0x40] sm:$0xff]
        %v6365 = vld [vmem:[%s6355 + $0x48] sm:$0xff]
        %v6366 = vld [vmem:[%s6355 + $0x50] sm:$0xff]
        %v6367 = vld [vmem:[%s6355 + $0x58] sm:$0xff]
        %v6368 = vld [vmem:[%s6355 + $0x60] sm:$0xff]
        %v6369 = vld [vmem:[%s6355 + $0x68] sm:$0xff]
        %v6370 = vld [vmem:[%s6355 + $0x70] sm:$0xff]
        %v6371 = vld [vmem:[%s6355 + $0x78] sm:$0xff]
        %v6372 = vld [vmem:[%s6355 + $0x80] sm:$0xff]
        %v6373 = vld [vmem:[%s6355 + $0x88] sm:$0xff]
        %v6374 = vld [vmem:[%s6355 + $0x90] sm:$0xff]
        %v6375 = vld [vmem:[%s6355 + $0x98] sm:$0xff]
        %v6376 = vld [vmem:[%s6355 + $0xa0] sm:$0xff]
        %v6377 = vld [vmem:[%s6355 + $0xa8] sm:$0xff]
        %v6378 = vld [vmem:[%s6355 + $0xb0] sm:$0xff]
        %v6379 = vld [vmem:[%s6355 + $0xb8] sm:$0xff]
        %v6380 = vld [vmem:[%s6355 + $0xc0] sm:$0xff]
        %v6381 = vld [vmem:[%s6355 + $0xc8] sm:$0xff]
        %v6382 = vld [vmem:[%s6355 + $0xd0] sm:$0xff]
        %v6383 = vld [vmem:[%s6355 + $0xd8] sm:$0xff]
        %v6384 = vld [vmem:[%s6355 + $0xe0] sm:$0xff]
        %v6385 = vld [vmem:[%s6355 + $0xe8] sm:$0xff]
        %v6386 = vld [vmem:[%s6355 + $0xf0] sm:$0xff]
        %v6387 = vld [vmem:[%s6355 + $0xf8] sm:$0xff]
        %v6388 = vld [vmem:[%s6355 + $0x100] sm:$0xff]
        %v6389 = vld [vmem:[%s6355 + $0x108] sm:$0xff]
        %v6390 = vld [vmem:[%s6355 + $0x110] sm:$0xff]
        %v6391 = vld [vmem:[%s6355 + $0x118] sm:$0xff]
        %v6392 = vld [vmem:[%s6355 + $0x120] sm:$0xff]
        %v6393 = vld [vmem:[%s6355 + $0x128] sm:$0xff]
        %v6394 = vld [vmem:[%s6355 + $0x130] sm:$0xff]
        %v6395 = vld [vmem:[%s6355 + $0x138] sm:$0xff]
        %v6396 = vld [vmem:[%s6355 + $0x140] sm:$0xff]
        %v6397 = vld [vmem:[%s6355 + $0x148] sm:$0xff]
        %v6398 = vld [vmem:[%s6355 + $0x150] sm:$0xff]
        %v6399 = vld [vmem:[%s6355 + $0x158] sm:$0xff]
        %v6400 = vld [vmem:[%s6355 + $0x160] sm:$0xff]
        %v6401 = vld [vmem:[%s6355 + $0x168] sm:$0xff]
        %v6402 = vld [vmem:[%s6355 + $0x170] sm:$0xff]
        %v6403 = vld [vmem:[%s6355 + $0x178] sm:$0xff]
        %v6404 = vld [vmem:[%s6355 + $0x180] sm:$0xff]
        %v6405 = vld [vmem:[%s6355 + $0x188] sm:$0xff]
        %v6406 = vld [vmem:[%s6355 + $0x190] sm:$0xff]
        %v6407 = vld [vmem:[%s6355 + $0x198] sm:$0xff]
        %v6408 = vld [vmem:[%s6355 + $0x1a0] sm:$0xff]
        %v6409 = vld [vmem:[%s6355 + $0x1a8] sm:$0xff]
        %v6410 = vld [vmem:[%s6355 + $0x1b0] sm:$0xff]
        %v6411 = vld [vmem:[%s6355 + $0x1b8] sm:$0xff]
        %v6412 = vld [vmem:[%s6355 + $0x1c0] sm:$0xff]
        %v6413 = vld [vmem:[%s6355 + $0x1c8] sm:$0xff]
        %v6414 = vld [vmem:[%s6355 + $0x1d0] sm:$0xff]
        %v6415 = vld [vmem:[%s6355 + $0x1d8] sm:$0xff]
        %v6416 = vld [vmem:[%s6355 + $0x1e0] sm:$0xff]
        %v6417 = vld [vmem:[%s6355 + $0x1e8] sm:$0xff]
        %v6418 = vld [vmem:[%s6355 + $0x1f0] sm:$0xff]
        %v6419 = vld [vmem:[%s6355 + $0x1f8] sm:$0xff]
        %6420 = vmatprep.subr.bf16.mxu0 %v3589
        %6421 = vmatpush1.bf16.msra.mxu0 %v3588
        %6422 = vmatprep.subr.bf16.mxu0 %v3585
        %6423 = vmatpush1.bf16.msra.mxu0 %v3584
        %6424 = vmatprep.subr.bf16.mxu0 %v3581
        %6425 = vmatpush1.bf16.msra.mxu0 %v3580
        %6426 = vmatprep.subr.bf16.mxu0 %v3577
        %6427 = vmatpush1.bf16.msra.mxu0 %v3576
        %6428 = vmatprep.subr.bf16.mxu0 %v3573
        %6429 = vmatpush1.bf16.msra.mxu0 %v3572
        %6430 = vmatprep.subr.bf16.mxu0 %v3569
        %6431 = vmatpush1.bf16.msra.mxu0 %v3568
        %6432 = vmatprep.subr.bf16.mxu0 %v3565
        %6433 = vmatpush1.bf16.msra.mxu0 %v3564
        %6434 = vmatprep.subr.bf16.mxu0 %v3561
        %6435 = vmatpush1.bf16.msra.mxu0 %v3560
        %6436 = vmatprep.subr.bf16.mxu0 0
        %6437 = vmatpush2.bf16.msra.mxu0 0
        %6438 = vmatprep.subr.bf16.mxu0 0
        %6439 = vmatpush2.bf16.msra.mxu0 0
        %6440 = vmatprep.subr.bf16.mxu0 0
        %6441 = vmatpush2.bf16.msra.mxu0 0
        %6442 = vmatprep.subr.bf16.mxu0 0
        %6443 = vmatpush2.bf16.msra.mxu0 0
        %6444 = vmatprep.subr.bf16.mxu0 0
        %6445 = vmatpush2.bf16.msra.mxu0 0
        %6446 = vmatprep.subr.bf16.mxu0 0
        %6447 = vmatpush2.bf16.msra.mxu0 0
        %6448 = vmatprep.subr.bf16.mxu0 0
        %6449 = vmatpush2.bf16.msra.mxu0 0
        %6450 = vmatprep.subr.bf16.mxu0 0
        %6451 = vmatpush2.bf16.msra.mxu0 0
        %6452 = vmatprep.mubr.bf16.mxu0 0
        %6453 = vmatmul.mubr.bf16.gmra.mxu0 %v6347
        %v6454 = vpop.f32.mrf.mxu0
        %v6455 = vadd.f32 %v6356, %v6454
        %v6456 = vpop.f32.mrf.mxu0
        %v6457 = vadd.f32 %v6357, %v6456
        %v6458 = vpop.f32.mrf.mxu0
        %v6459 = vadd.f32 %v6360, %v6458
        %v6460 = vpop.f32.mrf.mxu0
        %v6461 = vadd.f32 %v6361, %v6460
        %6462 = vmatprep.mubr.bf16.mxu0 0
        %6463 = vmatmul.mubr.bf16.gmra.mxu0 %v6348
        %v6464 = vpop.f32.mrf.mxu0
        %v6465 = vadd.f32 %v6364, %v6464
        %v6466 = vpop.f32.mrf.mxu0
        %v6467 = vadd.f32 %v6365, %v6466
        %v6468 = vpop.f32.mrf.mxu0
        %v6469 = vadd.f32 %v6368, %v6468
        %v6470 = vpop.f32.mrf.mxu0
        %v6471 = vadd.f32 %v6369, %v6470
        %6472 = vmatprep.mubr.bf16.mxu0 0
        %6473 = vmatmul.mubr.bf16.gmra.mxu0 %v6349
        %v6474 = vpop.f32.mrf.mxu0
        %v6475 = vadd.f32 %v6372, %v6474
        %v6476 = vpop.f32.mrf.mxu0
        %v6477 = vadd.f32 %v6373, %v6476
        %v6478 = vpop.f32.mrf.mxu0
        %v6479 = vadd.f32 %v6376, %v6478
        %v6480 = vpop.f32.mrf.mxu0
        %v6481 = vadd.f32 %v6377, %v6480
        %6482 = vmatprep.mubr.bf16.mxu0 0
        %6483 = vmatmul.mubr.bf16.gmra.mxu0 %v6350
        %v6484 = vpop.f32.mrf.mxu0
        %v6485 = vadd.f32 %v6380, %v6484
        %v6486 = vpop.f32.mrf.mxu0
        %v6487 = vadd.f32 %v6381, %v6486
        %v6488 = vpop.f32.mrf.mxu0
        %v6489 = vadd.f32 %v6384, %v6488
        %v6490 = vpop.f32.mrf.mxu0
        %v6491 = vadd.f32 %v6385, %v6490
        %6492 = vmatprep.mubr.bf16.mxu0 0
        %6493 = vmatmul.mubr.bf16.gmra.mxu0 %v6351
        %v6494 = vpop.f32.mrf.mxu0
        %v6495 = vadd.f32 %v6388, %v6494
        %v6496 = vpop.f32.mrf.mxu0
        %v6497 = vadd.f32 %v6389, %v6496
        %v6498 = vpop.f32.mrf.mxu0
        %v6499 = vadd.f32 %v6392, %v6498
        %v6500 = vpop.f32.mrf.mxu0
        %v6501 = vadd.f32 %v6393, %v6500
        %6502 = vmatprep.mubr.bf16.mxu0 0
        %6503 = vmatmul.mubr.bf16.gmra.mxu0 %v6352
        %v6504 = vpop.f32.mrf.mxu0
        %v6505 = vadd.f32 %v6396, %v6504
        %v6506 = vpop.f32.mrf.mxu0
        %v6507 = vadd.f32 %v6397, %v6506
        %v6508 = vpop.f32.mrf.mxu0
        %v6509 = vadd.f32 %v6400, %v6508
        %v6510 = vpop.f32.mrf.mxu0
        %v6511 = vadd.f32 %v6401, %v6510
        %6512 = vmatprep.mubr.bf16.mxu0 0
        %6513 = vmatmul.mubr.bf16.gmra.mxu0 %v6353
        %v6514 = vpop.f32.mrf.mxu0
        %v6515 = vadd.f32 %v6404, %v6514
        %v6516 = vpop.f32.mrf.mxu0
        %v6517 = vadd.f32 %v6405, %v6516
        %v6518 = vpop.f32.mrf.mxu0
        %v6519 = vadd.f32 %v6408, %v6518
        %v6520 = vpop.f32.mrf.mxu0
        %v6521 = vadd.f32 %v6409, %v6520
        %6522 = vmatprep.mubr.bf16.mxu0 0
        %6523 = vmatmul.mubr.bf16.gmra.mxu0 %v6354
        %v6524 = vpop.f32.mrf.mxu0
        %v6525 = vadd.f32 %v6412, %v6524
        %v6526 = vpop.f32.mrf.mxu0
        %v6527 = vadd.f32 %v6413, %v6526
        %v6528 = vpop.f32.mrf.mxu0
        %v6529 = vadd.f32 %v6416, %v6528
        %v6530 = vpop.f32.mrf.mxu0
        %v6531 = vadd.f32 %v6417, %v6530
        %6532 = vdwg.mxu0
        %6533 = vmatprep.subr.bf16.mxu0 %v3591
        %6534 = vmatpush1.bf16.msra.mxu0 %v3590
        %6535 = vmatprep.subr.bf16.mxu0 %v3587
        %6536 = vmatpush1.bf16.msra.mxu0 %v3586
        %6537 = vmatprep.subr.bf16.mxu0 %v3583
        %6538 = vmatpush1.bf16.msra.mxu0 %v3582
        %6539 = vmatprep.subr.bf16.mxu0 %v3579
        %6540 = vmatpush1.bf16.msra.mxu0 %v3578
        %6541 = vmatprep.subr.bf16.mxu0 %v3575
        %6542 = vmatpush1.bf16.msra.mxu0 %v3574
        %6543 = vmatprep.subr.bf16.mxu0 %v3571
        %6544 = vmatpush1.bf16.msra.mxu0 %v3570
        %6545 = vmatprep.subr.bf16.mxu0 %v3567
        %6546 = vmatpush1.bf16.msra.mxu0 %v3566
        %6547 = vmatprep.subr.bf16.mxu0 %v3563
        %6548 = vmatpush1.bf16.msra.mxu0 %v3562
        %6549 = vmatprep.subr.bf16.mxu0 0
        %6550 = vmatpush2.bf16.msra.mxu0 0
        %6551 = vmatprep.subr.bf16.mxu0 0
        %6552 = vmatpush2.bf16.msra.mxu0 0
        %6553 = vmatprep.subr.bf16.mxu0 0
        %6554 = vmatpush2.bf16.msra.mxu0 0
        %6555 = vmatprep.subr.bf16.mxu0 0
        %6556 = vmatpush2.bf16.msra.mxu0 0
        %6557 = vmatprep.subr.bf16.mxu0 0
        %6558 = vmatpush2.bf16.msra.mxu0 0
        %6559 = vmatprep.subr.bf16.mxu0 0
        %6560 = vmatpush2.bf16.msra.mxu0 0
        %6561 = vmatprep.subr.bf16.mxu0 0
        %6562 = vmatpush2.bf16.msra.mxu0 0
        %6563 = vmatprep.subr.bf16.mxu0 0
        %6564 = vmatpush2.bf16.msra.mxu0 0
        %6565 = vmatprep.mubr.bf16.mxu0 0
        %6566 = vmatmul.mubr.bf16.gmra.mxu0 %v6347
        %v6567 = vpop.f32.mrf.mxu0
        %v6568 = vadd.f32 %v6358, %v6567
        %v6569 = vpop.f32.mrf.mxu0
        %v6570 = vadd.f32 %v6359, %v6569
        %v6571 = vpop.f32.mrf.mxu0
        %v6572 = vadd.f32 %v6362, %v6571
        %v6573 = vpop.f32.mrf.mxu0
        %v6574 = vadd.f32 %v6363, %v6573
        %6575 = vmatprep.mubr.bf16.mxu0 0
        %6576 = vmatmul.mubr.bf16.gmra.mxu0 %v6348
        %v6577 = vpop.f32.mrf.mxu0
        %v6578 = vadd.f32 %v6366, %v6577
        %v6579 = vpop.f32.mrf.mxu0
        %v6580 = vadd.f32 %v6367, %v6579
        %v6581 = vpop.f32.mrf.mxu0
        %v6582 = vadd.f32 %v6370, %v6581
        %v6583 = vpop.f32.mrf.mxu0
        %v6584 = vadd.f32 %v6371, %v6583
        %6585 = vmatprep.mubr.bf16.mxu0 0
        %6586 = vmatmul.mubr.bf16.gmra.mxu0 %v6349
        %v6587 = vpop.f32.mrf.mxu0
        %v6588 = vadd.f32 %v6374, %v6587
        %v6589 = vpop.f32.mrf.mxu0
        %v6590 = vadd.f32 %v6375, %v6589
        %v6591 = vpop.f32.mrf.mxu0
        %v6592 = vadd.f32 %v6378, %v6591
        %v6593 = vpop.f32.mrf.mxu0
        %v6594 = vadd.f32 %v6379, %v6593
        %6595 = vmatprep.mubr.bf16.mxu0 0
        %6596 = vmatmul.mubr.bf16.gmra.mxu0 %v6350
        %v6597 = vpop.f32.mrf.mxu0
        %v6598 = vadd.f32 %v6382, %v6597
        %v6599 = vpop.f32.mrf.mxu0
        %v6600 = vadd.f32 %v6383, %v6599
        %v6601 = vpop.f32.mrf.mxu0
        %v6602 = vadd.f32 %v6386, %v6601
        %v6603 = vpop.f32.mrf.mxu0
        %v6604 = vadd.f32 %v6387, %v6603
        %6605 = vmatprep.mubr.bf16.mxu0 0
        %6606 = vmatmul.mubr.bf16.gmra.mxu0 %v6351
        %v6607 = vpop.f32.mrf.mxu0
        %v6608 = vadd.f32 %v6390, %v6607
        %v6609 = vpop.f32.mrf.mxu0
        %v6610 = vadd.f32 %v6391, %v6609
        %v6611 = vpop.f32.mrf.mxu0
        %v6612 = vadd.f32 %v6394, %v6611
        %v6613 = vpop.f32.mrf.mxu0
        %v6614 = vadd.f32 %v6395, %v6613
        %6615 = vmatprep.mubr.bf16.mxu0 0
        %6616 = vmatmul.mubr.bf16.gmra.mxu0 %v6352
        %v6617 = vpop.f32.mrf.mxu0
        %v6618 = vadd.f32 %v6398, %v6617
        %v6619 = vpop.f32.mrf.mxu0
        %v6620 = vadd.f32 %v6399, %v6619
        %v6621 = vpop.f32.mrf.mxu0
        %v6622 = vadd.f32 %v6402, %v6621
        %v6623 = vpop.f32.mrf.mxu0
        %v6624 = vadd.f32 %v6403, %v6623
        %6625 = vmatprep.mubr.bf16.mxu0 0
        %6626 = vmatmul.mubr.bf16.gmra.mxu0 %v6353
        %v6627 = vpop.f32.mrf.mxu0
        %v6628 = vadd.f32 %v6406, %v6627
        %v6629 = vpop.f32.mrf.mxu0
        %v6630 = vadd.f32 %v6407, %v6629
        %v6631 = vpop.f32.mrf.mxu0
        %v6632 = vadd.f32 %v6410, %v6631
        %v6633 = vpop.f32.mrf.mxu0
        %v6634 = vadd.f32 %v6411, %v6633
        %6635 = vmatprep.mubr.bf16.mxu0 0
        %6636 = vmatmul.mubr.bf16.gmra.mxu0 %v6354
        %v6637 = vpop.f32.mrf.mxu0
        %v6638 = vadd.f32 %v6414, %v6637
        %v6639 = vpop.f32.mrf.mxu0
        %v6640 = vadd.f32 %v6415, %v6639
        %v6641 = vpop.f32.mrf.mxu0
        %v6642 = vadd.f32 %v6418, %v6641
        %v6643 = vpop.f32.mrf.mxu0
        %v6644 = vadd.f32 %v6419, %v6643
        %6645 = vdwg.mxu0
        %v6646 = vxor.u32 %v6455, 2147483648
        %v6647 = vxor.u32 %v6459, 2147483648
        %v6648 = vxor.u32 %v6465, 2147483648
        %v6649 = vxor.u32 %v6469, 2147483648
        %v6650 = vxor.u32 %v6475, 2147483648
        %v6651 = vxor.u32 %v6479, 2147483648
        %v6652 = vxor.u32 %v6485, 2147483648
        %v6653 = vxor.u32 %v6489, 2147483648
        %v6654 = vxor.u32 %v6495, 2147483648
        %v6655 = vxor.u32 %v6499, 2147483648
        %v6656 = vxor.u32 %v6505, 2147483648
        %v6657 = vxor.u32 %v6509, 2147483648
        %v6658 = vxor.u32 %v6515, 2147483648
        %v6659 = vxor.u32 %v6519, 2147483648
        %v6660 = vxor.u32 %v6525, 2147483648
        %v6661 = vxor.u32 %v6529, 2147483648
        %v6662 = vmul.f32 %v6646, 1.442695
        %v6663 = vpow.pop %v6662
        %v6664 = vmul.f32 %v6647, 1.442695
        %v6665 = vpow.pop %v6664
        %v6666 = vmul.f32 %v6648, 1.442695
        %v6667 = vpow.pop %v6666
        %v6668 = vmul.f32 %v6649, 1.442695
        %v6669 = vpow.pop %v6668
        %v6670 = vmul.f32 %v6650, 1.442695
        %v6671 = vpow.pop %v6670
        %v6672 = vmul.f32 %v6651, 1.442695
        %v6673 = vpow.pop %v6672
        %v6674 = vmul.f32 %v6652, 1.442695
        %v6675 = vpow.pop %v6674
        %v6676 = vmul.f32 %v6653, 1.442695
        %v6677 = vpow.pop %v6676
        %v6678 = vmul.f32 %v6654, 1.442695
        %v6679 = vpow.pop %v6678
        %v6680 = vmul.f32 %v6655, 1.442695
        %v6681 = vpow.pop %v6680
        %v6682 = vmul.f32 %v6656, 1.442695
        %v6683 = vpow.pop %v6682
        %v6684 = vmul.f32 %v6657, 1.442695
        %v6685 = vpow.pop %v6684
        %v6686 = vmul.f32 %v6658, 1.442695
        %v6687 = vpow.pop %v6686
        %v6688 = vmul.f32 %v6659, 1.442695
        %v6689 = vpow.pop %v6688
        %v6690 = vmul.f32 %v6660, 1.442695
        %v6691 = vpow.pop %v6690
        %v6692 = vmul.f32 %v6661, 1.442695
        %v6693 = vpow.pop %v6692
        %v6694 = vadd.f32 %v6663, 1.0
        %v6695 = vadd.f32 %v6665, 1.0
        %v6696 = vadd.f32 %v6667, 1.0
        %v6697 = vadd.f32 %v6669, 1.0
        %v6698 = vadd.f32 %v6671, 1.0
        %v6699 = vadd.f32 %v6673, 1.0
        %v6700 = vadd.f32 %v6675, 1.0
        %v6701 = vadd.f32 %v6677, 1.0
        %v6702 = vadd.f32 %v6679, 1.0
        %v6703 = vadd.f32 %v6681, 1.0
        %v6704 = vadd.f32 %v6683, 1.0
        %v6705 = vadd.f32 %v6685, 1.0
        %v6706 = vadd.f32 %v6687, 1.0
        %v6707 = vadd.f32 %v6689, 1.0
        %v6708 = vadd.f32 %v6691, 1.0
        %v6709 = vadd.f32 %v6693, 1.0
        %v6710 = vrcp.pop %v6694
        %v6711 = vmul.f32 1.0, %v6710
        %v6712 = vrcp.pop %v6695
        %v6713 = vmul.f32 1.0, %v6712
        %v6714 = vrcp.pop %v6696
        %v6715 = vmul.f32 1.0, %v6714
        %v6716 = vrcp.pop %v6697
        %v6717 = vmul.f32 1.0, %v6716
        %v6718 = vrcp.pop %v6698
        %v6719 = vmul.f32 1.0, %v6718
        %v6720 = vrcp.pop %v6699
        %v6721 = vmul.f32 1.0, %v6720
        %v6722 = vrcp.pop %v6700
        %v6723 = vmul.f32 1.0, %v6722
        %v6724 = vrcp.pop %v6701
        %v6725 = vmul.f32 1.0, %v6724
        %v6726 = vrcp.pop %v6702
        %v6727 = vmul.f32 1.0, %v6726
        %v6728 = vrcp.pop %v6703
        %v6729 = vmul.f32 1.0, %v6728
        %v6730 = vrcp.pop %v6704
        %v6731 = vmul.f32 1.0, %v6730
        %v6732 = vrcp.pop %v6705
        %v6733 = vmul.f32 1.0, %v6732
        %v6734 = vrcp.pop %v6706
        %v6735 = vmul.f32 1.0, %v6734
        %v6736 = vrcp.pop %v6707
        %v6737 = vmul.f32 1.0, %v6736
        %v6738 = vrcp.pop %v6708
        %v6739 = vmul.f32 1.0, %v6738
        %v6740 = vrcp.pop %v6709
        %v6741 = vmul.f32 1.0, %v6740
        %v6742 = vxor.u32 %v6457, 2147483648
        %v6743 = vxor.u32 %v6461, 2147483648
        %v6744 = vxor.u32 %v6467, 2147483648
        %v6745 = vxor.u32 %v6471, 2147483648
        %v6746 = vxor.u32 %v6477, 2147483648
        %v6747 = vxor.u32 %v6481, 2147483648
        %v6748 = vxor.u32 %v6487, 2147483648
        %v6749 = vxor.u32 %v6491, 2147483648
        %v6750 = vxor.u32 %v6497, 2147483648
        %v6751 = vxor.u32 %v6501, 2147483648
        %v6752 = vxor.u32 %v6507, 2147483648
        %v6753 = vxor.u32 %v6511, 2147483648
        %v6754 = vxor.u32 %v6517, 2147483648
        %v6755 = vxor.u32 %v6521, 2147483648
        %v6756 = vxor.u32 %v6527, 2147483648
        %v6757 = vxor.u32 %v6531, 2147483648
        %v6758 = vmul.f32 %v6742, 1.442695
        %v6759 = vpow.pop %v6758
        %v6760 = vmul.f32 %v6743, 1.442695
        %v6761 = vpow.pop %v6760
        %v6762 = vmul.f32 %v6744, 1.442695
        %v6763 = vpow.pop %v6762
        %v6764 = vmul.f32 %v6745, 1.442695
        %v6765 = vpow.pop %v6764
        %v6766 = vmul.f32 %v6746, 1.442695
        %v6767 = vpow.pop %v6766
        %v6768 = vmul.f32 %v6747, 1.442695
        %v6769 = vpow.pop %v6768
        %v6770 = vmul.f32 %v6748, 1.442695
        %v6771 = vpow.pop %v6770
        %v6772 = vmul.f32 %v6749, 1.442695
        %v6773 = vpow.pop %v6772
        %v6774 = vmul.f32 %v6750, 1.442695
        %v6775 = vpow.pop %v6774
        %v6776 = vmul.f32 %v6751, 1.442695
        %v6777 = vpow.pop %v6776
        %v6778 = vmul.f32 %v6752, 1.442695
        %v6779 = vpow.pop %v6778
        %v6780 = vmul.f32 %v6753, 1.442695
        %v6781 = vpow.pop %v6780
        %v6782 = vmul.f32 %v6754, 1.442695
        %v6783 = vpow.pop %v6782
        %v6784 = vmul.f32 %v6755, 1.442695
        %v6785 = vpow.pop %v6784
        %v6786 = vmul.f32 %v6756, 1.442695
        %v6787 = vpow.pop %v6786
        %v6788 = vmul.f32 %v6757, 1.442695
        %v6789 = vpow.pop %v6788
        %v6790 = vadd.f32 %v6759, 1.0
        %v6791 = vadd.f32 %v6761, 1.0
        %v6792 = vadd.f32 %v6763, 1.0
        %v6793 = vadd.f32 %v6765, 1.0
        %v6794 = vadd.f32 %v6767, 1.0
        %v6795 = vadd.f32 %v6769, 1.0
        %v6796 = vadd.f32 %v6771, 1.0
        %v6797 = vadd.f32 %v6773, 1.0
        %v6798 = vadd.f32 %v6775, 1.0
        %v6799 = vadd.f32 %v6777, 1.0
        %v6800 = vadd.f32 %v6779, 1.0
        %v6801 = vadd.f32 %v6781, 1.0
        %v6802 = vadd.f32 %v6783, 1.0
        %v6803 = vadd.f32 %v6785, 1.0
        %v6804 = vadd.f32 %v6787, 1.0
        %v6805 = vadd.f32 %v6789, 1.0
        %v6806 = vrcp.pop %v6790
        %v6807 = vmul.f32 1.0, %v6806
        %v6808 = vrcp.pop %v6791
        %v6809 = vmul.f32 1.0, %v6808
        %v6810 = vrcp.pop %v6792
        %v6811 = vmul.f32 1.0, %v6810
        %v6812 = vrcp.pop %v6793
        %v6813 = vmul.f32 1.0, %v6812
        %v6814 = vrcp.pop %v6794
        %v6815 = vmul.f32 1.0, %v6814
        %v6816 = vrcp.pop %v6795
        %v6817 = vmul.f32 1.0, %v6816
        %v6818 = vrcp.pop %v6796
        %v6819 = vmul.f32 1.0, %v6818
        %v6820 = vrcp.pop %v6797
        %v6821 = vmul.f32 1.0, %v6820
        %v6822 = vrcp.pop %v6798
        %v6823 = vmul.f32 1.0, %v6822
        %v6824 = vrcp.pop %v6799
        %v6825 = vmul.f32 1.0, %v6824
        %v6826 = vrcp.pop %v6800
        %v6827 = vmul.f32 1.0, %v6826
        %v6828 = vrcp.pop %v6801
        %v6829 = vmul.f32 1.0, %v6828
        %v6830 = vrcp.pop %v6802
        %v6831 = vmul.f32 1.0, %v6830
        %v6832 = vrcp.pop %v6803
        %v6833 = vmul.f32 1.0, %v6832
        %v6834 = vrcp.pop %v6804
        %v6835 = vmul.f32 1.0, %v6834
        %v6836 = vrcp.pop %v6805
        %v6837 = vmul.f32 1.0, %v6836
        %v6838 = vtanh.pop %v6568
        %v6839 = vtanh.pop %v6572
        %v6840 = vtanh.pop %v6578
        %v6841 = vtanh.pop %v6582
        %v6842 = vtanh.pop %v6588
        %v6843 = vtanh.pop %v6592
        %v6844 = vtanh.pop %v6598
        %v6845 = vtanh.pop %v6602
        %v6846 = vtanh.pop %v6608
        %v6847 = vtanh.pop %v6612
        %v6848 = vtanh.pop %v6618
        %v6849 = vtanh.pop %v6622
        %v6850 = vtanh.pop %v6628
        %v6851 = vtanh.pop %v6632
        %v6852 = vtanh.pop %v6638
        %v6853 = vtanh.pop %v6642
        %v6854 = vxor.u32 %v6570, 2147483648
        %v6855 = vxor.u32 %v6574, 2147483648
        %v6856 = vxor.u32 %v6580, 2147483648
        %v6857 = vxor.u32 %v6584, 2147483648
        %v6858 = vxor.u32 %v6590, 2147483648
        %v6859 = vxor.u32 %v6594, 2147483648
        %v6860 = vxor.u32 %v6600, 2147483648
        %v6861 = vxor.u32 %v6604, 2147483648
        %v6862 = vxor.u32 %v6610, 2147483648
        %v6863 = vxor.u32 %v6614, 2147483648
        %v6864 = vxor.u32 %v6620, 2147483648
        %v6865 = vxor.u32 %v6624, 2147483648
        %v6866 = vxor.u32 %v6630, 2147483648
        %v6867 = vxor.u32 %v6634, 2147483648
        %v6868 = vxor.u32 %v6640, 2147483648
        %v6869 = vxor.u32 %v6644, 2147483648
        %v6870 = vmul.f32 %v6854, 1.442695
        %v6871 = vpow.pop %v6870
        %v6872 = vmul.f32 %v6855, 1.442695
        %v6873 = vpow.pop %v6872
        %v6874 = vmul.f32 %v6856, 1.442695
        %v6875 = vpow.pop %v6874
        %v6876 = vmul.f32 %v6857, 1.442695
        %v6877 = vpow.pop %v6876
        %v6878 = vmul.f32 %v6858, 1.442695
        %v6879 = vpow.pop %v6878
        %v6880 = vmul.f32 %v6859, 1.442695
        %v6881 = vpow.pop %v6880
        %v6882 = vmul.f32 %v6860, 1.442695
        %v6883 = vpow.pop %v6882
        %v6884 = vmul.f32 %v6861, 1.442695
        %v6885 = vpow.pop %v6884
        %v6886 = vmul.f32 %v6862, 1.442695
        %v6887 = vpow.pop %v6886
        %v6888 = vmul.f32 %v6863, 1.442695
        %v6889 = vpow.pop %v6888
        %v6890 = vmul.f32 %v6864, 1.442695
        %v6891 = vpow.pop %v6890
        %v6892 = vmul.f32 %v6865, 1.442695
        %v6893 = vpow.pop %v6892
        %v6894 = vmul.f32 %v6866, 1.442695
        %v6895 = vpow.pop %v6894
        %v6896 = vmul.f32 %v6867, 1.442695
        %v6897 = vpow.pop %v6896
        %v6898 = vmul.f32 %v6868, 1.442695
        %v6899 = vpow.pop %v6898
        %v6900 = vmul.f32 %v6869, 1.442695
        %v6901 = vpow.pop %v6900
        %v6902 = vadd.f32 %v6871, 1.0
        %v6903 = vadd.f32 %v6873, 1.0
        %v6904 = vadd.f32 %v6875, 1.0
        %v6905 = vadd.f32 %v6877, 1.0
        %v6906 = vadd.f32 %v6879, 1.0
        %v6907 = vadd.f32 %v6881, 1.0
        %v6908 = vadd.f32 %v6883, 1.0
        %v6909 = vadd.f32 %v6885, 1.0
        %v6910 = vadd.f32 %v6887, 1.0
        %v6911 = vadd.f32 %v6889, 1.0
        %v6912 = vadd.f32 %v6891, 1.0
        %v6913 = vadd.f32 %v6893, 1.0
        %v6914 = vadd.f32 %v6895, 1.0
        %v6915 = vadd.f32 %v6897, 1.0
        %v6916 = vadd.f32 %v6899, 1.0
        %v6917 = vadd.f32 %v6901, 1.0
        %v6918 = vrcp.pop %v6902
        %v6919 = vmul.f32 1.0, %v6918
        %v6920 = vrcp.pop %v6903
        %v6921 = vmul.f32 1.0, %v6920
        %v6922 = vrcp.pop %v6904
        %v6923 = vmul.f32 1.0, %v6922
        %v6924 = vrcp.pop %v6905
        %v6925 = vmul.f32 1.0, %v6924
        %v6926 = vrcp.pop %v6906
        %v6927 = vmul.f32 1.0, %v6926
        %v6928 = vrcp.pop %v6907
        %v6929 = vmul.f32 1.0, %v6928
        %v6930 = vrcp.pop %v6908
        %v6931 = vmul.f32 1.0, %v6930
        %v6932 = vrcp.pop %v6909
        %v6933 = vmul.f32 1.0, %v6932
        %v6934 = vrcp.pop %v6910
        %v6935 = vmul.f32 1.0, %v6934
        %v6936 = vrcp.pop %v6911
        %v6937 = vmul.f32 1.0, %v6936
        %v6938 = vrcp.pop %v6912
        %v6939 = vmul.f32 1.0, %v6938
        %v6940 = vrcp.pop %v6913
        %v6941 = vmul.f32 1.0, %v6940
        %v6942 = vrcp.pop %v6914
        %v6943 = vmul.f32 1.0, %v6942
        %v6944 = vrcp.pop %v6915
        %v6945 = vmul.f32 1.0, %v6944
        %v6946 = vrcp.pop %v6916
        %v6947 = vmul.f32 1.0, %v6946
        %v6948 = vrcp.pop %v6917
        %v6949 = vmul.f32 1.0, %v6948
        %v6950 = vmul.f32 %v6807, %v6283
        %v6951 = vmul.f32 %v6809, %v6284
        %v6952 = vmul.f32 %v6811, %v6285
        %v6953 = vmul.f32 %v6813, %v6286
        %v6954 = vmul.f32 %v6815, %v6287
        %v6955 = vmul.f32 %v6817, %v6288
        %v6956 = vmul.f32 %v6819, %v6289
        %v6957 = vmul.f32 %v6821, %v6290
        %v6958 = vmul.f32 %v6823, %v6291
        %v6959 = vmul.f32 %v6825, %v6292
        %v6960 = vmul.f32 %v6827, %v6293
        %v6961 = vmul.f32 %v6829, %v6294
        %v6962 = vmul.f32 %v6831, %v6295
        %v6963 = vmul.f32 %v6833, %v6296
        %v6964 = vmul.f32 %v6835, %v6297
        %v6965 = vmul.f32 %v6837, %v6298
        %v6966 = vmul.f32 %v6711, %v6838
        %v6967 = vmul.f32 %v6713, %v6839
        %v6968 = vmul.f32 %v6715, %v6840
        %v6969 = vmul.f32 %v6717, %v6841
        %v6970 = vmul.f32 %v6719, %v6842
        %v6971 = vmul.f32 %v6721, %v6843
        %v6972 = vmul.f32 %v6723, %v6844
        %v6973 = vmul.f32 %v6725, %v6845
        %v6974 = vmul.f32 %v6727, %v6846
        %v6975 = vmul.f32 %v6729, %v6847
        %v6976 = vmul.f32 %v6731, %v6848
        %v6977 = vmul.f32 %v6733, %v6849
        %v6978 = vmul.f32 %v6735, %v6850
        %v6979 = vmul.f32 %v6737, %v6851
        %v6980 = vmul.f32 %v6739, %v6852
        %v6981 = vmul.f32 %v6741, %v6853
        %v6982 = vadd.f32 %v6950, %v6966
        %v6983 = vadd.f32 %v6951, %v6967
        %v6984 = vadd.f32 %v6952, %v6968
        %v6985 = vadd.f32 %v6953, %v6969
        %v6986 = vadd.f32 %v6954, %v6970
        %v6987 = vadd.f32 %v6955, %v6971
        %v6988 = vadd.f32 %v6956, %v6972
        %v6989 = vadd.f32 %v6957, %v6973
        %v6990 = vadd.f32 %v6958, %v6974
        %v6991 = vadd.f32 %v6959, %v6975
        %v6992 = vadd.f32 %v6960, %v6976
        %v6993 = vadd.f32 %v6961, %v6977
        %v6994 = vadd.f32 %v6962, %v6978
        %v6995 = vadd.f32 %v6963, %v6979
        %v6996 = vadd.f32 %v6964, %v6980
        %v6997 = vadd.f32 %v6965, %v6981
        %v6998 = vtanh.pop %v6982
        %v6999 = vtanh.pop %v6983
        %v7000 = vtanh.pop %v6984
        %v7001 = vtanh.pop %v6985
        %v7002 = vtanh.pop %v6986
        %v7003 = vtanh.pop %v6987
        %v7004 = vtanh.pop %v6988
        %v7005 = vtanh.pop %v6989
        %v7006 = vtanh.pop %v6990
        %v7007 = vtanh.pop %v6991
        %v7008 = vtanh.pop %v6992
        %v7009 = vtanh.pop %v6993
        %v7010 = vtanh.pop %v6994
        %v7011 = vtanh.pop %v6995
        %v7012 = vtanh.pop %v6996
        %v7013 = vtanh.pop %v6997
        %v7014 = vmul.f32 %v6919, %v6998
        %v7015 = vmul.f32 %v6921, %v6999
        %v7016 = vmul.f32 %v6923, %v7000
        %v7017 = vmul.f32 %v6925, %v7001
        %v7018 = vmul.f32 %v6927, %v7002
        %v7019 = vmul.f32 %v6929, %v7003
        %v7020 = vmul.f32 %v6931, %v7004
        %v7021 = vmul.f32 %v6933, %v7005
        %v7022 = vmul.f32 %v6935, %v7006
        %v7023 = vmul.f32 %v6937, %v7007
        %v7024 = vmul.f32 %v6939, %v7008
        %v7025 = vmul.f32 %v6941, %v7009
        %v7026 = vmul.f32 %v6943, %v7010
        %v7027 = vmul.f32 %v6945, %v7011
        %v7028 = vmul.f32 %v6947, %v7012
        %v7029 = vmul.f32 %v6949, %v7013
        %v7030 = vadd.f32 %v6331, %v7014
        %v7031 = vadd.f32 %v6332, %v7015
        %v7032 = vadd.f32 %v6333, %v7016
        %v7033 = vadd.f32 %v6334, %v7017
        %v7034 = vadd.f32 %v6335, %v7018
        %v7035 = vadd.f32 %v6336, %v7019
        %v7036 = vadd.f32 %v6337, %v7020
        %v7037 = vadd.f32 %v6338, %v7021
        %v7038 = vadd.f32 %v6339, %v7022
        %v7039 = vadd.f32 %v6340, %v7023
        %v7040 = vadd.f32 %v6341, %v7024
        %v7041 = vadd.f32 %v6342, %v7025
        %v7042 = vadd.f32 %v6343, %v7026
        %v7043 = vadd.f32 %v6344, %v7027
        %v7044 = vadd.f32 %v6345, %v7028
        %v7045 = vadd.f32 %v6346, %v7029
        %v7046 = vpack.c.bf16 %v7015, %v7014
        %v7047 = vpack.c.bf16 %v7017, %v7016
        %v7048 = vpack.c.bf16 %v7019, %v7018
        %v7049 = vpack.c.bf16 %v7021, %v7020
        %v7050 = vpack.c.bf16 %v7023, %v7022
        %v7051 = vpack.c.bf16 %v7025, %v7024
        %v7052 = vpack.c.bf16 %v7027, %v7026
        %v7053 = vpack.c.bf16 %v7029, %v7028
        %s7054 = scalar_lea.vmem [#allocation2], 2560
        %v7055 = vld [vmem:[%s7054] sm:$0xff]
        %v7056 = vld [vmem:[%s7054 + $0x8] sm:$0xff]
        %v7057 = vld [vmem:[%s7054 + $0x10] sm:$0xff]
        %v7058 = vld [vmem:[%s7054 + $0x18] sm:$0xff]
        %v7059 = vld [vmem:[%s7054 + $0x20] sm:$0xff]
        %v7060 = vld [vmem:[%s7054 + $0x28] sm:$0xff]
        %v7061 = vld [vmem:[%s7054 + $0x30] sm:$0xff]
        %v7062 = vld [vmem:[%s7054 + $0x38] sm:$0xff]
        %v7063 = vld [vmem:[%s7054 + $0x40] sm:$0xff]
        %v7064 = vld [vmem:[%s7054 + $0x48] sm:$0xff]
        %v7065 = vld [vmem:[%s7054 + $0x50] sm:$0xff]
        %v7066 = vld [vmem:[%s7054 + $0x58] sm:$0xff]
        %v7067 = vld [vmem:[%s7054 + $0x60] sm:$0xff]
        %v7068 = vld [vmem:[%s7054 + $0x68] sm:$0xff]
        %v7069 = vld [vmem:[%s7054 + $0x70] sm:$0xff]
        %v7070 = vld [vmem:[%s7054 + $0x78] sm:$0xff]
        %v7071 = vld [vmem:[%s7054 + $0x80] sm:$0xff]
        %v7072 = vld [vmem:[%s7054 + $0x88] sm:$0xff]
        %v7073 = vld [vmem:[%s7054 + $0x90] sm:$0xff]
        %v7074 = vld [vmem:[%s7054 + $0x98] sm:$0xff]
        %v7075 = vld [vmem:[%s7054 + $0xa0] sm:$0xff]
        %v7076 = vld [vmem:[%s7054 + $0xa8] sm:$0xff]
        %v7077 = vld [vmem:[%s7054 + $0xb0] sm:$0xff]
        %v7078 = vld [vmem:[%s7054 + $0xb8] sm:$0xff]
        %v7079 = vld [vmem:[%s7054 + $0xc0] sm:$0xff]
        %v7080 = vld [vmem:[%s7054 + $0xc8] sm:$0xff]
        %v7081 = vld [vmem:[%s7054 + $0xd0] sm:$0xff]
        %v7082 = vld [vmem:[%s7054 + $0xd8] sm:$0xff]
        %v7083 = vld [vmem:[%s7054 + $0xe0] sm:$0xff]
        %v7084 = vld [vmem:[%s7054 + $0xe8] sm:$0xff]
        %v7085 = vld [vmem:[%s7054 + $0xf0] sm:$0xff]
        %v7086 = vld [vmem:[%s7054 + $0xf8] sm:$0xff]
        %v7087 = vld [vmem:[%s7054 + $0x100] sm:$0xff]
        %v7088 = vld [vmem:[%s7054 + $0x108] sm:$0xff]
        %v7089 = vld [vmem:[%s7054 + $0x110] sm:$0xff]
        %v7090 = vld [vmem:[%s7054 + $0x118] sm:$0xff]
        %v7091 = vld [vmem:[%s7054 + $0x120] sm:$0xff]
        %v7092 = vld [vmem:[%s7054 + $0x128] sm:$0xff]
        %v7093 = vld [vmem:[%s7054 + $0x130] sm:$0xff]
        %v7094 = vld [vmem:[%s7054 + $0x138] sm:$0xff]
        %v7095 = vld [vmem:[%s7054 + $0x140] sm:$0xff]
        %v7096 = vld [vmem:[%s7054 + $0x148] sm:$0xff]
        %v7097 = vld [vmem:[%s7054 + $0x150] sm:$0xff]
        %v7098 = vld [vmem:[%s7054 + $0x158] sm:$0xff]
        %v7099 = vld [vmem:[%s7054 + $0x160] sm:$0xff]
        %v7100 = vld [vmem:[%s7054 + $0x168] sm:$0xff]
        %v7101 = vld [vmem:[%s7054 + $0x170] sm:$0xff]
        %v7102 = vld [vmem:[%s7054 + $0x178] sm:$0xff]
        %v7103 = vld [vmem:[%s7054 + $0x180] sm:$0xff]
        %v7104 = vld [vmem:[%s7054 + $0x188] sm:$0xff]
        %v7105 = vld [vmem:[%s7054 + $0x190] sm:$0xff]
        %v7106 = vld [vmem:[%s7054 + $0x198] sm:$0xff]
        %v7107 = vld [vmem:[%s7054 + $0x1a0] sm:$0xff]
        %v7108 = vld [vmem:[%s7054 + $0x1a8] sm:$0xff]
        %v7109 = vld [vmem:[%s7054 + $0x1b0] sm:$0xff]
        %v7110 = vld [vmem:[%s7054 + $0x1b8] sm:$0xff]
        %v7111 = vld [vmem:[%s7054 + $0x1c0] sm:$0xff]
        %v7112 = vld [vmem:[%s7054 + $0x1c8] sm:$0xff]
        %v7113 = vld [vmem:[%s7054 + $0x1d0] sm:$0xff]
        %v7114 = vld [vmem:[%s7054 + $0x1d8] sm:$0xff]
        %v7115 = vld [vmem:[%s7054 + $0x1e0] sm:$0xff]
        %v7116 = vld [vmem:[%s7054 + $0x1e8] sm:$0xff]
        %v7117 = vld [vmem:[%s7054 + $0x1f0] sm:$0xff]
        %v7118 = vld [vmem:[%s7054 + $0x1f8] sm:$0xff]
        %7119 = vmatprep.subr.bf16.mxu0 %v3589
        %7120 = vmatpush1.bf16.msra.mxu0 %v3588
        %7121 = vmatprep.subr.bf16.mxu0 %v3585
        %7122 = vmatpush1.bf16.msra.mxu0 %v3584
        %7123 = vmatprep.subr.bf16.mxu0 %v3581
        %7124 = vmatpush1.bf16.msra.mxu0 %v3580
        %7125 = vmatprep.subr.bf16.mxu0 %v3577
        %7126 = vmatpush1.bf16.msra.mxu0 %v3576
        %7127 = vmatprep.subr.bf16.mxu0 %v3573
        %7128 = vmatpush1.bf16.msra.mxu0 %v3572
        %7129 = vmatprep.subr.bf16.mxu0 %v3569
        %7130 = vmatpush1.bf16.msra.mxu0 %v3568
        %7131 = vmatprep.subr.bf16.mxu0 %v3565
        %7132 = vmatpush1.bf16.msra.mxu0 %v3564
        %7133 = vmatprep.subr.bf16.mxu0 %v3561
        %7134 = vmatpush1.bf16.msra.mxu0 %v3560
        %7135 = vmatprep.subr.bf16.mxu0 0
        %7136 = vmatpush2.bf16.msra.mxu0 0
        %7137 = vmatprep.subr.bf16.mxu0 0
        %7138 = vmatpush2.bf16.msra.mxu0 0
        %7139 = vmatprep.subr.bf16.mxu0 0
        %7140 = vmatpush2.bf16.msra.mxu0 0
        %7141 = vmatprep.subr.bf16.mxu0 0
        %7142 = vmatpush2.bf16.msra.mxu0 0
        %7143 = vmatprep.subr.bf16.mxu0 0
        %7144 = vmatpush2.bf16.msra.mxu0 0
        %7145 = vmatprep.subr.bf16.mxu0 0
        %7146 = vmatpush2.bf16.msra.mxu0 0
        %7147 = vmatprep.subr.bf16.mxu0 0
        %7148 = vmatpush2.bf16.msra.mxu0 0
        %7149 = vmatprep.subr.bf16.mxu0 0
        %7150 = vmatpush2.bf16.msra.mxu0 0
        %7151 = vmatprep.mubr.bf16.mxu0 0
        %7152 = vmatmul.mubr.bf16.gmra.mxu0 %v7046
        %v7153 = vpop.f32.mrf.mxu0
        %v7154 = vadd.f32 %v7055, %v7153
        %v7155 = vpop.f32.mrf.mxu0
        %v7156 = vadd.f32 %v7056, %v7155
        %v7157 = vpop.f32.mrf.mxu0
        %v7158 = vadd.f32 %v7059, %v7157
        %v7159 = vpop.f32.mrf.mxu0
        %v7160 = vadd.f32 %v7060, %v7159
        %7161 = vmatprep.mubr.bf16.mxu0 0
        %7162 = vmatmul.mubr.bf16.gmra.mxu0 %v7047
        %v7163 = vpop.f32.mrf.mxu0
        %v7164 = vadd.f32 %v7063, %v7163
        %v7165 = vpop.f32.mrf.mxu0
        %v7166 = vadd.f32 %v7064, %v7165
        %v7167 = vpop.f32.mrf.mxu0
        %v7168 = vadd.f32 %v7067, %v7167
        %v7169 = vpop.f32.mrf.mxu0
        %v7170 = vadd.f32 %v7068, %v7169
        %7171 = vmatprep.mubr.bf16.mxu0 0
        %7172 = vmatmul.mubr.bf16.gmra.mxu0 %v7048
        %v7173 = vpop.f32.mrf.mxu0
        %v7174 = vadd.f32 %v7071, %v7173
        %v7175 = vpop.f32.mrf.mxu0
        %v7176 = vadd.f32 %v7072, %v7175
        %v7177 = vpop.f32.mrf.mxu0
        %v7178 = vadd.f32 %v7075, %v7177
        %v7179 = vpop.f32.mrf.mxu0
        %v7180 = vadd.f32 %v7076, %v7179
        %7181 = vmatprep.mubr.bf16.mxu0 0
        %7182 = vmatmul.mubr.bf16.gmra.mxu0 %v7049
        %v7183 = vpop.f32.mrf.mxu0
        %v7184 = vadd.f32 %v7079, %v7183
        %v7185 = vpop.f32.mrf.mxu0
        %v7186 = vadd.f32 %v7080, %v7185
        %v7187 = vpop.f32.mrf.mxu0
        %v7188 = vadd.f32 %v7083, %v7187
        %v7189 = vpop.f32.mrf.mxu0
        %v7190 = vadd.f32 %v7084, %v7189
        %7191 = vmatprep.mubr.bf16.mxu0 0
        %7192 = vmatmul.mubr.bf16.gmra.mxu0 %v7050
        %v7193 = vpop.f32.mrf.mxu0
        %v7194 = vadd.f32 %v7087, %v7193
        %v7195 = vpop.f32.mrf.mxu0
        %v7196 = vadd.f32 %v7088, %v7195
        %v7197 = vpop.f32.mrf.mxu0
        %v7198 = vadd.f32 %v7091, %v7197
        %v7199 = vpop.f32.mrf.mxu0
        %v7200 = vadd.f32 %v7092, %v7199
        %7201 = vmatprep.mubr.bf16.mxu0 0
        %7202 = vmatmul.mubr.bf16.gmra.mxu0 %v7051
        %v7203 = vpop.f32.mrf.mxu0
        %v7204 = vadd.f32 %v7095, %v7203
        %v7205 = vpop.f32.mrf.mxu0
        %v7206 = vadd.f32 %v7096, %v7205
        %v7207 = vpop.f32.mrf.mxu0
        %v7208 = vadd.f32 %v7099, %v7207
        %v7209 = vpop.f32.mrf.mxu0
        %v7210 = vadd.f32 %v7100, %v7209
        %7211 = vmatprep.mubr.bf16.mxu0 0
        %7212 = vmatmul.mubr.bf16.gmra.mxu0 %v7052
        %v7213 = vpop.f32.mrf.mxu0
        %v7214 = vadd.f32 %v7103, %v7213
        %v7215 = vpop.f32.mrf.mxu0
        %v7216 = vadd.f32 %v7104, %v7215
        %v7217 = vpop.f32.mrf.mxu0
        %v7218 = vadd.f32 %v7107, %v7217
        %v7219 = vpop.f32.mrf.mxu0
        %v7220 = vadd.f32 %v7108, %v7219
        %7221 = vmatprep.mubr.bf16.mxu0 0
        %7222 = vmatmul.mubr.bf16.gmra.mxu0 %v7053
        %v7223 = vpop.f32.mrf.mxu0
        %v7224 = vadd.f32 %v7111, %v7223
        %v7225 = vpop.f32.mrf.mxu0
        %v7226 = vadd.f32 %v7112, %v7225
        %v7227 = vpop.f32.mrf.mxu0
        %v7228 = vadd.f32 %v7115, %v7227
        %v7229 = vpop.f32.mrf.mxu0
        %v7230 = vadd.f32 %v7116, %v7229
        %7231 = vdwg.mxu0
        %7232 = vmatprep.subr.bf16.mxu0 %v3591
        %7233 = vmatpush1.bf16.msra.mxu0 %v3590
        %7234 = vmatprep.subr.bf16.mxu0 %v3587
        %7235 = vmatpush1.bf16.msra.mxu0 %v3586
        %7236 = vmatprep.subr.bf16.mxu0 %v3583
        %7237 = vmatpush1.bf16.msra.mxu0 %v3582
        %7238 = vmatprep.subr.bf16.mxu0 %v3579
        %7239 = vmatpush1.bf16.msra.mxu0 %v3578
        %7240 = vmatprep.subr.bf16.mxu0 %v3575
        %7241 = vmatpush1.bf16.msra.mxu0 %v3574
        %7242 = vmatprep.subr.bf16.mxu0 %v3571
        %7243 = vmatpush1.bf16.msra.mxu0 %v3570
        %7244 = vmatprep.subr.bf16.mxu0 %v3567
        %7245 = vmatpush1.bf16.msra.mxu0 %v3566
        %7246 = vmatprep.subr.bf16.mxu0 %v3563
        %7247 = vmatpush1.bf16.msra.mxu0 %v3562
        %7248 = vmatprep.subr.bf16.mxu0 0
        %7249 = vmatpush2.bf16.msra.mxu0 0
        %7250 = vmatprep.subr.bf16.mxu0 0
        %7251 = vmatpush2.bf16.msra.mxu0 0
        %7252 = vmatprep.subr.bf16.mxu0 0
        %7253 = vmatpush2.bf16.msra.mxu0 0
        %7254 = vmatprep.subr.bf16.mxu0 0
        %7255 = vmatpush2.bf16.msra.mxu0 0
        %7256 = vmatprep.subr.bf16.mxu0 0
        %7257 = vmatpush2.bf16.msra.mxu0 0
        %7258 = vmatprep.subr.bf16.mxu0 0
        %7259 = vmatpush2.bf16.msra.mxu0 0
        %7260 = vmatprep.subr.bf16.mxu0 0
        %7261 = vmatpush2.bf16.msra.mxu0 0
        %7262 = vmatprep.subr.bf16.mxu0 0
        %7263 = vmatpush2.bf16.msra.mxu0 0
        %7264 = vmatprep.mubr.bf16.mxu0 0
        %7265 = vmatmul.mubr.bf16.gmra.mxu0 %v7046
        %v7266 = vpop.f32.mrf.mxu0
        %v7267 = vadd.f32 %v7057, %v7266
        %v7268 = vpop.f32.mrf.mxu0
        %v7269 = vadd.f32 %v7058, %v7268
        %v7270 = vpop.f32.mrf.mxu0
        %v7271 = vadd.f32 %v7061, %v7270
        %v7272 = vpop.f32.mrf.mxu0
        %v7273 = vadd.f32 %v7062, %v7272
        %7274 = vmatprep.mubr.bf16.mxu0 0
        %7275 = vmatmul.mubr.bf16.gmra.mxu0 %v7047
        %v7276 = vpop.f32.mrf.mxu0
        %v7277 = vadd.f32 %v7065, %v7276
        %v7278 = vpop.f32.mrf.mxu0
        %v7279 = vadd.f32 %v7066, %v7278
        %v7280 = vpop.f32.mrf.mxu0
        %v7281 = vadd.f32 %v7069, %v7280
        %v7282 = vpop.f32.mrf.mxu0
        %v7283 = vadd.f32 %v7070, %v7282
        %7284 = vmatprep.mubr.bf16.mxu0 0
        %7285 = vmatmul.mubr.bf16.gmra.mxu0 %v7048
        %v7286 = vpop.f32.mrf.mxu0
        %v7287 = vadd.f32 %v7073, %v7286
        %v7288 = vpop.f32.mrf.mxu0
        %v7289 = vadd.f32 %v7074, %v7288
        %v7290 = vpop.f32.mrf.mxu0
        %v7291 = vadd.f32 %v7077, %v7290
        %v7292 = vpop.f32.mrf.mxu0
        %v7293 = vadd.f32 %v7078, %v7292
        %7294 = vmatprep.mubr.bf16.mxu0 0
        %7295 = vmatmul.mubr.bf16.gmra.mxu0 %v7049
        %v7296 = vpop.f32.mrf.mxu0
        %v7297 = vadd.f32 %v7081, %v7296
        %v7298 = vpop.f32.mrf.mxu0
        %v7299 = vadd.f32 %v7082, %v7298
        %v7300 = vpop.f32.mrf.mxu0
        %v7301 = vadd.f32 %v7085, %v7300
        %v7302 = vpop.f32.mrf.mxu0
        %v7303 = vadd.f32 %v7086, %v7302
        %7304 = vmatprep.mubr.bf16.mxu0 0
        %7305 = vmatmul.mubr.bf16.gmra.mxu0 %v7050
        %v7306 = vpop.f32.mrf.mxu0
        %v7307 = vadd.f32 %v7089, %v7306
        %v7308 = vpop.f32.mrf.mxu0
        %v7309 = vadd.f32 %v7090, %v7308
        %v7310 = vpop.f32.mrf.mxu0
        %v7311 = vadd.f32 %v7093, %v7310
        %v7312 = vpop.f32.mrf.mxu0
        %v7313 = vadd.f32 %v7094, %v7312
        %7314 = vmatprep.mubr.bf16.mxu0 0
        %7315 = vmatmul.mubr.bf16.gmra.mxu0 %v7051
        %v7316 = vpop.f32.mrf.mxu0
        %v7317 = vadd.f32 %v7097, %v7316
        %v7318 = vpop.f32.mrf.mxu0
        %v7319 = vadd.f32 %v7098, %v7318
        %v7320 = vpop.f32.mrf.mxu0
        %v7321 = vadd.f32 %v7101, %v7320
        %v7322 = vpop.f32.mrf.mxu0
        %v7323 = vadd.f32 %v7102, %v7322
        %7324 = vmatprep.mubr.bf16.mxu0 0
        %7325 = vmatmul.mubr.bf16.gmra.mxu0 %v7052
        %v7326 = vpop.f32.mrf.mxu0
        %v7327 = vadd.f32 %v7105, %v7326
        %v7328 = vpop.f32.mrf.mxu0
        %v7329 = vadd.f32 %v7106, %v7328
        %v7330 = vpop.f32.mrf.mxu0
        %v7331 = vadd.f32 %v7109, %v7330
        %v7332 = vpop.f32.mrf.mxu0
        %v7333 = vadd.f32 %v7110, %v7332
        %7334 = vmatprep.mubr.bf16.mxu0 0
        %7335 = vmatmul.mubr.bf16.gmra.mxu0 %v7053
        %v7336 = vpop.f32.mrf.mxu0
        %v7337 = vadd.f32 %v7113, %v7336
        %v7338 = vpop.f32.mrf.mxu0
        %v7339 = vadd.f32 %v7114, %v7338
        %v7340 = vpop.f32.mrf.mxu0
        %v7341 = vadd.f32 %v7117, %v7340
        %v7342 = vpop.f32.mrf.mxu0
        %v7343 = vadd.f32 %v7118, %v7342
        %7344 = vdwg.mxu0
        %v7345 = vxor.u32 %v7154, 2147483648
        %v7346 = vxor.u32 %v7158, 2147483648
        %v7347 = vxor.u32 %v7164, 2147483648
        %v7348 = vxor.u32 %v7168, 2147483648
        %v7349 = vxor.u32 %v7174, 2147483648
        %v7350 = vxor.u32 %v7178, 2147483648
        %v7351 = vxor.u32 %v7184, 2147483648
        %v7352 = vxor.u32 %v7188, 2147483648
        %v7353 = vxor.u32 %v7194, 2147483648
        %v7354 = vxor.u32 %v7198, 2147483648
        %v7355 = vxor.u32 %v7204, 2147483648
        %v7356 = vxor.u32 %v7208, 2147483648
        %v7357 = vxor.u32 %v7214, 2147483648
        %v7358 = vxor.u32 %v7218, 2147483648
        %v7359 = vxor.u32 %v7224, 2147483648
        %v7360 = vxor.u32 %v7228, 2147483648
        %v7361 = vmul.f32 %v7345, 1.442695
        %v7362 = vpow.pop %v7361
        %v7363 = vmul.f32 %v7346, 1.442695
        %v7364 = vpow.pop %v7363
        %v7365 = vmul.f32 %v7347, 1.442695
        %v7366 = vpow.pop %v7365
        %v7367 = vmul.f32 %v7348, 1.442695
        %v7368 = vpow.pop %v7367
        %v7369 = vmul.f32 %v7349, 1.442695
        %v7370 = vpow.pop %v7369
        %v7371 = vmul.f32 %v7350, 1.442695
        %v7372 = vpow.pop %v7371
        %v7373 = vmul.f32 %v7351, 1.442695
        %v7374 = vpow.pop %v7373
        %v7375 = vmul.f32 %v7352, 1.442695
        %v7376 = vpow.pop %v7375
        %v7377 = vmul.f32 %v7353, 1.442695
        %v7378 = vpow.pop %v7377
        %v7379 = vmul.f32 %v7354, 1.442695
        %v7380 = vpow.pop %v7379
        %v7381 = vmul.f32 %v7355, 1.442695
        %v7382 = vpow.pop %v7381
        %v7383 = vmul.f32 %v7356, 1.442695
        %v7384 = vpow.pop %v7383
        %v7385 = vmul.f32 %v7357, 1.442695
        %v7386 = vpow.pop %v7385
        %v7387 = vmul.f32 %v7358, 1.442695
        %v7388 = vpow.pop %v7387
        %v7389 = vmul.f32 %v7359, 1.442695
        %v7390 = vpow.pop %v7389
        %v7391 = vmul.f32 %v7360, 1.442695
        %v7392 = vpow.pop %v7391
        %v7393 = vadd.f32 %v7362, 1.0
        %v7394 = vadd.f32 %v7364, 1.0
        %v7395 = vadd.f32 %v7366, 1.0
        %v7396 = vadd.f32 %v7368, 1.0
        %v7397 = vadd.f32 %v7370, 1.0
        %v7398 = vadd.f32 %v7372, 1.0
        %v7399 = vadd.f32 %v7374, 1.0
        %v7400 = vadd.f32 %v7376, 1.0
        %v7401 = vadd.f32 %v7378, 1.0
        %v7402 = vadd.f32 %v7380, 1.0
        %v7403 = vadd.f32 %v7382, 1.0
        %v7404 = vadd.f32 %v7384, 1.0
        %v7405 = vadd.f32 %v7386, 1.0
        %v7406 = vadd.f32 %v7388, 1.0
        %v7407 = vadd.f32 %v7390, 1.0
        %v7408 = vadd.f32 %v7392, 1.0
        %v7409 = vrcp.pop %v7393
        %v7410 = vmul.f32 1.0, %v7409
        %v7411 = vrcp.pop %v7394
        %v7412 = vmul.f32 1.0, %v7411
        %v7413 = vrcp.pop %v7395
        %v7414 = vmul.f32 1.0, %v7413
        %v7415 = vrcp.pop %v7396
        %v7416 = vmul.f32 1.0, %v7415
        %v7417 = vrcp.pop %v7397
        %v7418 = vmul.f32 1.0, %v7417
        %v7419 = vrcp.pop %v7398
        %v7420 = vmul.f32 1.0, %v7419
        %v7421 = vrcp.pop %v7399
        %v7422 = vmul.f32 1.0, %v7421
        %v7423 = vrcp.pop %v7400
        %v7424 = vmul.f32 1.0, %v7423
        %v7425 = vrcp.pop %v7401
        %v7426 = vmul.f32 1.0, %v7425
        %v7427 = vrcp.pop %v7402
        %v7428 = vmul.f32 1.0, %v7427
        %v7429 = vrcp.pop %v7403
        %v7430 = vmul.f32 1.0, %v7429
        %v7431 = vrcp.pop %v7404
        %v7432 = vmul.f32 1.0, %v7431
        %v7433 = vrcp.pop %v7405
        %v7434 = vmul.f32 1.0, %v7433
        %v7435 = vrcp.pop %v7406
        %v7436 = vmul.f32 1.0, %v7435
        %v7437 = vrcp.pop %v7407
        %v7438 = vmul.f32 1.0, %v7437
        %v7439 = vrcp.pop %v7408
        %v7440 = vmul.f32 1.0, %v7439
        %v7441 = vxor.u32 %v7156, 2147483648
        %v7442 = vxor.u32 %v7160, 2147483648
        %v7443 = vxor.u32 %v7166, 2147483648
        %v7444 = vxor.u32 %v7170, 2147483648
        %v7445 = vxor.u32 %v7176, 2147483648
        %v7446 = vxor.u32 %v7180, 2147483648
        %v7447 = vxor.u32 %v7186, 2147483648
        %v7448 = vxor.u32 %v7190, 2147483648
        %v7449 = vxor.u32 %v7196, 2147483648
        %v7450 = vxor.u32 %v7200, 2147483648
        %v7451 = vxor.u32 %v7206, 2147483648
        %v7452 = vxor.u32 %v7210, 2147483648
        %v7453 = vxor.u32 %v7216, 2147483648
        %v7454 = vxor.u32 %v7220, 2147483648
        %v7455 = vxor.u32 %v7226, 2147483648
        %v7456 = vxor.u32 %v7230, 2147483648
        %v7457 = vmul.f32 %v7441, 1.442695
        %v7458 = vpow.pop %v7457
        %v7459 = vmul.f32 %v7442, 1.442695
        %v7460 = vpow.pop %v7459
        %v7461 = vmul.f32 %v7443, 1.442695
        %v7462 = vpow.pop %v7461
        %v7463 = vmul.f32 %v7444, 1.442695
        %v7464 = vpow.pop %v7463
        %v7465 = vmul.f32 %v7445, 1.442695
        %v7466 = vpow.pop %v7465
        %v7467 = vmul.f32 %v7446, 1.442695
        %v7468 = vpow.pop %v7467
        %v7469 = vmul.f32 %v7447, 1.442695
        %v7470 = vpow.pop %v7469
        %v7471 = vmul.f32 %v7448, 1.442695
        %v7472 = vpow.pop %v7471
        %v7473 = vmul.f32 %v7449, 1.442695
        %v7474 = vpow.pop %v7473
        %v7475 = vmul.f32 %v7450, 1.442695
        %v7476 = vpow.pop %v7475
        %v7477 = vmul.f32 %v7451, 1.442695
        %v7478 = vpow.pop %v7477
        %v7479 = vmul.f32 %v7452, 1.442695
        %v7480 = vpow.pop %v7479
        %v7481 = vmul.f32 %v7453, 1.442695
        %v7482 = vpow.pop %v7481
        %v7483 = vmul.f32 %v7454, 1.442695
        %v7484 = vpow.pop %v7483
        %v7485 = vmul.f32 %v7455, 1.442695
        %v7486 = vpow.pop %v7485
        %v7487 = vmul.f32 %v7456, 1.442695
        %v7488 = vpow.pop %v7487
        %v7489 = vadd.f32 %v7458, 1.0
        %v7490 = vadd.f32 %v7460, 1.0
        %v7491 = vadd.f32 %v7462, 1.0
        %v7492 = vadd.f32 %v7464, 1.0
        %v7493 = vadd.f32 %v7466, 1.0
        %v7494 = vadd.f32 %v7468, 1.0
        %v7495 = vadd.f32 %v7470, 1.0
        %v7496 = vadd.f32 %v7472, 1.0
        %v7497 = vadd.f32 %v7474, 1.0
        %v7498 = vadd.f32 %v7476, 1.0
        %v7499 = vadd.f32 %v7478, 1.0
        %v7500 = vadd.f32 %v7480, 1.0
        %v7501 = vadd.f32 %v7482, 1.0
        %v7502 = vadd.f32 %v7484, 1.0
        %v7503 = vadd.f32 %v7486, 1.0
        %v7504 = vadd.f32 %v7488, 1.0
        %v7505 = vrcp.pop %v7489
        %v7506 = vmul.f32 1.0, %v7505
        %v7507 = vrcp.pop %v7490
        %v7508 = vmul.f32 1.0, %v7507
        %v7509 = vrcp.pop %v7491
        %v7510 = vmul.f32 1.0, %v7509
        %v7511 = vrcp.pop %v7492
        %v7512 = vmul.f32 1.0, %v7511
        %v7513 = vrcp.pop %v7493
        %v7514 = vmul.f32 1.0, %v7513
        %v7515 = vrcp.pop %v7494
        %v7516 = vmul.f32 1.0, %v7515
        %v7517 = vrcp.pop %v7495
        %v7518 = vmul.f32 1.0, %v7517
        %v7519 = vrcp.pop %v7496
        %v7520 = vmul.f32 1.0, %v7519
        %v7521 = vrcp.pop %v7497
        %v7522 = vmul.f32 1.0, %v7521
        %v7523 = vrcp.pop %v7498
        %v7524 = vmul.f32 1.0, %v7523
        %v7525 = vrcp.pop %v7499
        %v7526 = vmul.f32 1.0, %v7525
        %v7527 = vrcp.pop %v7500
        %v7528 = vmul.f32 1.0, %v7527
        %v7529 = vrcp.pop %v7501
        %v7530 = vmul.f32 1.0, %v7529
        %v7531 = vrcp.pop %v7502
        %v7532 = vmul.f32 1.0, %v7531
        %v7533 = vrcp.pop %v7503
        %v7534 = vmul.f32 1.0, %v7533
        %v7535 = vrcp.pop %v7504
        %v7536 = vmul.f32 1.0, %v7535
        %v7537 = vtanh.pop %v7267
        %v7538 = vtanh.pop %v7271
        %v7539 = vtanh.pop %v7277
        %v7540 = vtanh.pop %v7281
        %v7541 = vtanh.pop %v7287
        %v7542 = vtanh.pop %v7291
        %v7543 = vtanh.pop %v7297
        %v7544 = vtanh.pop %v7301
        %v7545 = vtanh.pop %v7307
        %v7546 = vtanh.pop %v7311
        %v7547 = vtanh.pop %v7317
        %v7548 = vtanh.pop %v7321
        %v7549 = vtanh.pop %v7327
        %v7550 = vtanh.pop %v7331
        %v7551 = vtanh.pop %v7337
        %v7552 = vtanh.pop %v7341
        %v7553 = vxor.u32 %v7269, 2147483648
        %v7554 = vxor.u32 %v7273, 2147483648
        %v7555 = vxor.u32 %v7279, 2147483648
        %v7556 = vxor.u32 %v7283, 2147483648
        %v7557 = vxor.u32 %v7289, 2147483648
        %v7558 = vxor.u32 %v7293, 2147483648
        %v7559 = vxor.u32 %v7299, 2147483648
        %v7560 = vxor.u32 %v7303, 2147483648
        %v7561 = vxor.u32 %v7309, 2147483648
        %v7562 = vxor.u32 %v7313, 2147483648
        %v7563 = vxor.u32 %v7319, 2147483648
        %v7564 = vxor.u32 %v7323, 2147483648
        %v7565 = vxor.u32 %v7329, 2147483648
        %v7566 = vxor.u32 %v7333, 2147483648
        %v7567 = vxor.u32 %v7339, 2147483648
        %v7568 = vxor.u32 %v7343, 2147483648
        %v7569 = vmul.f32 %v7553, 1.442695
        %v7570 = vpow.pop %v7569
        %v7571 = vmul.f32 %v7554, 1.442695
        %v7572 = vpow.pop %v7571
        %v7573 = vmul.f32 %v7555, 1.442695
        %v7574 = vpow.pop %v7573
        %v7575 = vmul.f32 %v7556, 1.442695
        %v7576 = vpow.pop %v7575
        %v7577 = vmul.f32 %v7557, 1.442695
        %v7578 = vpow.pop %v7577
        %v7579 = vmul.f32 %v7558, 1.442695
        %v7580 = vpow.pop %v7579
        %v7581 = vmul.f32 %v7559, 1.442695
        %v7582 = vpow.pop %v7581
        %v7583 = vmul.f32 %v7560, 1.442695
        %v7584 = vpow.pop %v7583
        %v7585 = vmul.f32 %v7561, 1.442695
        %v7586 = vpow.pop %v7585
        %v7587 = vmul.f32 %v7562, 1.442695
        %v7588 = vpow.pop %v7587
        %v7589 = vmul.f32 %v7563, 1.442695
        %v7590 = vpow.pop %v7589
        %v7591 = vmul.f32 %v7564, 1.442695
        %v7592 = vpow.pop %v7591
        %v7593 = vmul.f32 %v7565, 1.442695
        %v7594 = vpow.pop %v7593
        %v7595 = vmul.f32 %v7566, 1.442695
        %v7596 = vpow.pop %v7595
        %v7597 = vmul.f32 %v7567, 1.442695
        %v7598 = vpow.pop %v7597
        %v7599 = vmul.f32 %v7568, 1.442695
        %v7600 = vpow.pop %v7599
        %v7601 = vadd.f32 %v7570, 1.0
        %v7602 = vadd.f32 %v7572, 1.0
        %v7603 = vadd.f32 %v7574, 1.0
        %v7604 = vadd.f32 %v7576, 1.0
        %v7605 = vadd.f32 %v7578, 1.0
        %v7606 = vadd.f32 %v7580, 1.0
        %v7607 = vadd.f32 %v7582, 1.0
        %v7608 = vadd.f32 %v7584, 1.0
        %v7609 = vadd.f32 %v7586, 1.0
        %v7610 = vadd.f32 %v7588, 1.0
        %v7611 = vadd.f32 %v7590, 1.0
        %v7612 = vadd.f32 %v7592, 1.0
        %v7613 = vadd.f32 %v7594, 1.0
        %v7614 = vadd.f32 %v7596, 1.0
        %v7615 = vadd.f32 %v7598, 1.0
        %v7616 = vadd.f32 %v7600, 1.0
        %v7617 = vrcp.pop %v7601
        %v7618 = vmul.f32 1.0, %v7617
        %v7619 = vrcp.pop %v7602
        %v7620 = vmul.f32 1.0, %v7619
        %v7621 = vrcp.pop %v7603
        %v7622 = vmul.f32 1.0, %v7621
        %v7623 = vrcp.pop %v7604
        %v7624 = vmul.f32 1.0, %v7623
        %v7625 = vrcp.pop %v7605
        %v7626 = vmul.f32 1.0, %v7625
        %v7627 = vrcp.pop %v7606
        %v7628 = vmul.f32 1.0, %v7627
        %v7629 = vrcp.pop %v7607
        %v7630 = vmul.f32 1.0, %v7629
        %v7631 = vrcp.pop %v7608
        %v7632 = vmul.f32 1.0, %v7631
        %v7633 = vrcp.pop %v7609
        %v7634 = vmul.f32 1.0, %v7633
        %v7635 = vrcp.pop %v7610
        %v7636 = vmul.f32 1.0, %v7635
        %v7637 = vrcp.pop %v7611
        %v7638 = vmul.f32 1.0, %v7637
        %v7639 = vrcp.pop %v7612
        %v7640 = vmul.f32 1.0, %v7639
        %v7641 = vrcp.pop %v7613
        %v7642 = vmul.f32 1.0, %v7641
        %v7643 = vrcp.pop %v7614
        %v7644 = vmul.f32 1.0, %v7643
        %v7645 = vrcp.pop %v7615
        %v7646 = vmul.f32 1.0, %v7645
        %v7647 = vrcp.pop %v7616
        %v7648 = vmul.f32 1.0, %v7647
        %v7649 = vmul.f32 %v7506, %v6982
        %v7650 = vmul.f32 %v7508, %v6983
        %v7651 = vmul.f32 %v7510, %v6984
        %v7652 = vmul.f32 %v7512, %v6985
        %v7653 = vmul.f32 %v7514, %v6986
        %v7654 = vmul.f32 %v7516, %v6987
        %v7655 = vmul.f32 %v7518, %v6988
        %v7656 = vmul.f32 %v7520, %v6989
        %v7657 = vmul.f32 %v7522, %v6990
        %v7658 = vmul.f32 %v7524, %v6991
        %v7659 = vmul.f32 %v7526, %v6992
        %v7660 = vmul.f32 %v7528, %v6993
        %v7661 = vmul.f32 %v7530, %v6994
        %v7662 = vmul.f32 %v7532, %v6995
        %v7663 = vmul.f32 %v7534, %v6996
        %v7664 = vmul.f32 %v7536, %v6997
        %v7665 = vmul.f32 %v7410, %v7537
        %v7666 = vmul.f32 %v7412, %v7538
        %v7667 = vmul.f32 %v7414, %v7539
        %v7668 = vmul.f32 %v7416, %v7540
        %v7669 = vmul.f32 %v7418, %v7541
        %v7670 = vmul.f32 %v7420, %v7542
        %v7671 = vmul.f32 %v7422, %v7543
        %v7672 = vmul.f32 %v7424, %v7544
        %v7673 = vmul.f32 %v7426, %v7545
        %v7674 = vmul.f32 %v7428, %v7546
        %v7675 = vmul.f32 %v7430, %v7547
        %v7676 = vmul.f32 %v7432, %v7548
        %v7677 = vmul.f32 %v7434, %v7549
        %v7678 = vmul.f32 %v7436, %v7550
        %v7679 = vmul.f32 %v7438, %v7551
        %v7680 = vmul.f32 %v7440, %v7552
        %v7681 = vadd.f32 %v7649, %v7665
        %v7682 = vadd.f32 %v7650, %v7666
        %v7683 = vadd.f32 %v7651, %v7667
        %v7684 = vadd.f32 %v7652, %v7668
        %v7685 = vadd.f32 %v7653, %v7669
        %v7686 = vadd.f32 %v7654, %v7670
        %v7687 = vadd.f32 %v7655, %v7671
        %v7688 = vadd.f32 %v7656, %v7672
        %v7689 = vadd.f32 %v7657, %v7673
        %v7690 = vadd.f32 %v7658, %v7674
        %v7691 = vadd.f32 %v7659, %v7675
        %v7692 = vadd.f32 %v7660, %v7676
        %v7693 = vadd.f32 %v7661, %v7677
        %v7694 = vadd.f32 %v7662, %v7678
        %v7695 = vadd.f32 %v7663, %v7679
        %v7696 = vadd.f32 %v7664, %v7680
        %v7697 = vtanh.pop %v7681
        %v7698 = vtanh.pop %v7682
        %v7699 = vtanh.pop %v7683
        %v7700 = vtanh.pop %v7684
        %v7701 = vtanh.pop %v7685
        %v7702 = vtanh.pop %v7686
        %v7703 = vtanh.pop %v7687
        %v7704 = vtanh.pop %v7688
        %v7705 = vtanh.pop %v7689
        %v7706 = vtanh.pop %v7690
        %v7707 = vtanh.pop %v7691
        %v7708 = vtanh.pop %v7692
        %v7709 = vtanh.pop %v7693
        %v7710 = vtanh.pop %v7694
        %v7711 = vtanh.pop %v7695
        %v7712 = vtanh.pop %v7696
        %v7713 = vmul.f32 %v7618, %v7697
        %v7714 = vmul.f32 %v7620, %v7698
        %v7715 = vmul.f32 %v7622, %v7699
        %v7716 = vmul.f32 %v7624, %v7700
        %v7717 = vmul.f32 %v7626, %v7701
        %v7718 = vmul.f32 %v7628, %v7702
        %v7719 = vmul.f32 %v7630, %v7703
        %v7720 = vmul.f32 %v7632, %v7704
        %v7721 = vmul.f32 %v7634, %v7705
        %v7722 = vmul.f32 %v7636, %v7706
        %v7723 = vmul.f32 %v7638, %v7707
        %v7724 = vmul.f32 %v7640, %v7708
        %v7725 = vmul.f32 %v7642, %v7709
        %v7726 = vmul.f32 %v7644, %v7710
        %v7727 = vmul.f32 %v7646, %v7711
        %v7728 = vmul.f32 %v7648, %v7712
        %v7729 = vadd.f32 %v7030, %v7713
        %v7730 = vadd.f32 %v7031, %v7714
        %v7731 = vadd.f32 %v7032, %v7715
        %v7732 = vadd.f32 %v7033, %v7716
        %v7733 = vadd.f32 %v7034, %v7717
        %v7734 = vadd.f32 %v7035, %v7718
        %v7735 = vadd.f32 %v7036, %v7719
        %v7736 = vadd.f32 %v7037, %v7720
        %v7737 = vadd.f32 %v7038, %v7721
        %v7738 = vadd.f32 %v7039, %v7722
        %v7739 = vadd.f32 %v7040, %v7723
        %v7740 = vadd.f32 %v7041, %v7724
        %v7741 = vadd.f32 %v7042, %v7725
        %v7742 = vadd.f32 %v7043, %v7726
        %v7743 = vadd.f32 %v7044, %v7727
        %v7744 = vadd.f32 %v7045, %v7728
        %v7745 = vpack.c.bf16 %v7714, %v7713
        %v7746 = vpack.c.bf16 %v7716, %v7715
        %v7747 = vpack.c.bf16 %v7718, %v7717
        %v7748 = vpack.c.bf16 %v7720, %v7719
        %v7749 = vpack.c.bf16 %v7722, %v7721
        %v7750 = vpack.c.bf16 %v7724, %v7723
        %v7751 = vpack.c.bf16 %v7726, %v7725
        %v7752 = vpack.c.bf16 %v7728, %v7727
        %s7753 = scalar_lea.vmem [#allocation2], 3072
        %v7754 = vld [vmem:[%s7753] sm:$0xff]
        %v7755 = vld [vmem:[%s7753 + $0x8] sm:$0xff]
        %v7756 = vld [vmem:[%s7753 + $0x10] sm:$0xff]
        %v7757 = vld [vmem:[%s7753 + $0x18] sm:$0xff]
        %v7758 = vld [vmem:[%s7753 + $0x20] sm:$0xff]
        %v7759 = vld [vmem:[%s7753 + $0x28] sm:$0xff]
        %v7760 = vld [vmem:[%s7753 + $0x30] sm:$0xff]
        %v7761 = vld [vmem:[%s7753 + $0x38] sm:$0xff]
        %v7762 = vld [vmem:[%s7753 + $0x40] sm:$0xff]
        %v7763 = vld [vmem:[%s7753 + $0x48] sm:$0xff]
        %v7764 = vld [vmem:[%s7753 + $0x50] sm:$0xff]
        %v7765 = vld [vmem:[%s7753 + $0x58] sm:$0xff]
        %v7766 = vld [vmem:[%s7753 + $0x60] sm:$0xff]
        %v7767 = vld [vmem:[%s7753 + $0x68] sm:$0xff]
        %v7768 = vld [vmem:[%s7753 + $0x70] sm:$0xff]
        %v7769 = vld [vmem:[%s7753 + $0x78] sm:$0xff]
        %v7770 = vld [vmem:[%s7753 + $0x80] sm:$0xff]
        %v7771 = vld [vmem:[%s7753 + $0x88] sm:$0xff]
        %v7772 = vld [vmem:[%s7753 + $0x90] sm:$0xff]
        %v7773 = vld [vmem:[%s7753 + $0x98] sm:$0xff]
        %v7774 = vld [vmem:[%s7753 + $0xa0] sm:$0xff]
        %v7775 = vld [vmem:[%s7753 + $0xa8] sm:$0xff]
        %v7776 = vld [vmem:[%s7753 + $0xb0] sm:$0xff]
        %v7777 = vld [vmem:[%s7753 + $0xb8] sm:$0xff]
        %v7778 = vld [vmem:[%s7753 + $0xc0] sm:$0xff]
        %v7779 = vld [vmem:[%s7753 + $0xc8] sm:$0xff]
        %v7780 = vld [vmem:[%s7753 + $0xd0] sm:$0xff]
        %v7781 = vld [vmem:[%s7753 + $0xd8] sm:$0xff]
        %v7782 = vld [vmem:[%s7753 + $0xe0] sm:$0xff]
        %v7783 = vld [vmem:[%s7753 + $0xe8] sm:$0xff]
        %v7784 = vld [vmem:[%s7753 + $0xf0] sm:$0xff]
        %v7785 = vld [vmem:[%s7753 + $0xf8] sm:$0xff]
        %v7786 = vld [vmem:[%s7753 + $0x100] sm:$0xff]
        %v7787 = vld [vmem:[%s7753 + $0x108] sm:$0xff]
        %v7788 = vld [vmem:[%s7753 + $0x110] sm:$0xff]
        %v7789 = vld [vmem:[%s7753 + $0x118] sm:$0xff]
        %v7790 = vld [vmem:[%s7753 + $0x120] sm:$0xff]
        %v7791 = vld [vmem:[%s7753 + $0x128] sm:$0xff]
        %v7792 = vld [vmem:[%s7753 + $0x130] sm:$0xff]
        %v7793 = vld [vmem:[%s7753 + $0x138] sm:$0xff]
        %v7794 = vld [vmem:[%s7753 + $0x140] sm:$0xff]
        %v7795 = vld [vmem:[%s7753 + $0x148] sm:$0xff]
        %v7796 = vld [vmem:[%s7753 + $0x150] sm:$0xff]
        %v7797 = vld [vmem:[%s7753 + $0x158] sm:$0xff]
        %v7798 = vld [vmem:[%s7753 + $0x160] sm:$0xff]
        %v7799 = vld [vmem:[%s7753 + $0x168] sm:$0xff]
        %v7800 = vld [vmem:[%s7753 + $0x170] sm:$0xff]
        %v7801 = vld [vmem:[%s7753 + $0x178] sm:$0xff]
        %v7802 = vld [vmem:[%s7753 + $0x180] sm:$0xff]
        %v7803 = vld [vmem:[%s7753 + $0x188] sm:$0xff]
        %v7804 = vld [vmem:[%s7753 + $0x190] sm:$0xff]
        %v7805 = vld [vmem:[%s7753 + $0x198] sm:$0xff]
        %v7806 = vld [vmem:[%s7753 + $0x1a0] sm:$0xff]
        %v7807 = vld [vmem:[%s7753 + $0x1a8] sm:$0xff]
        %v7808 = vld [vmem:[%s7753 + $0x1b0] sm:$0xff]
        %v7809 = vld [vmem:[%s7753 + $0x1b8] sm:$0xff]
        %v7810 = vld [vmem:[%s7753 + $0x1c0] sm:$0xff]
        %v7811 = vld [vmem:[%s7753 + $0x1c8] sm:$0xff]
        %v7812 = vld [vmem:[%s7753 + $0x1d0] sm:$0xff]
        %v7813 = vld [vmem:[%s7753 + $0x1d8] sm:$0xff]
        %v7814 = vld [vmem:[%s7753 + $0x1e0] sm:$0xff]
        %v7815 = vld [vmem:[%s7753 + $0x1e8] sm:$0xff]
        %v7816 = vld [vmem:[%s7753 + $0x1f0] sm:$0xff]
        %v7817 = vld [vmem:[%s7753 + $0x1f8] sm:$0xff]
        %7818 = vmatprep.subr.bf16.mxu0 %v3589
        %7819 = vmatpush1.bf16.msra.mxu0 %v3588
        %7820 = vmatprep.subr.bf16.mxu0 %v3585
        %7821 = vmatpush1.bf16.msra.mxu0 %v3584
        %7822 = vmatprep.subr.bf16.mxu0 %v3581
        %7823 = vmatpush1.bf16.msra.mxu0 %v3580
        %7824 = vmatprep.subr.bf16.mxu0 %v3577
        %7825 = vmatpush1.bf16.msra.mxu0 %v3576
        %7826 = vmatprep.subr.bf16.mxu0 %v3573
        %7827 = vmatpush1.bf16.msra.mxu0 %v3572
        %7828 = vmatprep.subr.bf16.mxu0 %v3569
        %7829 = vmatpush1.bf16.msra.mxu0 %v3568
        %7830 = vmatprep.subr.bf16.mxu0 %v3565
        %7831 = vmatpush1.bf16.msra.mxu0 %v3564
        %7832 = vmatprep.subr.bf16.mxu0 %v3561
        %7833 = vmatpush1.bf16.msra.mxu0 %v3560
        %7834 = vmatprep.subr.bf16.mxu0 0
        %7835 = vmatpush2.bf16.msra.mxu0 0
        %7836 = vmatprep.subr.bf16.mxu0 0
        %7837 = vmatpush2.bf16.msra.mxu0 0
        %7838 = vmatprep.subr.bf16.mxu0 0
        %7839 = vmatpush2.bf16.msra.mxu0 0
        %7840 = vmatprep.subr.bf16.mxu0 0
        %7841 = vmatpush2.bf16.msra.mxu0 0
        %7842 = vmatprep.subr.bf16.mxu0 0
        %7843 = vmatpush2.bf16.msra.mxu0 0
        %7844 = vmatprep.subr.bf16.mxu0 0
        %7845 = vmatpush2.bf16.msra.mxu0 0
        %7846 = vmatprep.subr.bf16.mxu0 0
        %7847 = vmatpush2.bf16.msra.mxu0 0
        %7848 = vmatprep.subr.bf16.mxu0 0
        %7849 = vmatpush2.bf16.msra.mxu0 0
        %7850 = vmatprep.mubr.bf16.mxu0 0
        %7851 = vmatmul.mubr.bf16.gmra.mxu0 %v7745
        %v7852 = vpop.f32.mrf.mxu0
        %v7853 = vadd.f32 %v7754, %v7852
        %v7854 = vpop.f32.mrf.mxu0
        %v7855 = vadd.f32 %v7755, %v7854
        %v7856 = vpop.f32.mrf.mxu0
        %v7857 = vadd.f32 %v7758, %v7856
        %v7858 = vpop.f32.mrf.mxu0
        %v7859 = vadd.f32 %v7759, %v7858
        %7860 = vmatprep.mubr.bf16.mxu0 0
        %7861 = vmatmul.mubr.bf16.gmra.mxu0 %v7746
        %v7862 = vpop.f32.mrf.mxu0
        %v7863 = vadd.f32 %v7762, %v7862
        %v7864 = vpop.f32.mrf.mxu0
        %v7865 = vadd.f32 %v7763, %v7864
        %v7866 = vpop.f32.mrf.mxu0
        %v7867 = vadd.f32 %v7766, %v7866
        %v7868 = vpop.f32.mrf.mxu0
        %v7869 = vadd.f32 %v7767, %v7868
        %7870 = vmatprep.mubr.bf16.mxu0 0
        %7871 = vmatmul.mubr.bf16.gmra.mxu0 %v7747
        %v7872 = vpop.f32.mrf.mxu0
        %v7873 = vadd.f32 %v7770, %v7872
        %v7874 = vpop.f32.mrf.mxu0
        %v7875 = vadd.f32 %v7771, %v7874
        %v7876 = vpop.f32.mrf.mxu0
        %v7877 = vadd.f32 %v7774, %v7876
        %v7878 = vpop.f32.mrf.mxu0
        %v7879 = vadd.f32 %v7775, %v7878
        %7880 = vmatprep.mubr.bf16.mxu0 0
        %7881 = vmatmul.mubr.bf16.gmra.mxu0 %v7748
        %v7882 = vpop.f32.mrf.mxu0
        %v7883 = vadd.f32 %v7778, %v7882
        %v7884 = vpop.f32.mrf.mxu0
        %v7885 = vadd.f32 %v7779, %v7884
        %v7886 = vpop.f32.mrf.mxu0
        %v7887 = vadd.f32 %v7782, %v7886
        %v7888 = vpop.f32.mrf.mxu0
        %v7889 = vadd.f32 %v7783, %v7888
        %7890 = vmatprep.mubr.bf16.mxu0 0
        %7891 = vmatmul.mubr.bf16.gmra.mxu0 %v7749
        %v7892 = vpop.f32.mrf.mxu0
        %v7893 = vadd.f32 %v7786, %v7892
        %v7894 = vpop.f32.mrf.mxu0
        %v7895 = vadd.f32 %v7787, %v7894
        %v7896 = vpop.f32.mrf.mxu0
        %v7897 = vadd.f32 %v7790, %v7896
        %v7898 = vpop.f32.mrf.mxu0
        %v7899 = vadd.f32 %v7791, %v7898
        %7900 = vmatprep.mubr.bf16.mxu0 0
        %7901 = vmatmul.mubr.bf16.gmra.mxu0 %v7750
        %v7902 = vpop.f32.mrf.mxu0
        %v7903 = vadd.f32 %v7794, %v7902
        %v7904 = vpop.f32.mrf.mxu0
        %v7905 = vadd.f32 %v7795, %v7904
        %v7906 = vpop.f32.mrf.mxu0
        %v7907 = vadd.f32 %v7798, %v7906
        %v7908 = vpop.f32.mrf.mxu0
        %v7909 = vadd.f32 %v7799, %v7908
        %7910 = vmatprep.mubr.bf16.mxu0 0
        %7911 = vmatmul.mubr.bf16.gmra.mxu0 %v7751
        %v7912 = vpop.f32.mrf.mxu0
        %v7913 = vadd.f32 %v7802, %v7912
        %v7914 = vpop.f32.mrf.mxu0
        %v7915 = vadd.f32 %v7803, %v7914
        %v7916 = vpop.f32.mrf.mxu0
        %v7917 = vadd.f32 %v7806, %v7916
        %v7918 = vpop.f32.mrf.mxu0
        %v7919 = vadd.f32 %v7807, %v7918
        %7920 = vmatprep.mubr.bf16.mxu0 0
        %7921 = vmatmul.mubr.bf16.gmra.mxu0 %v7752
        %v7922 = vpop.f32.mrf.mxu0
        %v7923 = vadd.f32 %v7810, %v7922
        %v7924 = vpop.f32.mrf.mxu0
        %v7925 = vadd.f32 %v7811, %v7924
        %v7926 = vpop.f32.mrf.mxu0
        %v7927 = vadd.f32 %v7814, %v7926
        %v7928 = vpop.f32.mrf.mxu0
        %v7929 = vadd.f32 %v7815, %v7928
        %7930 = vdwg.mxu0
        %7931 = vmatprep.subr.bf16.mxu0 %v3591
        %7932 = vmatpush1.bf16.msra.mxu0 %v3590
        %7933 = vmatprep.subr.bf16.mxu0 %v3587
        %7934 = vmatpush1.bf16.msra.mxu0 %v3586
        %7935 = vmatprep.subr.bf16.mxu0 %v3583
        %7936 = vmatpush1.bf16.msra.mxu0 %v3582
        %7937 = vmatprep.subr.bf16.mxu0 %v3579
        %7938 = vmatpush1.bf16.msra.mxu0 %v3578
        %7939 = vmatprep.subr.bf16.mxu0 %v3575
        %7940 = vmatpush1.bf16.msra.mxu0 %v3574
        %7941 = vmatprep.subr.bf16.mxu0 %v3571
        %7942 = vmatpush1.bf16.msra.mxu0 %v3570
        %7943 = vmatprep.subr.bf16.mxu0 %v3567
        %7944 = vmatpush1.bf16.msra.mxu0 %v3566
        %7945 = vmatprep.subr.bf16.mxu0 %v3563
        %7946 = vmatpush1.bf16.msra.mxu0 %v3562
        %7947 = vmatprep.subr.bf16.mxu0 0
        %7948 = vmatpush2.bf16.msra.mxu0 0
        %7949 = vmatprep.subr.bf16.mxu0 0
        %7950 = vmatpush2.bf16.msra.mxu0 0
        %7951 = vmatprep.subr.bf16.mxu0 0
        %7952 = vmatpush2.bf16.msra.mxu0 0
        %7953 = vmatprep.subr.bf16.mxu0 0
        %7954 = vmatpush2.bf16.msra.mxu0 0
        %7955 = vmatprep.subr.bf16.mxu0 0
        %7956 = vmatpush2.bf16.msra.mxu0 0
        %7957 = vmatprep.subr.bf16.mxu0 0
        %7958 = vmatpush2.bf16.msra.mxu0 0
        %7959 = vmatprep.subr.bf16.mxu0 0
        %7960 = vmatpush2.bf16.msra.mxu0 0
        %7961 = vmatprep.subr.bf16.mxu0 0
        %7962 = vmatpush2.bf16.msra.mxu0 0
        %7963 = vmatprep.mubr.bf16.mxu0 0
        %7964 = vmatmul.mubr.bf16.gmra.mxu0 %v7745
        %v7965 = vpop.f32.mrf.mxu0
        %v7966 = vadd.f32 %v7756, %v7965
        %v7967 = vpop.f32.mrf.mxu0
        %v7968 = vadd.f32 %v7757, %v7967
        %v7969 = vpop.f32.mrf.mxu0
        %v7970 = vadd.f32 %v7760, %v7969
        %v7971 = vpop.f32.mrf.mxu0
        %v7972 = vadd.f32 %v7761, %v7971
        %7973 = vmatprep.mubr.bf16.mxu0 0
        %7974 = vmatmul.mubr.bf16.gmra.mxu0 %v7746
        %v7975 = vpop.f32.mrf.mxu0
        %v7976 = vadd.f32 %v7764, %v7975
        %v7977 = vpop.f32.mrf.mxu0
        %v7978 = vadd.f32 %v7765, %v7977
        %v7979 = vpop.f32.mrf.mxu0
        %v7980 = vadd.f32 %v7768, %v7979
        %v7981 = vpop.f32.mrf.mxu0
        %v7982 = vadd.f32 %v7769, %v7981
        %7983 = vmatprep.mubr.bf16.mxu0 0
        %7984 = vmatmul.mubr.bf16.gmra.mxu0 %v7747
        %v7985 = vpop.f32.mrf.mxu0
        %v7986 = vadd.f32 %v7772, %v7985
        %v7987 = vpop.f32.mrf.mxu0
        %v7988 = vadd.f32 %v7773, %v7987
        %v7989 = vpop.f32.mrf.mxu0
        %v7990 = vadd.f32 %v7776, %v7989
        %v7991 = vpop.f32.mrf.mxu0
        %v7992 = vadd.f32 %v7777, %v7991
        %7993 = vmatprep.mubr.bf16.mxu0 0
        %7994 = vmatmul.mubr.bf16.gmra.mxu0 %v7748
        %v7995 = vpop.f32.mrf.mxu0
        %v7996 = vadd.f32 %v7780, %v7995
        %v7997 = vpop.f32.mrf.mxu0
        %v7998 = vadd.f32 %v7781, %v7997
        %v7999 = vpop.f32.mrf.mxu0
        %v8000 = vadd.f32 %v7784, %v7999
        %v8001 = vpop.f32.mrf.mxu0
        %v8002 = vadd.f32 %v7785, %v8001
        %8003 = vmatprep.mubr.bf16.mxu0 0
        %8004 = vmatmul.mubr.bf16.gmra.mxu0 %v7749
        %v8005 = vpop.f32.mrf.mxu0
        %v8006 = vadd.f32 %v7788, %v8005
        %v8007 = vpop.f32.mrf.mxu0
        %v8008 = vadd.f32 %v7789, %v8007
        %v8009 = vpop.f32.mrf.mxu0
        %v8010 = vadd.f32 %v7792, %v8009
        %v8011 = vpop.f32.mrf.mxu0
        %v8012 = vadd.f32 %v7793, %v8011
        %8013 = vmatprep.mubr.bf16.mxu0 0
        %8014 = vmatmul.mubr.bf16.gmra.mxu0 %v7750
        %v8015 = vpop.f32.mrf.mxu0
        %v8016 = vadd.f32 %v7796, %v8015
        %v8017 = vpop.f32.mrf.mxu0
        %v8018 = vadd.f32 %v7797, %v8017
        %v8019 = vpop.f32.mrf.mxu0
        %v8020 = vadd.f32 %v7800, %v8019
        %v8021 = vpop.f32.mrf.mxu0
        %v8022 = vadd.f32 %v7801, %v8021
        %8023 = vmatprep.mubr.bf16.mxu0 0
        %8024 = vmatmul.mubr.bf16.gmra.mxu0 %v7751
        %v8025 = vpop.f32.mrf.mxu0
        %v8026 = vadd.f32 %v7804, %v8025
        %v8027 = vpop.f32.mrf.mxu0
        %v8028 = vadd.f32 %v7805, %v8027
        %v8029 = vpop.f32.mrf.mxu0
        %v8030 = vadd.f32 %v7808, %v8029
        %v8031 = vpop.f32.mrf.mxu0
        %v8032 = vadd.f32 %v7809, %v8031
        %8033 = vmatprep.mubr.bf16.mxu0 0
        %8034 = vmatmul.mubr.bf16.gmra.mxu0 %v7752
        %v8035 = vpop.f32.mrf.mxu0
        %v8036 = vadd.f32 %v7812, %v8035
        %v8037 = vpop.f32.mrf.mxu0
        %v8038 = vadd.f32 %v7813, %v8037
        %v8039 = vpop.f32.mrf.mxu0
        %v8040 = vadd.f32 %v7816, %v8039
        %v8041 = vpop.f32.mrf.mxu0
        %v8042 = vadd.f32 %v7817, %v8041
        %8043 = vdwg.mxu0
        %v8044 = vxor.u32 %v7853, 2147483648
        %v8045 = vxor.u32 %v7857, 2147483648
        %v8046 = vxor.u32 %v7863, 2147483648
        %v8047 = vxor.u32 %v7867, 2147483648
        %v8048 = vxor.u32 %v7873, 2147483648
        %v8049 = vxor.u32 %v7877, 2147483648
        %v8050 = vxor.u32 %v7883, 2147483648
        %v8051 = vxor.u32 %v7887, 2147483648
        %v8052 = vxor.u32 %v7893, 2147483648
        %v8053 = vxor.u32 %v7897, 2147483648
        %v8054 = vxor.u32 %v7903, 2147483648
        %v8055 = vxor.u32 %v7907, 2147483648
        %v8056 = vxor.u32 %v7913, 2147483648
        %v8057 = vxor.u32 %v7917, 2147483648
        %v8058 = vxor.u32 %v7923, 2147483648
        %v8059 = vxor.u32 %v7927, 2147483648
        %v8060 = vmul.f32 %v8044, 1.442695
        %v8061 = vpow.pop %v8060
        %v8062 = vmul.f32 %v8045, 1.442695
        %v8063 = vpow.pop %v8062
        %v8064 = vmul.f32 %v8046, 1.442695
        %v8065 = vpow.pop %v8064
        %v8066 = vmul.f32 %v8047, 1.442695
        %v8067 = vpow.pop %v8066
        %v8068 = vmul.f32 %v8048, 1.442695
        %v8069 = vpow.pop %v8068
        %v8070 = vmul.f32 %v8049, 1.442695
        %v8071 = vpow.pop %v8070
        %v8072 = vmul.f32 %v8050, 1.442695
        %v8073 = vpow.pop %v8072
        %v8074 = vmul.f32 %v8051, 1.442695
        %v8075 = vpow.pop %v8074
        %v8076 = vmul.f32 %v8052, 1.442695
        %v8077 = vpow.pop %v8076
        %v8078 = vmul.f32 %v8053, 1.442695
        %v8079 = vpow.pop %v8078
        %v8080 = vmul.f32 %v8054, 1.442695
        %v8081 = vpow.pop %v8080
        %v8082 = vmul.f32 %v8055, 1.442695
        %v8083 = vpow.pop %v8082
        %v8084 = vmul.f32 %v8056, 1.442695
        %v8085 = vpow.pop %v8084
        %v8086 = vmul.f32 %v8057, 1.442695
        %v8087 = vpow.pop %v8086
        %v8088 = vmul.f32 %v8058, 1.442695
        %v8089 = vpow.pop %v8088
        %v8090 = vmul.f32 %v8059, 1.442695
        %v8091 = vpow.pop %v8090
        %v8092 = vadd.f32 %v8061, 1.0
        %v8093 = vadd.f32 %v8063, 1.0
        %v8094 = vadd.f32 %v8065, 1.0
        %v8095 = vadd.f32 %v8067, 1.0
        %v8096 = vadd.f32 %v8069, 1.0
        %v8097 = vadd.f32 %v8071, 1.0
        %v8098 = vadd.f32 %v8073, 1.0
        %v8099 = vadd.f32 %v8075, 1.0
        %v8100 = vadd.f32 %v8077, 1.0
        %v8101 = vadd.f32 %v8079, 1.0
        %v8102 = vadd.f32 %v8081, 1.0
        %v8103 = vadd.f32 %v8083, 1.0
        %v8104 = vadd.f32 %v8085, 1.0
        %v8105 = vadd.f32 %v8087, 1.0
        %v8106 = vadd.f32 %v8089, 1.0
        %v8107 = vadd.f32 %v8091, 1.0
        %v8108 = vrcp.pop %v8092
        %v8109 = vmul.f32 1.0, %v8108
        %v8110 = vrcp.pop %v8093
        %v8111 = vmul.f32 1.0, %v8110
        %v8112 = vrcp.pop %v8094
        %v8113 = vmul.f32 1.0, %v8112
        %v8114 = vrcp.pop %v8095
        %v8115 = vmul.f32 1.0, %v8114
        %v8116 = vrcp.pop %v8096
        %v8117 = vmul.f32 1.0, %v8116
        %v8118 = vrcp.pop %v8097
        %v8119 = vmul.f32 1.0, %v8118
        %v8120 = vrcp.pop %v8098
        %v8121 = vmul.f32 1.0, %v8120
        %v8122 = vrcp.pop %v8099
        %v8123 = vmul.f32 1.0, %v8122
        %v8124 = vrcp.pop %v8100
        %v8125 = vmul.f32 1.0, %v8124
        %v8126 = vrcp.pop %v8101
        %v8127 = vmul.f32 1.0, %v8126
        %v8128 = vrcp.pop %v8102
        %v8129 = vmul.f32 1.0, %v8128
        %v8130 = vrcp.pop %v8103
        %v8131 = vmul.f32 1.0, %v8130
        %v8132 = vrcp.pop %v8104
        %v8133 = vmul.f32 1.0, %v8132
        %v8134 = vrcp.pop %v8105
        %v8135 = vmul.f32 1.0, %v8134
        %v8136 = vrcp.pop %v8106
        %v8137 = vmul.f32 1.0, %v8136
        %v8138 = vrcp.pop %v8107
        %v8139 = vmul.f32 1.0, %v8138
        %v8140 = vxor.u32 %v7855, 2147483648
        %v8141 = vxor.u32 %v7859, 2147483648
        %v8142 = vxor.u32 %v7865, 2147483648
        %v8143 = vxor.u32 %v7869, 2147483648
        %v8144 = vxor.u32 %v7875, 2147483648
        %v8145 = vxor.u32 %v7879, 2147483648
        %v8146 = vxor.u32 %v7885, 2147483648
        %v8147 = vxor.u32 %v7889, 2147483648
        %v8148 = vxor.u32 %v7895, 2147483648
        %v8149 = vxor.u32 %v7899, 2147483648
        %v8150 = vxor.u32 %v7905, 2147483648
        %v8151 = vxor.u32 %v7909, 2147483648
        %v8152 = vxor.u32 %v7915, 2147483648
        %v8153 = vxor.u32 %v7919, 2147483648
        %v8154 = vxor.u32 %v7925, 2147483648
        %v8155 = vxor.u32 %v7929, 2147483648
        %v8156 = vmul.f32 %v8140, 1.442695
        %v8157 = vpow.pop %v8156
        %v8158 = vmul.f32 %v8141, 1.442695
        %v8159 = vpow.pop %v8158
        %v8160 = vmul.f32 %v8142, 1.442695
        %v8161 = vpow.pop %v8160
        %v8162 = vmul.f32 %v8143, 1.442695
        %v8163 = vpow.pop %v8162
        %v8164 = vmul.f32 %v8144, 1.442695
        %v8165 = vpow.pop %v8164
        %v8166 = vmul.f32 %v8145, 1.442695
        %v8167 = vpow.pop %v8166
        %v8168 = vmul.f32 %v8146, 1.442695
        %v8169 = vpow.pop %v8168
        %v8170 = vmul.f32 %v8147, 1.442695
        %v8171 = vpow.pop %v8170
        %v8172 = vmul.f32 %v8148, 1.442695
        %v8173 = vpow.pop %v8172
        %v8174 = vmul.f32 %v8149, 1.442695
        %v8175 = vpow.pop %v8174
        %v8176 = vmul.f32 %v8150, 1.442695
        %v8177 = vpow.pop %v8176
        %v8178 = vmul.f32 %v8151, 1.442695
        %v8179 = vpow.pop %v8178
        %v8180 = vmul.f32 %v8152, 1.442695
        %v8181 = vpow.pop %v8180
        %v8182 = vmul.f32 %v8153, 1.442695
        %v8183 = vpow.pop %v8182
        %v8184 = vmul.f32 %v8154, 1.442695
        %v8185 = vpow.pop %v8184
        %v8186 = vmul.f32 %v8155, 1.442695
        %v8187 = vpow.pop %v8186
        %v8188 = vadd.f32 %v8157, 1.0
        %v8189 = vadd.f32 %v8159, 1.0
        %v8190 = vadd.f32 %v8161, 1.0
        %v8191 = vadd.f32 %v8163, 1.0
        %v8192 = vadd.f32 %v8165, 1.0
        %v8193 = vadd.f32 %v8167, 1.0
        %v8194 = vadd.f32 %v8169, 1.0
        %v8195 = vadd.f32 %v8171, 1.0
        %v8196 = vadd.f32 %v8173, 1.0
        %v8197 = vadd.f32 %v8175, 1.0
        %v8198 = vadd.f32 %v8177, 1.0
        %v8199 = vadd.f32 %v8179, 1.0
        %v8200 = vadd.f32 %v8181, 1.0
        %v8201 = vadd.f32 %v8183, 1.0
        %v8202 = vadd.f32 %v8185, 1.0
        %v8203 = vadd.f32 %v8187, 1.0
        %v8204 = vrcp.pop %v8188
        %v8205 = vmul.f32 1.0, %v8204
        %v8206 = vrcp.pop %v8189
        %v8207 = vmul.f32 1.0, %v8206
        %v8208 = vrcp.pop %v8190
        %v8209 = vmul.f32 1.0, %v8208
        %v8210 = vrcp.pop %v8191
        %v8211 = vmul.f32 1.0, %v8210
        %v8212 = vrcp.pop %v8192
        %v8213 = vmul.f32 1.0, %v8212
        %v8214 = vrcp.pop %v8193
        %v8215 = vmul.f32 1.0, %v8214
        %v8216 = vrcp.pop %v8194
        %v8217 = vmul.f32 1.0, %v8216
        %v8218 = vrcp.pop %v8195
        %v8219 = vmul.f32 1.0, %v8218
        %v8220 = vrcp.pop %v8196
        %v8221 = vmul.f32 1.0, %v8220
        %v8222 = vrcp.pop %v8197
        %v8223 = vmul.f32 1.0, %v8222
        %v8224 = vrcp.pop %v8198
        %v8225 = vmul.f32 1.0, %v8224
        %v8226 = vrcp.pop %v8199
        %v8227 = vmul.f32 1.0, %v8226
        %v8228 = vrcp.pop %v8200
        %v8229 = vmul.f32 1.0, %v8228
        %v8230 = vrcp.pop %v8201
        %v8231 = vmul.f32 1.0, %v8230
        %v8232 = vrcp.pop %v8202
        %v8233 = vmul.f32 1.0, %v8232
        %v8234 = vrcp.pop %v8203
        %v8235 = vmul.f32 1.0, %v8234
        %v8236 = vtanh.pop %v7966
        %v8237 = vtanh.pop %v7970
        %v8238 = vtanh.pop %v7976
        %v8239 = vtanh.pop %v7980
        %v8240 = vtanh.pop %v7986
        %v8241 = vtanh.pop %v7990
        %v8242 = vtanh.pop %v7996
        %v8243 = vtanh.pop %v8000
        %v8244 = vtanh.pop %v8006
        %v8245 = vtanh.pop %v8010
        %v8246 = vtanh.pop %v8016
        %v8247 = vtanh.pop %v8020
        %v8248 = vtanh.pop %v8026
        %v8249 = vtanh.pop %v8030
        %v8250 = vtanh.pop %v8036
        %v8251 = vtanh.pop %v8040
        %v8252 = vxor.u32 %v7968, 2147483648
        %v8253 = vxor.u32 %v7972, 2147483648
        %v8254 = vxor.u32 %v7978, 2147483648
        %v8255 = vxor.u32 %v7982, 2147483648
        %v8256 = vxor.u32 %v7988, 2147483648
        %v8257 = vxor.u32 %v7992, 2147483648
        %v8258 = vxor.u32 %v7998, 2147483648
        %v8259 = vxor.u32 %v8002, 2147483648
        %v8260 = vxor.u32 %v8008, 2147483648
        %v8261 = vxor.u32 %v8012, 2147483648
        %v8262 = vxor.u32 %v8018, 2147483648
        %v8263 = vxor.u32 %v8022, 2147483648
        %v8264 = vxor.u32 %v8028, 2147483648
        %v8265 = vxor.u32 %v8032, 2147483648
        %v8266 = vxor.u32 %v8038, 2147483648
        %v8267 = vxor.u32 %v8042, 2147483648
        %v8268 = vmul.f32 %v8252, 1.442695
        %v8269 = vpow.pop %v8268
        %v8270 = vmul.f32 %v8253, 1.442695
        %v8271 = vpow.pop %v8270
        %v8272 = vmul.f32 %v8254, 1.442695
        %v8273 = vpow.pop %v8272
        %v8274 = vmul.f32 %v8255, 1.442695
        %v8275 = vpow.pop %v8274
        %v8276 = vmul.f32 %v8256, 1.442695
        %v8277 = vpow.pop %v8276
        %v8278 = vmul.f32 %v8257, 1.442695
        %v8279 = vpow.pop %v8278
        %v8280 = vmul.f32 %v8258, 1.442695
        %v8281 = vpow.pop %v8280
        %v8282 = vmul.f32 %v8259, 1.442695
        %v8283 = vpow.pop %v8282
        %v8284 = vmul.f32 %v8260, 1.442695
        %v8285 = vpow.pop %v8284
        %v8286 = vmul.f32 %v8261, 1.442695
        %v8287 = vpow.pop %v8286
        %v8288 = vmul.f32 %v8262, 1.442695
        %v8289 = vpow.pop %v8288
        %v8290 = vmul.f32 %v8263, 1.442695
        %v8291 = vpow.pop %v8290
        %v8292 = vmul.f32 %v8264, 1.442695
        %v8293 = vpow.pop %v8292
        %v8294 = vmul.f32 %v8265, 1.442695
        %v8295 = vpow.pop %v8294
        %v8296 = vmul.f32 %v8266, 1.442695
        %v8297 = vpow.pop %v8296
        %v8298 = vmul.f32 %v8267, 1.442695
        %v8299 = vpow.pop %v8298
        %v8300 = vadd.f32 %v8269, 1.0
        %v8301 = vadd.f32 %v8271, 1.0
        %v8302 = vadd.f32 %v8273, 1.0
        %v8303 = vadd.f32 %v8275, 1.0
        %v8304 = vadd.f32 %v8277, 1.0
        %v8305 = vadd.f32 %v8279, 1.0
        %v8306 = vadd.f32 %v8281, 1.0
        %v8307 = vadd.f32 %v8283, 1.0
        %v8308 = vadd.f32 %v8285, 1.0
        %v8309 = vadd.f32 %v8287, 1.0
        %v8310 = vadd.f32 %v8289, 1.0
        %v8311 = vadd.f32 %v8291, 1.0
        %v8312 = vadd.f32 %v8293, 1.0
        %v8313 = vadd.f32 %v8295, 1.0
        %v8314 = vadd.f32 %v8297, 1.0
        %v8315 = vadd.f32 %v8299, 1.0
        %v8316 = vrcp.pop %v8300
        %v8317 = vmul.f32 1.0, %v8316
        %v8318 = vrcp.pop %v8301
        %v8319 = vmul.f32 1.0, %v8318
        %v8320 = vrcp.pop %v8302
        %v8321 = vmul.f32 1.0, %v8320
        %v8322 = vrcp.pop %v8303
        %v8323 = vmul.f32 1.0, %v8322
        %v8324 = vrcp.pop %v8304
        %v8325 = vmul.f32 1.0, %v8324
        %v8326 = vrcp.pop %v8305
        %v8327 = vmul.f32 1.0, %v8326
        %v8328 = vrcp.pop %v8306
        %v8329 = vmul.f32 1.0, %v8328
        %v8330 = vrcp.pop %v8307
        %v8331 = vmul.f32 1.0, %v8330
        %v8332 = vrcp.pop %v8308
        %v8333 = vmul.f32 1.0, %v8332
        %v8334 = vrcp.pop %v8309
        %v8335 = vmul.f32 1.0, %v8334
        %v8336 = vrcp.pop %v8310
        %v8337 = vmul.f32 1.0, %v8336
        %v8338 = vrcp.pop %v8311
        %v8339 = vmul.f32 1.0, %v8338
        %v8340 = vrcp.pop %v8312
        %v8341 = vmul.f32 1.0, %v8340
        %v8342 = vrcp.pop %v8313
        %v8343 = vmul.f32 1.0, %v8342
        %v8344 = vrcp.pop %v8314
        %v8345 = vmul.f32 1.0, %v8344
        %v8346 = vrcp.pop %v8315
        %v8347 = vmul.f32 1.0, %v8346
        %v8348 = vmul.f32 %v8205, %v7681
        %v8349 = vmul.f32 %v8207, %v7682
        %v8350 = vmul.f32 %v8209, %v7683
        %v8351 = vmul.f32 %v8211, %v7684
        %v8352 = vmul.f32 %v8213, %v7685
        %v8353 = vmul.f32 %v8215, %v7686
        %v8354 = vmul.f32 %v8217, %v7687
        %v8355 = vmul.f32 %v8219, %v7688
        %v8356 = vmul.f32 %v8221, %v7689
        %v8357 = vmul.f32 %v8223, %v7690
        %v8358 = vmul.f32 %v8225, %v7691
        %v8359 = vmul.f32 %v8227, %v7692
        %v8360 = vmul.f32 %v8229, %v7693
        %v8361 = vmul.f32 %v8231, %v7694
        %v8362 = vmul.f32 %v8233, %v7695
        %v8363 = vmul.f32 %v8235, %v7696
        %v8364 = vmul.f32 %v8109, %v8236
        %v8365 = vmul.f32 %v8111, %v8237
        %v8366 = vmul.f32 %v8113, %v8238
        %v8367 = vmul.f32 %v8115, %v8239
        %v8368 = vmul.f32 %v8117, %v8240
        %v8369 = vmul.f32 %v8119, %v8241
        %v8370 = vmul.f32 %v8121, %v8242
        %v8371 = vmul.f32 %v8123, %v8243
        %v8372 = vmul.f32 %v8125, %v8244
        %v8373 = vmul.f32 %v8127, %v8245
        %v8374 = vmul.f32 %v8129, %v8246
        %v8375 = vmul.f32 %v8131, %v8247
        %v8376 = vmul.f32 %v8133, %v8248
        %v8377 = vmul.f32 %v8135, %v8249
        %v8378 = vmul.f32 %v8137, %v8250
        %v8379 = vmul.f32 %v8139, %v8251
        %v8380 = vadd.f32 %v8348, %v8364
        %v8381 = vadd.f32 %v8349, %v8365
        %v8382 = vadd.f32 %v8350, %v8366
        %v8383 = vadd.f32 %v8351, %v8367
        %v8384 = vadd.f32 %v8352, %v8368
        %v8385 = vadd.f32 %v8353, %v8369
        %v8386 = vadd.f32 %v8354, %v8370
        %v8387 = vadd.f32 %v8355, %v8371
        %v8388 = vadd.f32 %v8356, %v8372
        %v8389 = vadd.f32 %v8357, %v8373
        %v8390 = vadd.f32 %v8358, %v8374
        %v8391 = vadd.f32 %v8359, %v8375
        %v8392 = vadd.f32 %v8360, %v8376
        %v8393 = vadd.f32 %v8361, %v8377
        %v8394 = vadd.f32 %v8362, %v8378
        %v8395 = vadd.f32 %v8363, %v8379
        %v8396 = vtanh.pop %v8380
        %v8397 = vtanh.pop %v8381
        %v8398 = vtanh.pop %v8382
        %v8399 = vtanh.pop %v8383
        %v8400 = vtanh.pop %v8384
        %v8401 = vtanh.pop %v8385
        %v8402 = vtanh.pop %v8386
        %v8403 = vtanh.pop %v8387
        %v8404 = vtanh.pop %v8388
        %v8405 = vtanh.pop %v8389
        %v8406 = vtanh.pop %v8390
        %v8407 = vtanh.pop %v8391
        %v8408 = vtanh.pop %v8392
        %v8409 = vtanh.pop %v8393
        %v8410 = vtanh.pop %v8394
        %v8411 = vtanh.pop %v8395
        %v8412 = vmul.f32 %v8317, %v8396
        %v8413 = vmul.f32 %v8319, %v8397
        %v8414 = vmul.f32 %v8321, %v8398
        %v8415 = vmul.f32 %v8323, %v8399
        %v8416 = vmul.f32 %v8325, %v8400
        %v8417 = vmul.f32 %v8327, %v8401
        %v8418 = vmul.f32 %v8329, %v8402
        %v8419 = vmul.f32 %v8331, %v8403
        %v8420 = vmul.f32 %v8333, %v8404
        %v8421 = vmul.f32 %v8335, %v8405
        %v8422 = vmul.f32 %v8337, %v8406
        %v8423 = vmul.f32 %v8339, %v8407
        %v8424 = vmul.f32 %v8341, %v8408
        %v8425 = vmul.f32 %v8343, %v8409
        %v8426 = vmul.f32 %v8345, %v8410
        %v8427 = vmul.f32 %v8347, %v8411
        %v8428 = vadd.f32 %v7729, %v8412
        %v8429 = vadd.f32 %v7730, %v8413
        %v8430 = vadd.f32 %v7731, %v8414
        %v8431 = vadd.f32 %v7732, %v8415
        %v8432 = vadd.f32 %v7733, %v8416
        %v8433 = vadd.f32 %v7734, %v8417
        %v8434 = vadd.f32 %v7735, %v8418
        %v8435 = vadd.f32 %v7736, %v8419
        %v8436 = vadd.f32 %v7737, %v8420
        %v8437 = vadd.f32 %v7738, %v8421
        %v8438 = vadd.f32 %v7739, %v8422
        %v8439 = vadd.f32 %v7740, %v8423
        %v8440 = vadd.f32 %v7741, %v8424
        %v8441 = vadd.f32 %v7742, %v8425
        %v8442 = vadd.f32 %v7743, %v8426
        %v8443 = vadd.f32 %v7744, %v8427
        %v8444 = vpack.c.bf16 %v8413, %v8412
        %v8445 = vpack.c.bf16 %v8415, %v8414
        %v8446 = vpack.c.bf16 %v8417, %v8416
        %v8447 = vpack.c.bf16 %v8419, %v8418
        %v8448 = vpack.c.bf16 %v8421, %v8420
        %v8449 = vpack.c.bf16 %v8423, %v8422
        %v8450 = vpack.c.bf16 %v8425, %v8424
        %v8451 = vpack.c.bf16 %v8427, %v8426
        %s8452 = scalar_lea.vmem [#allocation2], 3584
        %v8453 = vld [vmem:[%s8452] sm:$0xff]
        %v8454 = vld [vmem:[%s8452 + $0x8] sm:$0xff]
        %v8455 = vld [vmem:[%s8452 + $0x10] sm:$0xff]
        %v8456 = vld [vmem:[%s8452 + $0x18] sm:$0xff]
        %v8457 = vld [vmem:[%s8452 + $0x20] sm:$0xff]
        %v8458 = vld [vmem:[%s8452 + $0x28] sm:$0xff]
        %v8459 = vld [vmem:[%s8452 + $0x30] sm:$0xff]
        %v8460 = vld [vmem:[%s8452 + $0x38] sm:$0xff]
        %v8461 = vld [vmem:[%s8452 + $0x40] sm:$0xff]
        %v8462 = vld [vmem:[%s8452 + $0x48] sm:$0xff]
        %v8463 = vld [vmem:[%s8452 + $0x50] sm:$0xff]
        %v8464 = vld [vmem:[%s8452 + $0x58] sm:$0xff]
        %v8465 = vld [vmem:[%s8452 + $0x60] sm:$0xff]
        %v8466 = vld [vmem:[%s8452 + $0x68] sm:$0xff]
        %v8467 = vld [vmem:[%s8452 + $0x70] sm:$0xff]
        %v8468 = vld [vmem:[%s8452 + $0x78] sm:$0xff]
        %v8469 = vld [vmem:[%s8452 + $0x80] sm:$0xff]
        %v8470 = vld [vmem:[%s8452 + $0x88] sm:$0xff]
        %v8471 = vld [vmem:[%s8452 + $0x90] sm:$0xff]
        %v8472 = vld [vmem:[%s8452 + $0x98] sm:$0xff]
        %v8473 = vld [vmem:[%s8452 + $0xa0] sm:$0xff]
        %v8474 = vld [vmem:[%s8452 + $0xa8] sm:$0xff]
        %v8475 = vld [vmem:[%s8452 + $0xb0] sm:$0xff]
        %v8476 = vld [vmem:[%s8452 + $0xb8] sm:$0xff]
        %v8477 = vld [vmem:[%s8452 + $0xc0] sm:$0xff]
        %v8478 = vld [vmem:[%s8452 + $0xc8] sm:$0xff]
        %v8479 = vld [vmem:[%s8452 + $0xd0] sm:$0xff]
        %v8480 = vld [vmem:[%s8452 + $0xd8] sm:$0xff]
        %v8481 = vld [vmem:[%s8452 + $0xe0] sm:$0xff]
        %v8482 = vld [vmem:[%s8452 + $0xe8] sm:$0xff]
        %v8483 = vld [vmem:[%s8452 + $0xf0] sm:$0xff]
        %v8484 = vld [vmem:[%s8452 + $0xf8] sm:$0xff]
        %v8485 = vld [vmem:[%s8452 + $0x100] sm:$0xff]
        %v8486 = vld [vmem:[%s8452 + $0x108] sm:$0xff]
        %v8487 = vld [vmem:[%s8452 + $0x110] sm:$0xff]
        %v8488 = vld [vmem:[%s8452 + $0x118] sm:$0xff]
        %v8489 = vld [vmem:[%s8452 + $0x120] sm:$0xff]
        %v8490 = vld [vmem:[%s8452 + $0x128] sm:$0xff]
        %v8491 = vld [vmem:[%s8452 + $0x130] sm:$0xff]
        %v8492 = vld [vmem:[%s8452 + $0x138] sm:$0xff]
        %v8493 = vld [vmem:[%s8452 + $0x140] sm:$0xff]
        %v8494 = vld [vmem:[%s8452 + $0x148] sm:$0xff]
        %v8495 = vld [vmem:[%s8452 + $0x150] sm:$0xff]
        %v8496 = vld [vmem:[%s8452 + $0x158] sm:$0xff]
        %v8497 = vld [vmem:[%s8452 + $0x160] sm:$0xff]
        %v8498 = vld [vmem:[%s8452 + $0x168] sm:$0xff]
        %v8499 = vld [vmem:[%s8452 + $0x170] sm:$0xff]
        %v8500 = vld [vmem:[%s8452 + $0x178] sm:$0xff]
        %v8501 = vld [vmem:[%s8452 + $0x180] sm:$0xff]
        %v8502 = vld [vmem:[%s8452 + $0x188] sm:$0xff]
        %v8503 = vld [vmem:[%s8452 + $0x190] sm:$0xff]
        %v8504 = vld [vmem:[%s8452 + $0x198] sm:$0xff]
        %v8505 = vld [vmem:[%s8452 + $0x1a0] sm:$0xff]
        %v8506 = vld [vmem:[%s8452 + $0x1a8] sm:$0xff]
        %v8507 = vld [vmem:[%s8452 + $0x1b0] sm:$0xff]
        %v8508 = vld [vmem:[%s8452 + $0x1b8] sm:$0xff]
        %v8509 = vld [vmem:[%s8452 + $0x1c0] sm:$0xff]
        %v8510 = vld [vmem:[%s8452 + $0x1c8] sm:$0xff]
        %v8511 = vld [vmem:[%s8452 + $0x1d0] sm:$0xff]
        %v8512 = vld [vmem:[%s8452 + $0x1d8] sm:$0xff]
        %v8513 = vld [vmem:[%s8452 + $0x1e0] sm:$0xff]
        %v8514 = vld [vmem:[%s8452 + $0x1e8] sm:$0xff]
        %v8515 = vld [vmem:[%s8452 + $0x1f0] sm:$0xff]
        %v8516 = vld [vmem:[%s8452 + $0x1f8] sm:$0xff]
        %8517 = vmatprep.subr.bf16.mxu0 %v3589
        %8518 = vmatpush1.bf16.msra.mxu0 %v3588
        %8519 = vmatprep.subr.bf16.mxu0 %v3585
        %8520 = vmatpush1.bf16.msra.mxu0 %v3584
        %8521 = vmatprep.subr.bf16.mxu0 %v3581
        %8522 = vmatpush1.bf16.msra.mxu0 %v3580
        %8523 = vmatprep.subr.bf16.mxu0 %v3577
        %8524 = vmatpush1.bf16.msra.mxu0 %v3576
        %8525 = vmatprep.subr.bf16.mxu0 %v3573
        %8526 = vmatpush1.bf16.msra.mxu0 %v3572
        %8527 = vmatprep.subr.bf16.mxu0 %v3569
        %8528 = vmatpush1.bf16.msra.mxu0 %v3568
        %8529 = vmatprep.subr.bf16.mxu0 %v3565
        %8530 = vmatpush1.bf16.msra.mxu0 %v3564
        %8531 = vmatprep.subr.bf16.mxu0 %v3561
        %8532 = vmatpush1.bf16.msra.mxu0 %v3560
        %8533 = vmatprep.subr.bf16.mxu0 0
        %8534 = vmatpush2.bf16.msra.mxu0 0
        %8535 = vmatprep.subr.bf16.mxu0 0
        %8536 = vmatpush2.bf16.msra.mxu0 0
        %8537 = vmatprep.subr.bf16.mxu0 0
        %8538 = vmatpush2.bf16.msra.mxu0 0
        %8539 = vmatprep.subr.bf16.mxu0 0
        %8540 = vmatpush2.bf16.msra.mxu0 0
        %8541 = vmatprep.subr.bf16.mxu0 0
        %8542 = vmatpush2.bf16.msra.mxu0 0
        %8543 = vmatprep.subr.bf16.mxu0 0
        %8544 = vmatpush2.bf16.msra.mxu0 0
        %8545 = vmatprep.subr.bf16.mxu0 0
        %8546 = vmatpush2.bf16.msra.mxu0 0
        %8547 = vmatprep.subr.bf16.mxu0 0
        %8548 = vmatpush2.bf16.msra.mxu0 0
        %8549 = vmatprep.mubr.bf16.mxu0 0
        %8550 = vmatmul.mubr.bf16.gmra.mxu0 %v8444
        %v8551 = vpop.f32.mrf.mxu0
        %v8552 = vadd.f32 %v8453, %v8551
        %v8553 = vpop.f32.mrf.mxu0
        %v8554 = vadd.f32 %v8454, %v8553
        %v8555 = vpop.f32.mrf.mxu0
        %v8556 = vadd.f32 %v8457, %v8555
        %v8557 = vpop.f32.mrf.mxu0
        %v8558 = vadd.f32 %v8458, %v8557
        %8559 = vmatprep.mubr.bf16.mxu0 0
        %8560 = vmatmul.mubr.bf16.gmra.mxu0 %v8445
        %v8561 = vpop.f32.mrf.mxu0
        %v8562 = vadd.f32 %v8461, %v8561
        %v8563 = vpop.f32.mrf.mxu0
        %v8564 = vadd.f32 %v8462, %v8563
        %v8565 = vpop.f32.mrf.mxu0
        %v8566 = vadd.f32 %v8465, %v8565
        %v8567 = vpop.f32.mrf.mxu0
        %v8568 = vadd.f32 %v8466, %v8567
        %8569 = vmatprep.mubr.bf16.mxu0 0
        %8570 = vmatmul.mubr.bf16.gmra.mxu0 %v8446
        %v8571 = vpop.f32.mrf.mxu0
        %v8572 = vadd.f32 %v8469, %v8571
        %v8573 = vpop.f32.mrf.mxu0
        %v8574 = vadd.f32 %v8470, %v8573
        %v8575 = vpop.f32.mrf.mxu0
        %v8576 = vadd.f32 %v8473, %v8575
        %v8577 = vpop.f32.mrf.mxu0
        %v8578 = vadd.f32 %v8474, %v8577
        %8579 = vmatprep.mubr.bf16.mxu0 0
        %8580 = vmatmul.mubr.bf16.gmra.mxu0 %v8447
        %v8581 = vpop.f32.mrf.mxu0
        %v8582 = vadd.f32 %v8477, %v8581
        %v8583 = vpop.f32.mrf.mxu0
        %v8584 = vadd.f32 %v8478, %v8583
        %v8585 = vpop.f32.mrf.mxu0
        %v8586 = vadd.f32 %v8481, %v8585
        %v8587 = vpop.f32.mrf.mxu0
        %v8588 = vadd.f32 %v8482, %v8587
        %8589 = vmatprep.mubr.bf16.mxu0 0
        %8590 = vmatmul.mubr.bf16.gmra.mxu0 %v8448
        %v8591 = vpop.f32.mrf.mxu0
        %v8592 = vadd.f32 %v8485, %v8591
        %v8593 = vpop.f32.mrf.mxu0
        %v8594 = vadd.f32 %v8486, %v8593
        %v8595 = vpop.f32.mrf.mxu0
        %v8596 = vadd.f32 %v8489, %v8595
        %v8597 = vpop.f32.mrf.mxu0
        %v8598 = vadd.f32 %v8490, %v8597
        %8599 = vmatprep.mubr.bf16.mxu0 0
        %8600 = vmatmul.mubr.bf16.gmra.mxu0 %v8449
        %v8601 = vpop.f32.mrf.mxu0
        %v8602 = vadd.f32 %v8493, %v8601
        %v8603 = vpop.f32.mrf.mxu0
        %v8604 = vadd.f32 %v8494, %v8603
        %v8605 = vpop.f32.mrf.mxu0
        %v8606 = vadd.f32 %v8497, %v8605
        %v8607 = vpop.f32.mrf.mxu0
        %v8608 = vadd.f32 %v8498, %v8607
        %8609 = vmatprep.mubr.bf16.mxu0 0
        %8610 = vmatmul.mubr.bf16.gmra.mxu0 %v8450
        %v8611 = vpop.f32.mrf.mxu0
        %v8612 = vadd.f32 %v8501, %v8611
        %v8613 = vpop.f32.mrf.mxu0
        %v8614 = vadd.f32 %v8502, %v8613
        %v8615 = vpop.f32.mrf.mxu0
        %v8616 = vadd.f32 %v8505, %v8615
        %v8617 = vpop.f32.mrf.mxu0
        %v8618 = vadd.f32 %v8506, %v8617
        %8619 = vmatprep.mubr.bf16.mxu0 0
        %8620 = vmatmul.mubr.bf16.gmra.mxu0 %v8451
        %v8621 = vpop.f32.mrf.mxu0
        %v8622 = vadd.f32 %v8509, %v8621
        %v8623 = vpop.f32.mrf.mxu0
        %v8624 = vadd.f32 %v8510, %v8623
        %v8625 = vpop.f32.mrf.mxu0
        %v8626 = vadd.f32 %v8513, %v8625
        %v8627 = vpop.f32.mrf.mxu0
        %v8628 = vadd.f32 %v8514, %v8627
        %8629 = vdwg.mxu0
        %8630 = vmatprep.subr.bf16.mxu0 %v3591
        %8631 = vmatpush1.bf16.msra.mxu0 %v3590
        %8632 = vmatprep.subr.bf16.mxu0 %v3587
        %8633 = vmatpush1.bf16.msra.mxu0 %v3586
        %8634 = vmatprep.subr.bf16.mxu0 %v3583
        %8635 = vmatpush1.bf16.msra.mxu0 %v3582
        %8636 = vmatprep.subr.bf16.mxu0 %v3579
        %8637 = vmatpush1.bf16.msra.mxu0 %v3578
        %8638 = vmatprep.subr.bf16.mxu0 %v3575
        %8639 = vmatpush1.bf16.msra.mxu0 %v3574
        %8640 = vmatprep.subr.bf16.mxu0 %v3571
        %8641 = vmatpush1.bf16.msra.mxu0 %v3570
        %8642 = vmatprep.subr.bf16.mxu0 %v3567
        %8643 = vmatpush1.bf16.msra.mxu0 %v3566
        %8644 = vmatprep.subr.bf16.mxu0 %v3563
        %8645 = vmatpush1.bf16.msra.mxu0 %v3562
        %8646 = vmatprep.subr.bf16.mxu0 0
        %8647 = vmatpush2.bf16.msra.mxu0 0
        %8648 = vmatprep.subr.bf16.mxu0 0
        %8649 = vmatpush2.bf16.msra.mxu0 0
        %8650 = vmatprep.subr.bf16.mxu0 0
        %8651 = vmatpush2.bf16.msra.mxu0 0
        %8652 = vmatprep.subr.bf16.mxu0 0
        %8653 = vmatpush2.bf16.msra.mxu0 0
        %8654 = vmatprep.subr.bf16.mxu0 0
        %8655 = vmatpush2.bf16.msra.mxu0 0
        %8656 = vmatprep.subr.bf16.mxu0 0
        %8657 = vmatpush2.bf16.msra.mxu0 0
        %8658 = vmatprep.subr.bf16.mxu0 0
        %8659 = vmatpush2.bf16.msra.mxu0 0
        %8660 = vmatprep.subr.bf16.mxu0 0
        %8661 = vmatpush2.bf16.msra.mxu0 0
        %8662 = vmatprep.mubr.bf16.mxu0 0
        %8663 = vmatmul.mubr.bf16.gmra.mxu0 %v8444
        %v8664 = vpop.f32.mrf.mxu0
        %v8665 = vadd.f32 %v8455, %v8664
        %v8666 = vpop.f32.mrf.mxu0
        %v8667 = vadd.f32 %v8456, %v8666
        %v8668 = vpop.f32.mrf.mxu0
        %v8669 = vadd.f32 %v8459, %v8668
        %v8670 = vpop.f32.mrf.mxu0
        %v8671 = vadd.f32 %v8460, %v8670
        %8672 = vmatprep.mubr.bf16.mxu0 0
        %8673 = vmatmul.mubr.bf16.gmra.mxu0 %v8445
        %v8674 = vpop.f32.mrf.mxu0
        %v8675 = vadd.f32 %v8463, %v8674
        %v8676 = vpop.f32.mrf.mxu0
        %v8677 = vadd.f32 %v8464, %v8676
        %v8678 = vpop.f32.mrf.mxu0
        %v8679 = vadd.f32 %v8467, %v8678
        %v8680 = vpop.f32.mrf.mxu0
        %v8681 = vadd.f32 %v8468, %v8680
        %8682 = vmatprep.mubr.bf16.mxu0 0
        %8683 = vmatmul.mubr.bf16.gmra.mxu0 %v8446
        %v8684 = vpop.f32.mrf.mxu0
        %v8685 = vadd.f32 %v8471, %v8684
        %v8686 = vpop.f32.mrf.mxu0
        %v8687 = vadd.f32 %v8472, %v8686
        %v8688 = vpop.f32.mrf.mxu0
        %v8689 = vadd.f32 %v8475, %v8688
        %v8690 = vpop.f32.mrf.mxu0
        %v8691 = vadd.f32 %v8476, %v8690
        %8692 = vmatprep.mubr.bf16.mxu0 0
        %8693 = vmatmul.mubr.bf16.gmra.mxu0 %v8447
        %v8694 = vpop.f32.mrf.mxu0
        %v8695 = vadd.f32 %v8479, %v8694
        %v8696 = vpop.f32.mrf.mxu0
        %v8697 = vadd.f32 %v8480, %v8696
        %v8698 = vpop.f32.mrf.mxu0
        %v8699 = vadd.f32 %v8483, %v8698
        %v8700 = vpop.f32.mrf.mxu0
        %v8701 = vadd.f32 %v8484, %v8700
        %8702 = vmatprep.mubr.bf16.mxu0 0
        %8703 = vmatmul.mubr.bf16.gmra.mxu0 %v8448
        %v8704 = vpop.f32.mrf.mxu0
        %v8705 = vadd.f32 %v8487, %v8704
        %v8706 = vpop.f32.mrf.mxu0
        %v8707 = vadd.f32 %v8488, %v8706
        %v8708 = vpop.f32.mrf.mxu0
        %v8709 = vadd.f32 %v8491, %v8708
        %v8710 = vpop.f32.mrf.mxu0
        %v8711 = vadd.f32 %v8492, %v8710
        %8712 = vmatprep.mubr.bf16.mxu0 0
        %8713 = vmatmul.mubr.bf16.gmra.mxu0 %v8449
        %v8714 = vpop.f32.mrf.mxu0
        %v8715 = vadd.f32 %v8495, %v8714
        %v8716 = vpop.f32.mrf.mxu0
        %v8717 = vadd.f32 %v8496, %v8716
        %v8718 = vpop.f32.mrf.mxu0
        %v8719 = vadd.f32 %v8499, %v8718
        %v8720 = vpop.f32.mrf.mxu0
        %v8721 = vadd.f32 %v8500, %v8720
        %8722 = vmatprep.mubr.bf16.mxu0 0
        %8723 = vmatmul.mubr.bf16.gmra.mxu0 %v8450
        %v8724 = vpop.f32.mrf.mxu0
        %v8725 = vadd.f32 %v8503, %v8724
        %v8726 = vpop.f32.mrf.mxu0
        %v8727 = vadd.f32 %v8504, %v8726
        %v8728 = vpop.f32.mrf.mxu0
        %v8729 = vadd.f32 %v8507, %v8728
        %v8730 = vpop.f32.mrf.mxu0
        %v8731 = vadd.f32 %v8508, %v8730
        %8732 = vmatprep.mubr.bf16.mxu0 0
        %8733 = vmatmul.mubr.bf16.gmra.mxu0 %v8451
        %v8734 = vpop.f32.mrf.mxu0
        %v8735 = vadd.f32 %v8511, %v8734
        %v8736 = vpop.f32.mrf.mxu0
        %v8737 = vadd.f32 %v8512, %v8736
        %v8738 = vpop.f32.mrf.mxu0
        %v8739 = vadd.f32 %v8515, %v8738
        %v8740 = vpop.f32.mrf.mxu0
        %v8741 = vadd.f32 %v8516, %v8740
        %8742 = vdwg.mxu0
        %v8743 = vxor.u32 %v8552, 2147483648
        %v8744 = vxor.u32 %v8556, 2147483648
        %v8745 = vxor.u32 %v8562, 2147483648
        %v8746 = vxor.u32 %v8566, 2147483648
        %v8747 = vxor.u32 %v8572, 2147483648
        %v8748 = vxor.u32 %v8576, 2147483648
        %v8749 = vxor.u32 %v8582, 2147483648
        %v8750 = vxor.u32 %v8586, 2147483648
        %v8751 = vxor.u32 %v8592, 2147483648
        %v8752 = vxor.u32 %v8596, 2147483648
        %v8753 = vxor.u32 %v8602, 2147483648
        %v8754 = vxor.u32 %v8606, 2147483648
        %v8755 = vxor.u32 %v8612, 2147483648
        %v8756 = vxor.u32 %v8616, 2147483648
        %v8757 = vxor.u32 %v8622, 2147483648
        %v8758 = vxor.u32 %v8626, 2147483648
        %v8759 = vmul.f32 %v8743, 1.442695
        %v8760 = vpow.pop %v8759
        %v8761 = vmul.f32 %v8744, 1.442695
        %v8762 = vpow.pop %v8761
        %v8763 = vmul.f32 %v8745, 1.442695
        %v8764 = vpow.pop %v8763
        %v8765 = vmul.f32 %v8746, 1.442695
        %v8766 = vpow.pop %v8765
        %v8767 = vmul.f32 %v8747, 1.442695
        %v8768 = vpow.pop %v8767
        %v8769 = vmul.f32 %v8748, 1.442695
        %v8770 = vpow.pop %v8769
        %v8771 = vmul.f32 %v8749, 1.442695
        %v8772 = vpow.pop %v8771
        %v8773 = vmul.f32 %v8750, 1.442695
        %v8774 = vpow.pop %v8773
        %v8775 = vmul.f32 %v8751, 1.442695
        %v8776 = vpow.pop %v8775
        %v8777 = vmul.f32 %v8752, 1.442695
        %v8778 = vpow.pop %v8777
        %v8779 = vmul.f32 %v8753, 1.442695
        %v8780 = vpow.pop %v8779
        %v8781 = vmul.f32 %v8754, 1.442695
        %v8782 = vpow.pop %v8781
        %v8783 = vmul.f32 %v8755, 1.442695
        %v8784 = vpow.pop %v8783
        %v8785 = vmul.f32 %v8756, 1.442695
        %v8786 = vpow.pop %v8785
        %v8787 = vmul.f32 %v8757, 1.442695
        %v8788 = vpow.pop %v8787
        %v8789 = vmul.f32 %v8758, 1.442695
        %v8790 = vpow.pop %v8789
        %v8791 = vadd.f32 %v8760, 1.0
        %v8792 = vadd.f32 %v8762, 1.0
        %v8793 = vadd.f32 %v8764, 1.0
        %v8794 = vadd.f32 %v8766, 1.0
        %v8795 = vadd.f32 %v8768, 1.0
        %v8796 = vadd.f32 %v8770, 1.0
        %v8797 = vadd.f32 %v8772, 1.0
        %v8798 = vadd.f32 %v8774, 1.0
        %v8799 = vadd.f32 %v8776, 1.0
        %v8800 = vadd.f32 %v8778, 1.0
        %v8801 = vadd.f32 %v8780, 1.0
        %v8802 = vadd.f32 %v8782, 1.0
        %v8803 = vadd.f32 %v8784, 1.0
        %v8804 = vadd.f32 %v8786, 1.0
        %v8805 = vadd.f32 %v8788, 1.0
        %v8806 = vadd.f32 %v8790, 1.0
        %v8807 = vrcp.pop %v8791
        %v8808 = vmul.f32 1.0, %v8807
        %v8809 = vrcp.pop %v8792
        %v8810 = vmul.f32 1.0, %v8809
        %v8811 = vrcp.pop %v8793
        %v8812 = vmul.f32 1.0, %v8811
        %v8813 = vrcp.pop %v8794
        %v8814 = vmul.f32 1.0, %v8813
        %v8815 = vrcp.pop %v8795
        %v8816 = vmul.f32 1.0, %v8815
        %v8817 = vrcp.pop %v8796
        %v8818 = vmul.f32 1.0, %v8817
        %v8819 = vrcp.pop %v8797
        %v8820 = vmul.f32 1.0, %v8819
        %v8821 = vrcp.pop %v8798
        %v8822 = vmul.f32 1.0, %v8821
        %v8823 = vrcp.pop %v8799
        %v8824 = vmul.f32 1.0, %v8823
        %v8825 = vrcp.pop %v8800
        %v8826 = vmul.f32 1.0, %v8825
        %v8827 = vrcp.pop %v8801
        %v8828 = vmul.f32 1.0, %v8827
        %v8829 = vrcp.pop %v8802
        %v8830 = vmul.f32 1.0, %v8829
        %v8831 = vrcp.pop %v8803
        %v8832 = vmul.f32 1.0, %v8831
        %v8833 = vrcp.pop %v8804
        %v8834 = vmul.f32 1.0, %v8833
        %v8835 = vrcp.pop %v8805
        %v8836 = vmul.f32 1.0, %v8835
        %v8837 = vrcp.pop %v8806
        %v8838 = vmul.f32 1.0, %v8837
        %v8839 = vxor.u32 %v8554, 2147483648
        %v8840 = vxor.u32 %v8558, 2147483648
        %v8841 = vxor.u32 %v8564, 2147483648
        %v8842 = vxor.u32 %v8568, 2147483648
        %v8843 = vxor.u32 %v8574, 2147483648
        %v8844 = vxor.u32 %v8578, 2147483648
        %v8845 = vxor.u32 %v8584, 2147483648
        %v8846 = vxor.u32 %v8588, 2147483648
        %v8847 = vxor.u32 %v8594, 2147483648
        %v8848 = vxor.u32 %v8598, 2147483648
        %v8849 = vxor.u32 %v8604, 2147483648
        %v8850 = vxor.u32 %v8608, 2147483648
        %v8851 = vxor.u32 %v8614, 2147483648
        %v8852 = vxor.u32 %v8618, 2147483648
        %v8853 = vxor.u32 %v8624, 2147483648
        %v8854 = vxor.u32 %v8628, 2147483648
        %v8855 = vmul.f32 %v8839, 1.442695
        %v8856 = vpow.pop %v8855
        %v8857 = vmul.f32 %v8840, 1.442695
        %v8858 = vpow.pop %v8857
        %v8859 = vmul.f32 %v8841, 1.442695
        %v8860 = vpow.pop %v8859
        %v8861 = vmul.f32 %v8842, 1.442695
        %v8862 = vpow.pop %v8861
        %v8863 = vmul.f32 %v8843, 1.442695
        %v8864 = vpow.pop %v8863
        %v8865 = vmul.f32 %v8844, 1.442695
        %v8866 = vpow.pop %v8865
        %v8867 = vmul.f32 %v8845, 1.442695
        %v8868 = vpow.pop %v8867
        %v8869 = vmul.f32 %v8846, 1.442695
        %v8870 = vpow.pop %v8869
        %v8871 = vmul.f32 %v8847, 1.442695
        %v8872 = vpow.pop %v8871
        %v8873 = vmul.f32 %v8848, 1.442695
        %v8874 = vpow.pop %v8873
        %v8875 = vmul.f32 %v8849, 1.442695
        %v8876 = vpow.pop %v8875
        %v8877 = vmul.f32 %v8850, 1.442695
        %v8878 = vpow.pop %v8877
        %v8879 = vmul.f32 %v8851, 1.442695
        %v8880 = vpow.pop %v8879
        %v8881 = vmul.f32 %v8852, 1.442695
        %v8882 = vpow.pop %v8881
        %v8883 = vmul.f32 %v8853, 1.442695
        %v8884 = vpow.pop %v8883
        %v8885 = vmul.f32 %v8854, 1.442695
        %v8886 = vpow.pop %v8885
        %v8887 = vadd.f32 %v8856, 1.0
        %v8888 = vadd.f32 %v8858, 1.0
        %v8889 = vadd.f32 %v8860, 1.0
        %v8890 = vadd.f32 %v8862, 1.0
        %v8891 = vadd.f32 %v8864, 1.0
        %v8892 = vadd.f32 %v8866, 1.0
        %v8893 = vadd.f32 %v8868, 1.0
        %v8894 = vadd.f32 %v8870, 1.0
        %v8895 = vadd.f32 %v8872, 1.0
        %v8896 = vadd.f32 %v8874, 1.0
        %v8897 = vadd.f32 %v8876, 1.0
        %v8898 = vadd.f32 %v8878, 1.0
        %v8899 = vadd.f32 %v8880, 1.0
        %v8900 = vadd.f32 %v8882, 1.0
        %v8901 = vadd.f32 %v8884, 1.0
        %v8902 = vadd.f32 %v8886, 1.0
        %v8903 = vrcp.pop %v8887
        %v8904 = vmul.f32 1.0, %v8903
        %v8905 = vrcp.pop %v8888
        %v8906 = vmul.f32 1.0, %v8905
        %v8907 = vrcp.pop %v8889
        %v8908 = vmul.f32 1.0, %v8907
        %v8909 = vrcp.pop %v8890
        %v8910 = vmul.f32 1.0, %v8909
        %v8911 = vrcp.pop %v8891
        %v8912 = vmul.f32 1.0, %v8911
        %v8913 = vrcp.pop %v8892
        %v8914 = vmul.f32 1.0, %v8913
        %v8915 = vrcp.pop %v8893
        %v8916 = vmul.f32 1.0, %v8915
        %v8917 = vrcp.pop %v8894
        %v8918 = vmul.f32 1.0, %v8917
        %v8919 = vrcp.pop %v8895
        %v8920 = vmul.f32 1.0, %v8919
        %v8921 = vrcp.pop %v8896
        %v8922 = vmul.f32 1.0, %v8921
        %v8923 = vrcp.pop %v8897
        %v8924 = vmul.f32 1.0, %v8923
        %v8925 = vrcp.pop %v8898
        %v8926 = vmul.f32 1.0, %v8925
        %v8927 = vrcp.pop %v8899
        %v8928 = vmul.f32 1.0, %v8927
        %v8929 = vrcp.pop %v8900
        %v8930 = vmul.f32 1.0, %v8929
        %v8931 = vrcp.pop %v8901
        %v8932 = vmul.f32 1.0, %v8931
        %v8933 = vrcp.pop %v8902
        %v8934 = vmul.f32 1.0, %v8933
        %v8935 = vtanh.pop %v8665
        %v8936 = vtanh.pop %v8669
        %v8937 = vtanh.pop %v8675
        %v8938 = vtanh.pop %v8679
        %v8939 = vtanh.pop %v8685
        %v8940 = vtanh.pop %v8689
        %v8941 = vtanh.pop %v8695
        %v8942 = vtanh.pop %v8699
        %v8943 = vtanh.pop %v8705
        %v8944 = vtanh.pop %v8709
        %v8945 = vtanh.pop %v8715
        %v8946 = vtanh.pop %v8719
        %v8947 = vtanh.pop %v8725
        %v8948 = vtanh.pop %v8729
        %v8949 = vtanh.pop %v8735
        %v8950 = vtanh.pop %v8739
        %v8951 = vxor.u32 %v8667, 2147483648
        %v8952 = vxor.u32 %v8671, 2147483648
        %v8953 = vxor.u32 %v8677, 2147483648
        %v8954 = vxor.u32 %v8681, 2147483648
        %v8955 = vxor.u32 %v8687, 2147483648
        %v8956 = vxor.u32 %v8691, 2147483648
        %v8957 = vxor.u32 %v8697, 2147483648
        %v8958 = vxor.u32 %v8701, 2147483648
        %v8959 = vxor.u32 %v8707, 2147483648
        %v8960 = vxor.u32 %v8711, 2147483648
        %v8961 = vxor.u32 %v8717, 2147483648
        %v8962 = vxor.u32 %v8721, 2147483648
        %v8963 = vxor.u32 %v8727, 2147483648
        %v8964 = vxor.u32 %v8731, 2147483648
        %v8965 = vxor.u32 %v8737, 2147483648
        %v8966 = vxor.u32 %v8741, 2147483648
        %v8967 = vmul.f32 %v8951, 1.442695
        %v8968 = vpow.pop %v8967
        %v8969 = vmul.f32 %v8952, 1.442695
        %v8970 = vpow.pop %v8969
        %v8971 = vmul.f32 %v8953, 1.442695
        %v8972 = vpow.pop %v8971
        %v8973 = vmul.f32 %v8954, 1.442695
        %v8974 = vpow.pop %v8973
        %v8975 = vmul.f32 %v8955, 1.442695
        %v8976 = vpow.pop %v8975
        %v8977 = vmul.f32 %v8956, 1.442695
        %v8978 = vpow.pop %v8977
        %v8979 = vmul.f32 %v8957, 1.442695
        %v8980 = vpow.pop %v8979
        %v8981 = vmul.f32 %v8958, 1.442695
        %v8982 = vpow.pop %v8981
        %v8983 = vmul.f32 %v8959, 1.442695
        %v8984 = vpow.pop %v8983
        %v8985 = vmul.f32 %v8960, 1.442695
        %v8986 = vpow.pop %v8985
        %v8987 = vmul.f32 %v8961, 1.442695
        %v8988 = vpow.pop %v8987
        %v8989 = vmul.f32 %v8962, 1.442695
        %v8990 = vpow.pop %v8989
        %v8991 = vmul.f32 %v8963, 1.442695
        %v8992 = vpow.pop %v8991
        %v8993 = vmul.f32 %v8964, 1.442695
        %v8994 = vpow.pop %v8993
        %v8995 = vmul.f32 %v8965, 1.442695
        %v8996 = vpow.pop %v8995
        %v8997 = vmul.f32 %v8966, 1.442695
        %v8998 = vpow.pop %v8997
        %v8999 = vadd.f32 %v8968, 1.0
        %v9000 = vadd.f32 %v8970, 1.0
        %v9001 = vadd.f32 %v8972, 1.0
        %v9002 = vadd.f32 %v8974, 1.0
        %v9003 = vadd.f32 %v8976, 1.0
        %v9004 = vadd.f32 %v8978, 1.0
        %v9005 = vadd.f32 %v8980, 1.0
        %v9006 = vadd.f32 %v8982, 1.0
        %v9007 = vadd.f32 %v8984, 1.0
        %v9008 = vadd.f32 %v8986, 1.0
        %v9009 = vadd.f32 %v8988, 1.0
        %v9010 = vadd.f32 %v8990, 1.0
        %v9011 = vadd.f32 %v8992, 1.0
        %v9012 = vadd.f32 %v8994, 1.0
        %v9013 = vadd.f32 %v8996, 1.0
        %v9014 = vadd.f32 %v8998, 1.0
        %v9015 = vrcp.pop %v8999
        %v9016 = vmul.f32 1.0, %v9015
        %v9017 = vrcp.pop %v9000
        %v9018 = vmul.f32 1.0, %v9017
        %v9019 = vrcp.pop %v9001
        %v9020 = vmul.f32 1.0, %v9019
        %v9021 = vrcp.pop %v9002
        %v9022 = vmul.f32 1.0, %v9021
        %v9023 = vrcp.pop %v9003
        %v9024 = vmul.f32 1.0, %v9023
        %v9025 = vrcp.pop %v9004
        %v9026 = vmul.f32 1.0, %v9025
        %v9027 = vrcp.pop %v9005
        %v9028 = vmul.f32 1.0, %v9027
        %v9029 = vrcp.pop %v9006
        %v9030 = vmul.f32 1.0, %v9029
        %v9031 = vrcp.pop %v9007
        %v9032 = vmul.f32 1.0, %v9031
        %v9033 = vrcp.pop %v9008
        %v9034 = vmul.f32 1.0, %v9033
        %v9035 = vrcp.pop %v9009
        %v9036 = vmul.f32 1.0, %v9035
        %v9037 = vrcp.pop %v9010
        %v9038 = vmul.f32 1.0, %v9037
        %v9039 = vrcp.pop %v9011
        %v9040 = vmul.f32 1.0, %v9039
        %v9041 = vrcp.pop %v9012
        %v9042 = vmul.f32 1.0, %v9041
        %v9043 = vrcp.pop %v9013
        %v9044 = vmul.f32 1.0, %v9043
        %v9045 = vrcp.pop %v9014
        %v9046 = vmul.f32 1.0, %v9045
        %v9047 = vmul.f32 %v8904, %v8380
        %v9048 = vmul.f32 %v8906, %v8381
        %v9049 = vmul.f32 %v8908, %v8382
        %v9050 = vmul.f32 %v8910, %v8383
        %v9051 = vmul.f32 %v8912, %v8384
        %v9052 = vmul.f32 %v8914, %v8385
        %v9053 = vmul.f32 %v8916, %v8386
        %v9054 = vmul.f32 %v8918, %v8387
        %v9055 = vmul.f32 %v8920, %v8388
        %v9056 = vmul.f32 %v8922, %v8389
        %v9057 = vmul.f32 %v8924, %v8390
        %v9058 = vmul.f32 %v8926, %v8391
        %v9059 = vmul.f32 %v8928, %v8392
        %v9060 = vmul.f32 %v8930, %v8393
        %v9061 = vmul.f32 %v8932, %v8394
        %v9062 = vmul.f32 %v8934, %v8395
        %v9063 = vmul.f32 %v8808, %v8935
        %v9064 = vmul.f32 %v8810, %v8936
        %v9065 = vmul.f32 %v8812, %v8937
        %v9066 = vmul.f32 %v8814, %v8938
        %v9067 = vmul.f32 %v8816, %v8939
        %v9068 = vmul.f32 %v8818, %v8940
        %v9069 = vmul.f32 %v8820, %v8941
        %v9070 = vmul.f32 %v8822, %v8942
        %v9071 = vmul.f32 %v8824, %v8943
        %v9072 = vmul.f32 %v8826, %v8944
        %v9073 = vmul.f32 %v8828, %v8945
        %v9074 = vmul.f32 %v8830, %v8946
        %v9075 = vmul.f32 %v8832, %v8947
        %v9076 = vmul.f32 %v8834, %v8948
        %v9077 = vmul.f32 %v8836, %v8949
        %v9078 = vmul.f32 %v8838, %v8950
        %v9079 = vadd.f32 %v9047, %v9063
        %v9080 = vadd.f32 %v9048, %v9064
        %v9081 = vadd.f32 %v9049, %v9065
        %v9082 = vadd.f32 %v9050, %v9066
        %v9083 = vadd.f32 %v9051, %v9067
        %v9084 = vadd.f32 %v9052, %v9068
        %v9085 = vadd.f32 %v9053, %v9069
        %v9086 = vadd.f32 %v9054, %v9070
        %v9087 = vadd.f32 %v9055, %v9071
        %v9088 = vadd.f32 %v9056, %v9072
        %v9089 = vadd.f32 %v9057, %v9073
        %v9090 = vadd.f32 %v9058, %v9074
        %v9091 = vadd.f32 %v9059, %v9075
        %v9092 = vadd.f32 %v9060, %v9076
        %v9093 = vadd.f32 %v9061, %v9077
        %v9094 = vadd.f32 %v9062, %v9078
        %v9095 = vtanh.pop %v9079
        %v9096 = vtanh.pop %v9080
        %v9097 = vtanh.pop %v9081
        %v9098 = vtanh.pop %v9082
        %v9099 = vtanh.pop %v9083
        %v9100 = vtanh.pop %v9084
        %v9101 = vtanh.pop %v9085
        %v9102 = vtanh.pop %v9086
        %v9103 = vtanh.pop %v9087
        %v9104 = vtanh.pop %v9088
        %v9105 = vtanh.pop %v9089
        %v9106 = vtanh.pop %v9090
        %v9107 = vtanh.pop %v9091
        %v9108 = vtanh.pop %v9092
        %v9109 = vtanh.pop %v9093
        %v9110 = vtanh.pop %v9094
        %v9111 = vmul.f32 %v9016, %v9095
        %v9112 = vmul.f32 %v9018, %v9096
        %v9113 = vmul.f32 %v9020, %v9097
        %v9114 = vmul.f32 %v9022, %v9098
        %v9115 = vmul.f32 %v9024, %v9099
        %v9116 = vmul.f32 %v9026, %v9100
        %v9117 = vmul.f32 %v9028, %v9101
        %v9118 = vmul.f32 %v9030, %v9102
        %v9119 = vmul.f32 %v9032, %v9103
        %v9120 = vmul.f32 %v9034, %v9104
        %v9121 = vmul.f32 %v9036, %v9105
        %v9122 = vmul.f32 %v9038, %v9106
        %v9123 = vmul.f32 %v9040, %v9107
        %v9124 = vmul.f32 %v9042, %v9108
        %v9125 = vmul.f32 %v9044, %v9109
        %v9126 = vmul.f32 %v9046, %v9110
        %v9127 = vadd.f32 %v8428, %v9111
        %v9128 = vadd.f32 %v8429, %v9112
        %v9129 = vadd.f32 %v8430, %v9113
        %v9130 = vadd.f32 %v8431, %v9114
        %v9131 = vadd.f32 %v8432, %v9115
        %v9132 = vadd.f32 %v8433, %v9116
        %v9133 = vadd.f32 %v8434, %v9117
        %v9134 = vadd.f32 %v8435, %v9118
        %v9135 = vadd.f32 %v8436, %v9119
        %v9136 = vadd.f32 %v8437, %v9120
        %v9137 = vadd.f32 %v8438, %v9121
        %v9138 = vadd.f32 %v8439, %v9122
        %v9139 = vadd.f32 %v8440, %v9123
        %v9140 = vadd.f32 %v8441, %v9124
        %v9141 = vadd.f32 %v8442, %v9125
        %v9142 = vadd.f32 %v8443, %v9126
        %v9143 = vmul.f32 %v9127, 0.125
        %v9144 = vmul.f32 %v9128, 0.125
        %v9145 = vmul.f32 %v9129, 0.125
        %v9146 = vmul.f32 %v9130, 0.125
        %v9147 = vmul.f32 %v9131, 0.125
        %v9148 = vmul.f32 %v9132, 0.125
        %v9149 = vmul.f32 %v9133, 0.125
        %v9150 = vmul.f32 %v9134, 0.125
        %v9151 = vmul.f32 %v9135, 0.125
        %v9152 = vmul.f32 %v9136, 0.125
        %v9153 = vmul.f32 %v9137, 0.125
        %v9154 = vmul.f32 %v9138, 0.125
        %v9155 = vmul.f32 %v9139, 0.125
        %v9156 = vmul.f32 %v9140, 0.125
        %v9157 = vmul.f32 %v9141, 0.125
        %v9158 = vmul.f32 %v9142, 0.125
        %9159 = vst [vmem:[%s747] sm:$0xff] %v9143
        %9160 = vst [vmem:[%s747 + $0x8] sm:$0xff] %v9144
        %9161 = vst [vmem:[%s747 + $0x10] sm:$0xff] %v9145
        %9162 = vst [vmem:[%s747 + $0x18] sm:$0xff] %v9146
        %9163 = vst [vmem:[%s747 + $0x20] sm:$0xff] %v9147
        %9164 = vst [vmem:[%s747 + $0x28] sm:$0xff] %v9148
        %9165 = vst [vmem:[%s747 + $0x30] sm:$0xff] %v9149
        %9166 = vst [vmem:[%s747 + $0x38] sm:$0xff] %v9150
        %9167 = vst [vmem:[%s747 + $0x40] sm:$0xff] %v9151
        %9168 = vst [vmem:[%s747 + $0x48] sm:$0xff] %v9152
        %9169 = vst [vmem:[%s747 + $0x50] sm:$0xff] %v9153
        %9170 = vst [vmem:[%s747 + $0x58] sm:$0xff] %v9154
        %9171 = vst [vmem:[%s747 + $0x60] sm:$0xff] %v9155
        %9172 = vst [vmem:[%s747 + $0x68] sm:$0xff] %v9156
        %9173 = vst [vmem:[%s747 + $0x70] sm:$0xff] %v9157
        %9174 = vst [vmem:[%s747 + $0x78] sm:$0xff] %v9158
        %s9175 = sand.u32 %s115, 1
        %s9176 = scalar_lea.sflag [#allocation5], %s9175
        %s9177 = sand.u32 %s115, 1
        %s9178 = smul.addr %s9177, 128
        %s9179 = scalar_lea.vmem [#allocation4], %s9178
        // Predicated region
        $region78: #{content_aggregation.1} parent=72 // pred_check
          %p9180 = pneg %p125
        $region79: #{content_aggregation.1} parent=72 // pred_check_branch
          %9182 = sbr.rel (%p9180) target = $region81
        $region80: #{content_aggregation.1} parent=72 // pred_region
          %s9183 = smul.u32 16, %s18
          %s9185 = ssub.s32 2048, 2048
          %9186 = vsyncadd %s9176, %s9185
          %s9187 = smul.addr %s9183, 128
          %s9188 = scalar_lea.hbm %s4, %s9187
          %s9189 = sshll.u32 %s9179, 4
          %s9190 = int_to_ptr.vmem [resolvable:$true] %s9189
          %9195 = dma.vmem_to_hbm [thread:$0]  %s9190, 2048, %s9188, %s9176, 128, 128, 8
        $region81: #{content_aggregation.1} parent=72 // pred_fallthru
          _
      $region73: #{content_aggregation.1} parent=5 // pred_fallthru
        _
      %p9196 = scmp.le.s32.totalorder 2, %s13
      // Predicated region
      $region82: #{content_aggregation.1} parent=5 // pred_check
        %p9197 = pneg %p9196
      $region83: #{content_aggregation.1} parent=5 // pred_check_branch
        %9199 = sbr.rel (%p9197) target = $region85
      $region84: #{content_aggregation.1} parent=5 // pred_region
        %s9200 = ssub.s32 %s13, 2
        // Predicated region
        $region86: #{content_aggregation.1} parent=84 // pred_check
          %p9201 = pneg %p131
        $region87: #{content_aggregation.1} parent=84 // pred_check_branch
          %9203 = sbr.rel (%p9201) target = $region89
        $region88: #{content_aggregation.1} parent=84 // pred_region
          %s9204 = sand.u32 %s116, 1
          %s9205 = scalar_lea.sflag [#allocation5], %s9204
          %s9206 = sand.u32 %s116, 1
          %s9207 = smul.addr %s9206, 128
          %s9208 = scalar_lea.vmem [#allocation4], %s9207
          %9209 = dma.done %s9205, 2048
        $region89: #{content_aggregation.1} parent=84 // pred_fallthru
          _
      $region85: #{content_aggregation.1} parent=5 // pred_fallthru
        _
    $region6: #{content_aggregation.1} parent=1 // loop_footer
      %s17 = sadd.s32 1, %s13
    $region7: #{content_aggregation.1} parent=1 // loop_footer_branch
      %12 = sbr.rel target = $region3
    $region8: #{content_aggregation.1} parent=1 // loop_exit
      _
    %9210 = vsyncpa [#allocation5], 1
    %s9211 = scalar_lea.sflag [#allocation5], 1
    %9212 = vsyncpa %s9211, 1

</llo_original>
